<compile_context>
chip_gen: v5e
topology: v5e:2x2
jax: 0.10.0
libtpu: 0.0.40
codegen_flags: <defaults>
</compile_context>

<pallas_src>
import functools
from math import sqrt

import jax
import jax.numpy as jnp
from jax import lax
from jax.experimental import pallas as pl
from jax.experimental.pallas import tpu as pltpu


# ---------------------------------------------------------------------------
# Fused Pallas kernel: input conv + 18 residual convs + output conv + ILR add
# ---------------------------------------------------------------------------
def _vdsr_fused_kernel(x_ref, w_in_ref, w_res_ref, w_out_ref, o_ref,
                       buf0, buf1, *, H, W, C, n_res):
    """Whole VDSR network for one batch element.

    x_ref    : (1, H+2, W+2, 1)      zero-padded input image
    w_in_ref : (9, 1, C)             input conv weights   [tap, 1, cout]
    w_res_ref: (n_res*3, 3*C, C)     residual weights     [layer*3+dh, dw*C+ci, co]
    w_out_ref: (9, 1, C)             output conv weights  [tap, 1, cin]
    o_ref    : (1, H, W, 1)          network output (NHWC)
    buf0/buf1: (H+2, W+2, C) f32     ping-pong padded activations (VMEM scratch)
    """
    # Zero the padded activation buffers once.  Only the interiors are
    # rewritten below, so the 1-px zero border provides SAME padding for
    # every layer (no jnp.pad / HBM traffic per layer).
    buf0[...] = jnp.zeros_like(buf0)
    buf1[...] = jnp.zeros_like(buf1)

    # ---- input conv (Cin=1 -> C) + ReLU: 9 VPU broadcast-FMA taps ----------
    acc_in = jnp.zeros((H, W, C), jnp.float32)
    for dh in range(3):
        for dw in range(3):
            patch = x_ref[0, dh:dh + H, dw:dw + W, :]          # (H, W, 1)
            acc_in = acc_in + patch * w_in_ref[dh * 3 + dw]    # -> (H, W, C)
    buf0[1:1 + H, 1:1 + W, :] = jnp.maximum(acc_in, 0.0)

    # ---- 18 x (3x3 conv C->C + ReLU), ping-pong buf0 <-> buf1 --------------
    def conv_relu_layer(layer, src, dst):
        acc = jnp.zeros((H * W, C), jnp.float32)
        for dh in range(3):
            # Fold the 3 dw taps into the contraction dim: K = 3*C = 192.
            patch = jnp.concatenate(
                [src[dh:dh + H, 0:W, :].reshape(H * W, C),
                 src[dh:dh + H, 1:W + 1, :].reshape(H * W, C),
                 src[dh:dh + H, 2:W + 2, :].reshape(H * W, C)],
                axis=-1)                                       # (H*W, 3*C)
            acc = acc + jnp.dot(patch, w_res_ref[layer * 3 + dh],
                                preferred_element_type=jnp.float32)
        dst[1:1 + H, 1:1 + W, :] = jnp.maximum(acc, 0.0).reshape(H, W, C)

    def two_layers(i, carry):
        conv_relu_layer(2 * i, buf0, buf1)
        conv_relu_layer(2 * i + 1, buf1, buf0)
        return carry

    lax.fori_loop(0, n_res // 2, two_layers, 0)
    # n_res is even, so the final hidden state is back in buf0.

    # ---- output conv (C -> 1) on VPU/XLU + fused ILR residual add ----------
    acc_out = jnp.zeros((H, W, C), jnp.float32)
    for dh in range(3):
        for dw in range(3):
            acc_out = acc_out + buf0[dh:dh + H, dw:dw + W, :] * w_out_ref[dh * 3 + dw]
    ilr = x_ref[0, 1:1 + H, 1:1 + W, :]                        # (H, W, 1)
    out = jnp.sum(acc_out, axis=-1, keepdims=True) + ilr       # (H, W, 1)
    o_ref[0] = out.astype(o_ref.dtype)


# ---------------------------------------------------------------------------
# Wrapper
# ---------------------------------------------------------------------------
def vdsr_forward(x_nchw, params):
    """VDSR forward: (N, 1, H, W) -> (N, 1, H, W)."""
    N, cin, H, W = x_nchw.shape
    assert cin == 1
    n_res = len(params["residual"])
    assert n_res % 2 == 0
    C = params["input_conv"].shape[-1]                         # 64

    x = jnp.transpose(x_nchw, (0, 2, 3, 1))                    # NCHW -> NHWC
    x_pad = jnp.pad(x, ((0, 0), (1, 1), (1, 1), (0, 0)))       # (N, H+2, W+2, 1)

    # Weight repacking (pure layout, done once per call):
    #   input : (3,3,1,C)       -> (9, 1, C)          [tap, 1, cout]
    #   resid : 18 x (3,3,C,C)  -> (18*3, 3*C, C)     [layer*3+dh, dw*C+ci, co]
    #   output: (3,3,C,1)       -> (9, 1, C)          [tap, 1, cin]
    w_in = params["input_conv"].reshape(9, 1, C)
    w_res = jnp.stack(params["residual"]).reshape(n_res * 3, 3 * C, C)
    w_out = params["output_conv"].reshape(9, 1, C)

    kernel = functools.partial(_vdsr_fused_kernel, H=H, W=W, C=C, n_res=n_res)

    out_nhwc = pl.pallas_call(
        kernel,
        out_shape=jax.ShapeDtypeStruct((N, H, W, 1), x.dtype),
        grid=(N,),
        in_specs=[
            pl.BlockSpec((1, H + 2, W + 2, 1), lambda n: (n, 0, 0, 0)),
            pl.BlockSpec((9, 1, C), lambda n: (0, 0, 0)),
            pl.BlockSpec((n_res * 3, 3 * C, C), lambda n: (0, 0, 0)),
            pl.BlockSpec((9, 1, C), lambda n: (0, 0, 0)),
        ],
        out_specs=pl.BlockSpec((1, H, W, 1), lambda n: (n, 0, 0, 0)),
        scratch_shapes=[
            pltpu.VMEM((H + 2, W + 2, C), jnp.float32),        # ping
            pltpu.VMEM((H + 2, W + 2, C), jnp.float32),        # pong
        ],
        compiler_params=pltpu.CompilerParams(
            dimension_semantics=("parallel",),
            vmem_limit_bytes=48 * 1024 * 1024,
        ),
    )(x_pad, w_in, w_res, w_out)

    return jnp.transpose(out_nhwc, (0, 3, 1, 2))               # NHWC -> NCHW


# ---------------------------------------------------------------------------
# Deterministic parameter init (matches nn.Conv2d normal_(0, sqrt(2/n)))
# ---------------------------------------------------------------------------
def init_params(key):
    keys = jax.random.split(key, 20)

    def conv_w(k, cin, cout):
        n = 3 * 3 * cout
        return (jax.random.normal(k, (3, 3, cin, cout), jnp.float32)
                * sqrt(2.0 / n))

    return {
        "input_conv": conv_w(keys[0], 1, 64),
        "residual": [conv_w(keys[1 + i], 64, 64) for i in range(18)],
        "output_conv": conv_w(keys[19], 64, 1),
    }


# ---------------------------------------------------------------------------
# Pure-JAX reference for validation
# ---------------------------------------------------------------------------
def ref_forward(x_nchw, params):
    x = jnp.transpose(x_nchw, (0, 2, 3, 1))

    def conv(a, w):
        return lax.conv_general_dilated(
            a, w, (1, 1), "SAME",
            dimension_numbers=("NHWC", "HWIO", "NHWC"))

    ilr = x
    h = jax.nn.relu(conv(x, params["input_conv"]))
    for w in params["residual"]:
        h = jax.nn.relu(conv(h, w))
    out = conv(h, params["output_conv"]) + ilr
    return jnp.transpose(out, (0, 3, 1, 2))


if __name__ == "__main__":
    key = jax.random.PRNGKey(0)
    k_param, k_x = jax.random.split(key)
    params = init_params(k_param)

    # PyTorch-style NCHW input: batch=2, channels=1, spatial=16x16.
    x = jax.random.normal(k_x, (2, 1, 16, 16), jnp.float32)

    out = jax.jit(vdsr_forward)(x, params)
    out = jax.block_until_ready(out)

    ref = ref_forward(x, params)
    assert out.shape == x.shape
    assert jnp.allclose(out, ref, rtol=1e-3, atol=1e-3)

    print("KERNEL_OK")
</pallas_src>

<mosaic_0001>
module attributes {stable_mosaic.version = 11 : i64} {
  func.func @_vdsr_fused_kernel(%arg0: i32, %arg1: memref<1x18x18x1xf32, #tpu.memory_space<vmem>>, %arg2: memref<9x1x64xf32, #tpu.memory_space<vmem>>, %arg3: memref<54x192x64xf32, #tpu.memory_space<vmem>>, %arg4: memref<9x1x64xf32, #tpu.memory_space<vmem>>, %arg5: memref<1x16x16x1xf32, #tpu.memory_space<vmem>>, %arg6: memref<18x18x64xf32, #tpu.memory_space<vmem>>, %arg7: memref<18x18x64xf32, #tpu.memory_space<vmem>>) attributes {dimension_semantics = [#tpu.dimension_semantics<parallel>], iteration_bounds = array<i64: 2>, scalar_prefetch = 0 : i64, scratch_operands = 2 : i64, tpu.core_type = #tpu.core_type<tc>, window_params = [{transform_indices = @transform_0, window_bounds = array<i64: 1, 18, 18, 1>}, {pipeline_mode = #tpu.pipeline_mode<synchronous>, transform_indices = @transform_1, window_bounds = array<i64: 9, 1, 64>}, {pipeline_mode = #tpu.pipeline_mode<synchronous>, transform_indices = @transform_2, window_bounds = array<i64: 54, 192, 64>}, {pipeline_mode = #tpu.pipeline_mode<synchronous>, transform_indices = @transform_3, window_bounds = array<i64: 9, 1, 64>}, {transform_indices = @transform_4, window_bounds = array<i64: 1, 16, 16, 1>}]} {
    %cst = arith.constant 0.000000e+00 : f32
    %0 = vector.broadcast %cst : f32 to vector<18x18x64xf32>
    %c0 = arith.constant 0 : index
    %c0_0 = arith.constant 0 : index
    %c0_1 = arith.constant 0 : index
    %1 = vector.load %arg6[%c0, %c0_0, %c0_1] : memref<18x18x64xf32, #tpu.memory_space<vmem>>, vector<18x18x64xf32>
    tpu.vector_store %arg6[%c0, %c0_0, %c0_1], %0 {strides = array<i32>} : memref<18x18x64xf32, #tpu.memory_space<vmem>>, vector<18x18x64xf32>,
    %cst_2 = arith.constant 0.000000e+00 : f32
    %2 = vector.broadcast %cst_2 : f32 to vector<18x18x64xf32>
    %c0_3 = arith.constant 0 : index
    %c0_4 = arith.constant 0 : index
    %c0_5 = arith.constant 0 : index
    %3 = vector.load %arg7[%c0_3, %c0_4, %c0_5] : memref<18x18x64xf32, #tpu.memory_space<vmem>>, vector<18x18x64xf32>
    tpu.vector_store %arg7[%c0_3, %c0_4, %c0_5], %2 {strides = array<i32>} : memref<18x18x64xf32, #tpu.memory_space<vmem>>, vector<18x18x64xf32>,
    %cst_6 = arith.constant 0.000000e+00 : f32
    %4 = vector.broadcast %cst_6 : f32 to vector<16x16x64xf32>
    %c0_7 = arith.constant 0 : index
    %c0_8 = arith.constant 0 : index
    %c0_9 = arith.constant 0 : index
    %c0_10 = arith.constant 0 : index
    %5 = vector.load %arg1[%c0_7, %c0_8, %c0_9, %c0_10] : memref<1x18x18x1xf32, #tpu.memory_space<vmem>>, vector<1x16x16x1xf32>
    %6 = vector.shape_cast %5 : vector<1x16x16x1xf32> to vector<16x16x1xf32>
    %c0_11 = arith.constant 0 : index
    %c0_12 = arith.constant 0 : index
    %c0_13 = arith.constant 0 : index
    %7 = vector.load %arg2[%c0_11, %c0_12, %c0_13] : memref<9x1x64xf32, #tpu.memory_space<vmem>>, vector<1x1x64xf32>
    %8 = vector.shape_cast %7 : vector<1x1x64xf32> to vector<1x64xf32>
    %9 = vector.shape_cast %8 : vector<1x64xf32> to vector<1x1x64xf32>
    %10 = vector.broadcast %6 : vector<16x16x1xf32> to vector<16x16x64xf32>
    %11 = vector.broadcast %9 : vector<1x1x64xf32> to vector<16x16x64xf32>
    %12 = arith.mulf %10, %11 : vector<16x16x64xf32>
    %13 = arith.addf %4, %12 : vector<16x16x64xf32>
    %c0_14 = arith.constant 0 : index
    %c0_15 = arith.constant 0 : index
    %c1 = arith.constant 1 : index
    %c0_16 = arith.constant 0 : index
    %14 = vector.load %arg1[%c0_14, %c0_15, %c1, %c0_16] : memref<1x18x18x1xf32, #tpu.memory_space<vmem>>, vector<1x16x16x1xf32>
    %15 = vector.shape_cast %14 : vector<1x16x16x1xf32> to vector<16x16x1xf32>
    %c1_17 = arith.constant 1 : index
    %c0_18 = arith.constant 0 : index
    %c0_19 = arith.constant 0 : index
    %16 = vector.load %arg2[%c1_17, %c0_18, %c0_19] : memref<9x1x64xf32, #tpu.memory_space<vmem>>, vector<1x1x64xf32>
    %17 = vector.shape_cast %16 : vector<1x1x64xf32> to vector<1x64xf32>
    %18 = vector.shape_cast %17 : vector<1x64xf32> to vector<1x1x64xf32>
    %19 = vector.broadcast %15 : vector<16x16x1xf32> to vector<16x16x64xf32>
    %20 = vector.broadcast %18 : vector<1x1x64xf32> to vector<16x16x64xf32>
    %21 = arith.mulf %19, %20 : vector<16x16x64xf32>
    %22 = arith.addf %13, %21 : vector<16x16x64xf32>
    %c0_20 = arith.constant 0 : index
    %c0_21 = arith.constant 0 : index
    %c2 = arith.constant 2 : index
    %c0_22 = arith.constant 0 : index
    %23 = vector.load %arg1[%c0_20, %c0_21, %c2, %c0_22] : memref<1x18x18x1xf32, #tpu.memory_space<vmem>>, vector<1x16x16x1xf32>
    %24 = vector.shape_cast %23 : vector<1x16x16x1xf32> to vector<16x16x1xf32>
    %c2_23 = arith.constant 2 : index
    %c0_24 = arith.constant 0 : index
    %c0_25 = arith.constant 0 : index
    %25 = vector.load %arg2[%c2_23, %c0_24, %c0_25] : memref<9x1x64xf32, #tpu.memory_space<vmem>>, vector<1x1x64xf32>
    %26 = vector.shape_cast %25 : vector<1x1x64xf32> to vector<1x64xf32>
    %27 = vector.shape_cast %26 : vector<1x64xf32> to vector<1x1x64xf32>
    %28 = vector.broadcast %24 : vector<16x16x1xf32> to vector<16x16x64xf32>
    %29 = vector.broadcast %27 : vector<1x1x64xf32> to vector<16x16x64xf32>
    %30 = arith.mulf %28, %29 : vector<16x16x64xf32>
    %31 = arith.addf %22, %30 : vector<16x16x64xf32>
    %c0_26 = arith.constant 0 : index
    %c1_27 = arith.constant 1 : index
    %c0_28 = arith.constant 0 : index
    %c0_29 = arith.constant 0 : index
    %32 = vector.load %arg1[%c0_26, %c1_27, %c0_28, %c0_29] : memref<1x18x18x1xf32, #tpu.memory_space<vmem>>, vector<1x16x16x1xf32>
    %33 = vector.shape_cast %32 : vector<1x16x16x1xf32> to vector<16x16x1xf32>
    %c3 = arith.constant 3 : index
    %c0_30 = arith.constant 0 : index
    %c0_31 = arith.constant 0 : index
    %34 = vector.load %arg2[%c3, %c0_30, %c0_31] : memref<9x1x64xf32, #tpu.memory_space<vmem>>, vector<1x1x64xf32>
    %35 = vector.shape_cast %34 : vector<1x1x64xf32> to vector<1x64xf32>
    %36 = vector.shape_cast %35 : vector<1x64xf32> to vector<1x1x64xf32>
    %37 = vector.broadcast %33 : vector<16x16x1xf32> to vector<16x16x64xf32>
    %38 = vector.broadcast %36 : vector<1x1x64xf32> to vector<16x16x64xf32>
    %39 = arith.mulf %37, %38 : vector<16x16x64xf32>
    %40 = arith.addf %31, %39 : vector<16x16x64xf32>
    %c0_32 = arith.constant 0 : index
    %c1_33 = arith.constant 1 : index
    %c1_34 = arith.constant 1 : index
    %c0_35 = arith.constant 0 : index
    %41 = vector.load %arg1[%c0_32, %c1_33, %c1_34, %c0_35] : memref<1x18x18x1xf32, #tpu.memory_space<vmem>>, vector<1x16x16x1xf32>
    %42 = vector.shape_cast %41 : vector<1x16x16x1xf32> to vector<16x16x1xf32>
    %c4 = arith.constant 4 : index
    %c0_36 = arith.constant 0 : index
    %c0_37 = arith.constant 0 : index
    %43 = vector.load %arg2[%c4, %c0_36, %c0_37] : memref<9x1x64xf32, #tpu.memory_space<vmem>>, vector<1x1x64xf32>
    %44 = vector.shape_cast %43 : vector<1x1x64xf32> to vector<1x64xf32>
    %45 = vector.shape_cast %44 : vector<1x64xf32> to vector<1x1x64xf32>
    %46 = vector.broadcast %42 : vector<16x16x1xf32> to vector<16x16x64xf32>
    %47 = vector.broadcast %45 : vector<1x1x64xf32> to vector<16x16x64xf32>
    %48 = arith.mulf %46, %47 : vector<16x16x64xf32>
    %49 = arith.addf %40, %48 : vector<16x16x64xf32>
    %c0_38 = arith.constant 0 : index
    %c1_39 = arith.constant 1 : index
    %c2_40 = arith.constant 2 : index
    %c0_41 = arith.constant 0 : index
    %50 = vector.load %arg1[%c0_38, %c1_39, %c2_40, %c0_41] : memref<1x18x18x1xf32, #tpu.memory_space<vmem>>, vector<1x16x16x1xf32>
    %51 = vector.shape_cast %50 : vector<1x16x16x1xf32> to vector<16x16x1xf32>
    %c5 = arith.constant 5 : index
    %c0_42 = arith.constant 0 : index
    %c0_43 = arith.constant 0 : index
    %52 = vector.load %arg2[%c5, %c0_42, %c0_43] : memref<9x1x64xf32, #tpu.memory_space<vmem>>, vector<1x1x64xf32>
    %53 = vector.shape_cast %52 : vector<1x1x64xf32> to vector<1x64xf32>
    %54 = vector.shape_cast %53 : vector<1x64xf32> to vector<1x1x64xf32>
    %55 = vector.broadcast %51 : vector<16x16x1xf32> to vector<16x16x64xf32>
    %56 = vector.broadcast %54 : vector<1x1x64xf32> to vector<16x16x64xf32>
    %57 = arith.mulf %55, %56 : vector<16x16x64xf32>
    %58 = arith.addf %49, %57 : vector<16x16x64xf32>
    %c0_44 = arith.constant 0 : index
    %c2_45 = arith.constant 2 : index
    %c0_46 = arith.constant 0 : index
    %c0_47 = arith.constant 0 : index
    %59 = vector.load %arg1[%c0_44, %c2_45, %c0_46, %c0_47] : memref<1x18x18x1xf32, #tpu.memory_space<vmem>>, vector<1x16x16x1xf32>
    %60 = vector.shape_cast %59 : vector<1x16x16x1xf32> to vector<16x16x1xf32>
    %c6 = arith.constant 6 : index
    %c0_48 = arith.constant 0 : index
    %c0_49 = arith.constant 0 : index
    %61 = vector.load %arg2[%c6, %c0_48, %c0_49] : memref<9x1x64xf32, #tpu.memory_space<vmem>>, vector<1x1x64xf32>
    %62 = vector.shape_cast %61 : vector<1x1x64xf32> to vector<1x64xf32>
    %63 = vector.shape_cast %62 : vector<1x64xf32> to vector<1x1x64xf32>
    %64 = vector.broadcast %60 : vector<16x16x1xf32> to vector<16x16x64xf32>
    %65 = vector.broadcast %63 : vector<1x1x64xf32> to vector<16x16x64xf32>
    %66 = arith.mulf %64, %65 : vector<16x16x64xf32>
    %67 = arith.addf %58, %66 : vector<16x16x64xf32>
    %c0_50 = arith.constant 0 : index
    %c2_51 = arith.constant 2 : index
    %c1_52 = arith.constant 1 : index
    %c0_53 = arith.constant 0 : index
    %68 = vector.load %arg1[%c0_50, %c2_51, %c1_52, %c0_53] : memref<1x18x18x1xf32, #tpu.memory_space<vmem>>, vector<1x16x16x1xf32>
    %69 = vector.shape_cast %68 : vector<1x16x16x1xf32> to vector<16x16x1xf32>
    %c7 = arith.constant 7 : index
    %c0_54 = arith.constant 0 : index
    %c0_55 = arith.constant 0 : index
    %70 = vector.load %arg2[%c7, %c0_54, %c0_55] : memref<9x1x64xf32, #tpu.memory_space<vmem>>, vector<1x1x64xf32>
    %71 = vector.shape_cast %70 : vector<1x1x64xf32> to vector<1x64xf32>
    %72 = vector.shape_cast %71 : vector<1x64xf32> to vector<1x1x64xf32>
    %73 = vector.broadcast %69 : vector<16x16x1xf32> to vector<16x16x64xf32>
    %74 = vector.broadcast %72 : vector<1x1x64xf32> to vector<16x16x64xf32>
    %75 = arith.mulf %73, %74 : vector<16x16x64xf32>
    %76 = arith.addf %67, %75 : vector<16x16x64xf32>
    %c0_56 = arith.constant 0 : index
    %c2_57 = arith.constant 2 : index
    %c2_58 = arith.constant 2 : index
    %c0_59 = arith.constant 0 : index
    %77 = vector.load %arg1[%c0_56, %c2_57, %c2_58, %c0_59] : memref<1x18x18x1xf32, #tpu.memory_space<vmem>>, vector<1x16x16x1xf32>
    %78 = vector.shape_cast %77 : vector<1x16x16x1xf32> to vector<16x16x1xf32>
    %c8 = arith.constant 8 : index
    %c0_60 = arith.constant 0 : index
    %c0_61 = arith.constant 0 : index
    %79 = vector.load %arg2[%c8, %c0_60, %c0_61] : memref<9x1x64xf32, #tpu.memory_space<vmem>>, vector<1x1x64xf32>
    %80 = vector.shape_cast %79 : vector<1x1x64xf32> to vector<1x64xf32>
    %81 = vector.shape_cast %80 : vector<1x64xf32> to vector<1x1x64xf32>
    %82 = vector.broadcast %78 : vector<16x16x1xf32> to vector<16x16x64xf32>
    %83 = vector.broadcast %81 : vector<1x1x64xf32> to vector<16x16x64xf32>
    %84 = arith.mulf %82, %83 : vector<16x16x64xf32>
    %85 = arith.addf %76, %84 : vector<16x16x64xf32>
    %cst_62 = arith.constant 0.000000e+00 : f32
    %86 = vector.broadcast %cst_62 : f32 to vector<16x16x64xf32>
    %87 = arith.maximumf %85, %86 : vector<16x16x64xf32>
    %c1_63 = arith.constant 1 : index
    %c1_64 = arith.constant 1 : index
    %c0_65 = arith.constant 0 : index
    %88 = vector.load %arg6[%c1_63, %c1_64, %c0_65] : memref<18x18x64xf32, #tpu.memory_space<vmem>>, vector<16x16x64xf32>
    tpu.vector_store %arg6[%c1_63, %c1_64, %c0_65], %87 {strides = array<i32>} : memref<18x18x64xf32, #tpu.memory_space<vmem>>, vector<16x16x64xf32>,
    %c0_i32 = arith.constant 0 : i32
    %c9_i32 = arith.constant 9 : i32
    %89 = arith.addi %c0_i32, %c9_i32 : i32
    %c1_i32 = arith.constant 1 : i32
    scf.for %arg8 = %c0_i32 to %89 step %c1_i32  : i32 {
      %c2_i32 = arith.constant 2 : i32
      %162 = arith.muli %c2_i32, %arg8 : i32
      %cst_131 = arith.constant 0.000000e+00 : f32
      %163 = vector.broadcast %cst_131 : f32 to vector<256x64xf32>
      %c0_132 = arith.constant 0 : index
      %c0_133 = arith.constant 0 : index
      %c0_134 = arith.constant 0 : index
      %164 = vector.load %arg6[%c0_132, %c0_133, %c0_134] : memref<18x18x64xf32, #tpu.memory_space<vmem>>, vector<16x16x64xf32>
      %165 = vector.shape_cast %164 : vector<16x16x64xf32> to vector<256x64xf32>
      %c0_135 = arith.constant 0 : index
      %c1_136 = arith.constant 1 : index
      %c0_137 = arith.constant 0 : index
      %166 = vector.load %arg6[%c0_135, %c1_136, %c0_137] : memref<18x18x64xf32, #tpu.memory_space<vmem>>, vector<16x16x64xf32>
      %167 = vector.shape_cast %166 : vector<16x16x64xf32> to vector<256x64xf32>
      %c0_138 = arith.constant 0 : index
      %c2_139 = arith.constant 2 : index
      %c0_140 = arith.constant 0 : index
      %168 = vector.load %arg6[%c0_138, %c2_139, %c0_140] : memref<18x18x64xf32, #tpu.memory_space<vmem>>, vector<16x16x64xf32>
      %169 = vector.shape_cast %168 : vector<16x16x64xf32> to vector<256x64xf32>
      %170 = tpu.concatenate %165, %167, %169 in 1 : vector<256x64xf32>, vector<256x64xf32>, vector<256x64xf32> -> vector<256x192xf32>
      %c3_i32 = arith.constant 3 : i32
      %171 = arith.muli %162, %c3_i32 : i32
      %c0_i32_141 = arith.constant 0 : i32
      %172 = arith.addi %171, %c0_i32_141 : i32
      %173 = arith.index_cast %172 : i32 to index
      %c0_142 = arith.constant 0 : index
      %c0_143 = arith.constant 0 : index
      %174 = vector.load %arg3[%173, %c0_142, %c0_143] : memref<54x192x64xf32, #tpu.memory_space<vmem>>, vector<1x192x64xf32>
      %175 = vector.shape_cast %174 : vector<1x192x64xf32> to vector<192x64xf32>
      %cst_144 = arith.constant dense<0.000000e+00> : vector<256x64xf32>
      %176 = tpu.matmul %170, %175, %cst_144 {dimension_numbers = #tpu.dot_dimension_numbers<[1], [0], [0], [1], [0, 0, 1, 1], [], []>} : vector<256x192xf32>, vector<192x64xf32>, vector<256x64xf32> -> vector<256x64xf32>
      %177 = arith.addf %163, %176 : vector<256x64xf32>
      %c1_145 = arith.constant 1 : index
      %c0_146 = arith.constant 0 : index
      %c0_147 = arith.constant 0 : index
      %178 = vector.load %arg6[%c1_145, %c0_146, %c0_147] : memref<18x18x64xf32, #tpu.memory_space<vmem>>, vector<16x16x64xf32>
      %179 = vector.shape_cast %178 : vector<16x16x64xf32> to vector<256x64xf32>
      %c1_148 = arith.constant 1 : index
      %c1_149 = arith.constant 1 : index
      %c0_150 = arith.constant 0 : index
      %180 = vector.load %arg6[%c1_148, %c1_149, %c0_150] : memref<18x18x64xf32, #tpu.memory_space<vmem>>, vector<16x16x64xf32>
      %181 = vector.shape_cast %180 : vector<16x16x64xf32> to vector<256x64xf32>
      %c1_151 = arith.constant 1 : index
      %c2_152 = arith.constant 2 : index
      %c0_153 = arith.constant 0 : index
      %182 = vector.load %arg6[%c1_151, %c2_152, %c0_153] : memref<18x18x64xf32, #tpu.memory_space<vmem>>, vector<16x16x64xf32>
      %183 = vector.shape_cast %182 : vector<16x16x64xf32> to vector<256x64xf32>
      %184 = tpu.concatenate %179, %181, %183 in 1 : vector<256x64xf32>, vector<256x64xf32>, vector<256x64xf32> -> vector<256x192xf32>
      %c3_i32_154 = arith.constant 3 : i32
      %185 = arith.muli %162, %c3_i32_154 : i32
      %c1_i32_155 = arith.constant 1 : i32
      %186 = arith.addi %185, %c1_i32_155 : i32
      %187 = arith.index_cast %186 : i32 to index
      %c0_156 = arith.constant 0 : index
      %c0_157 = arith.constant 0 : index
      %188 = vector.load %arg3[%187, %c0_156, %c0_157] : memref<54x192x64xf32, #tpu.memory_space<vmem>>, vector<1x192x64xf32>
      %189 = vector.shape_cast %188 : vector<1x192x64xf32> to vector<192x64xf32>
      %cst_158 = arith.constant dense<0.000000e+00> : vector<256x64xf32>
      %190 = tpu.matmul %184, %189, %cst_158 {dimension_numbers = #tpu.dot_dimension_numbers<[1], [0], [0], [1], [0, 0, 1, 1], [], []>} : vector<256x192xf32>, vector<192x64xf32>, vector<256x64xf32> -> vector<256x64xf32>
      %191 = arith.addf %177, %190 : vector<256x64xf32>
      %c2_159 = arith.constant 2 : index
      %c0_160 = arith.constant 0 : index
      %c0_161 = arith.constant 0 : index
      %192 = vector.load %arg6[%c2_159, %c0_160, %c0_161] : memref<18x18x64xf32, #tpu.memory_space<vmem>>, vector<16x16x64xf32>
      %193 = vector.shape_cast %192 : vector<16x16x64xf32> to vector<256x64xf32>
      %c2_162 = arith.constant 2 : index
      %c1_163 = arith.constant 1 : index
      %c0_164 = arith.constant 0 : index
      %194 = vector.load %arg6[%c2_162, %c1_163, %c0_164] : memref<18x18x64xf32, #tpu.memory_space<vmem>>, vector<16x16x64xf32>
      %195 = vector.shape_cast %194 : vector<16x16x64xf32> to vector<256x64xf32>
      %c2_165 = arith.constant 2 : index
      %c2_166 = arith.constant 2 : index
      %c0_167 = arith.constant 0 : index
      %196 = vector.load %arg6[%c2_165, %c2_166, %c0_167] : memref<18x18x64xf32, #tpu.memory_space<vmem>>, vector<16x16x64xf32>
      %197 = vector.shape_cast %196 : vector<16x16x64xf32> to vector<256x64xf32>
      %198 = tpu.concatenate %193, %195, %197 in 1 : vector<256x64xf32>, vector<256x64xf32>, vector<256x64xf32> -> vector<256x192xf32>
      %c3_i32_168 = arith.constant 3 : i32
      %199 = arith.muli %162, %c3_i32_168 : i32
      %c2_i32_169 = arith.constant 2 : i32
      %200 = arith.addi %199, %c2_i32_169 : i32
      %201 = arith.index_cast %200 : i32 to index
      %c0_170 = arith.constant 0 : index
      %c0_171 = arith.constant 0 : index
      %202 = vector.load %arg3[%201, %c0_170, %c0_171] : memref<54x192x64xf32, #tpu.memory_space<vmem>>, vector<1x192x64xf32>
      %203 = vector.shape_cast %202 : vector<1x192x64xf32> to vector<192x64xf32>
      %cst_172 = arith.constant dense<0.000000e+00> : vector<256x64xf32>
      %204 = tpu.matmul %198, %203, %cst_172 {dimension_numbers = #tpu.dot_dimension_numbers<[1], [0], [0], [1], [0, 0, 1, 1], [], []>} : vector<256x192xf32>, vector<192x64xf32>, vector<256x64xf32> -> vector<256x64xf32>
      %205 = arith.addf %191, %204 : vector<256x64xf32>
      %cst_173 = arith.constant 0.000000e+00 : f32
      %206 = vector.broadcast %cst_173 : f32 to vector<256x64xf32>
      %207 = arith.maximumf %205, %206 : vector<256x64xf32>
      %208 = vector.shape_cast %207 : vector<256x64xf32> to vector<16x16x64xf32>
      %c1_174 = arith.constant 1 : index
      %c1_175 = arith.constant 1 : index
      %c0_176 = arith.constant 0 : index
      %209 = vector.load %arg7[%c1_174, %c1_175, %c0_176] : memref<18x18x64xf32, #tpu.memory_space<vmem>>, vector<16x16x64xf32>
      tpu.vector_store %arg7[%c1_174, %c1_175, %c0_176], %208 {strides = array<i32>} : memref<18x18x64xf32, #tpu.memory_space<vmem>>, vector<16x16x64xf32>,
      %c2_i32_177 = arith.constant 2 : i32
      %210 = arith.muli %c2_i32_177, %arg8 : i32
      %c1_i32_178 = arith.constant 1 : i32
      %211 = arith.addi %210, %c1_i32_178 : i32
      %cst_179 = arith.constant 0.000000e+00 : f32
      %212 = vector.broadcast %cst_179 : f32 to vector<256x64xf32>
      %c0_180 = arith.constant 0 : index
      %c0_181 = arith.constant 0 : index
      %c0_182 = arith.constant 0 : index
      %213 = vector.load %arg7[%c0_180, %c0_181, %c0_182] : memref<18x18x64xf32, #tpu.memory_space<vmem>>, vector<16x16x64xf32>
      %214 = vector.shape_cast %213 : vector<16x16x64xf32> to vector<256x64xf32>
      %c0_183 = arith.constant 0 : index
      %c1_184 = arith.constant 1 : index
      %c0_185 = arith.constant 0 : index
      %215 = vector.load %arg7[%c0_183, %c1_184, %c0_185] : memref<18x18x64xf32, #tpu.memory_space<vmem>>, vector<16x16x64xf32>
      %216 = vector.shape_cast %215 : vector<16x16x64xf32> to vector<256x64xf32>
      %c0_186 = arith.constant 0 : index
      %c2_187 = arith.constant 2 : index
      %c0_188 = arith.constant 0 : index
      %217 = vector.load %arg7[%c0_186, %c2_187, %c0_188] : memref<18x18x64xf32, #tpu.memory_space<vmem>>, vector<16x16x64xf32>
      %218 = vector.shape_cast %217 : vector<16x16x64xf32> to vector<256x64xf32>
      %219 = tpu.concatenate %214, %216, %218 in 1 : vector<256x64xf32>, vector<256x64xf32>, vector<256x64xf32> -> vector<256x192xf32>
      %c3_i32_189 = arith.constant 3 : i32
      %220 = arith.muli %211, %c3_i32_189 : i32
      %c0_i32_190 = arith.constant 0 : i32
      %221 = arith.addi %220, %c0_i32_190 : i32
      %222 = arith.index_cast %221 : i32 to index
      %c0_191 = arith.constant 0 : index
      %c0_192 = arith.constant 0 : index
      %223 = vector.load %arg3[%222, %c0_191, %c0_192] : memref<54x192x64xf32, #tpu.memory_space<vmem>>, vector<1x192x64xf32>
      %224 = vector.shape_cast %223 : vector<1x192x64xf32> to vector<192x64xf32>
      %cst_193 = arith.constant dense<0.000000e+00> : vector<256x64xf32>
      %225 = tpu.matmul %219, %224, %cst_193 {dimension_numbers = #tpu.dot_dimension_numbers<[1], [0], [0], [1], [0, 0, 1, 1], [], []>} : vector<256x192xf32>, vector<192x64xf32>, vector<256x64xf32> -> vector<256x64xf32>
      %226 = arith.addf %212, %225 : vector<256x64xf32>
      %c1_194 = arith.constant 1 : index
      %c0_195 = arith.constant 0 : index
      %c0_196 = arith.constant 0 : index
      %227 = vector.load %arg7[%c1_194, %c0_195, %c0_196] : memref<18x18x64xf32, #tpu.memory_space<vmem>>, vector<16x16x64xf32>
      %228 = vector.shape_cast %227 : vector<16x16x64xf32> to vector<256x64xf32>
      %c1_197 = arith.constant 1 : index
      %c1_198 = arith.constant 1 : index
      %c0_199 = arith.constant 0 : index
      %229 = vector.load %arg7[%c1_197, %c1_198, %c0_199] : memref<18x18x64xf32, #tpu.memory_space<vmem>>, vector<16x16x64xf32>
      %230 = vector.shape_cast %229 : vector<16x16x64xf32> to vector<256x64xf32>
      %c1_200 = arith.constant 1 : index
      %c2_201 = arith.constant 2 : index
      %c0_202 = arith.constant 0 : index
      %231 = vector.load %arg7[%c1_200, %c2_201, %c0_202] : memref<18x18x64xf32, #tpu.memory_space<vmem>>, vector<16x16x64xf32>
      %232 = vector.shape_cast %231 : vector<16x16x64xf32> to vector<256x64xf32>
      %233 = tpu.concatenate %228, %230, %232 in 1 : vector<256x64xf32>, vector<256x64xf32>, vector<256x64xf32> -> vector<256x192xf32>
      %c3_i32_203 = arith.constant 3 : i32
      %234 = arith.muli %211, %c3_i32_203 : i32
      %c1_i32_204 = arith.constant 1 : i32
      %235 = arith.addi %234, %c1_i32_204 : i32
      %236 = arith.index_cast %235 : i32 to index
      %c0_205 = arith.constant 0 : index
      %c0_206 = arith.constant 0 : index
      %237 = vector.load %arg3[%236, %c0_205, %c0_206] : memref<54x192x64xf32, #tpu.memory_space<vmem>>, vector<1x192x64xf32>
      %238 = vector.shape_cast %237 : vector<1x192x64xf32> to vector<192x64xf32>
      %cst_207 = arith.constant dense<0.000000e+00> : vector<256x64xf32>
      %239 = tpu.matmul %233, %238, %cst_207 {dimension_numbers = #tpu.dot_dimension_numbers<[1], [0], [0], [1], [0, 0, 1, 1], [], []>} : vector<256x192xf32>, vector<192x64xf32>, vector<256x64xf32> -> vector<256x64xf32>
      %240 = arith.addf %226, %239 : vector<256x64xf32>
      %c2_208 = arith.constant 2 : index
      %c0_209 = arith.constant 0 : index
      %c0_210 = arith.constant 0 : index
      %241 = vector.load %arg7[%c2_208, %c0_209, %c0_210] : memref<18x18x64xf32, #tpu.memory_space<vmem>>, vector<16x16x64xf32>
      %242 = vector.shape_cast %241 : vector<16x16x64xf32> to vector<256x64xf32>
      %c2_211 = arith.constant 2 : index
      %c1_212 = arith.constant 1 : index
      %c0_213 = arith.constant 0 : index
      %243 = vector.load %arg7[%c2_211, %c1_212, %c0_213] : memref<18x18x64xf32, #tpu.memory_space<vmem>>, vector<16x16x64xf32>
      %244 = vector.shape_cast %243 : vector<16x16x64xf32> to vector<256x64xf32>
      %c2_214 = arith.constant 2 : index
      %c2_215 = arith.constant 2 : index
      %c0_216 = arith.constant 0 : index
      %245 = vector.load %arg7[%c2_214, %c2_215, %c0_216] : memref<18x18x64xf32, #tpu.memory_space<vmem>>, vector<16x16x64xf32>
      %246 = vector.shape_cast %245 : vector<16x16x64xf32> to vector<256x64xf32>
      %247 = tpu.concatenate %242, %244, %246 in 1 : vector<256x64xf32>, vector<256x64xf32>, vector<256x64xf32> -> vector<256x192xf32>
      %c3_i32_217 = arith.constant 3 : i32
      %248 = arith.muli %211, %c3_i32_217 : i32
      %c2_i32_218 = arith.constant 2 : i32
      %249 = arith.addi %248, %c2_i32_218 : i32
      %250 = arith.index_cast %249 : i32 to index
      %c0_219 = arith.constant 0 : index
      %c0_220 = arith.constant 0 : index
      %251 = vector.load %arg3[%250, %c0_219, %c0_220] : memref<54x192x64xf32, #tpu.memory_space<vmem>>, vector<1x192x64xf32>
      %252 = vector.shape_cast %251 : vector<1x192x64xf32> to vector<192x64xf32>
      %cst_221 = arith.constant dense<0.000000e+00> : vector<256x64xf32>
      %253 = tpu.matmul %247, %252, %cst_221 {dimension_numbers = #tpu.dot_dimension_numbers<[1], [0], [0], [1], [0, 0, 1, 1], [], []>} : vector<256x192xf32>, vector<192x64xf32>, vector<256x64xf32> -> vector<256x64xf32>
      %254 = arith.addf %240, %253 : vector<256x64xf32>
      %cst_222 = arith.constant 0.000000e+00 : f32
      %255 = vector.broadcast %cst_222 : f32 to vector<256x64xf32>
      %256 = arith.maximumf %254, %255 : vector<256x64xf32>
      %257 = vector.shape_cast %256 : vector<256x64xf32> to vector<16x16x64xf32>
      %c1_223 = arith.constant 1 : index
      %c1_224 = arith.constant 1 : index
      %c0_225 = arith.constant 0 : index
      %258 = vector.load %arg6[%c1_223, %c1_224, %c0_225] : memref<18x18x64xf32, #tpu.memory_space<vmem>>, vector<16x16x64xf32>
      tpu.vector_store %arg6[%c1_223, %c1_224, %c0_225], %257 {strides = array<i32>} : memref<18x18x64xf32, #tpu.memory_space<vmem>>, vector<16x16x64xf32>,
    }
    %c9_i32_66 = arith.constant 9 : i32
    %cst_67 = arith.constant 0.000000e+00 : f32
    %90 = vector.broadcast %cst_67 : f32 to vector<16x16x64xf32>
    %c0_68 = arith.constant 0 : index
    %c0_69 = arith.constant 0 : index
    %c0_70 = arith.constant 0 : index
    %91 = vector.load %arg6[%c0_68, %c0_69, %c0_70] : memref<18x18x64xf32, #tpu.memory_space<vmem>>, vector<16x16x64xf32>
    %c0_71 = arith.constant 0 : index
    %c0_72 = arith.constant 0 : index
    %c0_73 = arith.constant 0 : index
    %92 = vector.load %arg4[%c0_71, %c0_72, %c0_73] : memref<9x1x64xf32, #tpu.memory_space<vmem>>, vector<1x1x64xf32>
    %93 = vector.shape_cast %92 : vector<1x1x64xf32> to vector<1x64xf32>
    %94 = vector.shape_cast %93 : vector<1x64xf32> to vector<1x1x64xf32>
    %95 = vector.broadcast %94 : vector<1x1x64xf32> to vector<16x16x64xf32>
    %96 = arith.mulf %91, %95 : vector<16x16x64xf32>
    %97 = arith.addf %90, %96 : vector<16x16x64xf32>
    %c0_74 = arith.constant 0 : index
    %c1_75 = arith.constant 1 : index
    %c0_76 = arith.constant 0 : index
    %98 = vector.load %arg6[%c0_74, %c1_75, %c0_76] : memref<18x18x64xf32, #tpu.memory_space<vmem>>, vector<16x16x64xf32>
    %c1_77 = arith.constant 1 : index
    %c0_78 = arith.constant 0 : index
    %c0_79 = arith.constant 0 : index
    %99 = vector.load %arg4[%c1_77, %c0_78, %c0_79] : memref<9x1x64xf32, #tpu.memory_space<vmem>>, vector<1x1x64xf32>
    %100 = vector.shape_cast %99 : vector<1x1x64xf32> to vector<1x64xf32>
    %101 = vector.shape_cast %100 : vector<1x64xf32> to vector<1x1x64xf32>
    %102 = vector.broadcast %101 : vector<1x1x64xf32> to vector<16x16x64xf32>
    %103 = arith.mulf %98, %102 : vector<16x16x64xf32>
    %104 = arith.addf %97, %103 : vector<16x16x64xf32>
    %c0_80 = arith.constant 0 : index
    %c2_81 = arith.constant 2 : index
    %c0_82 = arith.constant 0 : index
    %105 = vector.load %arg6[%c0_80, %c2_81, %c0_82] : memref<18x18x64xf32, #tpu.memory_space<vmem>>, vector<16x16x64xf32>
    %c2_83 = arith.constant 2 : index
    %c0_84 = arith.constant 0 : index
    %c0_85 = arith.constant 0 : index
    %106 = vector.load %arg4[%c2_83, %c0_84, %c0_85] : memref<9x1x64xf32, #tpu.memory_space<vmem>>, vector<1x1x64xf32>
    %107 = vector.shape_cast %106 : vector<1x1x64xf32> to vector<1x64xf32>
    %108 = vector.shape_cast %107 : vector<1x64xf32> to vector<1x1x64xf32>
    %109 = vector.broadcast %108 : vector<1x1x64xf32> to vector<16x16x64xf32>
    %110 = arith.mulf %105, %109 : vector<16x16x64xf32>
    %111 = arith.addf %104, %110 : vector<16x16x64xf32>
    %c1_86 = arith.constant 1 : index
    %c0_87 = arith.constant 0 : index
    %c0_88 = arith.constant 0 : index
    %112 = vector.load %arg6[%c1_86, %c0_87, %c0_88] : memref<18x18x64xf32, #tpu.memory_space<vmem>>, vector<16x16x64xf32>
    %c3_89 = arith.constant 3 : index
    %c0_90 = arith.constant 0 : index
    %c0_91 = arith.constant 0 : index
    %113 = vector.load %arg4[%c3_89, %c0_90, %c0_91] : memref<9x1x64xf32, #tpu.memory_space<vmem>>, vector<1x1x64xf32>
    %114 = vector.shape_cast %113 : vector<1x1x64xf32> to vector<1x64xf32>
    %115 = vector.shape_cast %114 : vector<1x64xf32> to vector<1x1x64xf32>
    %116 = vector.broadcast %115 : vector<1x1x64xf32> to vector<16x16x64xf32>
    %117 = arith.mulf %112, %116 : vector<16x16x64xf32>
    %118 = arith.addf %111, %117 : vector<16x16x64xf32>
    %c1_92 = arith.constant 1 : index
    %c1_93 = arith.constant 1 : index
    %c0_94 = arith.constant 0 : index
    %119 = vector.load %arg6[%c1_92, %c1_93, %c0_94] : memref<18x18x64xf32, #tpu.memory_space<vmem>>, vector<16x16x64xf32>
    %c4_95 = arith.constant 4 : index
    %c0_96 = arith.constant 0 : index
    %c0_97 = arith.constant 0 : index
    %120 = vector.load %arg4[%c4_95, %c0_96, %c0_97] : memref<9x1x64xf32, #tpu.memory_space<vmem>>, vector<1x1x64xf32>
    %121 = vector.shape_cast %120 : vector<1x1x64xf32> to vector<1x64xf32>
    %122 = vector.shape_cast %121 : vector<1x64xf32> to vector<1x1x64xf32>
    %123 = vector.broadcast %122 : vector<1x1x64xf32> to vector<16x16x64xf32>
    %124 = arith.mulf %119, %123 : vector<16x16x64xf32>
    %125 = arith.addf %118, %124 : vector<16x16x64xf32>
    %c1_98 = arith.constant 1 : index
    %c2_99 = arith.constant 2 : index
    %c0_100 = arith.constant 0 : index
    %126 = vector.load %arg6[%c1_98, %c2_99, %c0_100] : memref<18x18x64xf32, #tpu.memory_space<vmem>>, vector<16x16x64xf32>
    %c5_101 = arith.constant 5 : index
    %c0_102 = arith.constant 0 : index
    %c0_103 = arith.constant 0 : index
    %127 = vector.load %arg4[%c5_101, %c0_102, %c0_103] : memref<9x1x64xf32, #tpu.memory_space<vmem>>, vector<1x1x64xf32>
    %128 = vector.shape_cast %127 : vector<1x1x64xf32> to vector<1x64xf32>
    %129 = vector.shape_cast %128 : vector<1x64xf32> to vector<1x1x64xf32>
    %130 = vector.broadcast %129 : vector<1x1x64xf32> to vector<16x16x64xf32>
    %131 = arith.mulf %126, %130 : vector<16x16x64xf32>
    %132 = arith.addf %125, %131 : vector<16x16x64xf32>
    %c2_104 = arith.constant 2 : index
    %c0_105 = arith.constant 0 : index
    %c0_106 = arith.constant 0 : index
    %133 = vector.load %arg6[%c2_104, %c0_105, %c0_106] : memref<18x18x64xf32, #tpu.memory_space<vmem>>, vector<16x16x64xf32>
    %c6_107 = arith.constant 6 : index
    %c0_108 = arith.constant 0 : index
    %c0_109 = arith.constant 0 : index
    %134 = vector.load %arg4[%c6_107, %c0_108, %c0_109] : memref<9x1x64xf32, #tpu.memory_space<vmem>>, vector<1x1x64xf32>
    %135 = vector.shape_cast %134 : vector<1x1x64xf32> to vector<1x64xf32>
    %136 = vector.shape_cast %135 : vector<1x64xf32> to vector<1x1x64xf32>
    %137 = vector.broadcast %136 : vector<1x1x64xf32> to vector<16x16x64xf32>
    %138 = arith.mulf %133, %137 : vector<16x16x64xf32>
    %139 = arith.addf %132, %138 : vector<16x16x64xf32>
    %c2_110 = arith.constant 2 : index
    %c1_111 = arith.constant 1 : index
    %c0_112 = arith.constant 0 : index
    %140 = vector.load %arg6[%c2_110, %c1_111, %c0_112] : memref<18x18x64xf32, #tpu.memory_space<vmem>>, vector<16x16x64xf32>
    %c7_113 = arith.constant 7 : index
    %c0_114 = arith.constant 0 : index
    %c0_115 = arith.constant 0 : index
    %141 = vector.load %arg4[%c7_113, %c0_114, %c0_115] : memref<9x1x64xf32, #tpu.memory_space<vmem>>, vector<1x1x64xf32>
    %142 = vector.shape_cast %141 : vector<1x1x64xf32> to vector<1x64xf32>
    %143 = vector.shape_cast %142 : vector<1x64xf32> to vector<1x1x64xf32>
    %144 = vector.broadcast %143 : vector<1x1x64xf32> to vector<16x16x64xf32>
    %145 = arith.mulf %140, %144 : vector<16x16x64xf32>
    %146 = arith.addf %139, %145 : vector<16x16x64xf32>
    %c2_116 = arith.constant 2 : index
    %c2_117 = arith.constant 2 : index
    %c0_118 = arith.constant 0 : index
    %147 = vector.load %arg6[%c2_116, %c2_117, %c0_118] : memref<18x18x64xf32, #tpu.memory_space<vmem>>, vector<16x16x64xf32>
    %c8_119 = arith.constant 8 : index
    %c0_120 = arith.constant 0 : index
    %c0_121 = arith.constant 0 : index
    %148 = vector.load %arg4[%c8_119, %c0_120, %c0_121] : memref<9x1x64xf32, #tpu.memory_space<vmem>>, vector<1x1x64xf32>
    %149 = vector.shape_cast %148 : vector<1x1x64xf32> to vector<1x64xf32>
    %150 = vector.shape_cast %149 : vector<1x64xf32> to vector<1x1x64xf32>
    %151 = vector.broadcast %150 : vector<1x1x64xf32> to vector<16x16x64xf32>
    %152 = arith.mulf %147, %151 : vector<16x16x64xf32>
    %153 = arith.addf %146, %152 : vector<16x16x64xf32>
    %c0_122 = arith.constant 0 : index
    %c1_123 = arith.constant 1 : index
    %c1_124 = arith.constant 1 : index
    %c0_125 = arith.constant 0 : index
    %154 = vector.load %arg1[%c0_122, %c1_123, %c1_124, %c0_125] : memref<1x18x18x1xf32, #tpu.memory_space<vmem>>, vector<1x16x16x1xf32>
    %155 = vector.shape_cast %154 : vector<1x16x16x1xf32> to vector<16x16x1xf32>
    %cst_126 = arith.constant dense<0.000000e+00> : vector<16x16xf32>
    %156 = vector.multi_reduction <add>, %153, %cst_126 [2] : vector<16x16x64xf32> to vector<16x16xf32>
    %157 = vector.shape_cast %156 : vector<16x16xf32> to vector<16x16x1xf32>
    %158 = arith.addf %157, %155 : vector<16x16x1xf32>
    %c0_127 = arith.constant 0 : index
    %c0_128 = arith.constant 0 : index
    %c0_129 = arith.constant 0 : index
    %c0_130 = arith.constant 0 : index
    %159 = vector.load %arg5[%c0_127, %c0_128, %c0_129, %c0_130] : memref<1x16x16x1xf32, #tpu.memory_space<vmem>>, vector<1x16x16x1xf32>
    %160 = vector.shape_cast %159 : vector<1x16x16x1xf32> to vector<16x16x1xf32>
    %161 = vector.shape_cast %158 : vector<16x16x1xf32> to vector<1x16x16x1xf32>
    tpu.vector_store %arg5[%c0_127, %c0_128, %c0_129, %c0_130], %161 {strides = array<i32>} : memref<1x16x16x1xf32, #tpu.memory_space<vmem>>, vector<1x16x16x1xf32>,
    return
  }
  func.func @transform_0(%arg0: i32) -> (i32, i32, i32, i32) {
    %c0_i32 = arith.constant 0 : i32
    %c0_i32_0 = arith.constant 0 : i32
    %c0_i32_1 = arith.constant 0 : i32
    %c0_i32_2 = arith.constant 0 : i32
    return %arg0, %c0_i32, %c0_i32_0, %c0_i32_1 : i32, i32, i32, i32
  }
  func.func @transform_1(%arg0: i32) -> (i32, i32, i32) {
    %c0_i32 = arith.constant 0 : i32
    %c0_i32_0 = arith.constant 0 : i32
    %c0_i32_1 = arith.constant 0 : i32
    %c0_i32_2 = arith.constant 0 : i32
    return %c0_i32, %c0_i32_0, %c0_i32_1 : i32, i32, i32
  }
  func.func @transform_2(%arg0: i32) -> (i32, i32, i32) {
    %c0_i32 = arith.constant 0 : i32
    %c0_i32_0 = arith.constant 0 : i32
    %c0_i32_1 = arith.constant 0 : i32
    %c0_i32_2 = arith.constant 0 : i32
    return %c0_i32, %c0_i32_0, %c0_i32_1 : i32, i32, i32
  }
  func.func @transform_3(%arg0: i32) -> (i32, i32, i32) {
    %c0_i32 = arith.constant 0 : i32
    %c0_i32_0 = arith.constant 0 : i32
    %c0_i32_1 = arith.constant 0 : i32
    %c0_i32_2 = arith.constant 0 : i32
    return %c0_i32, %c0_i32_0, %c0_i32_1 : i32, i32, i32
  }
  func.func @transform_4(%arg0: i32) -> (i32, i32, i32, i32) {
    %c0_i32 = arith.constant 0 : i32
    %c0_i32_0 = arith.constant 0 : i32
    %c0_i32_1 = arith.constant 0 : i32
    %c0_i32_2 = arith.constant 0 : i32
    return %arg0, %c0_i32, %c0_i32_0, %c0_i32_1 : i32, i32, i32, i32
  }
}

</mosaic_0001>

<llo_original>
// kernel: vdsr_forward.1
$region0: #{vdsr_forward.1}
  #allocation0 [shape = 'u32[]', space=smem, size = 0x4, offset = 0x4, fixed_abs, tag = 'smem constant byte address 0x4 - core index']
  #allocation1 [shape = 'u32[72,128]{1,0:T(1,128)}', space=vmem, size = 0x9000, scoped, tag = 'internal scratch']
  #allocation2 [shape = 'f32[18,18,64]{2,1,0:T(8,128)}', space=vmem, size = 0x36000, scoped, tag = 'scratch operand']
  #allocation3 [shape = 'f32[18,18,64]{2,1,0:T(8,128)}', space=vmem, size = 0x36000, scoped, tag = 'scratch operand']
  %s0 = inlined_call_operand.vmem [shape: f32[2,18,18,1], index: 0, kind: input, shape index: {}]
  %s1 = inlined_call_operand.vmem [shape: f32[9,1,64], index: 1, kind: input, shape index: {}]
  %s2 = inlined_call_operand.vmem [shape: f32[54,192,64], index: 2, kind: input, shape index: {}]
  %s3 = inlined_call_operand.vmem [shape: f32[9,1,64], index: 3, kind: input, shape index: {}]
  %s4 = inlined_call_operand.vmem [shape: f32[2,16,16,1], index: 4, kind: output, shape index: {}]
  %s5 = sld [smem:[#allocation0]]
  $region56: #{vdsr_forward.1} parent=0
    _
  %s7 = ssub.s32 1, %s5
  %s8 = scalar_select 0, %s7, %s5
  loop: start=0, step=1, limit=4
  $region2: #{vdsr_forward.1} parent=0 // loop_pre_header
    _
  $region3: #{vdsr_forward.1} parent=0 // loop_header
    %s10 = sphi 0, %s14
    %p11 = scmp.ge.s32.totalorder %s10, 4
    %s20 = sphi 0, %s22
    %s23 = sphi 0, %s20
    %s24 = sphi 0, %s23
    %s40 = sphi 0, %s24
    %s44 = sphi 0, %s44
    %s46 = sphi 0, %s44
    %s47 = sphi 0, %s46
    %s61 = sphi 0, %s47
    %s65 = sphi 0, %s65
    %s67 = sphi 0, %s65
    %s68 = sphi 0, %s67
    %s82 = sphi 0, %s68
    %s86 = sphi 0, %s86
    %s88 = sphi 0, %s86
    %s89 = sphi 0, %s88
    %s103 = sphi 0, %s89
    %s109 = sphi 0, %s111
    %s112 = sphi 0, %s109
    %s113 = sphi 0, %s112
    %s129 = sphi 0, %s113
  $region4: #{vdsr_forward.1} parent=0 // loop_header_branch
    %13 = sbr.rel (%p11) target = $region8
  $region5: #{vdsr_forward.1} parent=0 // loop_body
    %s15 = ssub.s32 %s10, 1
    %s16 = ssub.s32 %s10, 2
    %s17 = sadd.s32 %s10, 1
    %s18 = ssub.s32 %s10, %s17
    %p19 = scmp.eq.s32.totalorder %s18, 0
    %s21 = sadd.s32 %s20, 1
    %s22 = scalar_select %p19, %s20, %s21
    %p25 = pneg %p19
    %p26 = scmp.eq.s32.totalorder %s10, 1
    %p27 = por %p25, %p26
    %p28 = scmp.ne.s32.totalorder %s20, %s23
    %p29 = scmp.eq.s32.totalorder %s10, 0
    %p30 = por %p28, %p29
    %p31 = scmp.ne.s32.totalorder %s20, %s23
    %p32 = scmp.eq.s32.totalorder %s15, 1
    %p33 = por %p31, %p32
    %p34 = scmp.ne.s32.totalorder %s23, %s24
    %p35 = scmp.eq.s32.totalorder %s15, 0
    %p36 = por %p34, %p35
    %p37 = scmp.ne.s32.totalorder %s23, %s24
    %p38 = scmp.eq.s32.totalorder %s16, 1
    %p39 = por %p37, %p38
    %p41 = scmp.ne.s32.totalorder %s24, %s40
    %p42 = scmp.eq.s32.totalorder %s16, 0
    %p43 = por %p41, %p42
    %s45 = sadd.s32 %s44, 1
    %p48 = scmp.eq.s32.totalorder %s10, 1
    %p49 = scmp.ne.s32.totalorder %s44, %s46
    %p50 = scmp.eq.s32.totalorder %s10, 0
    %p51 = por %p49, %p50
    %p52 = scmp.ne.s32.totalorder %s44, %s46
    %p53 = scmp.eq.s32.totalorder %s15, 1
    %p54 = por %p52, %p53
    %p55 = scmp.ne.s32.totalorder %s46, %s47
    %p56 = scmp.eq.s32.totalorder %s15, 0
    %p57 = por %p55, %p56
    %p58 = scmp.ne.s32.totalorder %s46, %s47
    %p59 = scmp.eq.s32.totalorder %s16, 1
    %p60 = por %p58, %p59
    %p62 = scmp.ne.s32.totalorder %s47, %s61
    %p63 = scmp.eq.s32.totalorder %s16, 0
    %p64 = por %p62, %p63
    %s66 = sadd.s32 %s65, 1
    %p69 = scmp.eq.s32.totalorder %s10, 1
    %p70 = scmp.ne.s32.totalorder %s65, %s67
    %p71 = scmp.eq.s32.totalorder %s10, 0
    %p72 = por %p70, %p71
    %p73 = scmp.ne.s32.totalorder %s65, %s67
    %p74 = scmp.eq.s32.totalorder %s15, 1
    %p75 = por %p73, %p74
    %p76 = scmp.ne.s32.totalorder %s67, %s68
    %p77 = scmp.eq.s32.totalorder %s15, 0
    %p78 = por %p76, %p77
    %p79 = scmp.ne.s32.totalorder %s67, %s68
    %p80 = scmp.eq.s32.totalorder %s16, 1
    %p81 = por %p79, %p80
    %p83 = scmp.ne.s32.totalorder %s68, %s82
    %p84 = scmp.eq.s32.totalorder %s16, 0
    %p85 = por %p83, %p84
    %s87 = sadd.s32 %s86, 1
    %p90 = scmp.eq.s32.totalorder %s10, 1
    %p91 = scmp.ne.s32.totalorder %s86, %s88
    %p92 = scmp.eq.s32.totalorder %s10, 0
    %p93 = por %p91, %p92
    %p94 = scmp.ne.s32.totalorder %s86, %s88
    %p95 = scmp.eq.s32.totalorder %s15, 1
    %p96 = por %p94, %p95
    %p97 = scmp.ne.s32.totalorder %s88, %s89
    %p98 = scmp.eq.s32.totalorder %s15, 0
    %p99 = por %p97, %p98
    %p100 = scmp.ne.s32.totalorder %s88, %s89
    %p101 = scmp.eq.s32.totalorder %s16, 1
    %p102 = por %p100, %p101
    %p104 = scmp.ne.s32.totalorder %s89, %s103
    %p105 = scmp.eq.s32.totalorder %s16, 0
    %p106 = por %p104, %p105
    %s107 = ssub.s32 %s10, %s17
    %p108 = scmp.eq.s32.totalorder %s107, 0
    %s110 = sadd.s32 %s109, 1
    %s111 = scalar_select %p108, %s109, %s110
    %p114 = pneg %p108
    %p115 = scmp.eq.s32.totalorder %s10, 1
    %p116 = por %p114, %p115
    %p117 = scmp.ne.s32.totalorder %s109, %s112
    %p118 = scmp.eq.s32.totalorder %s10, 0
    %p119 = por %p117, %p118
    %p120 = scmp.ne.s32.totalorder %s109, %s112
    %p121 = scmp.eq.s32.totalorder %s15, 1
    %p122 = por %p120, %p121
    %p123 = scmp.ne.s32.totalorder %s112, %s113
    %p124 = scmp.eq.s32.totalorder %s15, 0
    %p125 = por %p123, %p124
    %p126 = scmp.ne.s32.totalorder %s112, %s113
    %p127 = scmp.eq.s32.totalorder %s16, 1
    %p128 = por %p126, %p127
    %p130 = scmp.ne.s32.totalorder %s113, %s129
    %p131 = scmp.eq.s32.totalorder %s16, 0
    %p132 = por %p130, %p131
    %p133 = scmp.le.s32.totalorder 1, %s10
    %p134 = scmp.lt.s32.totalorder %s10, 3
    %p135 = pnand %p133, %p134
    %p136 = pneg %p135
    // Predicated region
    $region9: #{vdsr_forward.1} parent=5 // pred_check
      _
    $region10: #{vdsr_forward.1} parent=5 // pred_check_branch
      %138 = sbr.rel (%p135) target = $region12
    $region11: #{vdsr_forward.1} parent=5 // pred_region
      %s139 = ssub.s32 %s10, 1
      // Predicated region
      $region13: #{vdsr_forward.1} parent=11 // pred_check
        %p140 = pneg %p57
      $region14: #{vdsr_forward.1} parent=11 // pred_check_branch
        %142 = sbr.rel (%p140) target = $region16
      $region15: #{vdsr_forward.1} parent=11 // pred_region
        _
      $region16: #{vdsr_forward.1} parent=11 // pred_fallthru
        _
      // Predicated region
      $region17: #{vdsr_forward.1} parent=11 // pred_check
        %p143 = pneg %p78
      $region18: #{vdsr_forward.1} parent=11 // pred_check_branch
        %145 = sbr.rel (%p143) target = $region20
      $region19: #{vdsr_forward.1} parent=11 // pred_region
        _
      $region20: #{vdsr_forward.1} parent=11 // pred_fallthru
        _
      // Predicated region
      $region21: #{vdsr_forward.1} parent=11 // pred_check
        %p146 = pneg %p99
      $region22: #{vdsr_forward.1} parent=11 // pred_check_branch
        %148 = sbr.rel (%p146) target = $region24
      $region23: #{vdsr_forward.1} parent=11 // pred_region
        _
      $region24: #{vdsr_forward.1} parent=11 // pred_fallthru
        _
    $region12: #{vdsr_forward.1} parent=5 // pred_fallthru
      _
    %p149 = scmp.lt.s32.totalorder %s10, 2
    // Predicated region
    $region25: #{vdsr_forward.1} parent=5 // pred_check
      %p150 = pneg %p149
    $region26: #{vdsr_forward.1} parent=5 // pred_check_branch
      %152 = sbr.rel (%p150) target = $region28
    $region27: #{vdsr_forward.1} parent=5 // pred_region
      // Predicated region
      $region29: #{vdsr_forward.1} parent=27 // pred_check
        %p153 = pneg %p30
      $region30: #{vdsr_forward.1} parent=27 // pred_check_branch
        %155 = sbr.rel (%p153) target = $region32
      $region31: #{vdsr_forward.1} parent=27 // pred_region
        %p156 = scmp.lt.s32.totalorder %s10, 1
        %s157 = scalar_select %p156, %s10, 1
        %s158 = smul.addr %s157, 54
        %s159 = smul.addr %s158, 8
        %s160 = scalar_lea.vmem %s0, %s159
      $region32: #{vdsr_forward.1} parent=27 // pred_fallthru
        _
    $region28: #{vdsr_forward.1} parent=5 // pred_fallthru
      _
    %p161 = scmp.le.s32.totalorder 1, %s10
    %p162 = scmp.lt.s32.totalorder %s10, 3
    %p163 = pnand %p161, %p162
    %p164 = pneg %p163
    // Predicated region
    $region33: #{vdsr_forward.1} parent=5 // pred_check
      _
    $region34: #{vdsr_forward.1} parent=5 // pred_check_branch
      %166 = sbr.rel (%p163) target = $region36
    $region35: #{vdsr_forward.1} parent=5 // pred_region
      %s167 = ssub.s32 %s10, 1
      %p168 = scmp.lt.s32.totalorder %s15, 1
      %s169 = scalar_select %p168, %s15, 1
      %s170 = smul.addr %s169, 54
      %s171 = smul.addr %s170, 8
      %s172 = scalar_lea.vmem %s0, %s171
      %p173 = pneg %p36
      %p174 = pneg %p33
      %p175 = pneg %p57
      %p176 = pneg %p54
      %p177 = pneg %p78
      %p178 = pneg %p75
      %p179 = pneg %p99
      %p180 = pneg %p96
      %p181 = pneg %p125
      %p182 = pneg %p122
      %p183 = scmp.lt.s32.totalorder %s15, 1
      %s184 = scalar_select %p183, %s15, 1
      %s185 = smul.addr %s184, 32
      %s186 = smul.addr %s185, 8
      %s187 = scalar_lea.vmem %s4, %s186
      %p188 = scmp.lt.s32.totalorder %s15, 1
      %s189 = scalar_select %p188, %s15, 1
      %s190 = smul.addr %s189, 54
      %s191 = smul.addr %s190, 8
      %s192 = scalar_lea.vmem %s0, %s191
      %p193 = scmp.lt.s32.totalorder %s15, 1
      %s194 = scalar_select %p193, %s15, 1
      %s195 = smul.addr %s194, 32
      %s196 = smul.addr %s195, 8
      %s197 = scalar_lea.vmem %s4, %s196
      %vm198 = vcmask 523264
      %199 = vst.msk [vmem:[#allocation2] sm:$0xff] %vm198, 0.0
      %200 = vst.msk [vmem:[#allocation2 + $0x8] sm:$0xff] %vm198, 0.0
      %vm201 = vcmask 517120
      %202 = vst.msk [vmem:[#allocation2 + $0x10] sm:$0x3] %vm201, 0.0
      %203 = vst.msk [vmem:[#allocation2 + $0x18] sm:$0xff] %vm198, 0.0
      %204 = vst.msk [vmem:[#allocation2 + $0x20] sm:$0xff] %vm198, 0.0
      %205 = vst.msk [vmem:[#allocation2 + $0x28] sm:$0x3] %vm201, 0.0
      %206 = vst.msk [vmem:[#allocation2 + $0x30] sm:$0xff] %vm198, 0.0
      %207 = vst.msk [vmem:[#allocation2 + $0x38] sm:$0xff] %vm198, 0.0
      %208 = vst.msk [vmem:[#allocation2 + $0x40] sm:$0x3] %vm201, 0.0
      %209 = vst.msk [vmem:[#allocation2 + $0x48] sm:$0xff] %vm198, 0.0
      %210 = vst.msk [vmem:[#allocation2 + $0x50] sm:$0xff] %vm198, 0.0
      %211 = vst.msk [vmem:[#allocation2 + $0x58] sm:$0x3] %vm201, 0.0
      %212 = vst.msk [vmem:[#allocation2 + $0x60] sm:$0xff] %vm198, 0.0
      %213 = vst.msk [vmem:[#allocation2 + $0x68] sm:$0xff] %vm198, 0.0
      %214 = vst.msk [vmem:[#allocation2 + $0x70] sm:$0x3] %vm201, 0.0
      %215 = vst.msk [vmem:[#allocation2 + $0x78] sm:$0xff] %vm198, 0.0
      %216 = vst.msk [vmem:[#allocation2 + $0x80] sm:$0xff] %vm198, 0.0
      %217 = vst.msk [vmem:[#allocation2 + $0x88] sm:$0x3] %vm201, 0.0
      %218 = vst.msk [vmem:[#allocation2 + $0x90] sm:$0xff] %vm198, 0.0
      %219 = vst.msk [vmem:[#allocation2 + $0x98] sm:$0xff] %vm198, 0.0
      %220 = vst.msk [vmem:[#allocation2 + $0xa0] sm:$0x3] %vm201, 0.0
      %221 = vst.msk [vmem:[#allocation2 + $0xa8] sm:$0xff] %vm198, 0.0
      %222 = vst.msk [vmem:[#allocation2 + $0xb0] sm:$0xff] %vm198, 0.0
      %223 = vst.msk [vmem:[#allocation2 + $0xb8] sm:$0x3] %vm201, 0.0
      %224 = vst.msk [vmem:[#allocation2 + $0xc0] sm:$0xff] %vm198, 0.0
      %225 = vst.msk [vmem:[#allocation2 + $0xc8] sm:$0xff] %vm198, 0.0
      %226 = vst.msk [vmem:[#allocation2 + $0xd0] sm:$0x3] %vm201, 0.0
      %227 = vst.msk [vmem:[#allocation2 + $0xd8] sm:$0xff] %vm198, 0.0
      %228 = vst.msk [vmem:[#allocation2 + $0xe0] sm:$0xff] %vm198, 0.0
      %229 = vst.msk [vmem:[#allocation2 + $0xe8] sm:$0x3] %vm201, 0.0
      %230 = vst.msk [vmem:[#allocation2 + $0xf0] sm:$0xff] %vm198, 0.0
      %231 = vst.msk [vmem:[#allocation2 + $0xf8] sm:$0xff] %vm198, 0.0
      %232 = vst.msk [vmem:[#allocation2 + $0x100] sm:$0x3] %vm201, 0.0
      %233 = vst.msk [vmem:[#allocation2 + $0x108] sm:$0xff] %vm198, 0.0
      %234 = vst.msk [vmem:[#allocation2 + $0x110] sm:$0xff] %vm198, 0.0
      %235 = vst.msk [vmem:[#allocation2 + $0x118] sm:$0x3] %vm201, 0.0
      %236 = vst.msk [vmem:[#allocation2 + $0x120] sm:$0xff] %vm198, 0.0
      %237 = vst.msk [vmem:[#allocation2 + $0x128] sm:$0xff] %vm198, 0.0
      %238 = vst.msk [vmem:[#allocation2 + $0x130] sm:$0x3] %vm201, 0.0
      %239 = vst.msk [vmem:[#allocation2 + $0x138] sm:$0xff] %vm198, 0.0
      %240 = vst.msk [vmem:[#allocation2 + $0x140] sm:$0xff] %vm198, 0.0
      %241 = vst.msk [vmem:[#allocation2 + $0x148] sm:$0x3] %vm201, 0.0
      %242 = vst.msk [vmem:[#allocation2 + $0x150] sm:$0xff] %vm198, 0.0
      %243 = vst.msk [vmem:[#allocation2 + $0x158] sm:$0xff] %vm198, 0.0
      %244 = vst.msk [vmem:[#allocation2 + $0x160] sm:$0x3] %vm201, 0.0
      %245 = vst.msk [vmem:[#allocation2 + $0x168] sm:$0xff] %vm198, 0.0
      %246 = vst.msk [vmem:[#allocation2 + $0x170] sm:$0xff] %vm198, 0.0
      %247 = vst.msk [vmem:[#allocation2 + $0x178] sm:$0x3] %vm201, 0.0
      %248 = vst.msk [vmem:[#allocation2 + $0x180] sm:$0xff] %vm198, 0.0
      %249 = vst.msk [vmem:[#allocation2 + $0x188] sm:$0xff] %vm198, 0.0
      %250 = vst.msk [vmem:[#allocation2 + $0x190] sm:$0x3] %vm201, 0.0
      %251 = vst.msk [vmem:[#allocation2 + $0x198] sm:$0xff] %vm198, 0.0
      %252 = vst.msk [vmem:[#allocation2 + $0x1a0] sm:$0xff] %vm198, 0.0
      %253 = vst.msk [vmem:[#allocation2 + $0x1a8] sm:$0x3] %vm201, 0.0
      %254 = vst.msk [vmem:[#allocation3] sm:$0xff] %vm198, 0.0
      %255 = vst.msk [vmem:[#allocation3 + $0x8] sm:$0xff] %vm198, 0.0
      %256 = vst.msk [vmem:[#allocation3 + $0x10] sm:$0x3] %vm201, 0.0
      %257 = vst.msk [vmem:[#allocation3 + $0x18] sm:$0xff] %vm198, 0.0
      %258 = vst.msk [vmem:[#allocation3 + $0x20] sm:$0xff] %vm198, 0.0
      %259 = vst.msk [vmem:[#allocation3 + $0x28] sm:$0x3] %vm201, 0.0
      %260 = vst.msk [vmem:[#allocation3 + $0x30] sm:$0xff] %vm198, 0.0
      %261 = vst.msk [vmem:[#allocation3 + $0x38] sm:$0xff] %vm198, 0.0
      %262 = vst.msk [vmem:[#allocation3 + $0x40] sm:$0x3] %vm201, 0.0
      %263 = vst.msk [vmem:[#allocation3 + $0x48] sm:$0xff] %vm198, 0.0
      %264 = vst.msk [vmem:[#allocation3 + $0x50] sm:$0xff] %vm198, 0.0
      %265 = vst.msk [vmem:[#allocation3 + $0x58] sm:$0x3] %vm201, 0.0
      %266 = vst.msk [vmem:[#allocation3 + $0x60] sm:$0xff] %vm198, 0.0
      %267 = vst.msk [vmem:[#allocation3 + $0x68] sm:$0xff] %vm198, 0.0
      %268 = vst.msk [vmem:[#allocation3 + $0x70] sm:$0x3] %vm201, 0.0
      %269 = vst.msk [vmem:[#allocation3 + $0x78] sm:$0xff] %vm198, 0.0
      %270 = vst.msk [vmem:[#allocation3 + $0x80] sm:$0xff] %vm198, 0.0
      %271 = vst.msk [vmem:[#allocation3 + $0x88] sm:$0x3] %vm201, 0.0
      %272 = vst.msk [vmem:[#allocation3 + $0x90] sm:$0xff] %vm198, 0.0
      %273 = vst.msk [vmem:[#allocation3 + $0x98] sm:$0xff] %vm198, 0.0
      %274 = vst.msk [vmem:[#allocation3 + $0xa0] sm:$0x3] %vm201, 0.0
      %275 = vst.msk [vmem:[#allocation3 + $0xa8] sm:$0xff] %vm198, 0.0
      %276 = vst.msk [vmem:[#allocation3 + $0xb0] sm:$0xff] %vm198, 0.0
      %277 = vst.msk [vmem:[#allocation3 + $0xb8] sm:$0x3] %vm201, 0.0
      %278 = vst.msk [vmem:[#allocation3 + $0xc0] sm:$0xff] %vm198, 0.0
      %279 = vst.msk [vmem:[#allocation3 + $0xc8] sm:$0xff] %vm198, 0.0
      %280 = vst.msk [vmem:[#allocation3 + $0xd0] sm:$0x3] %vm201, 0.0
      %281 = vst.msk [vmem:[#allocation3 + $0xd8] sm:$0xff] %vm198, 0.0
      %282 = vst.msk [vmem:[#allocation3 + $0xe0] sm:$0xff] %vm198, 0.0
      %283 = vst.msk [vmem:[#allocation3 + $0xe8] sm:$0x3] %vm201, 0.0
      %284 = vst.msk [vmem:[#allocation3 + $0xf0] sm:$0xff] %vm198, 0.0
      %285 = vst.msk [vmem:[#allocation3 + $0xf8] sm:$0xff] %vm198, 0.0
      %286 = vst.msk [vmem:[#allocation3 + $0x100] sm:$0x3] %vm201, 0.0
      %287 = vst.msk [vmem:[#allocation3 + $0x108] sm:$0xff] %vm198, 0.0
      %288 = vst.msk [vmem:[#allocation3 + $0x110] sm:$0xff] %vm198, 0.0
      %289 = vst.msk [vmem:[#allocation3 + $0x118] sm:$0x3] %vm201, 0.0
      %290 = vst.msk [vmem:[#allocation3 + $0x120] sm:$0xff] %vm198, 0.0
      %291 = vst.msk [vmem:[#allocation3 + $0x128] sm:$0xff] %vm198, 0.0
      %292 = vst.msk [vmem:[#allocation3 + $0x130] sm:$0x3] %vm201, 0.0
      %293 = vst.msk [vmem:[#allocation3 + $0x138] sm:$0xff] %vm198, 0.0
      %294 = vst.msk [vmem:[#allocation3 + $0x140] sm:$0xff] %vm198, 0.0
      %295 = vst.msk [vmem:[#allocation3 + $0x148] sm:$0x3] %vm201, 0.0
      %296 = vst.msk [vmem:[#allocation3 + $0x150] sm:$0xff] %vm198, 0.0
      %297 = vst.msk [vmem:[#allocation3 + $0x158] sm:$0xff] %vm198, 0.0
      %298 = vst.msk [vmem:[#allocation3 + $0x160] sm:$0x3] %vm201, 0.0
      %299 = vst.msk [vmem:[#allocation3 + $0x168] sm:$0xff] %vm198, 0.0
      %300 = vst.msk [vmem:[#allocation3 + $0x170] sm:$0xff] %vm198, 0.0
      %301 = vst.msk [vmem:[#allocation3 + $0x178] sm:$0x3] %vm201, 0.0
      %302 = vst.msk [vmem:[#allocation3 + $0x180] sm:$0xff] %vm198, 0.0
      %303 = vst.msk [vmem:[#allocation3 + $0x188] sm:$0xff] %vm198, 0.0
      %304 = vst.msk [vmem:[#allocation3 + $0x190] sm:$0x3] %vm201, 0.0
      %305 = vst.msk [vmem:[#allocation3 + $0x198] sm:$0xff] %vm198, 0.0
      %306 = vst.msk [vmem:[#allocation3 + $0x1a0] sm:$0xff] %vm198, 0.0
      %307 = vst.msk [vmem:[#allocation3 + $0x1a8] sm:$0x3] %vm201, 0.0
      %v308 = vld [vmem:[%s192] sm:$0xff]
      %v309 = vld [vmem:[%s192 + $0x8] sm:$0xff]
      %v310 = vld [vmem:[%s192 + $0x18] sm:$0xff]
      %v311 = vld [vmem:[%s192 + $0x20] sm:$0xff]
      %v312 = vld [vmem:[%s192 + $0x30] sm:$0xff]
      %v313 = vld [vmem:[%s192 + $0x38] sm:$0xff]
      %v314 = vld [vmem:[%s192 + $0x48] sm:$0xff]
      %v315 = vld [vmem:[%s192 + $0x50] sm:$0xff]
      %v316 = vld [vmem:[%s192 + $0x60] sm:$0xff]
      %v317 = vld [vmem:[%s192 + $0x68] sm:$0xff]
      %v318 = vld [vmem:[%s192 + $0x78] sm:$0xff]
      %v319 = vld [vmem:[%s192 + $0x80] sm:$0xff]
      %v320 = vld [vmem:[%s192 + $0x90] sm:$0xff]
      %v321 = vld [vmem:[%s192 + $0x98] sm:$0xff]
      %v322 = vld [vmem:[%s192 + $0xa8] sm:$0xff]
      %v323 = vld [vmem:[%s192 + $0xb0] sm:$0xff]
      %v324 = vld [vmem:[%s192 + $0xc0] sm:$0xff]
      %v325 = vld [vmem:[%s192 + $0xc8] sm:$0xff]
      %v326 = vld [vmem:[%s192 + $0xd8] sm:$0xff]
      %v327 = vld [vmem:[%s192 + $0xe0] sm:$0xff]
      %v328 = vld [vmem:[%s192 + $0xf0] sm:$0xff]
      %v329 = vld [vmem:[%s192 + $0xf8] sm:$0xff]
      %v330 = vld [vmem:[%s192 + $0x108] sm:$0xff]
      %v331 = vld [vmem:[%s192 + $0x110] sm:$0xff]
      %v332 = vld [vmem:[%s192 + $0x120] sm:$0xff]
      %v333 = vld [vmem:[%s192 + $0x128] sm:$0xff]
      %v334 = vld [vmem:[%s192 + $0x138] sm:$0xff]
      %v335 = vld [vmem:[%s192 + $0x140] sm:$0xff]
      %v336 = vld [vmem:[%s192 + $0x150] sm:$0xff]
      %v337 = vld [vmem:[%s192 + $0x158] sm:$0xff]
      %v338 = vld [vmem:[%s192 + $0x168] sm:$0xff]
      %v339 = vld [vmem:[%s192 + $0x170] sm:$0xff]
      %v340 = vld [vmem:[%s1] sm:$0x1]
      %342 = vset.pattern.permute.xlu0 0
      %343 = vperm.xlu0 %342, %v308
      %v344 = vpop.permute.xlu0 %343
      %347 = vset.pattern.permute.xlu0 0
      %348 = vperm.xlu0 %347, %v309
      %v349 = vpop.permute.xlu0 %348
      %352 = vset.pattern.permute.xlu0 0
      %353 = vperm.xlu0 %352, %v310
      %v354 = vpop.permute.xlu0 %353
      %357 = vset.pattern.permute.xlu0 0
      %358 = vperm.xlu0 %357, %v311
      %v359 = vpop.permute.xlu0 %358
      %362 = vset.pattern.permute.xlu0 0
      %363 = vperm.xlu0 %362, %v312
      %v364 = vpop.permute.xlu0 %363
      %367 = vset.pattern.permute.xlu0 0
      %368 = vperm.xlu0 %367, %v313
      %v369 = vpop.permute.xlu0 %368
      %372 = vset.pattern.permute.xlu0 0
      %373 = vperm.xlu0 %372, %v314
      %v374 = vpop.permute.xlu0 %373
      %377 = vset.pattern.permute.xlu0 0
      %378 = vperm.xlu0 %377, %v315
      %v379 = vpop.permute.xlu0 %378
      %382 = vset.pattern.permute.xlu0 0
      %383 = vperm.xlu0 %382, %v316
      %v384 = vpop.permute.xlu0 %383
      %387 = vset.pattern.permute.xlu0 0
      %388 = vperm.xlu0 %387, %v317
      %v389 = vpop.permute.xlu0 %388
      %392 = vset.pattern.permute.xlu0 0
      %393 = vperm.xlu0 %392, %v318
      %v394 = vpop.permute.xlu0 %393
      %397 = vset.pattern.permute.xlu0 0
      %398 = vperm.xlu0 %397, %v319
      %v399 = vpop.permute.xlu0 %398
      %402 = vset.pattern.permute.xlu0 0
      %403 = vperm.xlu0 %402, %v320
      %v404 = vpop.permute.xlu0 %403
      %407 = vset.pattern.permute.xlu0 0
      %408 = vperm.xlu0 %407, %v321
      %v409 = vpop.permute.xlu0 %408
      %412 = vset.pattern.permute.xlu0 0
      %413 = vperm.xlu0 %412, %v322
      %v414 = vpop.permute.xlu0 %413
      %417 = vset.pattern.permute.xlu0 0
      %418 = vperm.xlu0 %417, %v323
      %v419 = vpop.permute.xlu0 %418
      %422 = vset.pattern.permute.xlu0 0
      %423 = vperm.xlu0 %422, %v324
      %v424 = vpop.permute.xlu0 %423
      %427 = vset.pattern.permute.xlu0 0
      %428 = vperm.xlu0 %427, %v325
      %v429 = vpop.permute.xlu0 %428
      %432 = vset.pattern.permute.xlu0 0
      %433 = vperm.xlu0 %432, %v326
      %v434 = vpop.permute.xlu0 %433
      %437 = vset.pattern.permute.xlu0 0
      %438 = vperm.xlu0 %437, %v327
      %v439 = vpop.permute.xlu0 %438
      %442 = vset.pattern.permute.xlu0 0
      %443 = vperm.xlu0 %442, %v328
      %v444 = vpop.permute.xlu0 %443
      %447 = vset.pattern.permute.xlu0 0
      %448 = vperm.xlu0 %447, %v329
      %v449 = vpop.permute.xlu0 %448
      %452 = vset.pattern.permute.xlu0 0
      %453 = vperm.xlu0 %452, %v330
      %v454 = vpop.permute.xlu0 %453
      %457 = vset.pattern.permute.xlu0 0
      %458 = vperm.xlu0 %457, %v331
      %v459 = vpop.permute.xlu0 %458
      %462 = vset.pattern.permute.xlu0 0
      %463 = vperm.xlu0 %462, %v332
      %v464 = vpop.permute.xlu0 %463
      %467 = vset.pattern.permute.xlu0 0
      %468 = vperm.xlu0 %467, %v333
      %v469 = vpop.permute.xlu0 %468
      %472 = vset.pattern.permute.xlu0 0
      %473 = vperm.xlu0 %472, %v334
      %v474 = vpop.permute.xlu0 %473
      %477 = vset.pattern.permute.xlu0 0
      %478 = vperm.xlu0 %477, %v335
      %v479 = vpop.permute.xlu0 %478
      %482 = vset.pattern.permute.xlu0 0
      %483 = vperm.xlu0 %482, %v336
      %v484 = vpop.permute.xlu0 %483
      %487 = vset.pattern.permute.xlu0 0
      %488 = vperm.xlu0 %487, %v337
      %v489 = vpop.permute.xlu0 %488
      %492 = vset.pattern.permute.xlu0 0
      %493 = vperm.xlu0 %492, %v338
      %v494 = vpop.permute.xlu0 %493
      %497 = vset.pattern.permute.xlu0 0
      %498 = vperm.xlu0 %497, %v339
      %v499 = vpop.permute.xlu0 %498
      %v502 = vperm.slane %v340, 0
      %v504 = vmul.f32 %v344, %v502
      %v505 = vmul.f32 %v349, %v502
      %v506 = vmul.f32 %v354, %v502
      %v507 = vmul.f32 %v359, %v502
      %v508 = vmul.f32 %v364, %v502
      %v509 = vmul.f32 %v369, %v502
      %v510 = vmul.f32 %v374, %v502
      %v511 = vmul.f32 %v379, %v502
      %v512 = vmul.f32 %v384, %v502
      %v513 = vmul.f32 %v389, %v502
      %v514 = vmul.f32 %v394, %v502
      %v515 = vmul.f32 %v399, %v502
      %v516 = vmul.f32 %v404, %v502
      %v517 = vmul.f32 %v409, %v502
      %v518 = vmul.f32 %v414, %v502
      %v519 = vmul.f32 %v419, %v502
      %v520 = vmul.f32 %v424, %v502
      %v521 = vmul.f32 %v429, %v502
      %v522 = vmul.f32 %v434, %v502
      %v523 = vmul.f32 %v439, %v502
      %v524 = vmul.f32 %v444, %v502
      %v525 = vmul.f32 %v449, %v502
      %v526 = vmul.f32 %v454, %v502
      %v527 = vmul.f32 %v459, %v502
      %v528 = vmul.f32 %v464, %v502
      %v529 = vmul.f32 %v469, %v502
      %v530 = vmul.f32 %v474, %v502
      %v531 = vmul.f32 %v479, %v502
      %v532 = vmul.f32 %v484, %v502
      %v533 = vmul.f32 %v489, %v502
      %v534 = vmul.f32 %v494, %v502
      %v535 = vmul.f32 %v499, %v502
      %v536 = vadd.f32 %v504, 0.0
      %v537 = vadd.f32 %v505, 0.0
      %v538 = vadd.f32 %v506, 0.0
      %v539 = vadd.f32 %v507, 0.0
      %v540 = vadd.f32 %v508, 0.0
      %v541 = vadd.f32 %v509, 0.0
      %v542 = vadd.f32 %v510, 0.0
      %v543 = vadd.f32 %v511, 0.0
      %v544 = vadd.f32 %v512, 0.0
      %v545 = vadd.f32 %v513, 0.0
      %v546 = vadd.f32 %v514, 0.0
      %v547 = vadd.f32 %v515, 0.0
      %v548 = vadd.f32 %v516, 0.0
      %v549 = vadd.f32 %v517, 0.0
      %v550 = vadd.f32 %v518, 0.0
      %v551 = vadd.f32 %v519, 0.0
      %v552 = vadd.f32 %v520, 0.0
      %v553 = vadd.f32 %v521, 0.0
      %v554 = vadd.f32 %v522, 0.0
      %v555 = vadd.f32 %v523, 0.0
      %v556 = vadd.f32 %v524, 0.0
      %v557 = vadd.f32 %v525, 0.0
      %v558 = vadd.f32 %v526, 0.0
      %v559 = vadd.f32 %v527, 0.0
      %v560 = vadd.f32 %v528, 0.0
      %v561 = vadd.f32 %v529, 0.0
      %v562 = vadd.f32 %v530, 0.0
      %v563 = vadd.f32 %v531, 0.0
      %v564 = vadd.f32 %v532, 0.0
      %v565 = vadd.f32 %v533, 0.0
      %v566 = vadd.f32 %v534, 0.0
      %v567 = vadd.f32 %v535, 0.0
      %v568 = vld [vmem:[%s192 + $0x1] sm:$0xff]
      %v569 = vld [vmem:[%s192 + $0x9] sm:$0xff]
      %v570 = vld [vmem:[%s192 + $0x19] sm:$0xff]
      %v571 = vld [vmem:[%s192 + $0x21] sm:$0xff]
      %v572 = vld [vmem:[%s192 + $0x31] sm:$0xff]
      %v573 = vld [vmem:[%s192 + $0x39] sm:$0xff]
      %v574 = vld [vmem:[%s192 + $0x49] sm:$0xff]
      %v575 = vld [vmem:[%s192 + $0x51] sm:$0xff]
      %v576 = vld [vmem:[%s192 + $0x61] sm:$0xff]
      %v577 = vld [vmem:[%s192 + $0x69] sm:$0xff]
      %v578 = vld [vmem:[%s192 + $0x79] sm:$0xff]
      %v579 = vld [vmem:[%s192 + $0x81] sm:$0xff]
      %v580 = vld [vmem:[%s192 + $0x91] sm:$0xff]
      %v581 = vld [vmem:[%s192 + $0x99] sm:$0xff]
      %v582 = vld [vmem:[%s192 + $0xa9] sm:$0xff]
      %v583 = vld [vmem:[%s192 + $0xb1] sm:$0xff]
      %v584 = vld [vmem:[%s192 + $0xc1] sm:$0xff]
      %v585 = vld [vmem:[%s192 + $0xc9] sm:$0xff]
      %v586 = vld [vmem:[%s192 + $0xd9] sm:$0xff]
      %v587 = vld [vmem:[%s192 + $0xe1] sm:$0xff]
      %v588 = vld [vmem:[%s192 + $0xf1] sm:$0xff]
      %v589 = vld [vmem:[%s192 + $0xf9] sm:$0xff]
      %v590 = vld [vmem:[%s192 + $0x109] sm:$0xff]
      %v591 = vld [vmem:[%s192 + $0x111] sm:$0xff]
      %v592 = vld [vmem:[%s192 + $0x121] sm:$0xff]
      %v593 = vld [vmem:[%s192 + $0x129] sm:$0xff]
      %v594 = vld [vmem:[%s192 + $0x139] sm:$0xff]
      %v595 = vld [vmem:[%s192 + $0x141] sm:$0xff]
      %v596 = vld [vmem:[%s192 + $0x151] sm:$0xff]
      %v597 = vld [vmem:[%s192 + $0x159] sm:$0xff]
      %v598 = vld [vmem:[%s192 + $0x169] sm:$0xff]
      %v599 = vld [vmem:[%s192 + $0x171] sm:$0xff]
      %s600 = scalar_lea.vmem %s1, 1
      %v601 = vld [vmem:[%s600] sm:$0x1]
      %603 = vset.pattern.permute.xlu0 0
      %604 = vperm.xlu0 %603, %v568
      %v605 = vpop.permute.xlu0 %604
      %608 = vset.pattern.permute.xlu0 0
      %609 = vperm.xlu0 %608, %v569
      %v610 = vpop.permute.xlu0 %609
      %613 = vset.pattern.permute.xlu0 0
      %614 = vperm.xlu0 %613, %v570
      %v615 = vpop.permute.xlu0 %614
      %618 = vset.pattern.permute.xlu0 0
      %619 = vperm.xlu0 %618, %v571
      %v620 = vpop.permute.xlu0 %619
      %623 = vset.pattern.permute.xlu0 0
      %624 = vperm.xlu0 %623, %v572
      %v625 = vpop.permute.xlu0 %624
      %628 = vset.pattern.permute.xlu0 0
      %629 = vperm.xlu0 %628, %v573
      %v630 = vpop.permute.xlu0 %629
      %633 = vset.pattern.permute.xlu0 0
      %634 = vperm.xlu0 %633, %v574
      %v635 = vpop.permute.xlu0 %634
      %638 = vset.pattern.permute.xlu0 0
      %639 = vperm.xlu0 %638, %v575
      %v640 = vpop.permute.xlu0 %639
      %643 = vset.pattern.permute.xlu0 0
      %644 = vperm.xlu0 %643, %v576
      %v645 = vpop.permute.xlu0 %644
      %648 = vset.pattern.permute.xlu0 0
      %649 = vperm.xlu0 %648, %v577
      %v650 = vpop.permute.xlu0 %649
      %653 = vset.pattern.permute.xlu0 0
      %654 = vperm.xlu0 %653, %v578
      %v655 = vpop.permute.xlu0 %654
      %658 = vset.pattern.permute.xlu0 0
      %659 = vperm.xlu0 %658, %v579
      %v660 = vpop.permute.xlu0 %659
      %663 = vset.pattern.permute.xlu0 0
      %664 = vperm.xlu0 %663, %v580
      %v665 = vpop.permute.xlu0 %664
      %668 = vset.pattern.permute.xlu0 0
      %669 = vperm.xlu0 %668, %v581
      %v670 = vpop.permute.xlu0 %669
      %673 = vset.pattern.permute.xlu0 0
      %674 = vperm.xlu0 %673, %v582
      %v675 = vpop.permute.xlu0 %674
      %678 = vset.pattern.permute.xlu0 0
      %679 = vperm.xlu0 %678, %v583
      %v680 = vpop.permute.xlu0 %679
      %683 = vset.pattern.permute.xlu0 0
      %684 = vperm.xlu0 %683, %v584
      %v685 = vpop.permute.xlu0 %684
      %688 = vset.pattern.permute.xlu0 0
      %689 = vperm.xlu0 %688, %v585
      %v690 = vpop.permute.xlu0 %689
      %693 = vset.pattern.permute.xlu0 0
      %694 = vperm.xlu0 %693, %v586
      %v695 = vpop.permute.xlu0 %694
      %698 = vset.pattern.permute.xlu0 0
      %699 = vperm.xlu0 %698, %v587
      %v700 = vpop.permute.xlu0 %699
      %703 = vset.pattern.permute.xlu0 0
      %704 = vperm.xlu0 %703, %v588
      %v705 = vpop.permute.xlu0 %704
      %708 = vset.pattern.permute.xlu0 0
      %709 = vperm.xlu0 %708, %v589
      %v710 = vpop.permute.xlu0 %709
      %713 = vset.pattern.permute.xlu0 0
      %714 = vperm.xlu0 %713, %v590
      %v715 = vpop.permute.xlu0 %714
      %718 = vset.pattern.permute.xlu0 0
      %719 = vperm.xlu0 %718, %v591
      %v720 = vpop.permute.xlu0 %719
      %723 = vset.pattern.permute.xlu0 0
      %724 = vperm.xlu0 %723, %v592
      %v725 = vpop.permute.xlu0 %724
      %728 = vset.pattern.permute.xlu0 0
      %729 = vperm.xlu0 %728, %v593
      %v730 = vpop.permute.xlu0 %729
      %733 = vset.pattern.permute.xlu0 0
      %734 = vperm.xlu0 %733, %v594
      %v735 = vpop.permute.xlu0 %734
      %738 = vset.pattern.permute.xlu0 0
      %739 = vperm.xlu0 %738, %v595
      %v740 = vpop.permute.xlu0 %739
      %743 = vset.pattern.permute.xlu0 0
      %744 = vperm.xlu0 %743, %v596
      %v745 = vpop.permute.xlu0 %744
      %748 = vset.pattern.permute.xlu0 0
      %749 = vperm.xlu0 %748, %v597
      %v750 = vpop.permute.xlu0 %749
      %753 = vset.pattern.permute.xlu0 0
      %754 = vperm.xlu0 %753, %v598
      %v755 = vpop.permute.xlu0 %754
      %758 = vset.pattern.permute.xlu0 0
      %759 = vperm.xlu0 %758, %v599
      %v760 = vpop.permute.xlu0 %759
      %v763 = vperm.slane %v601, 0
      %v765 = vmul.f32 %v605, %v763
      %v766 = vmul.f32 %v610, %v763
      %v767 = vmul.f32 %v615, %v763
      %v768 = vmul.f32 %v620, %v763
      %v769 = vmul.f32 %v625, %v763
      %v770 = vmul.f32 %v630, %v763
      %v771 = vmul.f32 %v635, %v763
      %v772 = vmul.f32 %v640, %v763
      %v773 = vmul.f32 %v645, %v763
      %v774 = vmul.f32 %v650, %v763
      %v775 = vmul.f32 %v655, %v763
      %v776 = vmul.f32 %v660, %v763
      %v777 = vmul.f32 %v665, %v763
      %v778 = vmul.f32 %v670, %v763
      %v779 = vmul.f32 %v675, %v763
      %v780 = vmul.f32 %v680, %v763
      %v781 = vmul.f32 %v685, %v763
      %v782 = vmul.f32 %v690, %v763
      %v783 = vmul.f32 %v695, %v763
      %v784 = vmul.f32 %v700, %v763
      %v785 = vmul.f32 %v705, %v763
      %v786 = vmul.f32 %v710, %v763
      %v787 = vmul.f32 %v715, %v763
      %v788 = vmul.f32 %v720, %v763
      %v789 = vmul.f32 %v725, %v763
      %v790 = vmul.f32 %v730, %v763
      %v791 = vmul.f32 %v735, %v763
      %v792 = vmul.f32 %v740, %v763
      %v793 = vmul.f32 %v745, %v763
      %v794 = vmul.f32 %v750, %v763
      %v795 = vmul.f32 %v755, %v763
      %v796 = vmul.f32 %v760, %v763
      %v797 = vadd.f32 %v536, %v765
      %v798 = vadd.f32 %v537, %v766
      %v799 = vadd.f32 %v538, %v767
      %v800 = vadd.f32 %v539, %v768
      %v801 = vadd.f32 %v540, %v769
      %v802 = vadd.f32 %v541, %v770
      %v803 = vadd.f32 %v542, %v771
      %v804 = vadd.f32 %v543, %v772
      %v805 = vadd.f32 %v544, %v773
      %v806 = vadd.f32 %v545, %v774
      %v807 = vadd.f32 %v546, %v775
      %v808 = vadd.f32 %v547, %v776
      %v809 = vadd.f32 %v548, %v777
      %v810 = vadd.f32 %v549, %v778
      %v811 = vadd.f32 %v550, %v779
      %v812 = vadd.f32 %v551, %v780
      %v813 = vadd.f32 %v552, %v781
      %v814 = vadd.f32 %v553, %v782
      %v815 = vadd.f32 %v554, %v783
      %v816 = vadd.f32 %v555, %v784
      %v817 = vadd.f32 %v556, %v785
      %v818 = vadd.f32 %v557, %v786
      %v819 = vadd.f32 %v558, %v787
      %v820 = vadd.f32 %v559, %v788
      %v821 = vadd.f32 %v560, %v789
      %v822 = vadd.f32 %v561, %v790
      %v823 = vadd.f32 %v562, %v791
      %v824 = vadd.f32 %v563, %v792
      %v825 = vadd.f32 %v564, %v793
      %v826 = vadd.f32 %v565, %v794
      %v827 = vadd.f32 %v566, %v795
      %v828 = vadd.f32 %v567, %v796
      %v829 = vld [vmem:[%s192 + $0x2] sm:$0xff]
      %v830 = vld [vmem:[%s192 + $0xa] sm:$0xff]
      %v831 = vld [vmem:[%s192 + $0x1a] sm:$0xff]
      %v832 = vld [vmem:[%s192 + $0x22] sm:$0xff]
      %v833 = vld [vmem:[%s192 + $0x32] sm:$0xff]
      %v834 = vld [vmem:[%s192 + $0x3a] sm:$0xff]
      %v835 = vld [vmem:[%s192 + $0x4a] sm:$0xff]
      %v836 = vld [vmem:[%s192 + $0x52] sm:$0xff]
      %v837 = vld [vmem:[%s192 + $0x62] sm:$0xff]
      %v838 = vld [vmem:[%s192 + $0x6a] sm:$0xff]
      %v839 = vld [vmem:[%s192 + $0x7a] sm:$0xff]
      %v840 = vld [vmem:[%s192 + $0x82] sm:$0xff]
      %v841 = vld [vmem:[%s192 + $0x92] sm:$0xff]
      %v842 = vld [vmem:[%s192 + $0x9a] sm:$0xff]
      %v843 = vld [vmem:[%s192 + $0xaa] sm:$0xff]
      %v844 = vld [vmem:[%s192 + $0xb2] sm:$0xff]
      %v845 = vld [vmem:[%s192 + $0xc2] sm:$0xff]
      %v846 = vld [vmem:[%s192 + $0xca] sm:$0xff]
      %v847 = vld [vmem:[%s192 + $0xda] sm:$0xff]
      %v848 = vld [vmem:[%s192 + $0xe2] sm:$0xff]
      %v849 = vld [vmem:[%s192 + $0xf2] sm:$0xff]
      %v850 = vld [vmem:[%s192 + $0xfa] sm:$0xff]
      %v851 = vld [vmem:[%s192 + $0x10a] sm:$0xff]
      %v852 = vld [vmem:[%s192 + $0x112] sm:$0xff]
      %v853 = vld [vmem:[%s192 + $0x122] sm:$0xff]
      %v854 = vld [vmem:[%s192 + $0x12a] sm:$0xff]
      %v855 = vld [vmem:[%s192 + $0x13a] sm:$0xff]
      %v856 = vld [vmem:[%s192 + $0x142] sm:$0xff]
      %v857 = vld [vmem:[%s192 + $0x152] sm:$0xff]
      %v858 = vld [vmem:[%s192 + $0x15a] sm:$0xff]
      %v859 = vld [vmem:[%s192 + $0x16a] sm:$0xff]
      %v860 = vld [vmem:[%s192 + $0x172] sm:$0xff]
      %s861 = scalar_lea.vmem %s1, 2
      %v862 = vld [vmem:[%s861] sm:$0x1]
      %864 = vset.pattern.permute.xlu0 0
      %865 = vperm.xlu0 %864, %v829
      %v866 = vpop.permute.xlu0 %865
      %869 = vset.pattern.permute.xlu0 0
      %870 = vperm.xlu0 %869, %v830
      %v871 = vpop.permute.xlu0 %870
      %874 = vset.pattern.permute.xlu0 0
      %875 = vperm.xlu0 %874, %v831
      %v876 = vpop.permute.xlu0 %875
      %879 = vset.pattern.permute.xlu0 0
      %880 = vperm.xlu0 %879, %v832
      %v881 = vpop.permute.xlu0 %880
      %884 = vset.pattern.permute.xlu0 0
      %885 = vperm.xlu0 %884, %v833
      %v886 = vpop.permute.xlu0 %885
      %889 = vset.pattern.permute.xlu0 0
      %890 = vperm.xlu0 %889, %v834
      %v891 = vpop.permute.xlu0 %890
      %894 = vset.pattern.permute.xlu0 0
      %895 = vperm.xlu0 %894, %v835
      %v896 = vpop.permute.xlu0 %895
      %899 = vset.pattern.permute.xlu0 0
      %900 = vperm.xlu0 %899, %v836
      %v901 = vpop.permute.xlu0 %900
      %904 = vset.pattern.permute.xlu0 0
      %905 = vperm.xlu0 %904, %v837
      %v906 = vpop.permute.xlu0 %905
      %909 = vset.pattern.permute.xlu0 0
      %910 = vperm.xlu0 %909, %v838
      %v911 = vpop.permute.xlu0 %910
      %914 = vset.pattern.permute.xlu0 0
      %915 = vperm.xlu0 %914, %v839
      %v916 = vpop.permute.xlu0 %915
      %919 = vset.pattern.permute.xlu0 0
      %920 = vperm.xlu0 %919, %v840
      %v921 = vpop.permute.xlu0 %920
      %924 = vset.pattern.permute.xlu0 0
      %925 = vperm.xlu0 %924, %v841
      %v926 = vpop.permute.xlu0 %925
      %929 = vset.pattern.permute.xlu0 0
      %930 = vperm.xlu0 %929, %v842
      %v931 = vpop.permute.xlu0 %930
      %934 = vset.pattern.permute.xlu0 0
      %935 = vperm.xlu0 %934, %v843
      %v936 = vpop.permute.xlu0 %935
      %939 = vset.pattern.permute.xlu0 0
      %940 = vperm.xlu0 %939, %v844
      %v941 = vpop.permute.xlu0 %940
      %944 = vset.pattern.permute.xlu0 0
      %945 = vperm.xlu0 %944, %v845
      %v946 = vpop.permute.xlu0 %945
      %949 = vset.pattern.permute.xlu0 0
      %950 = vperm.xlu0 %949, %v846
      %v951 = vpop.permute.xlu0 %950
      %954 = vset.pattern.permute.xlu0 0
      %955 = vperm.xlu0 %954, %v847
      %v956 = vpop.permute.xlu0 %955
      %959 = vset.pattern.permute.xlu0 0
      %960 = vperm.xlu0 %959, %v848
      %v961 = vpop.permute.xlu0 %960
      %964 = vset.pattern.permute.xlu0 0
      %965 = vperm.xlu0 %964, %v849
      %v966 = vpop.permute.xlu0 %965
      %969 = vset.pattern.permute.xlu0 0
      %970 = vperm.xlu0 %969, %v850
      %v971 = vpop.permute.xlu0 %970
      %974 = vset.pattern.permute.xlu0 0
      %975 = vperm.xlu0 %974, %v851
      %v976 = vpop.permute.xlu0 %975
      %979 = vset.pattern.permute.xlu0 0
      %980 = vperm.xlu0 %979, %v852
      %v981 = vpop.permute.xlu0 %980
      %984 = vset.pattern.permute.xlu0 0
      %985 = vperm.xlu0 %984, %v853
      %v986 = vpop.permute.xlu0 %985
      %989 = vset.pattern.permute.xlu0 0
      %990 = vperm.xlu0 %989, %v854
      %v991 = vpop.permute.xlu0 %990
      %994 = vset.pattern.permute.xlu0 0
      %995 = vperm.xlu0 %994, %v855
      %v996 = vpop.permute.xlu0 %995
      %999 = vset.pattern.permute.xlu0 0
      %1000 = vperm.xlu0 %999, %v856
      %v1001 = vpop.permute.xlu0 %1000
      %1004 = vset.pattern.permute.xlu0 0
      %1005 = vperm.xlu0 %1004, %v857
      %v1006 = vpop.permute.xlu0 %1005
      %1009 = vset.pattern.permute.xlu0 0
      %1010 = vperm.xlu0 %1009, %v858
      %v1011 = vpop.permute.xlu0 %1010
      %1014 = vset.pattern.permute.xlu0 0
      %1015 = vperm.xlu0 %1014, %v859
      %v1016 = vpop.permute.xlu0 %1015
      %1019 = vset.pattern.permute.xlu0 0
      %1020 = vperm.xlu0 %1019, %v860
      %v1021 = vpop.permute.xlu0 %1020
      %v1024 = vperm.slane %v862, 0
      %v1026 = vmul.f32 %v866, %v1024
      %v1027 = vmul.f32 %v871, %v1024
      %v1028 = vmul.f32 %v876, %v1024
      %v1029 = vmul.f32 %v881, %v1024
      %v1030 = vmul.f32 %v886, %v1024
      %v1031 = vmul.f32 %v891, %v1024
      %v1032 = vmul.f32 %v896, %v1024
      %v1033 = vmul.f32 %v901, %v1024
      %v1034 = vmul.f32 %v906, %v1024
      %v1035 = vmul.f32 %v911, %v1024
      %v1036 = vmul.f32 %v916, %v1024
      %v1037 = vmul.f32 %v921, %v1024
      %v1038 = vmul.f32 %v926, %v1024
      %v1039 = vmul.f32 %v931, %v1024
      %v1040 = vmul.f32 %v936, %v1024
      %v1041 = vmul.f32 %v941, %v1024
      %v1042 = vmul.f32 %v946, %v1024
      %v1043 = vmul.f32 %v951, %v1024
      %v1044 = vmul.f32 %v956, %v1024
      %v1045 = vmul.f32 %v961, %v1024
      %v1046 = vmul.f32 %v966, %v1024
      %v1047 = vmul.f32 %v971, %v1024
      %v1048 = vmul.f32 %v976, %v1024
      %v1049 = vmul.f32 %v981, %v1024
      %v1050 = vmul.f32 %v986, %v1024
      %v1051 = vmul.f32 %v991, %v1024
      %v1052 = vmul.f32 %v996, %v1024
      %v1053 = vmul.f32 %v1001, %v1024
      %v1054 = vmul.f32 %v1006, %v1024
      %v1055 = vmul.f32 %v1011, %v1024
      %v1056 = vmul.f32 %v1016, %v1024
      %v1057 = vmul.f32 %v1021, %v1024
      %v1058 = vadd.f32 %v797, %v1026
      %v1059 = vadd.f32 %v798, %v1027
      %v1060 = vadd.f32 %v799, %v1028
      %v1061 = vadd.f32 %v800, %v1029
      %v1062 = vadd.f32 %v801, %v1030
      %v1063 = vadd.f32 %v802, %v1031
      %v1064 = vadd.f32 %v803, %v1032
      %v1065 = vadd.f32 %v804, %v1033
      %v1066 = vadd.f32 %v805, %v1034
      %v1067 = vadd.f32 %v806, %v1035
      %v1068 = vadd.f32 %v807, %v1036
      %v1069 = vadd.f32 %v808, %v1037
      %v1070 = vadd.f32 %v809, %v1038
      %v1071 = vadd.f32 %v810, %v1039
      %v1072 = vadd.f32 %v811, %v1040
      %v1073 = vadd.f32 %v812, %v1041
      %v1074 = vadd.f32 %v813, %v1042
      %v1075 = vadd.f32 %v814, %v1043
      %v1076 = vadd.f32 %v815, %v1044
      %v1077 = vadd.f32 %v816, %v1045
      %v1078 = vadd.f32 %v817, %v1046
      %v1079 = vadd.f32 %v818, %v1047
      %v1080 = vadd.f32 %v819, %v1048
      %v1081 = vadd.f32 %v820, %v1049
      %v1082 = vadd.f32 %v821, %v1050
      %v1083 = vadd.f32 %v822, %v1051
      %v1084 = vadd.f32 %v823, %v1052
      %v1085 = vadd.f32 %v824, %v1053
      %v1086 = vadd.f32 %v825, %v1054
      %v1087 = vadd.f32 %v826, %v1055
      %v1088 = vadd.f32 %v827, %v1056
      %v1089 = vadd.f32 %v828, %v1057
      %s1090 = scalar_lea.vmem %s192, 24
      %v1091 = vld [vmem:[%s1090] sm:$0xff]
      %v1092 = vld [vmem:[%s1090 + $0x8] sm:$0xff]
      %v1093 = vld [vmem:[%s1090 + $0x18] sm:$0xff]
      %v1094 = vld [vmem:[%s1090 + $0x20] sm:$0xff]
      %v1095 = vld [vmem:[%s1090 + $0x30] sm:$0xff]
      %v1096 = vld [vmem:[%s1090 + $0x38] sm:$0xff]
      %v1097 = vld [vmem:[%s1090 + $0x48] sm:$0xff]
      %v1098 = vld [vmem:[%s1090 + $0x50] sm:$0xff]
      %v1099 = vld [vmem:[%s1090 + $0x60] sm:$0xff]
      %v1100 = vld [vmem:[%s1090 + $0x68] sm:$0xff]
      %v1101 = vld [vmem:[%s1090 + $0x78] sm:$0xff]
      %v1102 = vld [vmem:[%s1090 + $0x80] sm:$0xff]
      %v1103 = vld [vmem:[%s1090 + $0x90] sm:$0xff]
      %v1104 = vld [vmem:[%s1090 + $0x98] sm:$0xff]
      %v1105 = vld [vmem:[%s1090 + $0xa8] sm:$0xff]
      %v1106 = vld [vmem:[%s1090 + $0xb0] sm:$0xff]
      %v1107 = vld [vmem:[%s1090 + $0xc0] sm:$0xff]
      %v1108 = vld [vmem:[%s1090 + $0xc8] sm:$0xff]
      %v1109 = vld [vmem:[%s1090 + $0xd8] sm:$0xff]
      %v1110 = vld [vmem:[%s1090 + $0xe0] sm:$0xff]
      %v1111 = vld [vmem:[%s1090 + $0xf0] sm:$0xff]
      %v1112 = vld [vmem:[%s1090 + $0xf8] sm:$0xff]
      %v1113 = vld [vmem:[%s1090 + $0x108] sm:$0xff]
      %v1114 = vld [vmem:[%s1090 + $0x110] sm:$0xff]
      %v1115 = vld [vmem:[%s1090 + $0x120] sm:$0xff]
      %v1116 = vld [vmem:[%s1090 + $0x128] sm:$0xff]
      %v1117 = vld [vmem:[%s1090 + $0x138] sm:$0xff]
      %v1118 = vld [vmem:[%s1090 + $0x140] sm:$0xff]
      %v1119 = vld [vmem:[%s1090 + $0x150] sm:$0xff]
      %v1120 = vld [vmem:[%s1090 + $0x158] sm:$0xff]
      %v1121 = vld [vmem:[%s1090 + $0x168] sm:$0xff]
      %v1122 = vld [vmem:[%s1090 + $0x170] sm:$0xff]
      %s1123 = scalar_lea.vmem %s1, 3
      %v1124 = vld [vmem:[%s1123] sm:$0x1]
      %1126 = vset.pattern.permute.xlu0 0
      %1127 = vperm.xlu0 %1126, %v1091
      %v1128 = vpop.permute.xlu0 %1127
      %1131 = vset.pattern.permute.xlu0 0
      %1132 = vperm.xlu0 %1131, %v1092
      %v1133 = vpop.permute.xlu0 %1132
      %1136 = vset.pattern.permute.xlu0 0
      %1137 = vperm.xlu0 %1136, %v1093
      %v1138 = vpop.permute.xlu0 %1137
      %1141 = vset.pattern.permute.xlu0 0
      %1142 = vperm.xlu0 %1141, %v1094
      %v1143 = vpop.permute.xlu0 %1142
      %1146 = vset.pattern.permute.xlu0 0
      %1147 = vperm.xlu0 %1146, %v1095
      %v1148 = vpop.permute.xlu0 %1147
      %1151 = vset.pattern.permute.xlu0 0
      %1152 = vperm.xlu0 %1151, %v1096
      %v1153 = vpop.permute.xlu0 %1152
      %1156 = vset.pattern.permute.xlu0 0
      %1157 = vperm.xlu0 %1156, %v1097
      %v1158 = vpop.permute.xlu0 %1157
      %1161 = vset.pattern.permute.xlu0 0
      %1162 = vperm.xlu0 %1161, %v1098
      %v1163 = vpop.permute.xlu0 %1162
      %1166 = vset.pattern.permute.xlu0 0
      %1167 = vperm.xlu0 %1166, %v1099
      %v1168 = vpop.permute.xlu0 %1167
      %1171 = vset.pattern.permute.xlu0 0
      %1172 = vperm.xlu0 %1171, %v1100
      %v1173 = vpop.permute.xlu0 %1172
      %1176 = vset.pattern.permute.xlu0 0
      %1177 = vperm.xlu0 %1176, %v1101
      %v1178 = vpop.permute.xlu0 %1177
      %1181 = vset.pattern.permute.xlu0 0
      %1182 = vperm.xlu0 %1181, %v1102
      %v1183 = vpop.permute.xlu0 %1182
      %1186 = vset.pattern.permute.xlu0 0
      %1187 = vperm.xlu0 %1186, %v1103
      %v1188 = vpop.permute.xlu0 %1187
      %1191 = vset.pattern.permute.xlu0 0
      %1192 = vperm.xlu0 %1191, %v1104
      %v1193 = vpop.permute.xlu0 %1192
      %1196 = vset.pattern.permute.xlu0 0
      %1197 = vperm.xlu0 %1196, %v1105
      %v1198 = vpop.permute.xlu0 %1197
      %1201 = vset.pattern.permute.xlu0 0
      %1202 = vperm.xlu0 %1201, %v1106
      %v1203 = vpop.permute.xlu0 %1202
      %1206 = vset.pattern.permute.xlu0 0
      %1207 = vperm.xlu0 %1206, %v1107
      %v1208 = vpop.permute.xlu0 %1207
      %1211 = vset.pattern.permute.xlu0 0
      %1212 = vperm.xlu0 %1211, %v1108
      %v1213 = vpop.permute.xlu0 %1212
      %1216 = vset.pattern.permute.xlu0 0
      %1217 = vperm.xlu0 %1216, %v1109
      %v1218 = vpop.permute.xlu0 %1217
      %1221 = vset.pattern.permute.xlu0 0
      %1222 = vperm.xlu0 %1221, %v1110
      %v1223 = vpop.permute.xlu0 %1222
      %1226 = vset.pattern.permute.xlu0 0
      %1227 = vperm.xlu0 %1226, %v1111
      %v1228 = vpop.permute.xlu0 %1227
      %1231 = vset.pattern.permute.xlu0 0
      %1232 = vperm.xlu0 %1231, %v1112
      %v1233 = vpop.permute.xlu0 %1232
      %1236 = vset.pattern.permute.xlu0 0
      %1237 = vperm.xlu0 %1236, %v1113
      %v1238 = vpop.permute.xlu0 %1237
      %1241 = vset.pattern.permute.xlu0 0
      %1242 = vperm.xlu0 %1241, %v1114
      %v1243 = vpop.permute.xlu0 %1242
      %1246 = vset.pattern.permute.xlu0 0
      %1247 = vperm.xlu0 %1246, %v1115
      %v1248 = vpop.permute.xlu0 %1247
      %1251 = vset.pattern.permute.xlu0 0
      %1252 = vperm.xlu0 %1251, %v1116
      %v1253 = vpop.permute.xlu0 %1252
      %1256 = vset.pattern.permute.xlu0 0
      %1257 = vperm.xlu0 %1256, %v1117
      %v1258 = vpop.permute.xlu0 %1257
      %1261 = vset.pattern.permute.xlu0 0
      %1262 = vperm.xlu0 %1261, %v1118
      %v1263 = vpop.permute.xlu0 %1262
      %1266 = vset.pattern.permute.xlu0 0
      %1267 = vperm.xlu0 %1266, %v1119
      %v1268 = vpop.permute.xlu0 %1267
      %1271 = vset.pattern.permute.xlu0 0
      %1272 = vperm.xlu0 %1271, %v1120
      %v1273 = vpop.permute.xlu0 %1272
      %1276 = vset.pattern.permute.xlu0 0
      %1277 = vperm.xlu0 %1276, %v1121
      %v1278 = vpop.permute.xlu0 %1277
      %1281 = vset.pattern.permute.xlu0 0
      %1282 = vperm.xlu0 %1281, %v1122
      %v1283 = vpop.permute.xlu0 %1282
      %v1286 = vperm.slane %v1124, 0
      %v1288 = vmul.f32 %v1128, %v1286
      %v1289 = vmul.f32 %v1133, %v1286
      %v1290 = vmul.f32 %v1138, %v1286
      %v1291 = vmul.f32 %v1143, %v1286
      %v1292 = vmul.f32 %v1148, %v1286
      %v1293 = vmul.f32 %v1153, %v1286
      %v1294 = vmul.f32 %v1158, %v1286
      %v1295 = vmul.f32 %v1163, %v1286
      %v1296 = vmul.f32 %v1168, %v1286
      %v1297 = vmul.f32 %v1173, %v1286
      %v1298 = vmul.f32 %v1178, %v1286
      %v1299 = vmul.f32 %v1183, %v1286
      %v1300 = vmul.f32 %v1188, %v1286
      %v1301 = vmul.f32 %v1193, %v1286
      %v1302 = vmul.f32 %v1198, %v1286
      %v1303 = vmul.f32 %v1203, %v1286
      %v1304 = vmul.f32 %v1208, %v1286
      %v1305 = vmul.f32 %v1213, %v1286
      %v1306 = vmul.f32 %v1218, %v1286
      %v1307 = vmul.f32 %v1223, %v1286
      %v1308 = vmul.f32 %v1228, %v1286
      %v1309 = vmul.f32 %v1233, %v1286
      %v1310 = vmul.f32 %v1238, %v1286
      %v1311 = vmul.f32 %v1243, %v1286
      %v1312 = vmul.f32 %v1248, %v1286
      %v1313 = vmul.f32 %v1253, %v1286
      %v1314 = vmul.f32 %v1258, %v1286
      %v1315 = vmul.f32 %v1263, %v1286
      %v1316 = vmul.f32 %v1268, %v1286
      %v1317 = vmul.f32 %v1273, %v1286
      %v1318 = vmul.f32 %v1278, %v1286
      %v1319 = vmul.f32 %v1283, %v1286
      %v1320 = vadd.f32 %v1058, %v1288
      %v1321 = vadd.f32 %v1059, %v1289
      %v1322 = vadd.f32 %v1060, %v1290
      %v1323 = vadd.f32 %v1061, %v1291
      %v1324 = vadd.f32 %v1062, %v1292
      %v1325 = vadd.f32 %v1063, %v1293
      %v1326 = vadd.f32 %v1064, %v1294
      %v1327 = vadd.f32 %v1065, %v1295
      %v1328 = vadd.f32 %v1066, %v1296
      %v1329 = vadd.f32 %v1067, %v1297
      %v1330 = vadd.f32 %v1068, %v1298
      %v1331 = vadd.f32 %v1069, %v1299
      %v1332 = vadd.f32 %v1070, %v1300
      %v1333 = vadd.f32 %v1071, %v1301
      %v1334 = vadd.f32 %v1072, %v1302
      %v1335 = vadd.f32 %v1073, %v1303
      %v1336 = vadd.f32 %v1074, %v1304
      %v1337 = vadd.f32 %v1075, %v1305
      %v1338 = vadd.f32 %v1076, %v1306
      %v1339 = vadd.f32 %v1077, %v1307
      %v1340 = vadd.f32 %v1078, %v1308
      %v1341 = vadd.f32 %v1079, %v1309
      %v1342 = vadd.f32 %v1080, %v1310
      %v1343 = vadd.f32 %v1081, %v1311
      %v1344 = vadd.f32 %v1082, %v1312
      %v1345 = vadd.f32 %v1083, %v1313
      %v1346 = vadd.f32 %v1084, %v1314
      %v1347 = vadd.f32 %v1085, %v1315
      %v1348 = vadd.f32 %v1086, %v1316
      %v1349 = vadd.f32 %v1087, %v1317
      %v1350 = vadd.f32 %v1088, %v1318
      %v1351 = vadd.f32 %v1089, %v1319
      %v1352 = vld [vmem:[%s1090 + $0x1] sm:$0xff]
      %v1353 = vld [vmem:[%s1090 + $0x9] sm:$0xff]
      %v1354 = vld [vmem:[%s1090 + $0x19] sm:$0xff]
      %v1355 = vld [vmem:[%s1090 + $0x21] sm:$0xff]
      %v1356 = vld [vmem:[%s1090 + $0x31] sm:$0xff]
      %v1357 = vld [vmem:[%s1090 + $0x39] sm:$0xff]
      %v1358 = vld [vmem:[%s1090 + $0x49] sm:$0xff]
      %v1359 = vld [vmem:[%s1090 + $0x51] sm:$0xff]
      %v1360 = vld [vmem:[%s1090 + $0x61] sm:$0xff]
      %v1361 = vld [vmem:[%s1090 + $0x69] sm:$0xff]
      %v1362 = vld [vmem:[%s1090 + $0x79] sm:$0xff]
      %v1363 = vld [vmem:[%s1090 + $0x81] sm:$0xff]
      %v1364 = vld [vmem:[%s1090 + $0x91] sm:$0xff]
      %v1365 = vld [vmem:[%s1090 + $0x99] sm:$0xff]
      %v1366 = vld [vmem:[%s1090 + $0xa9] sm:$0xff]
      %v1367 = vld [vmem:[%s1090 + $0xb1] sm:$0xff]
      %v1368 = vld [vmem:[%s1090 + $0xc1] sm:$0xff]
      %v1369 = vld [vmem:[%s1090 + $0xc9] sm:$0xff]
      %v1370 = vld [vmem:[%s1090 + $0xd9] sm:$0xff]
      %v1371 = vld [vmem:[%s1090 + $0xe1] sm:$0xff]
      %v1372 = vld [vmem:[%s1090 + $0xf1] sm:$0xff]
      %v1373 = vld [vmem:[%s1090 + $0xf9] sm:$0xff]
      %v1374 = vld [vmem:[%s1090 + $0x109] sm:$0xff]
      %v1375 = vld [vmem:[%s1090 + $0x111] sm:$0xff]
      %v1376 = vld [vmem:[%s1090 + $0x121] sm:$0xff]
      %v1377 = vld [vmem:[%s1090 + $0x129] sm:$0xff]
      %v1378 = vld [vmem:[%s1090 + $0x139] sm:$0xff]
      %v1379 = vld [vmem:[%s1090 + $0x141] sm:$0xff]
      %v1380 = vld [vmem:[%s1090 + $0x151] sm:$0xff]
      %v1381 = vld [vmem:[%s1090 + $0x159] sm:$0xff]
      %v1382 = vld [vmem:[%s1090 + $0x169] sm:$0xff]
      %v1383 = vld [vmem:[%s1090 + $0x171] sm:$0xff]
      %s1384 = scalar_lea.vmem %s1, 4
      %v1385 = vld [vmem:[%s1384] sm:$0x1]
      %1387 = vset.pattern.permute.xlu0 0
      %1388 = vperm.xlu0 %1387, %v1352
      %v1389 = vpop.permute.xlu0 %1388
      %1392 = vset.pattern.permute.xlu0 0
      %1393 = vperm.xlu0 %1392, %v1353
      %v1394 = vpop.permute.xlu0 %1393
      %1397 = vset.pattern.permute.xlu0 0
      %1398 = vperm.xlu0 %1397, %v1354
      %v1399 = vpop.permute.xlu0 %1398
      %1402 = vset.pattern.permute.xlu0 0
      %1403 = vperm.xlu0 %1402, %v1355
      %v1404 = vpop.permute.xlu0 %1403
      %1407 = vset.pattern.permute.xlu0 0
      %1408 = vperm.xlu0 %1407, %v1356
      %v1409 = vpop.permute.xlu0 %1408
      %1412 = vset.pattern.permute.xlu0 0
      %1413 = vperm.xlu0 %1412, %v1357
      %v1414 = vpop.permute.xlu0 %1413
      %1417 = vset.pattern.permute.xlu0 0
      %1418 = vperm.xlu0 %1417, %v1358
      %v1419 = vpop.permute.xlu0 %1418
      %1422 = vset.pattern.permute.xlu0 0
      %1423 = vperm.xlu0 %1422, %v1359
      %v1424 = vpop.permute.xlu0 %1423
      %1427 = vset.pattern.permute.xlu0 0
      %1428 = vperm.xlu0 %1427, %v1360
      %v1429 = vpop.permute.xlu0 %1428
      %1432 = vset.pattern.permute.xlu0 0
      %1433 = vperm.xlu0 %1432, %v1361
      %v1434 = vpop.permute.xlu0 %1433
      %1437 = vset.pattern.permute.xlu0 0
      %1438 = vperm.xlu0 %1437, %v1362
      %v1439 = vpop.permute.xlu0 %1438
      %1442 = vset.pattern.permute.xlu0 0
      %1443 = vperm.xlu0 %1442, %v1363
      %v1444 = vpop.permute.xlu0 %1443
      %1447 = vset.pattern.permute.xlu0 0
      %1448 = vperm.xlu0 %1447, %v1364
      %v1449 = vpop.permute.xlu0 %1448
      %1452 = vset.pattern.permute.xlu0 0
      %1453 = vperm.xlu0 %1452, %v1365
      %v1454 = vpop.permute.xlu0 %1453
      %1457 = vset.pattern.permute.xlu0 0
      %1458 = vperm.xlu0 %1457, %v1366
      %v1459 = vpop.permute.xlu0 %1458
      %1462 = vset.pattern.permute.xlu0 0
      %1463 = vperm.xlu0 %1462, %v1367
      %v1464 = vpop.permute.xlu0 %1463
      %1467 = vset.pattern.permute.xlu0 0
      %1468 = vperm.xlu0 %1467, %v1368
      %v1469 = vpop.permute.xlu0 %1468
      %1472 = vset.pattern.permute.xlu0 0
      %1473 = vperm.xlu0 %1472, %v1369
      %v1474 = vpop.permute.xlu0 %1473
      %1477 = vset.pattern.permute.xlu0 0
      %1478 = vperm.xlu0 %1477, %v1370
      %v1479 = vpop.permute.xlu0 %1478
      %1482 = vset.pattern.permute.xlu0 0
      %1483 = vperm.xlu0 %1482, %v1371
      %v1484 = vpop.permute.xlu0 %1483
      %1487 = vset.pattern.permute.xlu0 0
      %1488 = vperm.xlu0 %1487, %v1372
      %v1489 = vpop.permute.xlu0 %1488
      %1492 = vset.pattern.permute.xlu0 0
      %1493 = vperm.xlu0 %1492, %v1373
      %v1494 = vpop.permute.xlu0 %1493
      %1497 = vset.pattern.permute.xlu0 0
      %1498 = vperm.xlu0 %1497, %v1374
      %v1499 = vpop.permute.xlu0 %1498
      %1502 = vset.pattern.permute.xlu0 0
      %1503 = vperm.xlu0 %1502, %v1375
      %v1504 = vpop.permute.xlu0 %1503
      %1507 = vset.pattern.permute.xlu0 0
      %1508 = vperm.xlu0 %1507, %v1376
      %v1509 = vpop.permute.xlu0 %1508
      %1512 = vset.pattern.permute.xlu0 0
      %1513 = vperm.xlu0 %1512, %v1377
      %v1514 = vpop.permute.xlu0 %1513
      %1517 = vset.pattern.permute.xlu0 0
      %1518 = vperm.xlu0 %1517, %v1378
      %v1519 = vpop.permute.xlu0 %1518
      %1522 = vset.pattern.permute.xlu0 0
      %1523 = vperm.xlu0 %1522, %v1379
      %v1524 = vpop.permute.xlu0 %1523
      %1527 = vset.pattern.permute.xlu0 0
      %1528 = vperm.xlu0 %1527, %v1380
      %v1529 = vpop.permute.xlu0 %1528
      %1532 = vset.pattern.permute.xlu0 0
      %1533 = vperm.xlu0 %1532, %v1381
      %v1534 = vpop.permute.xlu0 %1533
      %1537 = vset.pattern.permute.xlu0 0
      %1538 = vperm.xlu0 %1537, %v1382
      %v1539 = vpop.permute.xlu0 %1538
      %1542 = vset.pattern.permute.xlu0 0
      %1543 = vperm.xlu0 %1542, %v1383
      %v1544 = vpop.permute.xlu0 %1543
      %v1547 = vperm.slane %v1385, 0
      %v1549 = vmul.f32 %v1389, %v1547
      %v1550 = vmul.f32 %v1394, %v1547
      %v1551 = vmul.f32 %v1399, %v1547
      %v1552 = vmul.f32 %v1404, %v1547
      %v1553 = vmul.f32 %v1409, %v1547
      %v1554 = vmul.f32 %v1414, %v1547
      %v1555 = vmul.f32 %v1419, %v1547
      %v1556 = vmul.f32 %v1424, %v1547
      %v1557 = vmul.f32 %v1429, %v1547
      %v1558 = vmul.f32 %v1434, %v1547
      %v1559 = vmul.f32 %v1439, %v1547
      %v1560 = vmul.f32 %v1444, %v1547
      %v1561 = vmul.f32 %v1449, %v1547
      %v1562 = vmul.f32 %v1454, %v1547
      %v1563 = vmul.f32 %v1459, %v1547
      %v1564 = vmul.f32 %v1464, %v1547
      %v1565 = vmul.f32 %v1469, %v1547
      %v1566 = vmul.f32 %v1474, %v1547
      %v1567 = vmul.f32 %v1479, %v1547
      %v1568 = vmul.f32 %v1484, %v1547
      %v1569 = vmul.f32 %v1489, %v1547
      %v1570 = vmul.f32 %v1494, %v1547
      %v1571 = vmul.f32 %v1499, %v1547
      %v1572 = vmul.f32 %v1504, %v1547
      %v1573 = vmul.f32 %v1509, %v1547
      %v1574 = vmul.f32 %v1514, %v1547
      %v1575 = vmul.f32 %v1519, %v1547
      %v1576 = vmul.f32 %v1524, %v1547
      %v1577 = vmul.f32 %v1529, %v1547
      %v1578 = vmul.f32 %v1534, %v1547
      %v1579 = vmul.f32 %v1539, %v1547
      %v1580 = vmul.f32 %v1544, %v1547
      %v1581 = vadd.f32 %v1320, %v1549
      %v1582 = vadd.f32 %v1321, %v1550
      %v1583 = vadd.f32 %v1322, %v1551
      %v1584 = vadd.f32 %v1323, %v1552
      %v1585 = vadd.f32 %v1324, %v1553
      %v1586 = vadd.f32 %v1325, %v1554
      %v1587 = vadd.f32 %v1326, %v1555
      %v1588 = vadd.f32 %v1327, %v1556
      %v1589 = vadd.f32 %v1328, %v1557
      %v1590 = vadd.f32 %v1329, %v1558
      %v1591 = vadd.f32 %v1330, %v1559
      %v1592 = vadd.f32 %v1331, %v1560
      %v1593 = vadd.f32 %v1332, %v1561
      %v1594 = vadd.f32 %v1333, %v1562
      %v1595 = vadd.f32 %v1334, %v1563
      %v1596 = vadd.f32 %v1335, %v1564
      %v1597 = vadd.f32 %v1336, %v1565
      %v1598 = vadd.f32 %v1337, %v1566
      %v1599 = vadd.f32 %v1338, %v1567
      %v1600 = vadd.f32 %v1339, %v1568
      %v1601 = vadd.f32 %v1340, %v1569
      %v1602 = vadd.f32 %v1341, %v1570
      %v1603 = vadd.f32 %v1342, %v1571
      %v1604 = vadd.f32 %v1343, %v1572
      %v1605 = vadd.f32 %v1344, %v1573
      %v1606 = vadd.f32 %v1345, %v1574
      %v1607 = vadd.f32 %v1346, %v1575
      %v1608 = vadd.f32 %v1347, %v1576
      %v1609 = vadd.f32 %v1348, %v1577
      %v1610 = vadd.f32 %v1349, %v1578
      %v1611 = vadd.f32 %v1350, %v1579
      %v1612 = vadd.f32 %v1351, %v1580
      %v1613 = vld [vmem:[%s1090 + $0x2] sm:$0xff]
      %v1614 = vld [vmem:[%s1090 + $0xa] sm:$0xff]
      %v1615 = vld [vmem:[%s1090 + $0x1a] sm:$0xff]
      %v1616 = vld [vmem:[%s1090 + $0x22] sm:$0xff]
      %v1617 = vld [vmem:[%s1090 + $0x32] sm:$0xff]
      %v1618 = vld [vmem:[%s1090 + $0x3a] sm:$0xff]
      %v1619 = vld [vmem:[%s1090 + $0x4a] sm:$0xff]
      %v1620 = vld [vmem:[%s1090 + $0x52] sm:$0xff]
      %v1621 = vld [vmem:[%s1090 + $0x62] sm:$0xff]
      %v1622 = vld [vmem:[%s1090 + $0x6a] sm:$0xff]
      %v1623 = vld [vmem:[%s1090 + $0x7a] sm:$0xff]
      %v1624 = vld [vmem:[%s1090 + $0x82] sm:$0xff]
      %v1625 = vld [vmem:[%s1090 + $0x92] sm:$0xff]
      %v1626 = vld [vmem:[%s1090 + $0x9a] sm:$0xff]
      %v1627 = vld [vmem:[%s1090 + $0xaa] sm:$0xff]
      %v1628 = vld [vmem:[%s1090 + $0xb2] sm:$0xff]
      %v1629 = vld [vmem:[%s1090 + $0xc2] sm:$0xff]
      %v1630 = vld [vmem:[%s1090 + $0xca] sm:$0xff]
      %v1631 = vld [vmem:[%s1090 + $0xda] sm:$0xff]
      %v1632 = vld [vmem:[%s1090 + $0xe2] sm:$0xff]
      %v1633 = vld [vmem:[%s1090 + $0xf2] sm:$0xff]
      %v1634 = vld [vmem:[%s1090 + $0xfa] sm:$0xff]
      %v1635 = vld [vmem:[%s1090 + $0x10a] sm:$0xff]
      %v1636 = vld [vmem:[%s1090 + $0x112] sm:$0xff]
      %v1637 = vld [vmem:[%s1090 + $0x122] sm:$0xff]
      %v1638 = vld [vmem:[%s1090 + $0x12a] sm:$0xff]
      %v1639 = vld [vmem:[%s1090 + $0x13a] sm:$0xff]
      %v1640 = vld [vmem:[%s1090 + $0x142] sm:$0xff]
      %v1641 = vld [vmem:[%s1090 + $0x152] sm:$0xff]
      %v1642 = vld [vmem:[%s1090 + $0x15a] sm:$0xff]
      %v1643 = vld [vmem:[%s1090 + $0x16a] sm:$0xff]
      %v1644 = vld [vmem:[%s1090 + $0x172] sm:$0xff]
      %s1645 = scalar_lea.vmem %s1, 5
      %v1646 = vld [vmem:[%s1645] sm:$0x1]
      %1648 = vset.pattern.permute.xlu0 0
      %1649 = vperm.xlu0 %1648, %v1613
      %v1650 = vpop.permute.xlu0 %1649
      %1653 = vset.pattern.permute.xlu0 0
      %1654 = vperm.xlu0 %1653, %v1614
      %v1655 = vpop.permute.xlu0 %1654
      %1658 = vset.pattern.permute.xlu0 0
      %1659 = vperm.xlu0 %1658, %v1615
      %v1660 = vpop.permute.xlu0 %1659
      %1663 = vset.pattern.permute.xlu0 0
      %1664 = vperm.xlu0 %1663, %v1616
      %v1665 = vpop.permute.xlu0 %1664
      %1668 = vset.pattern.permute.xlu0 0
      %1669 = vperm.xlu0 %1668, %v1617
      %v1670 = vpop.permute.xlu0 %1669
      %1673 = vset.pattern.permute.xlu0 0
      %1674 = vperm.xlu0 %1673, %v1618
      %v1675 = vpop.permute.xlu0 %1674
      %1678 = vset.pattern.permute.xlu0 0
      %1679 = vperm.xlu0 %1678, %v1619
      %v1680 = vpop.permute.xlu0 %1679
      %1683 = vset.pattern.permute.xlu0 0
      %1684 = vperm.xlu0 %1683, %v1620
      %v1685 = vpop.permute.xlu0 %1684
      %1688 = vset.pattern.permute.xlu0 0
      %1689 = vperm.xlu0 %1688, %v1621
      %v1690 = vpop.permute.xlu0 %1689
      %1693 = vset.pattern.permute.xlu0 0
      %1694 = vperm.xlu0 %1693, %v1622
      %v1695 = vpop.permute.xlu0 %1694
      %1698 = vset.pattern.permute.xlu0 0
      %1699 = vperm.xlu0 %1698, %v1623
      %v1700 = vpop.permute.xlu0 %1699
      %1703 = vset.pattern.permute.xlu0 0
      %1704 = vperm.xlu0 %1703, %v1624
      %v1705 = vpop.permute.xlu0 %1704
      %1708 = vset.pattern.permute.xlu0 0
      %1709 = vperm.xlu0 %1708, %v1625
      %v1710 = vpop.permute.xlu0 %1709
      %1713 = vset.pattern.permute.xlu0 0
      %1714 = vperm.xlu0 %1713, %v1626
      %v1715 = vpop.permute.xlu0 %1714
      %1718 = vset.pattern.permute.xlu0 0
      %1719 = vperm.xlu0 %1718, %v1627
      %v1720 = vpop.permute.xlu0 %1719
      %1723 = vset.pattern.permute.xlu0 0
      %1724 = vperm.xlu0 %1723, %v1628
      %v1725 = vpop.permute.xlu0 %1724
      %1728 = vset.pattern.permute.xlu0 0
      %1729 = vperm.xlu0 %1728, %v1629
      %v1730 = vpop.permute.xlu0 %1729
      %1733 = vset.pattern.permute.xlu0 0
      %1734 = vperm.xlu0 %1733, %v1630
      %v1735 = vpop.permute.xlu0 %1734
      %1738 = vset.pattern.permute.xlu0 0
      %1739 = vperm.xlu0 %1738, %v1631
      %v1740 = vpop.permute.xlu0 %1739
      %1743 = vset.pattern.permute.xlu0 0
      %1744 = vperm.xlu0 %1743, %v1632
      %v1745 = vpop.permute.xlu0 %1744
      %1748 = vset.pattern.permute.xlu0 0
      %1749 = vperm.xlu0 %1748, %v1633
      %v1750 = vpop.permute.xlu0 %1749
      %1753 = vset.pattern.permute.xlu0 0
      %1754 = vperm.xlu0 %1753, %v1634
      %v1755 = vpop.permute.xlu0 %1754
      %1758 = vset.pattern.permute.xlu0 0
      %1759 = vperm.xlu0 %1758, %v1635
      %v1760 = vpop.permute.xlu0 %1759
      %1763 = vset.pattern.permute.xlu0 0
      %1764 = vperm.xlu0 %1763, %v1636
      %v1765 = vpop.permute.xlu0 %1764
      %1768 = vset.pattern.permute.xlu0 0
      %1769 = vperm.xlu0 %1768, %v1637
      %v1770 = vpop.permute.xlu0 %1769
      %1773 = vset.pattern.permute.xlu0 0
      %1774 = vperm.xlu0 %1773, %v1638
      %v1775 = vpop.permute.xlu0 %1774
      %1778 = vset.pattern.permute.xlu0 0
      %1779 = vperm.xlu0 %1778, %v1639
      %v1780 = vpop.permute.xlu0 %1779
      %1783 = vset.pattern.permute.xlu0 0
      %1784 = vperm.xlu0 %1783, %v1640
      %v1785 = vpop.permute.xlu0 %1784
      %1788 = vset.pattern.permute.xlu0 0
      %1789 = vperm.xlu0 %1788, %v1641
      %v1790 = vpop.permute.xlu0 %1789
      %1793 = vset.pattern.permute.xlu0 0
      %1794 = vperm.xlu0 %1793, %v1642
      %v1795 = vpop.permute.xlu0 %1794
      %1798 = vset.pattern.permute.xlu0 0
      %1799 = vperm.xlu0 %1798, %v1643
      %v1800 = vpop.permute.xlu0 %1799
      %1803 = vset.pattern.permute.xlu0 0
      %1804 = vperm.xlu0 %1803, %v1644
      %v1805 = vpop.permute.xlu0 %1804
      %v1808 = vperm.slane %v1646, 0
      %v1810 = vmul.f32 %v1650, %v1808
      %v1811 = vmul.f32 %v1655, %v1808
      %v1812 = vmul.f32 %v1660, %v1808
      %v1813 = vmul.f32 %v1665, %v1808
      %v1814 = vmul.f32 %v1670, %v1808
      %v1815 = vmul.f32 %v1675, %v1808
      %v1816 = vmul.f32 %v1680, %v1808
      %v1817 = vmul.f32 %v1685, %v1808
      %v1818 = vmul.f32 %v1690, %v1808
      %v1819 = vmul.f32 %v1695, %v1808
      %v1820 = vmul.f32 %v1700, %v1808
      %v1821 = vmul.f32 %v1705, %v1808
      %v1822 = vmul.f32 %v1710, %v1808
      %v1823 = vmul.f32 %v1715, %v1808
      %v1824 = vmul.f32 %v1720, %v1808
      %v1825 = vmul.f32 %v1725, %v1808
      %v1826 = vmul.f32 %v1730, %v1808
      %v1827 = vmul.f32 %v1735, %v1808
      %v1828 = vmul.f32 %v1740, %v1808
      %v1829 = vmul.f32 %v1745, %v1808
      %v1830 = vmul.f32 %v1750, %v1808
      %v1831 = vmul.f32 %v1755, %v1808
      %v1832 = vmul.f32 %v1760, %v1808
      %v1833 = vmul.f32 %v1765, %v1808
      %v1834 = vmul.f32 %v1770, %v1808
      %v1835 = vmul.f32 %v1775, %v1808
      %v1836 = vmul.f32 %v1780, %v1808
      %v1837 = vmul.f32 %v1785, %v1808
      %v1838 = vmul.f32 %v1790, %v1808
      %v1839 = vmul.f32 %v1795, %v1808
      %v1840 = vmul.f32 %v1800, %v1808
      %v1841 = vmul.f32 %v1805, %v1808
      %v1842 = vadd.f32 %v1581, %v1810
      %v1843 = vadd.f32 %v1582, %v1811
      %v1844 = vadd.f32 %v1583, %v1812
      %v1845 = vadd.f32 %v1584, %v1813
      %v1846 = vadd.f32 %v1585, %v1814
      %v1847 = vadd.f32 %v1586, %v1815
      %v1848 = vadd.f32 %v1587, %v1816
      %v1849 = vadd.f32 %v1588, %v1817
      %v1850 = vadd.f32 %v1589, %v1818
      %v1851 = vadd.f32 %v1590, %v1819
      %v1852 = vadd.f32 %v1591, %v1820
      %v1853 = vadd.f32 %v1592, %v1821
      %v1854 = vadd.f32 %v1593, %v1822
      %v1855 = vadd.f32 %v1594, %v1823
      %v1856 = vadd.f32 %v1595, %v1824
      %v1857 = vadd.f32 %v1596, %v1825
      %v1858 = vadd.f32 %v1597, %v1826
      %v1859 = vadd.f32 %v1598, %v1827
      %v1860 = vadd.f32 %v1599, %v1828
      %v1861 = vadd.f32 %v1600, %v1829
      %v1862 = vadd.f32 %v1601, %v1830
      %v1863 = vadd.f32 %v1602, %v1831
      %v1864 = vadd.f32 %v1603, %v1832
      %v1865 = vadd.f32 %v1604, %v1833
      %v1866 = vadd.f32 %v1605, %v1834
      %v1867 = vadd.f32 %v1606, %v1835
      %v1868 = vadd.f32 %v1607, %v1836
      %v1869 = vadd.f32 %v1608, %v1837
      %v1870 = vadd.f32 %v1609, %v1838
      %v1871 = vadd.f32 %v1610, %v1839
      %v1872 = vadd.f32 %v1611, %v1840
      %v1873 = vadd.f32 %v1612, %v1841
      %s1874 = scalar_lea.vmem %s192, 48
      %v1875 = vld [vmem:[%s1874] sm:$0xff]
      %v1876 = vld [vmem:[%s1874 + $0x8] sm:$0xff]
      %v1877 = vld [vmem:[%s1874 + $0x18] sm:$0xff]
      %v1878 = vld [vmem:[%s1874 + $0x20] sm:$0xff]
      %v1879 = vld [vmem:[%s1874 + $0x30] sm:$0xff]
      %v1880 = vld [vmem:[%s1874 + $0x38] sm:$0xff]
      %v1881 = vld [vmem:[%s1874 + $0x48] sm:$0xff]
      %v1882 = vld [vmem:[%s1874 + $0x50] sm:$0xff]
      %v1883 = vld [vmem:[%s1874 + $0x60] sm:$0xff]
      %v1884 = vld [vmem:[%s1874 + $0x68] sm:$0xff]
      %v1885 = vld [vmem:[%s1874 + $0x78] sm:$0xff]
      %v1886 = vld [vmem:[%s1874 + $0x80] sm:$0xff]
      %v1887 = vld [vmem:[%s1874 + $0x90] sm:$0xff]
      %v1888 = vld [vmem:[%s1874 + $0x98] sm:$0xff]
      %v1889 = vld [vmem:[%s1874 + $0xa8] sm:$0xff]
      %v1890 = vld [vmem:[%s1874 + $0xb0] sm:$0xff]
      %v1891 = vld [vmem:[%s1874 + $0xc0] sm:$0xff]
      %v1892 = vld [vmem:[%s1874 + $0xc8] sm:$0xff]
      %v1893 = vld [vmem:[%s1874 + $0xd8] sm:$0xff]
      %v1894 = vld [vmem:[%s1874 + $0xe0] sm:$0xff]
      %v1895 = vld [vmem:[%s1874 + $0xf0] sm:$0xff]
      %v1896 = vld [vmem:[%s1874 + $0xf8] sm:$0xff]
      %v1897 = vld [vmem:[%s1874 + $0x108] sm:$0xff]
      %v1898 = vld [vmem:[%s1874 + $0x110] sm:$0xff]
      %v1899 = vld [vmem:[%s1874 + $0x120] sm:$0xff]
      %v1900 = vld [vmem:[%s1874 + $0x128] sm:$0xff]
      %v1901 = vld [vmem:[%s1874 + $0x138] sm:$0xff]
      %v1902 = vld [vmem:[%s1874 + $0x140] sm:$0xff]
      %v1903 = vld [vmem:[%s1874 + $0x150] sm:$0xff]
      %v1904 = vld [vmem:[%s1874 + $0x158] sm:$0xff]
      %v1905 = vld [vmem:[%s1874 + $0x168] sm:$0xff]
      %v1906 = vld [vmem:[%s1874 + $0x170] sm:$0xff]
      %s1907 = scalar_lea.vmem %s1, 6
      %v1908 = vld [vmem:[%s1907] sm:$0x1]
      %1910 = vset.pattern.permute.xlu0 0
      %1911 = vperm.xlu0 %1910, %v1875
      %v1912 = vpop.permute.xlu0 %1911
      %1915 = vset.pattern.permute.xlu0 0
      %1916 = vperm.xlu0 %1915, %v1876
      %v1917 = vpop.permute.xlu0 %1916
      %1920 = vset.pattern.permute.xlu0 0
      %1921 = vperm.xlu0 %1920, %v1877
      %v1922 = vpop.permute.xlu0 %1921
      %1925 = vset.pattern.permute.xlu0 0
      %1926 = vperm.xlu0 %1925, %v1878
      %v1927 = vpop.permute.xlu0 %1926
      %1930 = vset.pattern.permute.xlu0 0
      %1931 = vperm.xlu0 %1930, %v1879
      %v1932 = vpop.permute.xlu0 %1931
      %1935 = vset.pattern.permute.xlu0 0
      %1936 = vperm.xlu0 %1935, %v1880
      %v1937 = vpop.permute.xlu0 %1936
      %1940 = vset.pattern.permute.xlu0 0
      %1941 = vperm.xlu0 %1940, %v1881
      %v1942 = vpop.permute.xlu0 %1941
      %1945 = vset.pattern.permute.xlu0 0
      %1946 = vperm.xlu0 %1945, %v1882
      %v1947 = vpop.permute.xlu0 %1946
      %1950 = vset.pattern.permute.xlu0 0
      %1951 = vperm.xlu0 %1950, %v1883
      %v1952 = vpop.permute.xlu0 %1951
      %1955 = vset.pattern.permute.xlu0 0
      %1956 = vperm.xlu0 %1955, %v1884
      %v1957 = vpop.permute.xlu0 %1956
      %1960 = vset.pattern.permute.xlu0 0
      %1961 = vperm.xlu0 %1960, %v1885
      %v1962 = vpop.permute.xlu0 %1961
      %1965 = vset.pattern.permute.xlu0 0
      %1966 = vperm.xlu0 %1965, %v1886
      %v1967 = vpop.permute.xlu0 %1966
      %1970 = vset.pattern.permute.xlu0 0
      %1971 = vperm.xlu0 %1970, %v1887
      %v1972 = vpop.permute.xlu0 %1971
      %1975 = vset.pattern.permute.xlu0 0
      %1976 = vperm.xlu0 %1975, %v1888
      %v1977 = vpop.permute.xlu0 %1976
      %1980 = vset.pattern.permute.xlu0 0
      %1981 = vperm.xlu0 %1980, %v1889
      %v1982 = vpop.permute.xlu0 %1981
      %1985 = vset.pattern.permute.xlu0 0
      %1986 = vperm.xlu0 %1985, %v1890
      %v1987 = vpop.permute.xlu0 %1986
      %1990 = vset.pattern.permute.xlu0 0
      %1991 = vperm.xlu0 %1990, %v1891
      %v1992 = vpop.permute.xlu0 %1991
      %1995 = vset.pattern.permute.xlu0 0
      %1996 = vperm.xlu0 %1995, %v1892
      %v1997 = vpop.permute.xlu0 %1996
      %2000 = vset.pattern.permute.xlu0 0
      %2001 = vperm.xlu0 %2000, %v1893
      %v2002 = vpop.permute.xlu0 %2001
      %2005 = vset.pattern.permute.xlu0 0
      %2006 = vperm.xlu0 %2005, %v1894
      %v2007 = vpop.permute.xlu0 %2006
      %2010 = vset.pattern.permute.xlu0 0
      %2011 = vperm.xlu0 %2010, %v1895
      %v2012 = vpop.permute.xlu0 %2011
      %2015 = vset.pattern.permute.xlu0 0
      %2016 = vperm.xlu0 %2015, %v1896
      %v2017 = vpop.permute.xlu0 %2016
      %2020 = vset.pattern.permute.xlu0 0
      %2021 = vperm.xlu0 %2020, %v1897
      %v2022 = vpop.permute.xlu0 %2021
      %2025 = vset.pattern.permute.xlu0 0
      %2026 = vperm.xlu0 %2025, %v1898
      %v2027 = vpop.permute.xlu0 %2026
      %2030 = vset.pattern.permute.xlu0 0
      %2031 = vperm.xlu0 %2030, %v1899
      %v2032 = vpop.permute.xlu0 %2031
      %2035 = vset.pattern.permute.xlu0 0
      %2036 = vperm.xlu0 %2035, %v1900
      %v2037 = vpop.permute.xlu0 %2036
      %2040 = vset.pattern.permute.xlu0 0
      %2041 = vperm.xlu0 %2040, %v1901
      %v2042 = vpop.permute.xlu0 %2041
      %2045 = vset.pattern.permute.xlu0 0
      %2046 = vperm.xlu0 %2045, %v1902
      %v2047 = vpop.permute.xlu0 %2046
      %2050 = vset.pattern.permute.xlu0 0
      %2051 = vperm.xlu0 %2050, %v1903
      %v2052 = vpop.permute.xlu0 %2051
      %2055 = vset.pattern.permute.xlu0 0
      %2056 = vperm.xlu0 %2055, %v1904
      %v2057 = vpop.permute.xlu0 %2056
      %2060 = vset.pattern.permute.xlu0 0
      %2061 = vperm.xlu0 %2060, %v1905
      %v2062 = vpop.permute.xlu0 %2061
      %2065 = vset.pattern.permute.xlu0 0
      %2066 = vperm.xlu0 %2065, %v1906
      %v2067 = vpop.permute.xlu0 %2066
      %v2070 = vperm.slane %v1908, 0
      %v2072 = vmul.f32 %v1912, %v2070
      %v2073 = vmul.f32 %v1917, %v2070
      %v2074 = vmul.f32 %v1922, %v2070
      %v2075 = vmul.f32 %v1927, %v2070
      %v2076 = vmul.f32 %v1932, %v2070
      %v2077 = vmul.f32 %v1937, %v2070
      %v2078 = vmul.f32 %v1942, %v2070
      %v2079 = vmul.f32 %v1947, %v2070
      %v2080 = vmul.f32 %v1952, %v2070
      %v2081 = vmul.f32 %v1957, %v2070
      %v2082 = vmul.f32 %v1962, %v2070
      %v2083 = vmul.f32 %v1967, %v2070
      %v2084 = vmul.f32 %v1972, %v2070
      %v2085 = vmul.f32 %v1977, %v2070
      %v2086 = vmul.f32 %v1982, %v2070
      %v2087 = vmul.f32 %v1987, %v2070
      %v2088 = vmul.f32 %v1992, %v2070
      %v2089 = vmul.f32 %v1997, %v2070
      %v2090 = vmul.f32 %v2002, %v2070
      %v2091 = vmul.f32 %v2007, %v2070
      %v2092 = vmul.f32 %v2012, %v2070
      %v2093 = vmul.f32 %v2017, %v2070
      %v2094 = vmul.f32 %v2022, %v2070
      %v2095 = vmul.f32 %v2027, %v2070
      %v2096 = vmul.f32 %v2032, %v2070
      %v2097 = vmul.f32 %v2037, %v2070
      %v2098 = vmul.f32 %v2042, %v2070
      %v2099 = vmul.f32 %v2047, %v2070
      %v2100 = vmul.f32 %v2052, %v2070
      %v2101 = vmul.f32 %v2057, %v2070
      %v2102 = vmul.f32 %v2062, %v2070
      %v2103 = vmul.f32 %v2067, %v2070
      %v2104 = vadd.f32 %v1842, %v2072
      %v2105 = vadd.f32 %v1843, %v2073
      %v2106 = vadd.f32 %v1844, %v2074
      %v2107 = vadd.f32 %v1845, %v2075
      %v2108 = vadd.f32 %v1846, %v2076
      %v2109 = vadd.f32 %v1847, %v2077
      %v2110 = vadd.f32 %v1848, %v2078
      %v2111 = vadd.f32 %v1849, %v2079
      %v2112 = vadd.f32 %v1850, %v2080
      %v2113 = vadd.f32 %v1851, %v2081
      %v2114 = vadd.f32 %v1852, %v2082
      %v2115 = vadd.f32 %v1853, %v2083
      %v2116 = vadd.f32 %v1854, %v2084
      %v2117 = vadd.f32 %v1855, %v2085
      %v2118 = vadd.f32 %v1856, %v2086
      %v2119 = vadd.f32 %v1857, %v2087
      %v2120 = vadd.f32 %v1858, %v2088
      %v2121 = vadd.f32 %v1859, %v2089
      %v2122 = vadd.f32 %v1860, %v2090
      %v2123 = vadd.f32 %v1861, %v2091
      %v2124 = vadd.f32 %v1862, %v2092
      %v2125 = vadd.f32 %v1863, %v2093
      %v2126 = vadd.f32 %v1864, %v2094
      %v2127 = vadd.f32 %v1865, %v2095
      %v2128 = vadd.f32 %v1866, %v2096
      %v2129 = vadd.f32 %v1867, %v2097
      %v2130 = vadd.f32 %v1868, %v2098
      %v2131 = vadd.f32 %v1869, %v2099
      %v2132 = vadd.f32 %v1870, %v2100
      %v2133 = vadd.f32 %v1871, %v2101
      %v2134 = vadd.f32 %v1872, %v2102
      %v2135 = vadd.f32 %v1873, %v2103
      %v2136 = vld [vmem:[%s1874 + $0x1] sm:$0xff]
      %v2137 = vld [vmem:[%s1874 + $0x9] sm:$0xff]
      %v2138 = vld [vmem:[%s1874 + $0x19] sm:$0xff]
      %v2139 = vld [vmem:[%s1874 + $0x21] sm:$0xff]
      %v2140 = vld [vmem:[%s1874 + $0x31] sm:$0xff]
      %v2141 = vld [vmem:[%s1874 + $0x39] sm:$0xff]
      %v2142 = vld [vmem:[%s1874 + $0x49] sm:$0xff]
      %v2143 = vld [vmem:[%s1874 + $0x51] sm:$0xff]
      %v2144 = vld [vmem:[%s1874 + $0x61] sm:$0xff]
      %v2145 = vld [vmem:[%s1874 + $0x69] sm:$0xff]
      %v2146 = vld [vmem:[%s1874 + $0x79] sm:$0xff]
      %v2147 = vld [vmem:[%s1874 + $0x81] sm:$0xff]
      %v2148 = vld [vmem:[%s1874 + $0x91] sm:$0xff]
      %v2149 = vld [vmem:[%s1874 + $0x99] sm:$0xff]
      %v2150 = vld [vmem:[%s1874 + $0xa9] sm:$0xff]
      %v2151 = vld [vmem:[%s1874 + $0xb1] sm:$0xff]
      %v2152 = vld [vmem:[%s1874 + $0xc1] sm:$0xff]
      %v2153 = vld [vmem:[%s1874 + $0xc9] sm:$0xff]
      %v2154 = vld [vmem:[%s1874 + $0xd9] sm:$0xff]
      %v2155 = vld [vmem:[%s1874 + $0xe1] sm:$0xff]
      %v2156 = vld [vmem:[%s1874 + $0xf1] sm:$0xff]
      %v2157 = vld [vmem:[%s1874 + $0xf9] sm:$0xff]
      %v2158 = vld [vmem:[%s1874 + $0x109] sm:$0xff]
      %v2159 = vld [vmem:[%s1874 + $0x111] sm:$0xff]
      %v2160 = vld [vmem:[%s1874 + $0x121] sm:$0xff]
      %v2161 = vld [vmem:[%s1874 + $0x129] sm:$0xff]
      %v2162 = vld [vmem:[%s1874 + $0x139] sm:$0xff]
      %v2163 = vld [vmem:[%s1874 + $0x141] sm:$0xff]
      %v2164 = vld [vmem:[%s1874 + $0x151] sm:$0xff]
      %v2165 = vld [vmem:[%s1874 + $0x159] sm:$0xff]
      %v2166 = vld [vmem:[%s1874 + $0x169] sm:$0xff]
      %v2167 = vld [vmem:[%s1874 + $0x171] sm:$0xff]
      %s2168 = scalar_lea.vmem %s1, 7
      %v2169 = vld [vmem:[%s2168] sm:$0x1]
      %2171 = vset.pattern.permute.xlu0 0
      %2172 = vperm.xlu0 %2171, %v2136
      %v2173 = vpop.permute.xlu0 %2172
      %2176 = vset.pattern.permute.xlu0 0
      %2177 = vperm.xlu0 %2176, %v2137
      %v2178 = vpop.permute.xlu0 %2177
      %2181 = vset.pattern.permute.xlu0 0
      %2182 = vperm.xlu0 %2181, %v2138
      %v2183 = vpop.permute.xlu0 %2182
      %2186 = vset.pattern.permute.xlu0 0
      %2187 = vperm.xlu0 %2186, %v2139
      %v2188 = vpop.permute.xlu0 %2187
      %2191 = vset.pattern.permute.xlu0 0
      %2192 = vperm.xlu0 %2191, %v2140
      %v2193 = vpop.permute.xlu0 %2192
      %2196 = vset.pattern.permute.xlu0 0
      %2197 = vperm.xlu0 %2196, %v2141
      %v2198 = vpop.permute.xlu0 %2197
      %2201 = vset.pattern.permute.xlu0 0
      %2202 = vperm.xlu0 %2201, %v2142
      %v2203 = vpop.permute.xlu0 %2202
      %2206 = vset.pattern.permute.xlu0 0
      %2207 = vperm.xlu0 %2206, %v2143
      %v2208 = vpop.permute.xlu0 %2207
      %2211 = vset.pattern.permute.xlu0 0
      %2212 = vperm.xlu0 %2211, %v2144
      %v2213 = vpop.permute.xlu0 %2212
      %2216 = vset.pattern.permute.xlu0 0
      %2217 = vperm.xlu0 %2216, %v2145
      %v2218 = vpop.permute.xlu0 %2217
      %2221 = vset.pattern.permute.xlu0 0
      %2222 = vperm.xlu0 %2221, %v2146
      %v2223 = vpop.permute.xlu0 %2222
      %2226 = vset.pattern.permute.xlu0 0
      %2227 = vperm.xlu0 %2226, %v2147
      %v2228 = vpop.permute.xlu0 %2227
      %2231 = vset.pattern.permute.xlu0 0
      %2232 = vperm.xlu0 %2231, %v2148
      %v2233 = vpop.permute.xlu0 %2232
      %2236 = vset.pattern.permute.xlu0 0
      %2237 = vperm.xlu0 %2236, %v2149
      %v2238 = vpop.permute.xlu0 %2237
      %2241 = vset.pattern.permute.xlu0 0
      %2242 = vperm.xlu0 %2241, %v2150
      %v2243 = vpop.permute.xlu0 %2242
      %2246 = vset.pattern.permute.xlu0 0
      %2247 = vperm.xlu0 %2246, %v2151
      %v2248 = vpop.permute.xlu0 %2247
      %2251 = vset.pattern.permute.xlu0 0
      %2252 = vperm.xlu0 %2251, %v2152
      %v2253 = vpop.permute.xlu0 %2252
      %2256 = vset.pattern.permute.xlu0 0
      %2257 = vperm.xlu0 %2256, %v2153
      %v2258 = vpop.permute.xlu0 %2257
      %2261 = vset.pattern.permute.xlu0 0
      %2262 = vperm.xlu0 %2261, %v2154
      %v2263 = vpop.permute.xlu0 %2262
      %2266 = vset.pattern.permute.xlu0 0
      %2267 = vperm.xlu0 %2266, %v2155
      %v2268 = vpop.permute.xlu0 %2267
      %2271 = vset.pattern.permute.xlu0 0
      %2272 = vperm.xlu0 %2271, %v2156
      %v2273 = vpop.permute.xlu0 %2272
      %2276 = vset.pattern.permute.xlu0 0
      %2277 = vperm.xlu0 %2276, %v2157
      %v2278 = vpop.permute.xlu0 %2277
      %2281 = vset.pattern.permute.xlu0 0
      %2282 = vperm.xlu0 %2281, %v2158
      %v2283 = vpop.permute.xlu0 %2282
      %2286 = vset.pattern.permute.xlu0 0
      %2287 = vperm.xlu0 %2286, %v2159
      %v2288 = vpop.permute.xlu0 %2287
      %2291 = vset.pattern.permute.xlu0 0
      %2292 = vperm.xlu0 %2291, %v2160
      %v2293 = vpop.permute.xlu0 %2292
      %2296 = vset.pattern.permute.xlu0 0
      %2297 = vperm.xlu0 %2296, %v2161
      %v2298 = vpop.permute.xlu0 %2297
      %2301 = vset.pattern.permute.xlu0 0
      %2302 = vperm.xlu0 %2301, %v2162
      %v2303 = vpop.permute.xlu0 %2302
      %2306 = vset.pattern.permute.xlu0 0
      %2307 = vperm.xlu0 %2306, %v2163
      %v2308 = vpop.permute.xlu0 %2307
      %2311 = vset.pattern.permute.xlu0 0
      %2312 = vperm.xlu0 %2311, %v2164
      %v2313 = vpop.permute.xlu0 %2312
      %2316 = vset.pattern.permute.xlu0 0
      %2317 = vperm.xlu0 %2316, %v2165
      %v2318 = vpop.permute.xlu0 %2317
      %2321 = vset.pattern.permute.xlu0 0
      %2322 = vperm.xlu0 %2321, %v2166
      %v2323 = vpop.permute.xlu0 %2322
      %2326 = vset.pattern.permute.xlu0 0
      %2327 = vperm.xlu0 %2326, %v2167
      %v2328 = vpop.permute.xlu0 %2327
      %v2331 = vperm.slane %v2169, 0
      %v2333 = vmul.f32 %v2173, %v2331
      %v2334 = vmul.f32 %v2178, %v2331
      %v2335 = vmul.f32 %v2183, %v2331
      %v2336 = vmul.f32 %v2188, %v2331
      %v2337 = vmul.f32 %v2193, %v2331
      %v2338 = vmul.f32 %v2198, %v2331
      %v2339 = vmul.f32 %v2203, %v2331
      %v2340 = vmul.f32 %v2208, %v2331
      %v2341 = vmul.f32 %v2213, %v2331
      %v2342 = vmul.f32 %v2218, %v2331
      %v2343 = vmul.f32 %v2223, %v2331
      %v2344 = vmul.f32 %v2228, %v2331
      %v2345 = vmul.f32 %v2233, %v2331
      %v2346 = vmul.f32 %v2238, %v2331
      %v2347 = vmul.f32 %v2243, %v2331
      %v2348 = vmul.f32 %v2248, %v2331
      %v2349 = vmul.f32 %v2253, %v2331
      %v2350 = vmul.f32 %v2258, %v2331
      %v2351 = vmul.f32 %v2263, %v2331
      %v2352 = vmul.f32 %v2268, %v2331
      %v2353 = vmul.f32 %v2273, %v2331
      %v2354 = vmul.f32 %v2278, %v2331
      %v2355 = vmul.f32 %v2283, %v2331
      %v2356 = vmul.f32 %v2288, %v2331
      %v2357 = vmul.f32 %v2293, %v2331
      %v2358 = vmul.f32 %v2298, %v2331
      %v2359 = vmul.f32 %v2303, %v2331
      %v2360 = vmul.f32 %v2308, %v2331
      %v2361 = vmul.f32 %v2313, %v2331
      %v2362 = vmul.f32 %v2318, %v2331
      %v2363 = vmul.f32 %v2323, %v2331
      %v2364 = vmul.f32 %v2328, %v2331
      %v2365 = vadd.f32 %v2104, %v2333
      %v2366 = vadd.f32 %v2105, %v2334
      %v2367 = vadd.f32 %v2106, %v2335
      %v2368 = vadd.f32 %v2107, %v2336
      %v2369 = vadd.f32 %v2108, %v2337
      %v2370 = vadd.f32 %v2109, %v2338
      %v2371 = vadd.f32 %v2110, %v2339
      %v2372 = vadd.f32 %v2111, %v2340
      %v2373 = vadd.f32 %v2112, %v2341
      %v2374 = vadd.f32 %v2113, %v2342
      %v2375 = vadd.f32 %v2114, %v2343
      %v2376 = vadd.f32 %v2115, %v2344
      %v2377 = vadd.f32 %v2116, %v2345
      %v2378 = vadd.f32 %v2117, %v2346
      %v2379 = vadd.f32 %v2118, %v2347
      %v2380 = vadd.f32 %v2119, %v2348
      %v2381 = vadd.f32 %v2120, %v2349
      %v2382 = vadd.f32 %v2121, %v2350
      %v2383 = vadd.f32 %v2122, %v2351
      %v2384 = vadd.f32 %v2123, %v2352
      %v2385 = vadd.f32 %v2124, %v2353
      %v2386 = vadd.f32 %v2125, %v2354
      %v2387 = vadd.f32 %v2126, %v2355
      %v2388 = vadd.f32 %v2127, %v2356
      %v2389 = vadd.f32 %v2128, %v2357
      %v2390 = vadd.f32 %v2129, %v2358
      %v2391 = vadd.f32 %v2130, %v2359
      %v2392 = vadd.f32 %v2131, %v2360
      %v2393 = vadd.f32 %v2132, %v2361
      %v2394 = vadd.f32 %v2133, %v2362
      %v2395 = vadd.f32 %v2134, %v2363
      %v2396 = vadd.f32 %v2135, %v2364
      %v2397 = vld [vmem:[%s1874 + $0x2] sm:$0xff]
      %v2398 = vld [vmem:[%s1874 + $0xa] sm:$0xff]
      %v2399 = vld [vmem:[%s1874 + $0x1a] sm:$0xff]
      %v2400 = vld [vmem:[%s1874 + $0x22] sm:$0xff]
      %v2401 = vld [vmem:[%s1874 + $0x32] sm:$0xff]
      %v2402 = vld [vmem:[%s1874 + $0x3a] sm:$0xff]
      %v2403 = vld [vmem:[%s1874 + $0x4a] sm:$0xff]
      %v2404 = vld [vmem:[%s1874 + $0x52] sm:$0xff]
      %v2405 = vld [vmem:[%s1874 + $0x62] sm:$0xff]
      %v2406 = vld [vmem:[%s1874 + $0x6a] sm:$0xff]
      %v2407 = vld [vmem:[%s1874 + $0x7a] sm:$0xff]
      %v2408 = vld [vmem:[%s1874 + $0x82] sm:$0xff]
      %v2409 = vld [vmem:[%s1874 + $0x92] sm:$0xff]
      %v2410 = vld [vmem:[%s1874 + $0x9a] sm:$0xff]
      %v2411 = vld [vmem:[%s1874 + $0xaa] sm:$0xff]
      %v2412 = vld [vmem:[%s1874 + $0xb2] sm:$0xff]
      %v2413 = vld [vmem:[%s1874 + $0xc2] sm:$0xff]
      %v2414 = vld [vmem:[%s1874 + $0xca] sm:$0xff]
      %v2415 = vld [vmem:[%s1874 + $0xda] sm:$0xff]
      %v2416 = vld [vmem:[%s1874 + $0xe2] sm:$0xff]
      %v2417 = vld [vmem:[%s1874 + $0xf2] sm:$0xff]
      %v2418 = vld [vmem:[%s1874 + $0xfa] sm:$0xff]
      %v2419 = vld [vmem:[%s1874 + $0x10a] sm:$0xff]
      %v2420 = vld [vmem:[%s1874 + $0x112] sm:$0xff]
      %v2421 = vld [vmem:[%s1874 + $0x122] sm:$0xff]
      %v2422 = vld [vmem:[%s1874 + $0x12a] sm:$0xff]
      %v2423 = vld [vmem:[%s1874 + $0x13a] sm:$0xff]
      %v2424 = vld [vmem:[%s1874 + $0x142] sm:$0xff]
      %v2425 = vld [vmem:[%s1874 + $0x152] sm:$0xff]
      %v2426 = vld [vmem:[%s1874 + $0x15a] sm:$0xff]
      %v2427 = vld [vmem:[%s1874 + $0x16a] sm:$0xff]
      %v2428 = vld [vmem:[%s1874 + $0x172] sm:$0xff]
      %s2429 = scalar_lea.vmem %s1, 8
      %v2430 = vld [vmem:[%s2429] sm:$0x1]
      %2432 = vset.pattern.permute.xlu0 0
      %2433 = vperm.xlu0 %2432, %v2397
      %v2434 = vpop.permute.xlu0 %2433
      %2437 = vset.pattern.permute.xlu0 0
      %2438 = vperm.xlu0 %2437, %v2398
      %v2439 = vpop.permute.xlu0 %2438
      %2442 = vset.pattern.permute.xlu0 0
      %2443 = vperm.xlu0 %2442, %v2399
      %v2444 = vpop.permute.xlu0 %2443
      %2447 = vset.pattern.permute.xlu0 0
      %2448 = vperm.xlu0 %2447, %v2400
      %v2449 = vpop.permute.xlu0 %2448
      %2452 = vset.pattern.permute.xlu0 0
      %2453 = vperm.xlu0 %2452, %v2401
      %v2454 = vpop.permute.xlu0 %2453
      %2457 = vset.pattern.permute.xlu0 0
      %2458 = vperm.xlu0 %2457, %v2402
      %v2459 = vpop.permute.xlu0 %2458
      %2462 = vset.pattern.permute.xlu0 0
      %2463 = vperm.xlu0 %2462, %v2403
      %v2464 = vpop.permute.xlu0 %2463
      %2467 = vset.pattern.permute.xlu0 0
      %2468 = vperm.xlu0 %2467, %v2404
      %v2469 = vpop.permute.xlu0 %2468
      %2472 = vset.pattern.permute.xlu0 0
      %2473 = vperm.xlu0 %2472, %v2405
      %v2474 = vpop.permute.xlu0 %2473
      %2477 = vset.pattern.permute.xlu0 0
      %2478 = vperm.xlu0 %2477, %v2406
      %v2479 = vpop.permute.xlu0 %2478
      %2482 = vset.pattern.permute.xlu0 0
      %2483 = vperm.xlu0 %2482, %v2407
      %v2484 = vpop.permute.xlu0 %2483
      %2487 = vset.pattern.permute.xlu0 0
      %2488 = vperm.xlu0 %2487, %v2408
      %v2489 = vpop.permute.xlu0 %2488
      %2492 = vset.pattern.permute.xlu0 0
      %2493 = vperm.xlu0 %2492, %v2409
      %v2494 = vpop.permute.xlu0 %2493
      %2497 = vset.pattern.permute.xlu0 0
      %2498 = vperm.xlu0 %2497, %v2410
      %v2499 = vpop.permute.xlu0 %2498
      %2502 = vset.pattern.permute.xlu0 0
      %2503 = vperm.xlu0 %2502, %v2411
      %v2504 = vpop.permute.xlu0 %2503
      %2507 = vset.pattern.permute.xlu0 0
      %2508 = vperm.xlu0 %2507, %v2412
      %v2509 = vpop.permute.xlu0 %2508
      %2512 = vset.pattern.permute.xlu0 0
      %2513 = vperm.xlu0 %2512, %v2413
      %v2514 = vpop.permute.xlu0 %2513
      %2517 = vset.pattern.permute.xlu0 0
      %2518 = vperm.xlu0 %2517, %v2414
      %v2519 = vpop.permute.xlu0 %2518
      %2522 = vset.pattern.permute.xlu0 0
      %2523 = vperm.xlu0 %2522, %v2415
      %v2524 = vpop.permute.xlu0 %2523
      %2527 = vset.pattern.permute.xlu0 0
      %2528 = vperm.xlu0 %2527, %v2416
      %v2529 = vpop.permute.xlu0 %2528
      %2532 = vset.pattern.permute.xlu0 0
      %2533 = vperm.xlu0 %2532, %v2417
      %v2534 = vpop.permute.xlu0 %2533
      %2537 = vset.pattern.permute.xlu0 0
      %2538 = vperm.xlu0 %2537, %v2418
      %v2539 = vpop.permute.xlu0 %2538
      %2542 = vset.pattern.permute.xlu0 0
      %2543 = vperm.xlu0 %2542, %v2419
      %v2544 = vpop.permute.xlu0 %2543
      %2547 = vset.pattern.permute.xlu0 0
      %2548 = vperm.xlu0 %2547, %v2420
      %v2549 = vpop.permute.xlu0 %2548
      %2552 = vset.pattern.permute.xlu0 0
      %2553 = vperm.xlu0 %2552, %v2421
      %v2554 = vpop.permute.xlu0 %2553
      %2557 = vset.pattern.permute.xlu0 0
      %2558 = vperm.xlu0 %2557, %v2422
      %v2559 = vpop.permute.xlu0 %2558
      %2562 = vset.pattern.permute.xlu0 0
      %2563 = vperm.xlu0 %2562, %v2423
      %v2564 = vpop.permute.xlu0 %2563
      %2567 = vset.pattern.permute.xlu0 0
      %2568 = vperm.xlu0 %2567, %v2424
      %v2569 = vpop.permute.xlu0 %2568
      %2572 = vset.pattern.permute.xlu0 0
      %2573 = vperm.xlu0 %2572, %v2425
      %v2574 = vpop.permute.xlu0 %2573
      %2577 = vset.pattern.permute.xlu0 0
      %2578 = vperm.xlu0 %2577, %v2426
      %v2579 = vpop.permute.xlu0 %2578
      %2582 = vset.pattern.permute.xlu0 0
      %2583 = vperm.xlu0 %2582, %v2427
      %v2584 = vpop.permute.xlu0 %2583
      %2587 = vset.pattern.permute.xlu0 0
      %2588 = vperm.xlu0 %2587, %v2428
      %v2589 = vpop.permute.xlu0 %2588
      %v2592 = vperm.slane %v2430, 0
      %v2594 = vmul.f32 %v2434, %v2592
      %v2595 = vmul.f32 %v2439, %v2592
      %v2596 = vmul.f32 %v2444, %v2592
      %v2597 = vmul.f32 %v2449, %v2592
      %v2598 = vmul.f32 %v2454, %v2592
      %v2599 = vmul.f32 %v2459, %v2592
      %v2600 = vmul.f32 %v2464, %v2592
      %v2601 = vmul.f32 %v2469, %v2592
      %v2602 = vmul.f32 %v2474, %v2592
      %v2603 = vmul.f32 %v2479, %v2592
      %v2604 = vmul.f32 %v2484, %v2592
      %v2605 = vmul.f32 %v2489, %v2592
      %v2606 = vmul.f32 %v2494, %v2592
      %v2607 = vmul.f32 %v2499, %v2592
      %v2608 = vmul.f32 %v2504, %v2592
      %v2609 = vmul.f32 %v2509, %v2592
      %v2610 = vmul.f32 %v2514, %v2592
      %v2611 = vmul.f32 %v2519, %v2592
      %v2612 = vmul.f32 %v2524, %v2592
      %v2613 = vmul.f32 %v2529, %v2592
      %v2614 = vmul.f32 %v2534, %v2592
      %v2615 = vmul.f32 %v2539, %v2592
      %v2616 = vmul.f32 %v2544, %v2592
      %v2617 = vmul.f32 %v2549, %v2592
      %v2618 = vmul.f32 %v2554, %v2592
      %v2619 = vmul.f32 %v2559, %v2592
      %v2620 = vmul.f32 %v2564, %v2592
      %v2621 = vmul.f32 %v2569, %v2592
      %v2622 = vmul.f32 %v2574, %v2592
      %v2623 = vmul.f32 %v2579, %v2592
      %v2624 = vmul.f32 %v2584, %v2592
      %v2625 = vmul.f32 %v2589, %v2592
      %v2626 = vadd.f32 %v2365, %v2594
      %v2627 = vadd.f32 %v2366, %v2595
      %v2628 = vadd.f32 %v2367, %v2596
      %v2629 = vadd.f32 %v2368, %v2597
      %v2630 = vadd.f32 %v2369, %v2598
      %v2631 = vadd.f32 %v2370, %v2599
      %v2632 = vadd.f32 %v2371, %v2600
      %v2633 = vadd.f32 %v2372, %v2601
      %v2634 = vadd.f32 %v2373, %v2602
      %v2635 = vadd.f32 %v2374, %v2603
      %v2636 = vadd.f32 %v2375, %v2604
      %v2637 = vadd.f32 %v2376, %v2605
      %v2638 = vadd.f32 %v2377, %v2606
      %v2639 = vadd.f32 %v2378, %v2607
      %v2640 = vadd.f32 %v2379, %v2608
      %v2641 = vadd.f32 %v2380, %v2609
      %v2642 = vadd.f32 %v2381, %v2610
      %v2643 = vadd.f32 %v2382, %v2611
      %v2644 = vadd.f32 %v2383, %v2612
      %v2645 = vadd.f32 %v2384, %v2613
      %v2646 = vadd.f32 %v2385, %v2614
      %v2647 = vadd.f32 %v2386, %v2615
      %v2648 = vadd.f32 %v2387, %v2616
      %v2649 = vadd.f32 %v2388, %v2617
      %v2650 = vadd.f32 %v2389, %v2618
      %v2651 = vadd.f32 %v2390, %v2619
      %v2652 = vadd.f32 %v2391, %v2620
      %v2653 = vadd.f32 %v2392, %v2621
      %v2654 = vadd.f32 %v2393, %v2622
      %v2655 = vadd.f32 %v2394, %v2623
      %v2656 = vadd.f32 %v2395, %v2624
      %v2657 = vadd.f32 %v2396, %v2625
      %v2658 = vmax.f32 %v2626, 0.0
      %v2659 = vmax.f32 %v2627, 0.0
      %v2660 = vmax.f32 %v2628, 0.0
      %v2661 = vmax.f32 %v2629, 0.0
      %v2662 = vmax.f32 %v2630, 0.0
      %v2663 = vmax.f32 %v2631, 0.0
      %v2664 = vmax.f32 %v2632, 0.0
      %v2665 = vmax.f32 %v2633, 0.0
      %v2666 = vmax.f32 %v2634, 0.0
      %v2667 = vmax.f32 %v2635, 0.0
      %v2668 = vmax.f32 %v2636, 0.0
      %v2669 = vmax.f32 %v2637, 0.0
      %v2670 = vmax.f32 %v2638, 0.0
      %v2671 = vmax.f32 %v2639, 0.0
      %v2672 = vmax.f32 %v2640, 0.0
      %v2673 = vmax.f32 %v2641, 0.0
      %v2674 = vmax.f32 %v2642, 0.0
      %v2675 = vmax.f32 %v2643, 0.0
      %v2676 = vmax.f32 %v2644, 0.0
      %v2677 = vmax.f32 %v2645, 0.0
      %v2678 = vmax.f32 %v2646, 0.0
      %v2679 = vmax.f32 %v2647, 0.0
      %v2680 = vmax.f32 %v2648, 0.0
      %v2681 = vmax.f32 %v2649, 0.0
      %v2682 = vmax.f32 %v2650, 0.0
      %v2683 = vmax.f32 %v2651, 0.0
      %v2684 = vmax.f32 %v2652, 0.0
      %v2685 = vmax.f32 %v2653, 0.0
      %v2686 = vmax.f32 %v2654, 0.0
      %v2687 = vmax.f32 %v2655, 0.0
      %v2688 = vmax.f32 %v2656, 0.0
      %v2689 = vmax.f32 %v2657, 0.0
      %s2690 = scalar_lea.vmem [#allocation2], 24
      %2691 = vst.msk [vmem:[%s2690 + $0x1] sm:$0xff] %vm198, %v2658
      %2692 = vst.msk [vmem:[%s2690 + $0x9] sm:$0xff] %vm198, %v2659
      %2693 = vst.msk [vmem:[%s2690 + $0x19] sm:$0xff] %vm198, %v2660
      %2694 = vst.msk [vmem:[%s2690 + $0x21] sm:$0xff] %vm198, %v2661
      %2695 = vst.msk [vmem:[%s2690 + $0x31] sm:$0xff] %vm198, %v2662
      %2696 = vst.msk [vmem:[%s2690 + $0x39] sm:$0xff] %vm198, %v2663
      %2697 = vst.msk [vmem:[%s2690 + $0x49] sm:$0xff] %vm198, %v2664
      %2698 = vst.msk [vmem:[%s2690 + $0x51] sm:$0xff] %vm198, %v2665
      %2699 = vst.msk [vmem:[%s2690 + $0x61] sm:$0xff] %vm198, %v2666
      %2700 = vst.msk [vmem:[%s2690 + $0x69] sm:$0xff] %vm198, %v2667
      %2701 = vst.msk [vmem:[%s2690 + $0x79] sm:$0xff] %vm198, %v2668
      %2702 = vst.msk [vmem:[%s2690 + $0x81] sm:$0xff] %vm198, %v2669
      %2703 = vst.msk [vmem:[%s2690 + $0x91] sm:$0xff] %vm198, %v2670
      %2704 = vst.msk [vmem:[%s2690 + $0x99] sm:$0xff] %vm198, %v2671
      %2705 = vst.msk [vmem:[%s2690 + $0xa9] sm:$0xff] %vm198, %v2672
      %2706 = vst.msk [vmem:[%s2690 + $0xb1] sm:$0xff] %vm198, %v2673
      %2707 = vst.msk [vmem:[%s2690 + $0xc1] sm:$0xff] %vm198, %v2674
      %2708 = vst.msk [vmem:[%s2690 + $0xc9] sm:$0xff] %vm198, %v2675
      %2709 = vst.msk [vmem:[%s2690 + $0xd9] sm:$0xff] %vm198, %v2676
      %2710 = vst.msk [vmem:[%s2690 + $0xe1] sm:$0xff] %vm198, %v2677
      %2711 = vst.msk [vmem:[%s2690 + $0xf1] sm:$0xff] %vm198, %v2678
      %2712 = vst.msk [vmem:[%s2690 + $0xf9] sm:$0xff] %vm198, %v2679
      %2713 = vst.msk [vmem:[%s2690 + $0x109] sm:$0xff] %vm198, %v2680
      %2714 = vst.msk [vmem:[%s2690 + $0x111] sm:$0xff] %vm198, %v2681
      %2715 = vst.msk [vmem:[%s2690 + $0x121] sm:$0xff] %vm198, %v2682
      %2716 = vst.msk [vmem:[%s2690 + $0x129] sm:$0xff] %vm198, %v2683
      %2717 = vst.msk [vmem:[%s2690 + $0x139] sm:$0xff] %vm198, %v2684
      %2718 = vst.msk [vmem:[%s2690 + $0x141] sm:$0xff] %vm198, %v2685
      %2719 = vst.msk [vmem:[%s2690 + $0x151] sm:$0xff] %vm198, %v2686
      %2720 = vst.msk [vmem:[%s2690 + $0x159] sm:$0xff] %vm198, %v2687
      %2721 = vst.msk [vmem:[%s2690 + $0x169] sm:$0xff] %vm198, %v2688
      %2722 = vst.msk [vmem:[%s2690 + $0x171] sm:$0xff] %vm198, %v2689
      loop: start=0, step=1, limit=9
      $region37: #{vdsr_forward.1} parent=35 // loop_pre_header
        _
      $region38: #{vdsr_forward.1} parent=35 // loop_header
        %s2724 = sphi 0, %s2728
        %p2725 = scmp.ge.s32.totalorder %s2724, 9
      $region39: #{vdsr_forward.1} parent=35 // loop_header_branch
        %2727 = sbr.rel (%p2725) target = $region43
      $region40: #{vdsr_forward.1} parent=35 // loop_body
        %v2729 = vld [vmem:[#allocation2] sm:$0xff]
        %v2730 = vld [vmem:[#allocation2 + $0x8] sm:$0xff]
        %v2731 = vld [vmem:[#allocation2 + $0x18] sm:$0xff]
        %v2732 = vld [vmem:[#allocation2 + $0x20] sm:$0xff]
        %v2733 = vld [vmem:[#allocation2 + $0x30] sm:$0xff]
        %v2734 = vld [vmem:[#allocation2 + $0x38] sm:$0xff]
        %v2735 = vld [vmem:[#allocation2 + $0x48] sm:$0xff]
        %v2736 = vld [vmem:[#allocation2 + $0x50] sm:$0xff]
        %v2737 = vld [vmem:[#allocation2 + $0x60] sm:$0xff]
        %v2738 = vld [vmem:[#allocation2 + $0x68] sm:$0xff]
        %v2739 = vld [vmem:[#allocation2 + $0x78] sm:$0xff]
        %v2740 = vld [vmem:[#allocation2 + $0x80] sm:$0xff]
        %v2741 = vld [vmem:[#allocation2 + $0x90] sm:$0xff]
        %v2742 = vld [vmem:[#allocation2 + $0x98] sm:$0xff]
        %v2743 = vld [vmem:[#allocation2 + $0xa8] sm:$0xff]
        %v2744 = vld [vmem:[#allocation2 + $0xb0] sm:$0xff]
        %v2745 = vld [vmem:[#allocation2 + $0xc0] sm:$0xff]
        %v2746 = vld [vmem:[#allocation2 + $0xc8] sm:$0xff]
        %v2747 = vld [vmem:[#allocation2 + $0xd8] sm:$0xff]
        %v2748 = vld [vmem:[#allocation2 + $0xe0] sm:$0xff]
        %v2749 = vld [vmem:[#allocation2 + $0xf0] sm:$0xff]
        %v2750 = vld [vmem:[#allocation2 + $0xf8] sm:$0xff]
        %v2751 = vld [vmem:[#allocation2 + $0x108] sm:$0xff]
        %v2752 = vld [vmem:[#allocation2 + $0x110] sm:$0xff]
        %v2753 = vld [vmem:[#allocation2 + $0x120] sm:$0xff]
        %v2754 = vld [vmem:[#allocation2 + $0x128] sm:$0xff]
        %v2755 = vld [vmem:[#allocation2 + $0x138] sm:$0xff]
        %v2756 = vld [vmem:[#allocation2 + $0x140] sm:$0xff]
        %v2757 = vld [vmem:[#allocation2 + $0x150] sm:$0xff]
        %v2758 = vld [vmem:[#allocation2 + $0x158] sm:$0xff]
        %v2759 = vld [vmem:[#allocation2 + $0x168] sm:$0xff]
        %v2760 = vld [vmem:[#allocation2 + $0x170] sm:$0xff]
        %v2761 = vld [vmem:[#allocation2 + $0x1] sm:$0xff]
        %v2762 = vld [vmem:[#allocation2 + $0x9] sm:$0xff]
        %v2763 = vld [vmem:[#allocation2 + $0x19] sm:$0xff]
        %v2764 = vld [vmem:[#allocation2 + $0x21] sm:$0xff]
        %v2765 = vld [vmem:[#allocation2 + $0x31] sm:$0xff]
        %v2766 = vld [vmem:[#allocation2 + $0x39] sm:$0xff]
        %v2767 = vld [vmem:[#allocation2 + $0x49] sm:$0xff]
        %v2768 = vld [vmem:[#allocation2 + $0x51] sm:$0xff]
        %v2769 = vld [vmem:[#allocation2 + $0x61] sm:$0xff]
        %v2770 = vld [vmem:[#allocation2 + $0x69] sm:$0xff]
        %v2771 = vld [vmem:[#allocation2 + $0x79] sm:$0xff]
        %v2772 = vld [vmem:[#allocation2 + $0x81] sm:$0xff]
        %v2773 = vld [vmem:[#allocation2 + $0x91] sm:$0xff]
        %v2774 = vld [vmem:[#allocation2 + $0x99] sm:$0xff]
        %v2775 = vld [vmem:[#allocation2 + $0xa9] sm:$0xff]
        %v2776 = vld [vmem:[#allocation2 + $0xb1] sm:$0xff]
        %v2777 = vld [vmem:[#allocation2 + $0xc1] sm:$0xff]
        %v2778 = vld [vmem:[#allocation2 + $0xc9] sm:$0xff]
        %v2779 = vld [vmem:[#allocation2 + $0xd9] sm:$0xff]
        %v2780 = vld [vmem:[#allocation2 + $0xe1] sm:$0xff]
        %v2781 = vld [vmem:[#allocation2 + $0xf1] sm:$0xff]
        %v2782 = vld [vmem:[#allocation2 + $0xf9] sm:$0xff]
        %v2783 = vld [vmem:[#allocation2 + $0x109] sm:$0xff]
        %v2784 = vld [vmem:[#allocation2 + $0x111] sm:$0xff]
        %v2785 = vld [vmem:[#allocation2 + $0x121] sm:$0xff]
        %v2786 = vld [vmem:[#allocation2 + $0x129] sm:$0xff]
        %v2787 = vld [vmem:[#allocation2 + $0x139] sm:$0xff]
        %v2788 = vld [vmem:[#allocation2 + $0x141] sm:$0xff]
        %v2789 = vld [vmem:[#allocation2 + $0x151] sm:$0xff]
        %v2790 = vld [vmem:[#allocation2 + $0x159] sm:$0xff]
        %v2791 = vld [vmem:[#allocation2 + $0x169] sm:$0xff]
        %v2792 = vld [vmem:[#allocation2 + $0x171] sm:$0xff]
        %v2793 = vld [vmem:[#allocation2 + $0x2] sm:$0xff]
        %v2794 = vld [vmem:[#allocation2 + $0xa] sm:$0xff]
        %v2795 = vld [vmem:[#allocation2 + $0x1a] sm:$0xff]
        %v2796 = vld [vmem:[#allocation2 + $0x22] sm:$0xff]
        %v2797 = vld [vmem:[#allocation2 + $0x32] sm:$0xff]
        %v2798 = vld [vmem:[#allocation2 + $0x3a] sm:$0xff]
        %v2799 = vld [vmem:[#allocation2 + $0x4a] sm:$0xff]
        %v2800 = vld [vmem:[#allocation2 + $0x52] sm:$0xff]
        %v2801 = vld [vmem:[#allocation2 + $0x62] sm:$0xff]
        %v2802 = vld [vmem:[#allocation2 + $0x6a] sm:$0xff]
        %v2803 = vld [vmem:[#allocation2 + $0x7a] sm:$0xff]
        %v2804 = vld [vmem:[#allocation2 + $0x82] sm:$0xff]
        %v2805 = vld [vmem:[#allocation2 + $0x92] sm:$0xff]
        %v2806 = vld [vmem:[#allocation2 + $0x9a] sm:$0xff]
        %v2807 = vld [vmem:[#allocation2 + $0xaa] sm:$0xff]
        %v2808 = vld [vmem:[#allocation2 + $0xb2] sm:$0xff]
        %v2809 = vld [vmem:[#allocation2 + $0xc2] sm:$0xff]
        %v2810 = vld [vmem:[#allocation2 + $0xca] sm:$0xff]
        %v2811 = vld [vmem:[#allocation2 + $0xda] sm:$0xff]
        %v2812 = vld [vmem:[#allocation2 + $0xe2] sm:$0xff]
        %v2813 = vld [vmem:[#allocation2 + $0xf2] sm:$0xff]
        %v2814 = vld [vmem:[#allocation2 + $0xfa] sm:$0xff]
        %v2815 = vld [vmem:[#allocation2 + $0x10a] sm:$0xff]
        %v2816 = vld [vmem:[#allocation2 + $0x112] sm:$0xff]
        %v2817 = vld [vmem:[#allocation2 + $0x122] sm:$0xff]
        %v2818 = vld [vmem:[#allocation2 + $0x12a] sm:$0xff]
        %v2819 = vld [vmem:[#allocation2 + $0x13a] sm:$0xff]
        %v2820 = vld [vmem:[#allocation2 + $0x142] sm:$0xff]
        %v2821 = vld [vmem:[#allocation2 + $0x152] sm:$0xff]
        %v2822 = vld [vmem:[#allocation2 + $0x15a] sm:$0xff]
        %v2823 = vld [vmem:[#allocation2 + $0x16a] sm:$0xff]
        %v2824 = vld [vmem:[#allocation2 + $0x172] sm:$0xff]
        %2857 = vrot.lane.b32.xlu0 %v2761, 64
        %v2858 = vpop.permute.xlu0 %2857
        %2859 = vrot.lane.b32.xlu0 %v2762, 64
        %v2860 = vpop.permute.xlu0 %2859
        %2861 = vrot.lane.b32.xlu0 %v2763, 64
        %v2862 = vpop.permute.xlu0 %2861
        %2863 = vrot.lane.b32.xlu0 %v2764, 64
        %v2864 = vpop.permute.xlu0 %2863
        %2865 = vrot.lane.b32.xlu0 %v2765, 64
        %v2866 = vpop.permute.xlu0 %2865
        %2867 = vrot.lane.b32.xlu0 %v2766, 64
        %v2868 = vpop.permute.xlu0 %2867
        %2869 = vrot.lane.b32.xlu0 %v2767, 64
        %v2870 = vpop.permute.xlu0 %2869
        %2871 = vrot.lane.b32.xlu0 %v2768, 64
        %v2872 = vpop.permute.xlu0 %2871
        %2873 = vrot.lane.b32.xlu0 %v2769, 64
        %v2874 = vpop.permute.xlu0 %2873
        %2875 = vrot.lane.b32.xlu0 %v2770, 64
        %v2876 = vpop.permute.xlu0 %2875
        %2877 = vrot.lane.b32.xlu0 %v2771, 64
        %v2878 = vpop.permute.xlu0 %2877
        %2879 = vrot.lane.b32.xlu0 %v2772, 64
        %v2880 = vpop.permute.xlu0 %2879
        %2881 = vrot.lane.b32.xlu0 %v2773, 64
        %v2882 = vpop.permute.xlu0 %2881
        %2883 = vrot.lane.b32.xlu0 %v2774, 64
        %v2884 = vpop.permute.xlu0 %2883
        %2885 = vrot.lane.b32.xlu0 %v2775, 64
        %v2886 = vpop.permute.xlu0 %2885
        %2887 = vrot.lane.b32.xlu0 %v2776, 64
        %v2888 = vpop.permute.xlu0 %2887
        %2889 = vrot.lane.b32.xlu0 %v2777, 64
        %v2890 = vpop.permute.xlu0 %2889
        %2891 = vrot.lane.b32.xlu0 %v2778, 64
        %v2892 = vpop.permute.xlu0 %2891
        %2893 = vrot.lane.b32.xlu0 %v2779, 64
        %v2894 = vpop.permute.xlu0 %2893
        %2895 = vrot.lane.b32.xlu0 %v2780, 64
        %v2896 = vpop.permute.xlu0 %2895
        %2897 = vrot.lane.b32.xlu0 %v2781, 64
        %v2898 = vpop.permute.xlu0 %2897
        %2899 = vrot.lane.b32.xlu0 %v2782, 64
        %v2900 = vpop.permute.xlu0 %2899
        %2901 = vrot.lane.b32.xlu0 %v2783, 64
        %v2902 = vpop.permute.xlu0 %2901
        %2903 = vrot.lane.b32.xlu0 %v2784, 64
        %v2904 = vpop.permute.xlu0 %2903
        %2905 = vrot.lane.b32.xlu0 %v2785, 64
        %v2906 = vpop.permute.xlu0 %2905
        %2907 = vrot.lane.b32.xlu0 %v2786, 64
        %v2908 = vpop.permute.xlu0 %2907
        %2909 = vrot.lane.b32.xlu0 %v2787, 64
        %v2910 = vpop.permute.xlu0 %2909
        %2911 = vrot.lane.b32.xlu0 %v2788, 64
        %v2912 = vpop.permute.xlu0 %2911
        %2913 = vrot.lane.b32.xlu0 %v2789, 64
        %v2914 = vpop.permute.xlu0 %2913
        %2915 = vrot.lane.b32.xlu0 %v2790, 64
        %v2916 = vpop.permute.xlu0 %2915
        %2917 = vrot.lane.b32.xlu0 %v2791, 64
        %v2918 = vpop.permute.xlu0 %2917
        %2919 = vrot.lane.b32.xlu0 %v2792, 64
        %v2920 = vpop.permute.xlu0 %2919
        %v2953 = vsel %vm198, %v2729, %v2858
        %v2954 = vsel %vm198, %v2730, %v2860
        %v2955 = vsel %vm198, %v2731, %v2862
        %v2956 = vsel %vm198, %v2732, %v2864
        %v2957 = vsel %vm198, %v2733, %v2866
        %v2958 = vsel %vm198, %v2734, %v2868
        %v2959 = vsel %vm198, %v2735, %v2870
        %v2960 = vsel %vm198, %v2736, %v2872
        %v2961 = vsel %vm198, %v2737, %v2874
        %v2962 = vsel %vm198, %v2738, %v2876
        %v2963 = vsel %vm198, %v2739, %v2878
        %v2964 = vsel %vm198, %v2740, %v2880
        %v2965 = vsel %vm198, %v2741, %v2882
        %v2966 = vsel %vm198, %v2742, %v2884
        %v2967 = vsel %vm198, %v2743, %v2886
        %v2968 = vsel %vm198, %v2744, %v2888
        %v2969 = vsel %vm198, %v2745, %v2890
        %v2970 = vsel %vm198, %v2746, %v2892
        %v2971 = vsel %vm198, %v2747, %v2894
        %v2972 = vsel %vm198, %v2748, %v2896
        %v2973 = vsel %vm198, %v2749, %v2898
        %v2974 = vsel %vm198, %v2750, %v2900
        %v2975 = vsel %vm198, %v2751, %v2902
        %v2976 = vsel %vm198, %v2752, %v2904
        %v2977 = vsel %vm198, %v2753, %v2906
        %v2978 = vsel %vm198, %v2754, %v2908
        %v2979 = vsel %vm198, %v2755, %v2910
        %v2980 = vsel %vm198, %v2756, %v2912
        %v2981 = vsel %vm198, %v2757, %v2914
        %v2982 = vsel %vm198, %v2758, %v2916
        %v2983 = vsel %vm198, %v2759, %v2918
        %v2984 = vsel %vm198, %v2760, %v2920
        %s2985 = smul.u32 %s2724, 6
        %s2986 = smul.u32 %s2985, 192
        %s2987 = scalar_lea.vmem %s2, %s2986
        %v2988 = vld [vmem:[%s2987] sm:$0xff]
        %v2989 = vld [vmem:[%s2987 + $0x8] sm:$0xff]
        %v2990 = vld [vmem:[%s2987 + $0x10] sm:$0xff]
        %v2991 = vld [vmem:[%s2987 + $0x18] sm:$0xff]
        %v2992 = vld [vmem:[%s2987 + $0x20] sm:$0xff]
        %v2993 = vld [vmem:[%s2987 + $0x28] sm:$0xff]
        %v2994 = vld [vmem:[%s2987 + $0x30] sm:$0xff]
        %v2995 = vld [vmem:[%s2987 + $0x38] sm:$0xff]
        %v2996 = vld [vmem:[%s2987 + $0x40] sm:$0xff]
        %v2997 = vld [vmem:[%s2987 + $0x48] sm:$0xff]
        %v2998 = vld [vmem:[%s2987 + $0x50] sm:$0xff]
        %v2999 = vld [vmem:[%s2987 + $0x58] sm:$0xff]
        %v3000 = vld [vmem:[%s2987 + $0x60] sm:$0xff]
        %v3001 = vld [vmem:[%s2987 + $0x68] sm:$0xff]
        %v3002 = vld [vmem:[%s2987 + $0x70] sm:$0xff]
        %v3003 = vld [vmem:[%s2987 + $0x78] sm:$0xff]
        %v3004 = vld [vmem:[%s2987 + $0x80] sm:$0xff]
        %v3005 = vld [vmem:[%s2987 + $0x88] sm:$0xff]
        %v3006 = vld [vmem:[%s2987 + $0x90] sm:$0xff]
        %v3007 = vld [vmem:[%s2987 + $0x98] sm:$0xff]
        %v3008 = vld [vmem:[%s2987 + $0xa0] sm:$0xff]
        %v3009 = vld [vmem:[%s2987 + $0xa8] sm:$0xff]
        %v3010 = vld [vmem:[%s2987 + $0xb0] sm:$0xff]
        %v3011 = vld [vmem:[%s2987 + $0xb8] sm:$0xff]
        %v3012 = vld [vmem:[%s2690] sm:$0xff]
        %v3013 = vld [vmem:[%s2690 + $0x8] sm:$0xff]
        %v3014 = vld [vmem:[%s2690 + $0x18] sm:$0xff]
        %v3015 = vld [vmem:[%s2690 + $0x20] sm:$0xff]
        %v3016 = vld [vmem:[%s2690 + $0x30] sm:$0xff]
        %v3017 = vld [vmem:[%s2690 + $0x38] sm:$0xff]
        %v3018 = vld [vmem:[%s2690 + $0x48] sm:$0xff]
        %v3019 = vld [vmem:[%s2690 + $0x50] sm:$0xff]
        %v3020 = vld [vmem:[%s2690 + $0x60] sm:$0xff]
        %v3021 = vld [vmem:[%s2690 + $0x68] sm:$0xff]
        %v3022 = vld [vmem:[%s2690 + $0x78] sm:$0xff]
        %v3023 = vld [vmem:[%s2690 + $0x80] sm:$0xff]
        %v3024 = vld [vmem:[%s2690 + $0x90] sm:$0xff]
        %v3025 = vld [vmem:[%s2690 + $0x98] sm:$0xff]
        %v3026 = vld [vmem:[%s2690 + $0xa8] sm:$0xff]
        %v3027 = vld [vmem:[%s2690 + $0xb0] sm:$0xff]
        %v3028 = vld [vmem:[%s2690 + $0xc0] sm:$0xff]
        %v3029 = vld [vmem:[%s2690 + $0xc8] sm:$0xff]
        %v3030 = vld [vmem:[%s2690 + $0xd8] sm:$0xff]
        %v3031 = vld [vmem:[%s2690 + $0xe0] sm:$0xff]
        %v3032 = vld [vmem:[%s2690 + $0xf0] sm:$0xff]
        %v3033 = vld [vmem:[%s2690 + $0xf8] sm:$0xff]
        %v3034 = vld [vmem:[%s2690 + $0x108] sm:$0xff]
        %v3035 = vld [vmem:[%s2690 + $0x110] sm:$0xff]
        %v3036 = vld [vmem:[%s2690 + $0x120] sm:$0xff]
        %v3037 = vld [vmem:[%s2690 + $0x128] sm:$0xff]
        %v3038 = vld [vmem:[%s2690 + $0x138] sm:$0xff]
        %v3039 = vld [vmem:[%s2690 + $0x140] sm:$0xff]
        %v3040 = vld [vmem:[%s2690 + $0x150] sm:$0xff]
        %v3041 = vld [vmem:[%s2690 + $0x158] sm:$0xff]
        %v3042 = vld [vmem:[%s2690 + $0x168] sm:$0xff]
        %v3043 = vld [vmem:[%s2690 + $0x170] sm:$0xff]
        %v3044 = vld [vmem:[%s2690 + $0x1] sm:$0xff]
        %v3045 = vld [vmem:[%s2690 + $0x9] sm:$0xff]
        %v3046 = vld [vmem:[%s2690 + $0x19] sm:$0xff]
        %v3047 = vld [vmem:[%s2690 + $0x21] sm:$0xff]
        %v3048 = vld [vmem:[%s2690 + $0x31] sm:$0xff]
        %v3049 = vld [vmem:[%s2690 + $0x39] sm:$0xff]
        %v3050 = vld [vmem:[%s2690 + $0x49] sm:$0xff]
        %v3051 = vld [vmem:[%s2690 + $0x51] sm:$0xff]
        %v3052 = vld [vmem:[%s2690 + $0x61] sm:$0xff]
        %v3053 = vld [vmem:[%s2690 + $0x69] sm:$0xff]
        %v3054 = vld [vmem:[%s2690 + $0x79] sm:$0xff]
        %v3055 = vld [vmem:[%s2690 + $0x81] sm:$0xff]
        %v3056 = vld [vmem:[%s2690 + $0x91] sm:$0xff]
        %v3057 = vld [vmem:[%s2690 + $0x99] sm:$0xff]
        %v3058 = vld [vmem:[%s2690 + $0xa9] sm:$0xff]
        %v3059 = vld [vmem:[%s2690 + $0xb1] sm:$0xff]
        %v3060 = vld [vmem:[%s2690 + $0xc1] sm:$0xff]
        %v3061 = vld [vmem:[%s2690 + $0xc9] sm:$0xff]
        %v3062 = vld [vmem:[%s2690 + $0xd9] sm:$0xff]
        %v3063 = vld [vmem:[%s2690 + $0xe1] sm:$0xff]
        %v3064 = vld [vmem:[%s2690 + $0xf1] sm:$0xff]
        %v3065 = vld [vmem:[%s2690 + $0xf9] sm:$0xff]
        %v3066 = vld [vmem:[%s2690 + $0x109] sm:$0xff]
        %v3067 = vld [vmem:[%s2690 + $0x111] sm:$0xff]
        %v3068 = vld [vmem:[%s2690 + $0x121] sm:$0xff]
        %v3069 = vld [vmem:[%s2690 + $0x129] sm:$0xff]
        %v3070 = vld [vmem:[%s2690 + $0x139] sm:$0xff]
        %v3071 = vld [vmem:[%s2690 + $0x141] sm:$0xff]
        %v3072 = vld [vmem:[%s2690 + $0x151] sm:$0xff]
        %v3073 = vld [vmem:[%s2690 + $0x159] sm:$0xff]
        %v3074 = vld [vmem:[%s2690 + $0x169] sm:$0xff]
        %v3075 = vld [vmem:[%s2690 + $0x171] sm:$0xff]
        %v3076 = vld [vmem:[%s2690 + $0x2] sm:$0xff]
        %v3077 = vld [vmem:[%s2690 + $0xa] sm:$0xff]
        %v3078 = vld [vmem:[%s2690 + $0x1a] sm:$0xff]
        %v3079 = vld [vmem:[%s2690 + $0x22] sm:$0xff]
        %v3080 = vld [vmem:[%s2690 + $0x32] sm:$0xff]
        %v3081 = vld [vmem:[%s2690 + $0x3a] sm:$0xff]
        %v3082 = vld [vmem:[%s2690 + $0x4a] sm:$0xff]
        %v3083 = vld [vmem:[%s2690 + $0x52] sm:$0xff]
        %v3084 = vld [vmem:[%s2690 + $0x62] sm:$0xff]
        %v3085 = vld [vmem:[%s2690 + $0x6a] sm:$0xff]
        %v3086 = vld [vmem:[%s2690 + $0x7a] sm:$0xff]
        %v3087 = vld [vmem:[%s2690 + $0x82] sm:$0xff]
        %v3088 = vld [vmem:[%s2690 + $0x92] sm:$0xff]
        %v3089 = vld [vmem:[%s2690 + $0x9a] sm:$0xff]
        %v3090 = vld [vmem:[%s2690 + $0xaa] sm:$0xff]
        %v3091 = vld [vmem:[%s2690 + $0xb2] sm:$0xff]
        %v3092 = vld [vmem:[%s2690 + $0xc2] sm:$0xff]
        %v3093 = vld [vmem:[%s2690 + $0xca] sm:$0xff]
        %v3094 = vld [vmem:[%s2690 + $0xda] sm:$0xff]
        %v3095 = vld [vmem:[%s2690 + $0xe2] sm:$0xff]
        %v3096 = vld [vmem:[%s2690 + $0xf2] sm:$0xff]
        %v3097 = vld [vmem:[%s2690 + $0xfa] sm:$0xff]
        %v3098 = vld [vmem:[%s2690 + $0x10a] sm:$0xff]
        %v3099 = vld [vmem:[%s2690 + $0x112] sm:$0xff]
        %v3100 = vld [vmem:[%s2690 + $0x122] sm:$0xff]
        %v3101 = vld [vmem:[%s2690 + $0x12a] sm:$0xff]
        %v3102 = vld [vmem:[%s2690 + $0x13a] sm:$0xff]
        %v3103 = vld [vmem:[%s2690 + $0x142] sm:$0xff]
        %v3104 = vld [vmem:[%s2690 + $0x152] sm:$0xff]
        %v3105 = vld [vmem:[%s2690 + $0x15a] sm:$0xff]
        %v3106 = vld [vmem:[%s2690 + $0x16a] sm:$0xff]
        %v3107 = vld [vmem:[%s2690 + $0x172] sm:$0xff]
        %3140 = vrot.lane.b32.xlu0 %v3044, 64
        %v3141 = vpop.permute.xlu0 %3140
        %3142 = vrot.lane.b32.xlu0 %v3045, 64
        %v3143 = vpop.permute.xlu0 %3142
        %3144 = vrot.lane.b32.xlu0 %v3046, 64
        %v3145 = vpop.permute.xlu0 %3144
        %3146 = vrot.lane.b32.xlu0 %v3047, 64
        %v3147 = vpop.permute.xlu0 %3146
        %3148 = vrot.lane.b32.xlu0 %v3048, 64
        %v3149 = vpop.permute.xlu0 %3148
        %3150 = vrot.lane.b32.xlu0 %v3049, 64
        %v3151 = vpop.permute.xlu0 %3150
        %3152 = vrot.lane.b32.xlu0 %v3050, 64
        %v3153 = vpop.permute.xlu0 %3152
        %3154 = vrot.lane.b32.xlu0 %v3051, 64
        %v3155 = vpop.permute.xlu0 %3154
        %3156 = vrot.lane.b32.xlu0 %v3052, 64
        %v3157 = vpop.permute.xlu0 %3156
        %3158 = vrot.lane.b32.xlu0 %v3053, 64
        %v3159 = vpop.permute.xlu0 %3158
        %3160 = vrot.lane.b32.xlu0 %v3054, 64
        %v3161 = vpop.permute.xlu0 %3160
        %3162 = vrot.lane.b32.xlu0 %v3055, 64
        %v3163 = vpop.permute.xlu0 %3162
        %3164 = vrot.lane.b32.xlu0 %v3056, 64
        %v3165 = vpop.permute.xlu0 %3164
        %3166 = vrot.lane.b32.xlu0 %v3057, 64
        %v3167 = vpop.permute.xlu0 %3166
        %3168 = vrot.lane.b32.xlu0 %v3058, 64
        %v3169 = vpop.permute.xlu0 %3168
        %3170 = vrot.lane.b32.xlu0 %v3059, 64
        %v3171 = vpop.permute.xlu0 %3170
        %3172 = vrot.lane.b32.xlu0 %v3060, 64
        %v3173 = vpop.permute.xlu0 %3172
        %3174 = vrot.lane.b32.xlu0 %v3061, 64
        %v3175 = vpop.permute.xlu0 %3174
        %3176 = vrot.lane.b32.xlu0 %v3062, 64
        %v3177 = vpop.permute.xlu0 %3176
        %3178 = vrot.lane.b32.xlu0 %v3063, 64
        %v3179 = vpop.permute.xlu0 %3178
        %3180 = vrot.lane.b32.xlu0 %v3064, 64
        %v3181 = vpop.permute.xlu0 %3180
        %3182 = vrot.lane.b32.xlu0 %v3065, 64
        %v3183 = vpop.permute.xlu0 %3182
        %3184 = vrot.lane.b32.xlu0 %v3066, 64
        %v3185 = vpop.permute.xlu0 %3184
        %3186 = vrot.lane.b32.xlu0 %v3067, 64
        %v3187 = vpop.permute.xlu0 %3186
        %3188 = vrot.lane.b32.xlu0 %v3068, 64
        %v3189 = vpop.permute.xlu0 %3188
        %3190 = vrot.lane.b32.xlu0 %v3069, 64
        %v3191 = vpop.permute.xlu0 %3190
        %3192 = vrot.lane.b32.xlu0 %v3070, 64
        %v3193 = vpop.permute.xlu0 %3192
        %3194 = vrot.lane.b32.xlu0 %v3071, 64
        %v3195 = vpop.permute.xlu0 %3194
        %3196 = vrot.lane.b32.xlu0 %v3072, 64
        %v3197 = vpop.permute.xlu0 %3196
        %3198 = vrot.lane.b32.xlu0 %v3073, 64
        %v3199 = vpop.permute.xlu0 %3198
        %3200 = vrot.lane.b32.xlu0 %v3074, 64
        %v3201 = vpop.permute.xlu0 %3200
        %3202 = vrot.lane.b32.xlu0 %v3075, 64
        %v3203 = vpop.permute.xlu0 %3202
        %v3236 = vsel %vm198, %v3012, %v3141
        %v3237 = vsel %vm198, %v3013, %v3143
        %v3238 = vsel %vm198, %v3014, %v3145
        %v3239 = vsel %vm198, %v3015, %v3147
        %v3240 = vsel %vm198, %v3016, %v3149
        %v3241 = vsel %vm198, %v3017, %v3151
        %v3242 = vsel %vm198, %v3018, %v3153
        %v3243 = vsel %vm198, %v3019, %v3155
        %v3244 = vsel %vm198, %v3020, %v3157
        %v3245 = vsel %vm198, %v3021, %v3159
        %v3246 = vsel %vm198, %v3022, %v3161
        %v3247 = vsel %vm198, %v3023, %v3163
        %v3248 = vsel %vm198, %v3024, %v3165
        %v3249 = vsel %vm198, %v3025, %v3167
        %v3250 = vsel %vm198, %v3026, %v3169
        %v3251 = vsel %vm198, %v3027, %v3171
        %v3252 = vsel %vm198, %v3028, %v3173
        %v3253 = vsel %vm198, %v3029, %v3175
        %v3254 = vsel %vm198, %v3030, %v3177
        %v3255 = vsel %vm198, %v3031, %v3179
        %v3256 = vsel %vm198, %v3032, %v3181
        %v3257 = vsel %vm198, %v3033, %v3183
        %v3258 = vsel %vm198, %v3034, %v3185
        %v3259 = vsel %vm198, %v3035, %v3187
        %v3260 = vsel %vm198, %v3036, %v3189
        %v3261 = vsel %vm198, %v3037, %v3191
        %v3262 = vsel %vm198, %v3038, %v3193
        %v3263 = vsel %vm198, %v3039, %v3195
        %v3264 = vsel %vm198, %v3040, %v3197
        %v3265 = vsel %vm198, %v3041, %v3199
        %v3266 = vsel %vm198, %v3042, %v3201
        %v3267 = vsel %vm198, %v3043, %v3203
        %s3268 = sadd.s32 %s2985, 1
        %s3269 = smul.u32 %s3268, 192
        %s3270 = scalar_lea.vmem %s2, %s3269
        %v3271 = vld [vmem:[%s3270] sm:$0xff]
        %v3272 = vld [vmem:[%s3270 + $0x8] sm:$0xff]
        %v3273 = vld [vmem:[%s3270 + $0x10] sm:$0xff]
        %v3274 = vld [vmem:[%s3270 + $0x18] sm:$0xff]
        %v3275 = vld [vmem:[%s3270 + $0x20] sm:$0xff]
        %v3276 = vld [vmem:[%s3270 + $0x28] sm:$0xff]
        %v3277 = vld [vmem:[%s3270 + $0x30] sm:$0xff]
        %v3278 = vld [vmem:[%s3270 + $0x38] sm:$0xff]
        %v3279 = vld [vmem:[%s3270 + $0x40] sm:$0xff]
        %v3280 = vld [vmem:[%s3270 + $0x48] sm:$0xff]
        %v3281 = vld [vmem:[%s3270 + $0x50] sm:$0xff]
        %v3282 = vld [vmem:[%s3270 + $0x58] sm:$0xff]
        %v3283 = vld [vmem:[%s3270 + $0x60] sm:$0xff]
        %v3284 = vld [vmem:[%s3270 + $0x68] sm:$0xff]
        %v3285 = vld [vmem:[%s3270 + $0x70] sm:$0xff]
        %v3286 = vld [vmem:[%s3270 + $0x78] sm:$0xff]
        %v3287 = vld [vmem:[%s3270 + $0x80] sm:$0xff]
        %v3288 = vld [vmem:[%s3270 + $0x88] sm:$0xff]
        %v3289 = vld [vmem:[%s3270 + $0x90] sm:$0xff]
        %v3290 = vld [vmem:[%s3270 + $0x98] sm:$0xff]
        %v3291 = vld [vmem:[%s3270 + $0xa0] sm:$0xff]
        %v3292 = vld [vmem:[%s3270 + $0xa8] sm:$0xff]
        %v3293 = vld [vmem:[%s3270 + $0xb0] sm:$0xff]
        %v3294 = vld [vmem:[%s3270 + $0xb8] sm:$0xff]
        %v3296 = vsel %vm198, %v3076, 0
        %v3299 = vsel %vm198, %v3077, 0
        %v3302 = vsel %vm198, %v3078, 0
        %v3305 = vsel %vm198, %v3079, 0
        %v3308 = vsel %vm198, %v3080, 0
        %v3311 = vsel %vm198, %v3081, 0
        %v3314 = vsel %vm198, %v3082, 0
        %v3317 = vsel %vm198, %v3083, 0
        %v3320 = vsel %vm198, %v3084, 0
        %v3323 = vsel %vm198, %v3085, 0
        %v3326 = vsel %vm198, %v3086, 0
        %v3329 = vsel %vm198, %v3087, 0
        %v3332 = vsel %vm198, %v3088, 0
        %v3335 = vsel %vm198, %v3089, 0
        %v3338 = vsel %vm198, %v3090, 0
        %v3341 = vsel %vm198, %v3091, 0
        %v3344 = vsel %vm198, %v3092, 0
        %v3347 = vsel %vm198, %v3093, 0
        %v3350 = vsel %vm198, %v3094, 0
        %v3353 = vsel %vm198, %v3095, 0
        %v3356 = vsel %vm198, %v3096, 0
        %v3359 = vsel %vm198, %v3097, 0
        %v3362 = vsel %vm198, %v3098, 0
        %v3365 = vsel %vm198, %v3099, 0
        %v3368 = vsel %vm198, %v3100, 0
        %v3371 = vsel %vm198, %v3101, 0
        %v3374 = vsel %vm198, %v3102, 0
        %v3377 = vsel %vm198, %v3103, 0
        %v3380 = vsel %vm198, %v3104, 0
        %v3383 = vsel %vm198, %v3105, 0
        %v3386 = vsel %vm198, %v3106, 0
        %v3389 = vsel %vm198, %v3107, 0
        %3391 = vmatpush.msra.mxu0 %v3286
        %3392 = vmatpush.msra.mxu0 %v3285
        %3393 = vmatpush.msra.mxu0 %v3284
        %3394 = vmatpush.msra.mxu0 %v3283
        %3395 = vmatpush.msra.mxu0 %v3282
        %3396 = vmatpush.msra.mxu0 %v3281
        %3397 = vmatpush.msra.mxu0 %v3280
        %3398 = vmatpush.msra.mxu0 %v3279
        %3399 = vmatpush.msra.mxu0 %v3278
        %3400 = vmatpush.msra.mxu0 %v3277
        %3401 = vmatpush.msra.mxu0 %v3276
        %3402 = vmatpush.msra.mxu0 %v3275
        %3403 = vmatpush.msra.mxu0 %v3274
        %3404 = vmatpush.msra.mxu0 %v3273
        %3405 = vmatpush.msra.mxu0 %v3272
        %3406 = vmatpush.msra.mxu0 %v3271
        %3407 = vmatmul.f32.gmra.mxu0 %v3236
        %v3408 = vpop.f32.mrf.mxu0
        %v3409 = vadd.f32 0.0, %v3408
        %3410 = vmatmul.f32.gmra.mxu0 %v3237
        %v3411 = vpop.f32.mrf.mxu0
        %v3412 = vadd.f32 0.0, %v3411
        %3413 = vmatmul.f32.gmra.mxu0 %v3238
        %v3414 = vpop.f32.mrf.mxu0
        %v3415 = vadd.f32 0.0, %v3414
        %3416 = vmatmul.f32.gmra.mxu0 %v3239
        %v3417 = vpop.f32.mrf.mxu0
        %v3418 = vadd.f32 0.0, %v3417
        %3419 = vmatmul.f32.gmra.mxu0 %v3240
        %v3420 = vpop.f32.mrf.mxu0
        %v3421 = vadd.f32 0.0, %v3420
        %3422 = vmatmul.f32.gmra.mxu0 %v3241
        %v3423 = vpop.f32.mrf.mxu0
        %v3424 = vadd.f32 0.0, %v3423
        %3425 = vmatmul.f32.gmra.mxu0 %v3242
        %v3426 = vpop.f32.mrf.mxu0
        %v3427 = vadd.f32 0.0, %v3426
        %3428 = vmatmul.f32.gmra.mxu0 %v3243
        %v3429 = vpop.f32.mrf.mxu0
        %v3430 = vadd.f32 0.0, %v3429
        %3431 = vmatmul.f32.gmra.mxu0 %v3244
        %v3432 = vpop.f32.mrf.mxu0
        %v3433 = vadd.f32 0.0, %v3432
        %3434 = vmatmul.f32.gmra.mxu0 %v3245
        %v3435 = vpop.f32.mrf.mxu0
        %v3436 = vadd.f32 0.0, %v3435
        %3437 = vmatmul.f32.gmra.mxu0 %v3246
        %v3438 = vpop.f32.mrf.mxu0
        %v3439 = vadd.f32 0.0, %v3438
        %3440 = vmatmul.f32.gmra.mxu0 %v3247
        %v3441 = vpop.f32.mrf.mxu0
        %v3442 = vadd.f32 0.0, %v3441
        %3443 = vmatmul.f32.gmra.mxu0 %v3248
        %v3444 = vpop.f32.mrf.mxu0
        %v3445 = vadd.f32 0.0, %v3444
        %3446 = vmatmul.f32.gmra.mxu0 %v3249
        %v3447 = vpop.f32.mrf.mxu0
        %v3448 = vadd.f32 0.0, %v3447
        %3449 = vmatmul.f32.gmra.mxu0 %v3250
        %v3450 = vpop.f32.mrf.mxu0
        %v3451 = vadd.f32 0.0, %v3450
        %3452 = vmatmul.f32.gmra.mxu0 %v3251
        %v3453 = vpop.f32.mrf.mxu0
        %v3454 = vadd.f32 0.0, %v3453
        %3455 = vmatmul.f32.gmra.mxu0 %v3252
        %v3456 = vpop.f32.mrf.mxu0
        %v3457 = vadd.f32 0.0, %v3456
        %3458 = vmatmul.f32.gmra.mxu0 %v3253
        %v3459 = vpop.f32.mrf.mxu0
        %v3460 = vadd.f32 0.0, %v3459
        %3461 = vmatmul.f32.gmra.mxu0 %v3254
        %v3462 = vpop.f32.mrf.mxu0
        %v3463 = vadd.f32 0.0, %v3462
        %3464 = vmatmul.f32.gmra.mxu0 %v3255
        %v3465 = vpop.f32.mrf.mxu0
        %v3466 = vadd.f32 0.0, %v3465
        %3467 = vmatmul.f32.gmra.mxu0 %v3256
        %v3468 = vpop.f32.mrf.mxu0
        %v3469 = vadd.f32 0.0, %v3468
        %3470 = vmatmul.f32.gmra.mxu0 %v3257
        %v3471 = vpop.f32.mrf.mxu0
        %v3472 = vadd.f32 0.0, %v3471
        %3473 = vmatmul.f32.gmra.mxu0 %v3258
        %v3474 = vpop.f32.mrf.mxu0
        %v3475 = vadd.f32 0.0, %v3474
        %3476 = vmatmul.f32.gmra.mxu0 %v3259
        %v3477 = vpop.f32.mrf.mxu0
        %v3478 = vadd.f32 0.0, %v3477
        %3479 = vmatmul.f32.gmra.mxu0 %v3260
        %v3480 = vpop.f32.mrf.mxu0
        %v3481 = vadd.f32 0.0, %v3480
        %3482 = vmatmul.f32.gmra.mxu0 %v3261
        %v3483 = vpop.f32.mrf.mxu0
        %v3484 = vadd.f32 0.0, %v3483
        %3485 = vmatmul.f32.gmra.mxu0 %v3262
        %v3486 = vpop.f32.mrf.mxu0
        %v3487 = vadd.f32 0.0, %v3486
        %3488 = vmatmul.f32.gmra.mxu0 %v3263
        %v3489 = vpop.f32.mrf.mxu0
        %v3490 = vadd.f32 0.0, %v3489
        %3491 = vmatmul.f32.gmra.mxu0 %v3264
        %v3492 = vpop.f32.mrf.mxu0
        %v3493 = vadd.f32 0.0, %v3492
        %3494 = vmatmul.f32.gmra.mxu0 %v3265
        %v3495 = vpop.f32.mrf.mxu0
        %v3496 = vadd.f32 0.0, %v3495
        %3497 = vmatmul.f32.gmra.mxu0 %v3266
        %v3498 = vpop.f32.mrf.mxu0
        %v3499 = vadd.f32 0.0, %v3498
        %3500 = vmatmul.f32.gmra.mxu0 %v3267
        %v3501 = vpop.f32.mrf.mxu0
        %v3502 = vadd.f32 0.0, %v3501
        %3503 = vdwg.mxu0
        %3504 = vmatpush.msra.mxu0 0.0
        %3505 = vmatpush.msra.mxu0 0.0
        %3506 = vmatpush.msra.mxu0 0.0
        %3507 = vmatpush.msra.mxu0 0.0
        %3508 = vmatpush.msra.mxu0 0.0
        %3509 = vmatpush.msra.mxu0 0.0
        %3510 = vmatpush.msra.mxu0 0.0
        %3511 = vmatpush.msra.mxu0 0.0
        %3512 = vmatpush.msra.mxu0 %v3294
        %3513 = vmatpush.msra.mxu0 %v3293
        %3514 = vmatpush.msra.mxu0 %v3292
        %3515 = vmatpush.msra.mxu0 %v3291
        %3516 = vmatpush.msra.mxu0 %v3290
        %3517 = vmatpush.msra.mxu0 %v3289
        %3518 = vmatpush.msra.mxu0 %v3288
        %3519 = vmatpush.msra.mxu0 %v3287
        %3520 = vmatmul.f32.gmra.mxu0 %v3296
        %v3521 = vpop.f32.mrf.mxu0
        %v3522 = vadd.f32 %v3409, %v3521
        %3523 = vmatmul.f32.gmra.mxu0 %v3299
        %v3524 = vpop.f32.mrf.mxu0
        %v3525 = vadd.f32 %v3412, %v3524
        %3526 = vmatmul.f32.gmra.mxu0 %v3302
        %v3527 = vpop.f32.mrf.mxu0
        %v3528 = vadd.f32 %v3415, %v3527
        %3529 = vmatmul.f32.gmra.mxu0 %v3305
        %v3530 = vpop.f32.mrf.mxu0
        %v3531 = vadd.f32 %v3418, %v3530
        %3532 = vmatmul.f32.gmra.mxu0 %v3308
        %v3533 = vpop.f32.mrf.mxu0
        %v3534 = vadd.f32 %v3421, %v3533
        %3535 = vmatmul.f32.gmra.mxu0 %v3311
        %v3536 = vpop.f32.mrf.mxu0
        %v3537 = vadd.f32 %v3424, %v3536
        %3538 = vmatmul.f32.gmra.mxu0 %v3314
        %v3539 = vpop.f32.mrf.mxu0
        %v3540 = vadd.f32 %v3427, %v3539
        %3541 = vmatmul.f32.gmra.mxu0 %v3317
        %v3542 = vpop.f32.mrf.mxu0
        %v3543 = vadd.f32 %v3430, %v3542
        %3544 = vmatmul.f32.gmra.mxu0 %v3320
        %v3545 = vpop.f32.mrf.mxu0
        %v3546 = vadd.f32 %v3433, %v3545
        %3547 = vmatmul.f32.gmra.mxu0 %v3323
        %v3548 = vpop.f32.mrf.mxu0
        %v3549 = vadd.f32 %v3436, %v3548
        %3550 = vmatmul.f32.gmra.mxu0 %v3326
        %v3551 = vpop.f32.mrf.mxu0
        %v3552 = vadd.f32 %v3439, %v3551
        %3553 = vmatmul.f32.gmra.mxu0 %v3329
        %v3554 = vpop.f32.mrf.mxu0
        %v3555 = vadd.f32 %v3442, %v3554
        %3556 = vmatmul.f32.gmra.mxu0 %v3332
        %v3557 = vpop.f32.mrf.mxu0
        %v3558 = vadd.f32 %v3445, %v3557
        %3559 = vmatmul.f32.gmra.mxu0 %v3335
        %v3560 = vpop.f32.mrf.mxu0
        %v3561 = vadd.f32 %v3448, %v3560
        %3562 = vmatmul.f32.gmra.mxu0 %v3338
        %v3563 = vpop.f32.mrf.mxu0
        %v3564 = vadd.f32 %v3451, %v3563
        %3565 = vmatmul.f32.gmra.mxu0 %v3341
        %v3566 = vpop.f32.mrf.mxu0
        %v3567 = vadd.f32 %v3454, %v3566
        %3568 = vmatmul.f32.gmra.mxu0 %v3344
        %v3569 = vpop.f32.mrf.mxu0
        %v3570 = vadd.f32 %v3457, %v3569
        %3571 = vmatmul.f32.gmra.mxu0 %v3347
        %v3572 = vpop.f32.mrf.mxu0
        %v3573 = vadd.f32 %v3460, %v3572
        %3574 = vmatmul.f32.gmra.mxu0 %v3350
        %v3575 = vpop.f32.mrf.mxu0
        %v3576 = vadd.f32 %v3463, %v3575
        %3577 = vmatmul.f32.gmra.mxu0 %v3353
        %v3578 = vpop.f32.mrf.mxu0
        %v3579 = vadd.f32 %v3466, %v3578
        %3580 = vmatmul.f32.gmra.mxu0 %v3356
        %v3581 = vpop.f32.mrf.mxu0
        %v3582 = vadd.f32 %v3469, %v3581
        %3583 = vmatmul.f32.gmra.mxu0 %v3359
        %v3584 = vpop.f32.mrf.mxu0
        %v3585 = vadd.f32 %v3472, %v3584
        %3586 = vmatmul.f32.gmra.mxu0 %v3362
        %v3587 = vpop.f32.mrf.mxu0
        %v3588 = vadd.f32 %v3475, %v3587
        %3589 = vmatmul.f32.gmra.mxu0 %v3365
        %v3590 = vpop.f32.mrf.mxu0
        %v3591 = vadd.f32 %v3478, %v3590
        %3592 = vmatmul.f32.gmra.mxu0 %v3368
        %v3593 = vpop.f32.mrf.mxu0
        %v3594 = vadd.f32 %v3481, %v3593
        %3595 = vmatmul.f32.gmra.mxu0 %v3371
        %v3596 = vpop.f32.mrf.mxu0
        %v3597 = vadd.f32 %v3484, %v3596
        %3598 = vmatmul.f32.gmra.mxu0 %v3374
        %v3599 = vpop.f32.mrf.mxu0
        %v3600 = vadd.f32 %v3487, %v3599
        %3601 = vmatmul.f32.gmra.mxu0 %v3377
        %v3602 = vpop.f32.mrf.mxu0
        %v3603 = vadd.f32 %v3490, %v3602
        %3604 = vmatmul.f32.gmra.mxu0 %v3380
        %v3605 = vpop.f32.mrf.mxu0
        %v3606 = vadd.f32 %v3493, %v3605
        %3607 = vmatmul.f32.gmra.mxu0 %v3383
        %v3608 = vpop.f32.mrf.mxu0
        %v3609 = vadd.f32 %v3496, %v3608
        %3610 = vmatmul.f32.gmra.mxu0 %v3386
        %v3611 = vpop.f32.mrf.mxu0
        %v3612 = vadd.f32 %v3499, %v3611
        %3613 = vmatmul.f32.gmra.mxu0 %v3389
        %v3614 = vpop.f32.mrf.mxu0
        %v3615 = vadd.f32 %v3502, %v3614
        %3616 = vdwg.mxu0
        %v3618 = vsel %vm198, %v2793, 0
        %v3621 = vsel %vm198, %v2794, 0
        %v3624 = vsel %vm198, %v2795, 0
        %v3627 = vsel %vm198, %v2796, 0
        %v3630 = vsel %vm198, %v2797, 0
        %v3633 = vsel %vm198, %v2798, 0
        %v3636 = vsel %vm198, %v2799, 0
        %v3639 = vsel %vm198, %v2800, 0
        %v3642 = vsel %vm198, %v2801, 0
        %v3645 = vsel %vm198, %v2802, 0
        %v3648 = vsel %vm198, %v2803, 0
        %v3651 = vsel %vm198, %v2804, 0
        %v3654 = vsel %vm198, %v2805, 0
        %v3657 = vsel %vm198, %v2806, 0
        %v3660 = vsel %vm198, %v2807, 0
        %v3663 = vsel %vm198, %v2808, 0
        %v3666 = vsel %vm198, %v2809, 0
        %v3669 = vsel %vm198, %v2810, 0
        %v3672 = vsel %vm198, %v2811, 0
        %v3675 = vsel %vm198, %v2812, 0
        %v3678 = vsel %vm198, %v2813, 0
        %v3681 = vsel %vm198, %v2814, 0
        %v3684 = vsel %vm198, %v2815, 0
        %v3687 = vsel %vm198, %v2816, 0
        %v3690 = vsel %vm198, %v2817, 0
        %v3693 = vsel %vm198, %v2818, 0
        %v3696 = vsel %vm198, %v2819, 0
        %v3699 = vsel %vm198, %v2820, 0
        %v3702 = vsel %vm198, %v2821, 0
        %v3705 = vsel %vm198, %v2822, 0
        %v3708 = vsel %vm198, %v2823, 0
        %v3711 = vsel %vm198, %v2824, 0
        %3713 = vmatpush.msra.mxu0 %v3003
        %3714 = vmatpush.msra.mxu0 %v3002
        %3715 = vmatpush.msra.mxu0 %v3001
        %3716 = vmatpush.msra.mxu0 %v3000
        %3717 = vmatpush.msra.mxu0 %v2999
        %3718 = vmatpush.msra.mxu0 %v2998
        %3719 = vmatpush.msra.mxu0 %v2997
        %3720 = vmatpush.msra.mxu0 %v2996
        %3721 = vmatpush.msra.mxu0 %v2995
        %3722 = vmatpush.msra.mxu0 %v2994
        %3723 = vmatpush.msra.mxu0 %v2993
        %3724 = vmatpush.msra.mxu0 %v2992
        %3725 = vmatpush.msra.mxu0 %v2991
        %3726 = vmatpush.msra.mxu0 %v2990
        %3727 = vmatpush.msra.mxu0 %v2989
        %3728 = vmatpush.msra.mxu0 %v2988
        %3729 = vmatmul.f32.gmra.mxu0 %v2953
        %v3730 = vpop.f32.mrf.mxu0
        %v3731 = vadd.f32 %v3522, %v3730
        %3732 = vmatmul.f32.gmra.mxu0 %v2954
        %v3733 = vpop.f32.mrf.mxu0
        %v3734 = vadd.f32 %v3525, %v3733
        %3735 = vmatmul.f32.gmra.mxu0 %v2955
        %v3736 = vpop.f32.mrf.mxu0
        %v3737 = vadd.f32 %v3528, %v3736
        %3738 = vmatmul.f32.gmra.mxu0 %v2956
        %v3739 = vpop.f32.mrf.mxu0
        %v3740 = vadd.f32 %v3531, %v3739
        %3741 = vmatmul.f32.gmra.mxu0 %v2957
        %v3742 = vpop.f32.mrf.mxu0
        %v3743 = vadd.f32 %v3534, %v3742
        %3744 = vmatmul.f32.gmra.mxu0 %v2958
        %v3745 = vpop.f32.mrf.mxu0
        %v3746 = vadd.f32 %v3537, %v3745
        %3747 = vmatmul.f32.gmra.mxu0 %v2959
        %v3748 = vpop.f32.mrf.mxu0
        %v3749 = vadd.f32 %v3540, %v3748
        %3750 = vmatmul.f32.gmra.mxu0 %v2960
        %v3751 = vpop.f32.mrf.mxu0
        %v3752 = vadd.f32 %v3543, %v3751
        %3753 = vmatmul.f32.gmra.mxu0 %v2961
        %v3754 = vpop.f32.mrf.mxu0
        %v3755 = vadd.f32 %v3546, %v3754
        %3756 = vmatmul.f32.gmra.mxu0 %v2962
        %v3757 = vpop.f32.mrf.mxu0
        %v3758 = vadd.f32 %v3549, %v3757
        %3759 = vmatmul.f32.gmra.mxu0 %v2963
        %v3760 = vpop.f32.mrf.mxu0
        %v3761 = vadd.f32 %v3552, %v3760
        %3762 = vmatmul.f32.gmra.mxu0 %v2964
        %v3763 = vpop.f32.mrf.mxu0
        %v3764 = vadd.f32 %v3555, %v3763
        %3765 = vmatmul.f32.gmra.mxu0 %v2965
        %v3766 = vpop.f32.mrf.mxu0
        %v3767 = vadd.f32 %v3558, %v3766
        %3768 = vmatmul.f32.gmra.mxu0 %v2966
        %v3769 = vpop.f32.mrf.mxu0
        %v3770 = vadd.f32 %v3561, %v3769
        %3771 = vmatmul.f32.gmra.mxu0 %v2967
        %v3772 = vpop.f32.mrf.mxu0
        %v3773 = vadd.f32 %v3564, %v3772
        %3774 = vmatmul.f32.gmra.mxu0 %v2968
        %v3775 = vpop.f32.mrf.mxu0
        %v3776 = vadd.f32 %v3567, %v3775
        %3777 = vmatmul.f32.gmra.mxu0 %v2969
        %v3778 = vpop.f32.mrf.mxu0
        %v3779 = vadd.f32 %v3570, %v3778
        %3780 = vmatmul.f32.gmra.mxu0 %v2970
        %v3781 = vpop.f32.mrf.mxu0
        %v3782 = vadd.f32 %v3573, %v3781
        %3783 = vmatmul.f32.gmra.mxu0 %v2971
        %v3784 = vpop.f32.mrf.mxu0
        %v3785 = vadd.f32 %v3576, %v3784
        %3786 = vmatmul.f32.gmra.mxu0 %v2972
        %v3787 = vpop.f32.mrf.mxu0
        %v3788 = vadd.f32 %v3579, %v3787
        %3789 = vmatmul.f32.gmra.mxu0 %v2973
        %v3790 = vpop.f32.mrf.mxu0
        %v3791 = vadd.f32 %v3582, %v3790
        %3792 = vmatmul.f32.gmra.mxu0 %v2974
        %v3793 = vpop.f32.mrf.mxu0
        %v3794 = vadd.f32 %v3585, %v3793
        %3795 = vmatmul.f32.gmra.mxu0 %v2975
        %v3796 = vpop.f32.mrf.mxu0
        %v3797 = vadd.f32 %v3588, %v3796
        %3798 = vmatmul.f32.gmra.mxu0 %v2976
        %v3799 = vpop.f32.mrf.mxu0
        %v3800 = vadd.f32 %v3591, %v3799
        %3801 = vmatmul.f32.gmra.mxu0 %v2977
        %v3802 = vpop.f32.mrf.mxu0
        %v3803 = vadd.f32 %v3594, %v3802
        %3804 = vmatmul.f32.gmra.mxu0 %v2978
        %v3805 = vpop.f32.mrf.mxu0
        %v3806 = vadd.f32 %v3597, %v3805
        %3807 = vmatmul.f32.gmra.mxu0 %v2979
        %v3808 = vpop.f32.mrf.mxu0
        %v3809 = vadd.f32 %v3600, %v3808
        %3810 = vmatmul.f32.gmra.mxu0 %v2980
        %v3811 = vpop.f32.mrf.mxu0
        %v3812 = vadd.f32 %v3603, %v3811
        %3813 = vmatmul.f32.gmra.mxu0 %v2981
        %v3814 = vpop.f32.mrf.mxu0
        %v3815 = vadd.f32 %v3606, %v3814
        %3816 = vmatmul.f32.gmra.mxu0 %v2982
        %v3817 = vpop.f32.mrf.mxu0
        %v3818 = vadd.f32 %v3609, %v3817
        %3819 = vmatmul.f32.gmra.mxu0 %v2983
        %v3820 = vpop.f32.mrf.mxu0
        %v3821 = vadd.f32 %v3612, %v3820
        %3822 = vmatmul.f32.gmra.mxu0 %v2984
        %v3823 = vpop.f32.mrf.mxu0
        %v3824 = vadd.f32 %v3615, %v3823
        %3825 = vdwg.mxu0
        %3826 = vmatpush.msra.mxu0 0.0
        %3827 = vmatpush.msra.mxu0 0.0
        %3828 = vmatpush.msra.mxu0 0.0
        %3829 = vmatpush.msra.mxu0 0.0
        %3830 = vmatpush.msra.mxu0 0.0
        %3831 = vmatpush.msra.mxu0 0.0
        %3832 = vmatpush.msra.mxu0 0.0
        %3833 = vmatpush.msra.mxu0 0.0
        %3834 = vmatpush.msra.mxu0 %v3011
        %3835 = vmatpush.msra.mxu0 %v3010
        %3836 = vmatpush.msra.mxu0 %v3009
        %3837 = vmatpush.msra.mxu0 %v3008
        %3838 = vmatpush.msra.mxu0 %v3007
        %3839 = vmatpush.msra.mxu0 %v3006
        %3840 = vmatpush.msra.mxu0 %v3005
        %3841 = vmatpush.msra.mxu0 %v3004
        %3842 = vmatmul.f32.gmra.mxu0 %v3618
        %v3843 = vpop.f32.mrf.mxu0
        %v3844 = vadd.f32 %v3731, %v3843
        %3845 = vmatmul.f32.gmra.mxu0 %v3621
        %v3846 = vpop.f32.mrf.mxu0
        %v3847 = vadd.f32 %v3734, %v3846
        %3848 = vmatmul.f32.gmra.mxu0 %v3624
        %v3849 = vpop.f32.mrf.mxu0
        %v3850 = vadd.f32 %v3737, %v3849
        %3851 = vmatmul.f32.gmra.mxu0 %v3627
        %v3852 = vpop.f32.mrf.mxu0
        %v3853 = vadd.f32 %v3740, %v3852
        %3854 = vmatmul.f32.gmra.mxu0 %v3630
        %v3855 = vpop.f32.mrf.mxu0
        %v3856 = vadd.f32 %v3743, %v3855
        %3857 = vmatmul.f32.gmra.mxu0 %v3633
        %v3858 = vpop.f32.mrf.mxu0
        %v3859 = vadd.f32 %v3746, %v3858
        %3860 = vmatmul.f32.gmra.mxu0 %v3636
        %v3861 = vpop.f32.mrf.mxu0
        %v3862 = vadd.f32 %v3749, %v3861
        %3863 = vmatmul.f32.gmra.mxu0 %v3639
        %v3864 = vpop.f32.mrf.mxu0
        %v3865 = vadd.f32 %v3752, %v3864
        %3866 = vmatmul.f32.gmra.mxu0 %v3642
        %v3867 = vpop.f32.mrf.mxu0
        %v3868 = vadd.f32 %v3755, %v3867
        %3869 = vmatmul.f32.gmra.mxu0 %v3645
        %v3870 = vpop.f32.mrf.mxu0
        %v3871 = vadd.f32 %v3758, %v3870
        %3872 = vmatmul.f32.gmra.mxu0 %v3648
        %v3873 = vpop.f32.mrf.mxu0
        %v3874 = vadd.f32 %v3761, %v3873
        %3875 = vmatmul.f32.gmra.mxu0 %v3651
        %v3876 = vpop.f32.mrf.mxu0
        %v3877 = vadd.f32 %v3764, %v3876
        %3878 = vmatmul.f32.gmra.mxu0 %v3654
        %v3879 = vpop.f32.mrf.mxu0
        %v3880 = vadd.f32 %v3767, %v3879
        %3881 = vmatmul.f32.gmra.mxu0 %v3657
        %v3882 = vpop.f32.mrf.mxu0
        %v3883 = vadd.f32 %v3770, %v3882
        %3884 = vmatmul.f32.gmra.mxu0 %v3660
        %v3885 = vpop.f32.mrf.mxu0
        %v3886 = vadd.f32 %v3773, %v3885
        %3887 = vmatmul.f32.gmra.mxu0 %v3663
        %v3888 = vpop.f32.mrf.mxu0
        %v3889 = vadd.f32 %v3776, %v3888
        %3890 = vmatmul.f32.gmra.mxu0 %v3666
        %v3891 = vpop.f32.mrf.mxu0
        %v3892 = vadd.f32 %v3779, %v3891
        %3893 = vmatmul.f32.gmra.mxu0 %v3669
        %v3894 = vpop.f32.mrf.mxu0
        %v3895 = vadd.f32 %v3782, %v3894
        %3896 = vmatmul.f32.gmra.mxu0 %v3672
        %v3897 = vpop.f32.mrf.mxu0
        %v3898 = vadd.f32 %v3785, %v3897
        %3899 = vmatmul.f32.gmra.mxu0 %v3675
        %v3900 = vpop.f32.mrf.mxu0
        %v3901 = vadd.f32 %v3788, %v3900
        %3902 = vmatmul.f32.gmra.mxu0 %v3678
        %v3903 = vpop.f32.mrf.mxu0
        %v3904 = vadd.f32 %v3791, %v3903
        %3905 = vmatmul.f32.gmra.mxu0 %v3681
        %v3906 = vpop.f32.mrf.mxu0
        %v3907 = vadd.f32 %v3794, %v3906
        %3908 = vmatmul.f32.gmra.mxu0 %v3684
        %v3909 = vpop.f32.mrf.mxu0
        %v3910 = vadd.f32 %v3797, %v3909
        %3911 = vmatmul.f32.gmra.mxu0 %v3687
        %v3912 = vpop.f32.mrf.mxu0
        %v3913 = vadd.f32 %v3800, %v3912
        %3914 = vmatmul.f32.gmra.mxu0 %v3690
        %v3915 = vpop.f32.mrf.mxu0
        %v3916 = vadd.f32 %v3803, %v3915
        %3917 = vmatmul.f32.gmra.mxu0 %v3693
        %v3918 = vpop.f32.mrf.mxu0
        %v3919 = vadd.f32 %v3806, %v3918
        %3920 = vmatmul.f32.gmra.mxu0 %v3696
        %v3921 = vpop.f32.mrf.mxu0
        %v3922 = vadd.f32 %v3809, %v3921
        %3923 = vmatmul.f32.gmra.mxu0 %v3699
        %v3924 = vpop.f32.mrf.mxu0
        %v3925 = vadd.f32 %v3812, %v3924
        %3926 = vmatmul.f32.gmra.mxu0 %v3702
        %v3927 = vpop.f32.mrf.mxu0
        %v3928 = vadd.f32 %v3815, %v3927
        %3929 = vmatmul.f32.gmra.mxu0 %v3705
        %v3930 = vpop.f32.mrf.mxu0
        %v3931 = vadd.f32 %v3818, %v3930
        %3932 = vmatmul.f32.gmra.mxu0 %v3708
        %v3933 = vpop.f32.mrf.mxu0
        %v3934 = vadd.f32 %v3821, %v3933
        %3935 = vmatmul.f32.gmra.mxu0 %v3711
        %v3936 = vpop.f32.mrf.mxu0
        %v3937 = vadd.f32 %v3824, %v3936
        %3938 = vdwg.mxu0
        %s3939 = scalar_lea.vmem [#allocation2], 48
        %v3940 = vld [vmem:[%s3939] sm:$0xff]
        %v3941 = vld [vmem:[%s3939 + $0x8] sm:$0xff]
        %v3942 = vld [vmem:[%s3939 + $0x18] sm:$0xff]
        %v3943 = vld [vmem:[%s3939 + $0x20] sm:$0xff]
        %v3944 = vld [vmem:[%s3939 + $0x30] sm:$0xff]
        %v3945 = vld [vmem:[%s3939 + $0x38] sm:$0xff]
        %v3946 = vld [vmem:[%s3939 + $0x48] sm:$0xff]
        %v3947 = vld [vmem:[%s3939 + $0x50] sm:$0xff]
        %v3948 = vld [vmem:[%s3939 + $0x60] sm:$0xff]
        %v3949 = vld [vmem:[%s3939 + $0x68] sm:$0xff]
        %v3950 = vld [vmem:[%s3939 + $0x78] sm:$0xff]
        %v3951 = vld [vmem:[%s3939 + $0x80] sm:$0xff]
        %v3952 = vld [vmem:[%s3939 + $0x90] sm:$0xff]
        %v3953 = vld [vmem:[%s3939 + $0x98] sm:$0xff]
        %v3954 = vld [vmem:[%s3939 + $0xa8] sm:$0xff]
        %v3955 = vld [vmem:[%s3939 + $0xb0] sm:$0xff]
        %v3956 = vld [vmem:[%s3939 + $0xc0] sm:$0xff]
        %v3957 = vld [vmem:[%s3939 + $0xc8] sm:$0xff]
        %v3958 = vld [vmem:[%s3939 + $0xd8] sm:$0xff]
        %v3959 = vld [vmem:[%s3939 + $0xe0] sm:$0xff]
        %v3960 = vld [vmem:[%s3939 + $0xf0] sm:$0xff]
        %v3961 = vld [vmem:[%s3939 + $0xf8] sm:$0xff]
        %v3962 = vld [vmem:[%s3939 + $0x108] sm:$0xff]
        %v3963 = vld [vmem:[%s3939 + $0x110] sm:$0xff]
        %v3964 = vld [vmem:[%s3939 + $0x120] sm:$0xff]
        %v3965 = vld [vmem:[%s3939 + $0x128] sm:$0xff]
        %v3966 = vld [vmem:[%s3939 + $0x138] sm:$0xff]
        %v3967 = vld [vmem:[%s3939 + $0x140] sm:$0xff]
        %v3968 = vld [vmem:[%s3939 + $0x150] sm:$0xff]
        %v3969 = vld [vmem:[%s3939 + $0x158] sm:$0xff]
        %v3970 = vld [vmem:[%s3939 + $0x168] sm:$0xff]
        %v3971 = vld [vmem:[%s3939 + $0x170] sm:$0xff]
        %v3972 = vld [vmem:[%s3939 + $0x1] sm:$0xff]
        %v3973 = vld [vmem:[%s3939 + $0x9] sm:$0xff]
        %v3974 = vld [vmem:[%s3939 + $0x19] sm:$0xff]
        %v3975 = vld [vmem:[%s3939 + $0x21] sm:$0xff]
        %v3976 = vld [vmem:[%s3939 + $0x31] sm:$0xff]
        %v3977 = vld [vmem:[%s3939 + $0x39] sm:$0xff]
        %v3978 = vld [vmem:[%s3939 + $0x49] sm:$0xff]
        %v3979 = vld [vmem:[%s3939 + $0x51] sm:$0xff]
        %v3980 = vld [vmem:[%s3939 + $0x61] sm:$0xff]
        %v3981 = vld [vmem:[%s3939 + $0x69] sm:$0xff]
        %v3982 = vld [vmem:[%s3939 + $0x79] sm:$0xff]
        %v3983 = vld [vmem:[%s3939 + $0x81] sm:$0xff]
        %v3984 = vld [vmem:[%s3939 + $0x91] sm:$0xff]
        %v3985 = vld [vmem:[%s3939 + $0x99] sm:$0xff]
        %v3986 = vld [vmem:[%s3939 + $0xa9] sm:$0xff]
        %v3987 = vld [vmem:[%s3939 + $0xb1] sm:$0xff]
        %v3988 = vld [vmem:[%s3939 + $0xc1] sm:$0xff]
        %v3989 = vld [vmem:[%s3939 + $0xc9] sm:$0xff]
        %v3990 = vld [vmem:[%s3939 + $0xd9] sm:$0xff]
        %v3991 = vld [vmem:[%s3939 + $0xe1] sm:$0xff]
        %v3992 = vld [vmem:[%s3939 + $0xf1] sm:$0xff]
        %v3993 = vld [vmem:[%s3939 + $0xf9] sm:$0xff]
        %v3994 = vld [vmem:[%s3939 + $0x109] sm:$0xff]
        %v3995 = vld [vmem:[%s3939 + $0x111] sm:$0xff]
        %v3996 = vld [vmem:[%s3939 + $0x121] sm:$0xff]
        %v3997 = vld [vmem:[%s3939 + $0x129] sm:$0xff]
        %v3998 = vld [vmem:[%s3939 + $0x139] sm:$0xff]
        %v3999 = vld [vmem:[%s3939 + $0x141] sm:$0xff]
        %v4000 = vld [vmem:[%s3939 + $0x151] sm:$0xff]
        %v4001 = vld [vmem:[%s3939 + $0x159] sm:$0xff]
        %v4002 = vld [vmem:[%s3939 + $0x169] sm:$0xff]
        %v4003 = vld [vmem:[%s3939 + $0x171] sm:$0xff]
        %v4004 = vld [vmem:[%s3939 + $0x2] sm:$0xff]
        %v4005 = vld [vmem:[%s3939 + $0xa] sm:$0xff]
        %v4006 = vld [vmem:[%s3939 + $0x1a] sm:$0xff]
        %v4007 = vld [vmem:[%s3939 + $0x22] sm:$0xff]
        %v4008 = vld [vmem:[%s3939 + $0x32] sm:$0xff]
        %v4009 = vld [vmem:[%s3939 + $0x3a] sm:$0xff]
        %v4010 = vld [vmem:[%s3939 + $0x4a] sm:$0xff]
        %v4011 = vld [vmem:[%s3939 + $0x52] sm:$0xff]
        %v4012 = vld [vmem:[%s3939 + $0x62] sm:$0xff]
        %v4013 = vld [vmem:[%s3939 + $0x6a] sm:$0xff]
        %v4014 = vld [vmem:[%s3939 + $0x7a] sm:$0xff]
        %v4015 = vld [vmem:[%s3939 + $0x82] sm:$0xff]
        %v4016 = vld [vmem:[%s3939 + $0x92] sm:$0xff]
        %v4017 = vld [vmem:[%s3939 + $0x9a] sm:$0xff]
        %v4018 = vld [vmem:[%s3939 + $0xaa] sm:$0xff]
        %v4019 = vld [vmem:[%s3939 + $0xb2] sm:$0xff]
        %v4020 = vld [vmem:[%s3939 + $0xc2] sm:$0xff]
        %v4021 = vld [vmem:[%s3939 + $0xca] sm:$0xff]
        %v4022 = vld [vmem:[%s3939 + $0xda] sm:$0xff]
        %v4023 = vld [vmem:[%s3939 + $0xe2] sm:$0xff]
        %v4024 = vld [vmem:[%s3939 + $0xf2] sm:$0xff]
        %v4025 = vld [vmem:[%s3939 + $0xfa] sm:$0xff]
        %v4026 = vld [vmem:[%s3939 + $0x10a] sm:$0xff]
        %v4027 = vld [vmem:[%s3939 + $0x112] sm:$0xff]
        %v4028 = vld [vmem:[%s3939 + $0x122] sm:$0xff]
        %v4029 = vld [vmem:[%s3939 + $0x12a] sm:$0xff]
        %v4030 = vld [vmem:[%s3939 + $0x13a] sm:$0xff]
        %v4031 = vld [vmem:[%s3939 + $0x142] sm:$0xff]
        %v4032 = vld [vmem:[%s3939 + $0x152] sm:$0xff]
        %v4033 = vld [vmem:[%s3939 + $0x15a] sm:$0xff]
        %v4034 = vld [vmem:[%s3939 + $0x16a] sm:$0xff]
        %v4035 = vld [vmem:[%s3939 + $0x172] sm:$0xff]
        %4068 = vrot.lane.b32.xlu0 %v3972, 64
        %v4069 = vpop.permute.xlu0 %4068
        %4070 = vrot.lane.b32.xlu0 %v3973, 64
        %v4071 = vpop.permute.xlu0 %4070
        %4072 = vrot.lane.b32.xlu0 %v3974, 64
        %v4073 = vpop.permute.xlu0 %4072
        %4074 = vrot.lane.b32.xlu0 %v3975, 64
        %v4075 = vpop.permute.xlu0 %4074
        %4076 = vrot.lane.b32.xlu0 %v3976, 64
        %v4077 = vpop.permute.xlu0 %4076
        %4078 = vrot.lane.b32.xlu0 %v3977, 64
        %v4079 = vpop.permute.xlu0 %4078
        %4080 = vrot.lane.b32.xlu0 %v3978, 64
        %v4081 = vpop.permute.xlu0 %4080
        %4082 = vrot.lane.b32.xlu0 %v3979, 64
        %v4083 = vpop.permute.xlu0 %4082
        %4084 = vrot.lane.b32.xlu0 %v3980, 64
        %v4085 = vpop.permute.xlu0 %4084
        %4086 = vrot.lane.b32.xlu0 %v3981, 64
        %v4087 = vpop.permute.xlu0 %4086
        %4088 = vrot.lane.b32.xlu0 %v3982, 64
        %v4089 = vpop.permute.xlu0 %4088
        %4090 = vrot.lane.b32.xlu0 %v3983, 64
        %v4091 = vpop.permute.xlu0 %4090
        %4092 = vrot.lane.b32.xlu0 %v3984, 64
        %v4093 = vpop.permute.xlu0 %4092
        %4094 = vrot.lane.b32.xlu0 %v3985, 64
        %v4095 = vpop.permute.xlu0 %4094
        %4096 = vrot.lane.b32.xlu0 %v3986, 64
        %v4097 = vpop.permute.xlu0 %4096
        %4098 = vrot.lane.b32.xlu0 %v3987, 64
        %v4099 = vpop.permute.xlu0 %4098
        %4100 = vrot.lane.b32.xlu0 %v3988, 64
        %v4101 = vpop.permute.xlu0 %4100
        %4102 = vrot.lane.b32.xlu0 %v3989, 64
        %v4103 = vpop.permute.xlu0 %4102
        %4104 = vrot.lane.b32.xlu0 %v3990, 64
        %v4105 = vpop.permute.xlu0 %4104
        %4106 = vrot.lane.b32.xlu0 %v3991, 64
        %v4107 = vpop.permute.xlu0 %4106
        %4108 = vrot.lane.b32.xlu0 %v3992, 64
        %v4109 = vpop.permute.xlu0 %4108
        %4110 = vrot.lane.b32.xlu0 %v3993, 64
        %v4111 = vpop.permute.xlu0 %4110
        %4112 = vrot.lane.b32.xlu0 %v3994, 64
        %v4113 = vpop.permute.xlu0 %4112
        %4114 = vrot.lane.b32.xlu0 %v3995, 64
        %v4115 = vpop.permute.xlu0 %4114
        %4116 = vrot.lane.b32.xlu0 %v3996, 64
        %v4117 = vpop.permute.xlu0 %4116
        %4118 = vrot.lane.b32.xlu0 %v3997, 64
        %v4119 = vpop.permute.xlu0 %4118
        %4120 = vrot.lane.b32.xlu0 %v3998, 64
        %v4121 = vpop.permute.xlu0 %4120
        %4122 = vrot.lane.b32.xlu0 %v3999, 64
        %v4123 = vpop.permute.xlu0 %4122
        %4124 = vrot.lane.b32.xlu0 %v4000, 64
        %v4125 = vpop.permute.xlu0 %4124
        %4126 = vrot.lane.b32.xlu0 %v4001, 64
        %v4127 = vpop.permute.xlu0 %4126
        %4128 = vrot.lane.b32.xlu0 %v4002, 64
        %v4129 = vpop.permute.xlu0 %4128
        %4130 = vrot.lane.b32.xlu0 %v4003, 64
        %v4131 = vpop.permute.xlu0 %4130
        %v4164 = vsel %vm198, %v3940, %v4069
        %v4165 = vsel %vm198, %v3941, %v4071
        %v4166 = vsel %vm198, %v3942, %v4073
        %v4167 = vsel %vm198, %v3943, %v4075
        %v4168 = vsel %vm198, %v3944, %v4077
        %v4169 = vsel %vm198, %v3945, %v4079
        %v4170 = vsel %vm198, %v3946, %v4081
        %v4171 = vsel %vm198, %v3947, %v4083
        %v4172 = vsel %vm198, %v3948, %v4085
        %v4173 = vsel %vm198, %v3949, %v4087
        %v4174 = vsel %vm198, %v3950, %v4089
        %v4175 = vsel %vm198, %v3951, %v4091
        %v4176 = vsel %vm198, %v3952, %v4093
        %v4177 = vsel %vm198, %v3953, %v4095
        %v4178 = vsel %vm198, %v3954, %v4097
        %v4179 = vsel %vm198, %v3955, %v4099
        %v4180 = vsel %vm198, %v3956, %v4101
        %v4181 = vsel %vm198, %v3957, %v4103
        %v4182 = vsel %vm198, %v3958, %v4105
        %v4183 = vsel %vm198, %v3959, %v4107
        %v4184 = vsel %vm198, %v3960, %v4109
        %v4185 = vsel %vm198, %v3961, %v4111
        %v4186 = vsel %vm198, %v3962, %v4113
        %v4187 = vsel %vm198, %v3963, %v4115
        %v4188 = vsel %vm198, %v3964, %v4117
        %v4189 = vsel %vm198, %v3965, %v4119
        %v4190 = vsel %vm198, %v3966, %v4121
        %v4191 = vsel %vm198, %v3967, %v4123
        %v4192 = vsel %vm198, %v3968, %v4125
        %v4193 = vsel %vm198, %v3969, %v4127
        %v4194 = vsel %vm198, %v3970, %v4129
        %v4195 = vsel %vm198, %v3971, %v4131
        %s4196 = sadd.s32 %s2985, 2
        %s4197 = smul.u32 %s4196, 192
        %s4198 = scalar_lea.vmem %s2, %s4197
        %v4199 = vld [vmem:[%s4198] sm:$0xff]
        %v4200 = vld [vmem:[%s4198 + $0x8] sm:$0xff]
        %v4201 = vld [vmem:[%s4198 + $0x10] sm:$0xff]
        %v4202 = vld [vmem:[%s4198 + $0x18] sm:$0xff]
        %v4203 = vld [vmem:[%s4198 + $0x20] sm:$0xff]
        %v4204 = vld [vmem:[%s4198 + $0x28] sm:$0xff]
        %v4205 = vld [vmem:[%s4198 + $0x30] sm:$0xff]
        %v4206 = vld [vmem:[%s4198 + $0x38] sm:$0xff]
        %v4207 = vld [vmem:[%s4198 + $0x40] sm:$0xff]
        %v4208 = vld [vmem:[%s4198 + $0x48] sm:$0xff]
        %v4209 = vld [vmem:[%s4198 + $0x50] sm:$0xff]
        %v4210 = vld [vmem:[%s4198 + $0x58] sm:$0xff]
        %v4211 = vld [vmem:[%s4198 + $0x60] sm:$0xff]
        %v4212 = vld [vmem:[%s4198 + $0x68] sm:$0xff]
        %v4213 = vld [vmem:[%s4198 + $0x70] sm:$0xff]
        %v4214 = vld [vmem:[%s4198 + $0x78] sm:$0xff]
        %v4215 = vld [vmem:[%s4198 + $0x80] sm:$0xff]
        %v4216 = vld [vmem:[%s4198 + $0x88] sm:$0xff]
        %v4217 = vld [vmem:[%s4198 + $0x90] sm:$0xff]
        %v4218 = vld [vmem:[%s4198 + $0x98] sm:$0xff]
        %v4219 = vld [vmem:[%s4198 + $0xa0] sm:$0xff]
        %v4220 = vld [vmem:[%s4198 + $0xa8] sm:$0xff]
        %v4221 = vld [vmem:[%s4198 + $0xb0] sm:$0xff]
        %v4222 = vld [vmem:[%s4198 + $0xb8] sm:$0xff]
        %v4224 = vsel %vm198, %v4004, 0
        %v4227 = vsel %vm198, %v4005, 0
        %v4230 = vsel %vm198, %v4006, 0
        %v4233 = vsel %vm198, %v4007, 0
        %v4236 = vsel %vm198, %v4008, 0
        %v4239 = vsel %vm198, %v4009, 0
        %v4242 = vsel %vm198, %v4010, 0
        %v4245 = vsel %vm198, %v4011, 0
        %v4248 = vsel %vm198, %v4012, 0
        %v4251 = vsel %vm198, %v4013, 0
        %v4254 = vsel %vm198, %v4014, 0
        %v4257 = vsel %vm198, %v4015, 0
        %v4260 = vsel %vm198, %v4016, 0
        %v4263 = vsel %vm198, %v4017, 0
        %v4266 = vsel %vm198, %v4018, 0
        %v4269 = vsel %vm198, %v4019, 0
        %v4272 = vsel %vm198, %v4020, 0
        %v4275 = vsel %vm198, %v4021, 0
        %v4278 = vsel %vm198, %v4022, 0
        %v4281 = vsel %vm198, %v4023, 0
        %v4284 = vsel %vm198, %v4024, 0
        %v4287 = vsel %vm198, %v4025, 0
        %v4290 = vsel %vm198, %v4026, 0
        %v4293 = vsel %vm198, %v4027, 0
        %v4296 = vsel %vm198, %v4028, 0
        %v4299 = vsel %vm198, %v4029, 0
        %v4302 = vsel %vm198, %v4030, 0
        %v4305 = vsel %vm198, %v4031, 0
        %v4308 = vsel %vm198, %v4032, 0
        %v4311 = vsel %vm198, %v4033, 0
        %v4314 = vsel %vm198, %v4034, 0
        %v4317 = vsel %vm198, %v4035, 0
        %4319 = vmatpush.msra.mxu0 %v4214
        %4320 = vmatpush.msra.mxu0 %v4213
        %4321 = vmatpush.msra.mxu0 %v4212
        %4322 = vmatpush.msra.mxu0 %v4211
        %4323 = vmatpush.msra.mxu0 %v4210
        %4324 = vmatpush.msra.mxu0 %v4209
        %4325 = vmatpush.msra.mxu0 %v4208
        %4326 = vmatpush.msra.mxu0 %v4207
        %4327 = vmatpush.msra.mxu0 %v4206
        %4328 = vmatpush.msra.mxu0 %v4205
        %4329 = vmatpush.msra.mxu0 %v4204
        %4330 = vmatpush.msra.mxu0 %v4203
        %4331 = vmatpush.msra.mxu0 %v4202
        %4332 = vmatpush.msra.mxu0 %v4201
        %4333 = vmatpush.msra.mxu0 %v4200
        %4334 = vmatpush.msra.mxu0 %v4199
        %4335 = vmatmul.f32.gmra.mxu0 %v4164
        %v4336 = vpop.f32.mrf.mxu0
        %v4337 = vadd.f32 0.0, %v4336
        %4338 = vmatmul.f32.gmra.mxu0 %v4165
        %v4339 = vpop.f32.mrf.mxu0
        %v4340 = vadd.f32 0.0, %v4339
        %4341 = vmatmul.f32.gmra.mxu0 %v4166
        %v4342 = vpop.f32.mrf.mxu0
        %v4343 = vadd.f32 0.0, %v4342
        %4344 = vmatmul.f32.gmra.mxu0 %v4167
        %v4345 = vpop.f32.mrf.mxu0
        %v4346 = vadd.f32 0.0, %v4345
        %4347 = vmatmul.f32.gmra.mxu0 %v4168
        %v4348 = vpop.f32.mrf.mxu0
        %v4349 = vadd.f32 0.0, %v4348
        %4350 = vmatmul.f32.gmra.mxu0 %v4169
        %v4351 = vpop.f32.mrf.mxu0
        %v4352 = vadd.f32 0.0, %v4351
        %4353 = vmatmul.f32.gmra.mxu0 %v4170
        %v4354 = vpop.f32.mrf.mxu0
        %v4355 = vadd.f32 0.0, %v4354
        %4356 = vmatmul.f32.gmra.mxu0 %v4171
        %v4357 = vpop.f32.mrf.mxu0
        %v4358 = vadd.f32 0.0, %v4357
        %4359 = vmatmul.f32.gmra.mxu0 %v4172
        %v4360 = vpop.f32.mrf.mxu0
        %v4361 = vadd.f32 0.0, %v4360
        %4362 = vmatmul.f32.gmra.mxu0 %v4173
        %v4363 = vpop.f32.mrf.mxu0
        %v4364 = vadd.f32 0.0, %v4363
        %4365 = vmatmul.f32.gmra.mxu0 %v4174
        %v4366 = vpop.f32.mrf.mxu0
        %v4367 = vadd.f32 0.0, %v4366
        %4368 = vmatmul.f32.gmra.mxu0 %v4175
        %v4369 = vpop.f32.mrf.mxu0
        %v4370 = vadd.f32 0.0, %v4369
        %4371 = vmatmul.f32.gmra.mxu0 %v4176
        %v4372 = vpop.f32.mrf.mxu0
        %v4373 = vadd.f32 0.0, %v4372
        %4374 = vmatmul.f32.gmra.mxu0 %v4177
        %v4375 = vpop.f32.mrf.mxu0
        %v4376 = vadd.f32 0.0, %v4375
        %4377 = vmatmul.f32.gmra.mxu0 %v4178
        %v4378 = vpop.f32.mrf.mxu0
        %v4379 = vadd.f32 0.0, %v4378
        %4380 = vmatmul.f32.gmra.mxu0 %v4179
        %v4381 = vpop.f32.mrf.mxu0
        %v4382 = vadd.f32 0.0, %v4381
        %4383 = vmatmul.f32.gmra.mxu0 %v4180
        %v4384 = vpop.f32.mrf.mxu0
        %v4385 = vadd.f32 0.0, %v4384
        %4386 = vmatmul.f32.gmra.mxu0 %v4181
        %v4387 = vpop.f32.mrf.mxu0
        %v4388 = vadd.f32 0.0, %v4387
        %4389 = vmatmul.f32.gmra.mxu0 %v4182
        %v4390 = vpop.f32.mrf.mxu0
        %v4391 = vadd.f32 0.0, %v4390
        %4392 = vmatmul.f32.gmra.mxu0 %v4183
        %v4393 = vpop.f32.mrf.mxu0
        %v4394 = vadd.f32 0.0, %v4393
        %4395 = vmatmul.f32.gmra.mxu0 %v4184
        %v4396 = vpop.f32.mrf.mxu0
        %v4397 = vadd.f32 0.0, %v4396
        %4398 = vmatmul.f32.gmra.mxu0 %v4185
        %v4399 = vpop.f32.mrf.mxu0
        %v4400 = vadd.f32 0.0, %v4399
        %4401 = vmatmul.f32.gmra.mxu0 %v4186
        %v4402 = vpop.f32.mrf.mxu0
        %v4403 = vadd.f32 0.0, %v4402
        %4404 = vmatmul.f32.gmra.mxu0 %v4187
        %v4405 = vpop.f32.mrf.mxu0
        %v4406 = vadd.f32 0.0, %v4405
        %4407 = vmatmul.f32.gmra.mxu0 %v4188
        %v4408 = vpop.f32.mrf.mxu0
        %v4409 = vadd.f32 0.0, %v4408
        %4410 = vmatmul.f32.gmra.mxu0 %v4189
        %v4411 = vpop.f32.mrf.mxu0
        %v4412 = vadd.f32 0.0, %v4411
        %4413 = vmatmul.f32.gmra.mxu0 %v4190
        %v4414 = vpop.f32.mrf.mxu0
        %v4415 = vadd.f32 0.0, %v4414
        %4416 = vmatmul.f32.gmra.mxu0 %v4191
        %v4417 = vpop.f32.mrf.mxu0
        %v4418 = vadd.f32 0.0, %v4417
        %4419 = vmatmul.f32.gmra.mxu0 %v4192
        %v4420 = vpop.f32.mrf.mxu0
        %v4421 = vadd.f32 0.0, %v4420
        %4422 = vmatmul.f32.gmra.mxu0 %v4193
        %v4423 = vpop.f32.mrf.mxu0
        %v4424 = vadd.f32 0.0, %v4423
        %4425 = vmatmul.f32.gmra.mxu0 %v4194
        %v4426 = vpop.f32.mrf.mxu0
        %v4427 = vadd.f32 0.0, %v4426
        %4428 = vmatmul.f32.gmra.mxu0 %v4195
        %v4429 = vpop.f32.mrf.mxu0
        %v4430 = vadd.f32 0.0, %v4429
        %4431 = vdwg.mxu0
        %4432 = vmatpush.msra.mxu0 0.0
        %4433 = vmatpush.msra.mxu0 0.0
        %4434 = vmatpush.msra.mxu0 0.0
        %4435 = vmatpush.msra.mxu0 0.0
        %4436 = vmatpush.msra.mxu0 0.0
        %4437 = vmatpush.msra.mxu0 0.0
        %4438 = vmatpush.msra.mxu0 0.0
        %4439 = vmatpush.msra.mxu0 0.0
        %4440 = vmatpush.msra.mxu0 %v4222
        %4441 = vmatpush.msra.mxu0 %v4221
        %4442 = vmatpush.msra.mxu0 %v4220
        %4443 = vmatpush.msra.mxu0 %v4219
        %4444 = vmatpush.msra.mxu0 %v4218
        %4445 = vmatpush.msra.mxu0 %v4217
        %4446 = vmatpush.msra.mxu0 %v4216
        %4447 = vmatpush.msra.mxu0 %v4215
        %4448 = vmatmul.f32.gmra.mxu0 %v4224
        %v4449 = vpop.f32.mrf.mxu0
        %v4450 = vadd.f32 %v4337, %v4449
        %4451 = vmatmul.f32.gmra.mxu0 %v4227
        %v4452 = vpop.f32.mrf.mxu0
        %v4453 = vadd.f32 %v4340, %v4452
        %4454 = vmatmul.f32.gmra.mxu0 %v4230
        %v4455 = vpop.f32.mrf.mxu0
        %v4456 = vadd.f32 %v4343, %v4455
        %4457 = vmatmul.f32.gmra.mxu0 %v4233
        %v4458 = vpop.f32.mrf.mxu0
        %v4459 = vadd.f32 %v4346, %v4458
        %4460 = vmatmul.f32.gmra.mxu0 %v4236
        %v4461 = vpop.f32.mrf.mxu0
        %v4462 = vadd.f32 %v4349, %v4461
        %4463 = vmatmul.f32.gmra.mxu0 %v4239
        %v4464 = vpop.f32.mrf.mxu0
        %v4465 = vadd.f32 %v4352, %v4464
        %4466 = vmatmul.f32.gmra.mxu0 %v4242
        %v4467 = vpop.f32.mrf.mxu0
        %v4468 = vadd.f32 %v4355, %v4467
        %4469 = vmatmul.f32.gmra.mxu0 %v4245
        %v4470 = vpop.f32.mrf.mxu0
        %v4471 = vadd.f32 %v4358, %v4470
        %4472 = vmatmul.f32.gmra.mxu0 %v4248
        %v4473 = vpop.f32.mrf.mxu0
        %v4474 = vadd.f32 %v4361, %v4473
        %4475 = vmatmul.f32.gmra.mxu0 %v4251
        %v4476 = vpop.f32.mrf.mxu0
        %v4477 = vadd.f32 %v4364, %v4476
        %4478 = vmatmul.f32.gmra.mxu0 %v4254
        %v4479 = vpop.f32.mrf.mxu0
        %v4480 = vadd.f32 %v4367, %v4479
        %4481 = vmatmul.f32.gmra.mxu0 %v4257
        %v4482 = vpop.f32.mrf.mxu0
        %v4483 = vadd.f32 %v4370, %v4482
        %4484 = vmatmul.f32.gmra.mxu0 %v4260
        %v4485 = vpop.f32.mrf.mxu0
        %v4486 = vadd.f32 %v4373, %v4485
        %4487 = vmatmul.f32.gmra.mxu0 %v4263
        %v4488 = vpop.f32.mrf.mxu0
        %v4489 = vadd.f32 %v4376, %v4488
        %4490 = vmatmul.f32.gmra.mxu0 %v4266
        %v4491 = vpop.f32.mrf.mxu0
        %v4492 = vadd.f32 %v4379, %v4491
        %4493 = vmatmul.f32.gmra.mxu0 %v4269
        %v4494 = vpop.f32.mrf.mxu0
        %v4495 = vadd.f32 %v4382, %v4494
        %4496 = vmatmul.f32.gmra.mxu0 %v4272
        %v4497 = vpop.f32.mrf.mxu0
        %v4498 = vadd.f32 %v4385, %v4497
        %4499 = vmatmul.f32.gmra.mxu0 %v4275
        %v4500 = vpop.f32.mrf.mxu0
        %v4501 = vadd.f32 %v4388, %v4500
        %4502 = vmatmul.f32.gmra.mxu0 %v4278
        %v4503 = vpop.f32.mrf.mxu0
        %v4504 = vadd.f32 %v4391, %v4503
        %4505 = vmatmul.f32.gmra.mxu0 %v4281
        %v4506 = vpop.f32.mrf.mxu0
        %v4507 = vadd.f32 %v4394, %v4506
        %4508 = vmatmul.f32.gmra.mxu0 %v4284
        %v4509 = vpop.f32.mrf.mxu0
        %v4510 = vadd.f32 %v4397, %v4509
        %4511 = vmatmul.f32.gmra.mxu0 %v4287
        %v4512 = vpop.f32.mrf.mxu0
        %v4513 = vadd.f32 %v4400, %v4512
        %4514 = vmatmul.f32.gmra.mxu0 %v4290
        %v4515 = vpop.f32.mrf.mxu0
        %v4516 = vadd.f32 %v4403, %v4515
        %4517 = vmatmul.f32.gmra.mxu0 %v4293
        %v4518 = vpop.f32.mrf.mxu0
        %v4519 = vadd.f32 %v4406, %v4518
        %4520 = vmatmul.f32.gmra.mxu0 %v4296
        %v4521 = vpop.f32.mrf.mxu0
        %v4522 = vadd.f32 %v4409, %v4521
        %4523 = vmatmul.f32.gmra.mxu0 %v4299
        %v4524 = vpop.f32.mrf.mxu0
        %v4525 = vadd.f32 %v4412, %v4524
        %4526 = vmatmul.f32.gmra.mxu0 %v4302
        %v4527 = vpop.f32.mrf.mxu0
        %v4528 = vadd.f32 %v4415, %v4527
        %4529 = vmatmul.f32.gmra.mxu0 %v4305
        %v4530 = vpop.f32.mrf.mxu0
        %v4531 = vadd.f32 %v4418, %v4530
        %4532 = vmatmul.f32.gmra.mxu0 %v4308
        %v4533 = vpop.f32.mrf.mxu0
        %v4534 = vadd.f32 %v4421, %v4533
        %4535 = vmatmul.f32.gmra.mxu0 %v4311
        %v4536 = vpop.f32.mrf.mxu0
        %v4537 = vadd.f32 %v4424, %v4536
        %4538 = vmatmul.f32.gmra.mxu0 %v4314
        %v4539 = vpop.f32.mrf.mxu0
        %v4540 = vadd.f32 %v4427, %v4539
        %4541 = vmatmul.f32.gmra.mxu0 %v4317
        %v4542 = vpop.f32.mrf.mxu0
        %v4543 = vadd.f32 %v4430, %v4542
        %4544 = vdwg.mxu0
        %v4545 = vadd.f32 %v3844, %v4450
        %v4546 = vadd.f32 %v3847, %v4453
        %v4547 = vadd.f32 %v3850, %v4456
        %v4548 = vadd.f32 %v3853, %v4459
        %v4549 = vadd.f32 %v3856, %v4462
        %v4550 = vadd.f32 %v3859, %v4465
        %v4551 = vadd.f32 %v3862, %v4468
        %v4552 = vadd.f32 %v3865, %v4471
        %v4553 = vadd.f32 %v3868, %v4474
        %v4554 = vadd.f32 %v3871, %v4477
        %v4555 = vadd.f32 %v3874, %v4480
        %v4556 = vadd.f32 %v3877, %v4483
        %v4557 = vadd.f32 %v3880, %v4486
        %v4558 = vadd.f32 %v3883, %v4489
        %v4559 = vadd.f32 %v3886, %v4492
        %v4560 = vadd.f32 %v3889, %v4495
        %v4561 = vadd.f32 %v3892, %v4498
        %v4562 = vadd.f32 %v3895, %v4501
        %v4563 = vadd.f32 %v3898, %v4504
        %v4564 = vadd.f32 %v3901, %v4507
        %v4565 = vadd.f32 %v3904, %v4510
        %v4566 = vadd.f32 %v3907, %v4513
        %v4567 = vadd.f32 %v3910, %v4516
        %v4568 = vadd.f32 %v3913, %v4519
        %v4569 = vadd.f32 %v3916, %v4522
        %v4570 = vadd.f32 %v3919, %v4525
        %v4571 = vadd.f32 %v3922, %v4528
        %v4572 = vadd.f32 %v3925, %v4531
        %v4573 = vadd.f32 %v3928, %v4534
        %v4574 = vadd.f32 %v3931, %v4537
        %v4575 = vadd.f32 %v3934, %v4540
        %v4576 = vadd.f32 %v3937, %v4543
        %v4577 = vmax.f32 %v4545, 0.0
        %v4578 = vmax.f32 %v4546, 0.0
        %v4579 = vmax.f32 %v4547, 0.0
        %v4580 = vmax.f32 %v4548, 0.0
        %v4581 = vmax.f32 %v4549, 0.0
        %v4582 = vmax.f32 %v4550, 0.0
        %v4583 = vmax.f32 %v4551, 0.0
        %v4584 = vmax.f32 %v4552, 0.0
        %v4585 = vmax.f32 %v4553, 0.0
        %v4586 = vmax.f32 %v4554, 0.0
        %v4587 = vmax.f32 %v4555, 0.0
        %v4588 = vmax.f32 %v4556, 0.0
        %v4589 = vmax.f32 %v4557, 0.0
        %v4590 = vmax.f32 %v4558, 0.0
        %v4591 = vmax.f32 %v4559, 0.0
        %v4592 = vmax.f32 %v4560, 0.0
        %v4593 = vmax.f32 %v4561, 0.0
        %v4594 = vmax.f32 %v4562, 0.0
        %v4595 = vmax.f32 %v4563, 0.0
        %v4596 = vmax.f32 %v4564, 0.0
        %v4597 = vmax.f32 %v4565, 0.0
        %v4598 = vmax.f32 %v4566, 0.0
        %v4599 = vmax.f32 %v4567, 0.0
        %v4600 = vmax.f32 %v4568, 0.0
        %v4601 = vmax.f32 %v4569, 0.0
        %v4602 = vmax.f32 %v4570, 0.0
        %v4603 = vmax.f32 %v4571, 0.0
        %v4604 = vmax.f32 %v4572, 0.0
        %v4605 = vmax.f32 %v4573, 0.0
        %v4606 = vmax.f32 %v4574, 0.0
        %v4607 = vmax.f32 %v4575, 0.0
        %v4608 = vmax.f32 %v4576, 0.0
        %s4609 = scalar_lea.vmem [#allocation3], 24
        %4610 = vst.msk [vmem:[%s4609 + $0x1] sm:$0xff] %vm198, %v4577
        %4611 = vst.msk [vmem:[%s4609 + $0x9] sm:$0xff] %vm198, %v4578
        %4612 = vst.msk [vmem:[%s4609 + $0x19] sm:$0xff] %vm198, %v4579
        %4613 = vst.msk [vmem:[%s4609 + $0x21] sm:$0xff] %vm198, %v4580
        %4614 = vst.msk [vmem:[%s4609 + $0x31] sm:$0xff] %vm198, %v4581
        %4615 = vst.msk [vmem:[%s4609 + $0x39] sm:$0xff] %vm198, %v4582
        %4616 = vst.msk [vmem:[%s4609 + $0x49] sm:$0xff] %vm198, %v4583
        %4617 = vst.msk [vmem:[%s4609 + $0x51] sm:$0xff] %vm198, %v4584
        %4618 = vst.msk [vmem:[%s4609 + $0x61] sm:$0xff] %vm198, %v4585
        %4619 = vst.msk [vmem:[%s4609 + $0x69] sm:$0xff] %vm198, %v4586
        %4620 = vst.msk [vmem:[%s4609 + $0x79] sm:$0xff] %vm198, %v4587
        %4621 = vst.msk [vmem:[%s4609 + $0x81] sm:$0xff] %vm198, %v4588
        %4622 = vst.msk [vmem:[%s4609 + $0x91] sm:$0xff] %vm198, %v4589
        %4623 = vst.msk [vmem:[%s4609 + $0x99] sm:$0xff] %vm198, %v4590
        %4624 = vst.msk [vmem:[%s4609 + $0xa9] sm:$0xff] %vm198, %v4591
        %4625 = vst.msk [vmem:[%s4609 + $0xb1] sm:$0xff] %vm198, %v4592
        %4626 = vst.msk [vmem:[%s4609 + $0xc1] sm:$0xff] %vm198, %v4593
        %4627 = vst.msk [vmem:[%s4609 + $0xc9] sm:$0xff] %vm198, %v4594
        %4628 = vst.msk [vmem:[%s4609 + $0xd9] sm:$0xff] %vm198, %v4595
        %4629 = vst.msk [vmem:[%s4609 + $0xe1] sm:$0xff] %vm198, %v4596
        %4630 = vst.msk [vmem:[%s4609 + $0xf1] sm:$0xff] %vm198, %v4597
        %4631 = vst.msk [vmem:[%s4609 + $0xf9] sm:$0xff] %vm198, %v4598
        %4632 = vst.msk [vmem:[%s4609 + $0x109] sm:$0xff] %vm198, %v4599
        %4633 = vst.msk [vmem:[%s4609 + $0x111] sm:$0xff] %vm198, %v4600
        %4634 = vst.msk [vmem:[%s4609 + $0x121] sm:$0xff] %vm198, %v4601
        %4635 = vst.msk [vmem:[%s4609 + $0x129] sm:$0xff] %vm198, %v4602
        %4636 = vst.msk [vmem:[%s4609 + $0x139] sm:$0xff] %vm198, %v4603
        %4637 = vst.msk [vmem:[%s4609 + $0x141] sm:$0xff] %vm198, %v4604
        %4638 = vst.msk [vmem:[%s4609 + $0x151] sm:$0xff] %vm198, %v4605
        %4639 = vst.msk [vmem:[%s4609 + $0x159] sm:$0xff] %vm198, %v4606
        %4640 = vst.msk [vmem:[%s4609 + $0x169] sm:$0xff] %vm198, %v4607
        %4641 = vst.msk [vmem:[%s4609 + $0x171] sm:$0xff] %vm198, %v4608
        %s4642 = smul.u32 %s2724, 2
        %s4643 = sadd.s32 %s4642, 1
        %v4644 = vld [vmem:[#allocation3] sm:$0xff]
        %v4645 = vld [vmem:[#allocation3 + $0x8] sm:$0xff]
        %v4646 = vld [vmem:[#allocation3 + $0x18] sm:$0xff]
        %v4647 = vld [vmem:[#allocation3 + $0x20] sm:$0xff]
        %v4648 = vld [vmem:[#allocation3 + $0x30] sm:$0xff]
        %v4649 = vld [vmem:[#allocation3 + $0x38] sm:$0xff]
        %v4650 = vld [vmem:[#allocation3 + $0x48] sm:$0xff]
        %v4651 = vld [vmem:[#allocation3 + $0x50] sm:$0xff]
        %v4652 = vld [vmem:[#allocation3 + $0x60] sm:$0xff]
        %v4653 = vld [vmem:[#allocation3 + $0x68] sm:$0xff]
        %v4654 = vld [vmem:[#allocation3 + $0x78] sm:$0xff]
        %v4655 = vld [vmem:[#allocation3 + $0x80] sm:$0xff]
        %v4656 = vld [vmem:[#allocation3 + $0x90] sm:$0xff]
        %v4657 = vld [vmem:[#allocation3 + $0x98] sm:$0xff]
        %v4658 = vld [vmem:[#allocation3 + $0xa8] sm:$0xff]
        %v4659 = vld [vmem:[#allocation3 + $0xb0] sm:$0xff]
        %v4660 = vld [vmem:[#allocation3 + $0xc0] sm:$0xff]
        %v4661 = vld [vmem:[#allocation3 + $0xc8] sm:$0xff]
        %v4662 = vld [vmem:[#allocation3 + $0xd8] sm:$0xff]
        %v4663 = vld [vmem:[#allocation3 + $0xe0] sm:$0xff]
        %v4664 = vld [vmem:[#allocation3 + $0xf0] sm:$0xff]
        %v4665 = vld [vmem:[#allocation3 + $0xf8] sm:$0xff]
        %v4666 = vld [vmem:[#allocation3 + $0x108] sm:$0xff]
        %v4667 = vld [vmem:[#allocation3 + $0x110] sm:$0xff]
        %v4668 = vld [vmem:[#allocation3 + $0x120] sm:$0xff]
        %v4669 = vld [vmem:[#allocation3 + $0x128] sm:$0xff]
        %v4670 = vld [vmem:[#allocation3 + $0x138] sm:$0xff]
        %v4671 = vld [vmem:[#allocation3 + $0x140] sm:$0xff]
        %v4672 = vld [vmem:[#allocation3 + $0x150] sm:$0xff]
        %v4673 = vld [vmem:[#allocation3 + $0x158] sm:$0xff]
        %v4674 = vld [vmem:[#allocation3 + $0x168] sm:$0xff]
        %v4675 = vld [vmem:[#allocation3 + $0x170] sm:$0xff]
        %v4676 = vld [vmem:[#allocation3 + $0x1] sm:$0xff]
        %v4677 = vld [vmem:[#allocation3 + $0x9] sm:$0xff]
        %v4678 = vld [vmem:[#allocation3 + $0x19] sm:$0xff]
        %v4679 = vld [vmem:[#allocation3 + $0x21] sm:$0xff]
        %v4680 = vld [vmem:[#allocation3 + $0x31] sm:$0xff]
        %v4681 = vld [vmem:[#allocation3 + $0x39] sm:$0xff]
        %v4682 = vld [vmem:[#allocation3 + $0x49] sm:$0xff]
        %v4683 = vld [vmem:[#allocation3 + $0x51] sm:$0xff]
        %v4684 = vld [vmem:[#allocation3 + $0x61] sm:$0xff]
        %v4685 = vld [vmem:[#allocation3 + $0x69] sm:$0xff]
        %v4686 = vld [vmem:[#allocation3 + $0x79] sm:$0xff]
        %v4687 = vld [vmem:[#allocation3 + $0x81] sm:$0xff]
        %v4688 = vld [vmem:[#allocation3 + $0x91] sm:$0xff]
        %v4689 = vld [vmem:[#allocation3 + $0x99] sm:$0xff]
        %v4690 = vld [vmem:[#allocation3 + $0xa9] sm:$0xff]
        %v4691 = vld [vmem:[#allocation3 + $0xb1] sm:$0xff]
        %v4692 = vld [vmem:[#allocation3 + $0xc1] sm:$0xff]
        %v4693 = vld [vmem:[#allocation3 + $0xc9] sm:$0xff]
        %v4694 = vld [vmem:[#allocation3 + $0xd9] sm:$0xff]
        %v4695 = vld [vmem:[#allocation3 + $0xe1] sm:$0xff]
        %v4696 = vld [vmem:[#allocation3 + $0xf1] sm:$0xff]
        %v4697 = vld [vmem:[#allocation3 + $0xf9] sm:$0xff]
        %v4698 = vld [vmem:[#allocation3 + $0x109] sm:$0xff]
        %v4699 = vld [vmem:[#allocation3 + $0x111] sm:$0xff]
        %v4700 = vld [vmem:[#allocation3 + $0x121] sm:$0xff]
        %v4701 = vld [vmem:[#allocation3 + $0x129] sm:$0xff]
        %v4702 = vld [vmem:[#allocation3 + $0x139] sm:$0xff]
        %v4703 = vld [vmem:[#allocation3 + $0x141] sm:$0xff]
        %v4704 = vld [vmem:[#allocation3 + $0x151] sm:$0xff]
        %v4705 = vld [vmem:[#allocation3 + $0x159] sm:$0xff]
        %v4706 = vld [vmem:[#allocation3 + $0x169] sm:$0xff]
        %v4707 = vld [vmem:[#allocation3 + $0x171] sm:$0xff]
        %v4708 = vld [vmem:[#allocation3 + $0x2] sm:$0xff]
        %v4709 = vld [vmem:[#allocation3 + $0xa] sm:$0xff]
        %v4710 = vld [vmem:[#allocation3 + $0x1a] sm:$0xff]
        %v4711 = vld [vmem:[#allocation3 + $0x22] sm:$0xff]
        %v4712 = vld [vmem:[#allocation3 + $0x32] sm:$0xff]
        %v4713 = vld [vmem:[#allocation3 + $0x3a] sm:$0xff]
        %v4714 = vld [vmem:[#allocation3 + $0x4a] sm:$0xff]
        %v4715 = vld [vmem:[#allocation3 + $0x52] sm:$0xff]
        %v4716 = vld [vmem:[#allocation3 + $0x62] sm:$0xff]
        %v4717 = vld [vmem:[#allocation3 + $0x6a] sm:$0xff]
        %v4718 = vld [vmem:[#allocation3 + $0x7a] sm:$0xff]
        %v4719 = vld [vmem:[#allocation3 + $0x82] sm:$0xff]
        %v4720 = vld [vmem:[#allocation3 + $0x92] sm:$0xff]
        %v4721 = vld [vmem:[#allocation3 + $0x9a] sm:$0xff]
        %v4722 = vld [vmem:[#allocation3 + $0xaa] sm:$0xff]
        %v4723 = vld [vmem:[#allocation3 + $0xb2] sm:$0xff]
        %v4724 = vld [vmem:[#allocation3 + $0xc2] sm:$0xff]
        %v4725 = vld [vmem:[#allocation3 + $0xca] sm:$0xff]
        %v4726 = vld [vmem:[#allocation3 + $0xda] sm:$0xff]
        %v4727 = vld [vmem:[#allocation3 + $0xe2] sm:$0xff]
        %v4728 = vld [vmem:[#allocation3 + $0xf2] sm:$0xff]
        %v4729 = vld [vmem:[#allocation3 + $0xfa] sm:$0xff]
        %v4730 = vld [vmem:[#allocation3 + $0x10a] sm:$0xff]
        %v4731 = vld [vmem:[#allocation3 + $0x112] sm:$0xff]
        %v4732 = vld [vmem:[#allocation3 + $0x122] sm:$0xff]
        %v4733 = vld [vmem:[#allocation3 + $0x12a] sm:$0xff]
        %v4734 = vld [vmem:[#allocation3 + $0x13a] sm:$0xff]
        %v4735 = vld [vmem:[#allocation3 + $0x142] sm:$0xff]
        %v4736 = vld [vmem:[#allocation3 + $0x152] sm:$0xff]
        %v4737 = vld [vmem:[#allocation3 + $0x15a] sm:$0xff]
        %v4738 = vld [vmem:[#allocation3 + $0x16a] sm:$0xff]
        %v4739 = vld [vmem:[#allocation3 + $0x172] sm:$0xff]
        %4772 = vrot.lane.b32.xlu0 %v4676, 64
        %v4773 = vpop.permute.xlu0 %4772
        %4774 = vrot.lane.b32.xlu0 %v4677, 64
        %v4775 = vpop.permute.xlu0 %4774
        %4776 = vrot.lane.b32.xlu0 %v4678, 64
        %v4777 = vpop.permute.xlu0 %4776
        %4778 = vrot.lane.b32.xlu0 %v4679, 64
        %v4779 = vpop.permute.xlu0 %4778
        %4780 = vrot.lane.b32.xlu0 %v4680, 64
        %v4781 = vpop.permute.xlu0 %4780
        %4782 = vrot.lane.b32.xlu0 %v4681, 64
        %v4783 = vpop.permute.xlu0 %4782
        %4784 = vrot.lane.b32.xlu0 %v4682, 64
        %v4785 = vpop.permute.xlu0 %4784
        %4786 = vrot.lane.b32.xlu0 %v4683, 64
        %v4787 = vpop.permute.xlu0 %4786
        %4788 = vrot.lane.b32.xlu0 %v4684, 64
        %v4789 = vpop.permute.xlu0 %4788
        %4790 = vrot.lane.b32.xlu0 %v4685, 64
        %v4791 = vpop.permute.xlu0 %4790
        %4792 = vrot.lane.b32.xlu0 %v4686, 64
        %v4793 = vpop.permute.xlu0 %4792
        %4794 = vrot.lane.b32.xlu0 %v4687, 64
        %v4795 = vpop.permute.xlu0 %4794
        %4796 = vrot.lane.b32.xlu0 %v4688, 64
        %v4797 = vpop.permute.xlu0 %4796
        %4798 = vrot.lane.b32.xlu0 %v4689, 64
        %v4799 = vpop.permute.xlu0 %4798
        %4800 = vrot.lane.b32.xlu0 %v4690, 64
        %v4801 = vpop.permute.xlu0 %4800
        %4802 = vrot.lane.b32.xlu0 %v4691, 64
        %v4803 = vpop.permute.xlu0 %4802
        %4804 = vrot.lane.b32.xlu0 %v4692, 64
        %v4805 = vpop.permute.xlu0 %4804
        %4806 = vrot.lane.b32.xlu0 %v4693, 64
        %v4807 = vpop.permute.xlu0 %4806
        %4808 = vrot.lane.b32.xlu0 %v4694, 64
        %v4809 = vpop.permute.xlu0 %4808
        %4810 = vrot.lane.b32.xlu0 %v4695, 64
        %v4811 = vpop.permute.xlu0 %4810
        %4812 = vrot.lane.b32.xlu0 %v4696, 64
        %v4813 = vpop.permute.xlu0 %4812
        %4814 = vrot.lane.b32.xlu0 %v4697, 64
        %v4815 = vpop.permute.xlu0 %4814
        %4816 = vrot.lane.b32.xlu0 %v4698, 64
        %v4817 = vpop.permute.xlu0 %4816
        %4818 = vrot.lane.b32.xlu0 %v4699, 64
        %v4819 = vpop.permute.xlu0 %4818
        %4820 = vrot.lane.b32.xlu0 %v4700, 64
        %v4821 = vpop.permute.xlu0 %4820
        %4822 = vrot.lane.b32.xlu0 %v4701, 64
        %v4823 = vpop.permute.xlu0 %4822
        %4824 = vrot.lane.b32.xlu0 %v4702, 64
        %v4825 = vpop.permute.xlu0 %4824
        %4826 = vrot.lane.b32.xlu0 %v4703, 64
        %v4827 = vpop.permute.xlu0 %4826
        %4828 = vrot.lane.b32.xlu0 %v4704, 64
        %v4829 = vpop.permute.xlu0 %4828
        %4830 = vrot.lane.b32.xlu0 %v4705, 64
        %v4831 = vpop.permute.xlu0 %4830
        %4832 = vrot.lane.b32.xlu0 %v4706, 64
        %v4833 = vpop.permute.xlu0 %4832
        %4834 = vrot.lane.b32.xlu0 %v4707, 64
        %v4835 = vpop.permute.xlu0 %4834
        %v4868 = vsel %vm198, %v4644, %v4773
        %v4869 = vsel %vm198, %v4645, %v4775
        %v4870 = vsel %vm198, %v4646, %v4777
        %v4871 = vsel %vm198, %v4647, %v4779
        %v4872 = vsel %vm198, %v4648, %v4781
        %v4873 = vsel %vm198, %v4649, %v4783
        %v4874 = vsel %vm198, %v4650, %v4785
        %v4875 = vsel %vm198, %v4651, %v4787
        %v4876 = vsel %vm198, %v4652, %v4789
        %v4877 = vsel %vm198, %v4653, %v4791
        %v4878 = vsel %vm198, %v4654, %v4793
        %v4879 = vsel %vm198, %v4655, %v4795
        %v4880 = vsel %vm198, %v4656, %v4797
        %v4881 = vsel %vm198, %v4657, %v4799
        %v4882 = vsel %vm198, %v4658, %v4801
        %v4883 = vsel %vm198, %v4659, %v4803
        %v4884 = vsel %vm198, %v4660, %v4805
        %v4885 = vsel %vm198, %v4661, %v4807
        %v4886 = vsel %vm198, %v4662, %v4809
        %v4887 = vsel %vm198, %v4663, %v4811
        %v4888 = vsel %vm198, %v4664, %v4813
        %v4889 = vsel %vm198, %v4665, %v4815
        %v4890 = vsel %vm198, %v4666, %v4817
        %v4891 = vsel %vm198, %v4667, %v4819
        %v4892 = vsel %vm198, %v4668, %v4821
        %v4893 = vsel %vm198, %v4669, %v4823
        %v4894 = vsel %vm198, %v4670, %v4825
        %v4895 = vsel %vm198, %v4671, %v4827
        %v4896 = vsel %vm198, %v4672, %v4829
        %v4897 = vsel %vm198, %v4673, %v4831
        %v4898 = vsel %vm198, %v4674, %v4833
        %v4899 = vsel %vm198, %v4675, %v4835
        %s4900 = smul.u32 %s4643, 3
        %s4901 = smul.u32 %s4900, 192
        %s4902 = scalar_lea.vmem %s2, %s4901
        %v4903 = vld [vmem:[%s4902] sm:$0xff]
        %v4904 = vld [vmem:[%s4902 + $0x8] sm:$0xff]
        %v4905 = vld [vmem:[%s4902 + $0x10] sm:$0xff]
        %v4906 = vld [vmem:[%s4902 + $0x18] sm:$0xff]
        %v4907 = vld [vmem:[%s4902 + $0x20] sm:$0xff]
        %v4908 = vld [vmem:[%s4902 + $0x28] sm:$0xff]
        %v4909 = vld [vmem:[%s4902 + $0x30] sm:$0xff]
        %v4910 = vld [vmem:[%s4902 + $0x38] sm:$0xff]
        %v4911 = vld [vmem:[%s4902 + $0x40] sm:$0xff]
        %v4912 = vld [vmem:[%s4902 + $0x48] sm:$0xff]
        %v4913 = vld [vmem:[%s4902 + $0x50] sm:$0xff]
        %v4914 = vld [vmem:[%s4902 + $0x58] sm:$0xff]
        %v4915 = vld [vmem:[%s4902 + $0x60] sm:$0xff]
        %v4916 = vld [vmem:[%s4902 + $0x68] sm:$0xff]
        %v4917 = vld [vmem:[%s4902 + $0x70] sm:$0xff]
        %v4918 = vld [vmem:[%s4902 + $0x78] sm:$0xff]
        %v4919 = vld [vmem:[%s4902 + $0x80] sm:$0xff]
        %v4920 = vld [vmem:[%s4902 + $0x88] sm:$0xff]
        %v4921 = vld [vmem:[%s4902 + $0x90] sm:$0xff]
        %v4922 = vld [vmem:[%s4902 + $0x98] sm:$0xff]
        %v4923 = vld [vmem:[%s4902 + $0xa0] sm:$0xff]
        %v4924 = vld [vmem:[%s4902 + $0xa8] sm:$0xff]
        %v4925 = vld [vmem:[%s4902 + $0xb0] sm:$0xff]
        %v4926 = vld [vmem:[%s4902 + $0xb8] sm:$0xff]
        %v4927 = vld [vmem:[%s4609] sm:$0xff]
        %v4928 = vld [vmem:[%s4609 + $0x8] sm:$0xff]
        %v4929 = vld [vmem:[%s4609 + $0x18] sm:$0xff]
        %v4930 = vld [vmem:[%s4609 + $0x20] sm:$0xff]
        %v4931 = vld [vmem:[%s4609 + $0x30] sm:$0xff]
        %v4932 = vld [vmem:[%s4609 + $0x38] sm:$0xff]
        %v4933 = vld [vmem:[%s4609 + $0x48] sm:$0xff]
        %v4934 = vld [vmem:[%s4609 + $0x50] sm:$0xff]
        %v4935 = vld [vmem:[%s4609 + $0x60] sm:$0xff]
        %v4936 = vld [vmem:[%s4609 + $0x68] sm:$0xff]
        %v4937 = vld [vmem:[%s4609 + $0x78] sm:$0xff]
        %v4938 = vld [vmem:[%s4609 + $0x80] sm:$0xff]
        %v4939 = vld [vmem:[%s4609 + $0x90] sm:$0xff]
        %v4940 = vld [vmem:[%s4609 + $0x98] sm:$0xff]
        %v4941 = vld [vmem:[%s4609 + $0xa8] sm:$0xff]
        %v4942 = vld [vmem:[%s4609 + $0xb0] sm:$0xff]
        %v4943 = vld [vmem:[%s4609 + $0xc0] sm:$0xff]
        %v4944 = vld [vmem:[%s4609 + $0xc8] sm:$0xff]
        %v4945 = vld [vmem:[%s4609 + $0xd8] sm:$0xff]
        %v4946 = vld [vmem:[%s4609 + $0xe0] sm:$0xff]
        %v4947 = vld [vmem:[%s4609 + $0xf0] sm:$0xff]
        %v4948 = vld [vmem:[%s4609 + $0xf8] sm:$0xff]
        %v4949 = vld [vmem:[%s4609 + $0x108] sm:$0xff]
        %v4950 = vld [vmem:[%s4609 + $0x110] sm:$0xff]
        %v4951 = vld [vmem:[%s4609 + $0x120] sm:$0xff]
        %v4952 = vld [vmem:[%s4609 + $0x128] sm:$0xff]
        %v4953 = vld [vmem:[%s4609 + $0x138] sm:$0xff]
        %v4954 = vld [vmem:[%s4609 + $0x140] sm:$0xff]
        %v4955 = vld [vmem:[%s4609 + $0x150] sm:$0xff]
        %v4956 = vld [vmem:[%s4609 + $0x158] sm:$0xff]
        %v4957 = vld [vmem:[%s4609 + $0x168] sm:$0xff]
        %v4958 = vld [vmem:[%s4609 + $0x170] sm:$0xff]
        %v4959 = vld [vmem:[%s4609 + $0x1] sm:$0xff]
        %v4960 = vld [vmem:[%s4609 + $0x9] sm:$0xff]
        %v4961 = vld [vmem:[%s4609 + $0x19] sm:$0xff]
        %v4962 = vld [vmem:[%s4609 + $0x21] sm:$0xff]
        %v4963 = vld [vmem:[%s4609 + $0x31] sm:$0xff]
        %v4964 = vld [vmem:[%s4609 + $0x39] sm:$0xff]
        %v4965 = vld [vmem:[%s4609 + $0x49] sm:$0xff]
        %v4966 = vld [vmem:[%s4609 + $0x51] sm:$0xff]
        %v4967 = vld [vmem:[%s4609 + $0x61] sm:$0xff]
        %v4968 = vld [vmem:[%s4609 + $0x69] sm:$0xff]
        %v4969 = vld [vmem:[%s4609 + $0x79] sm:$0xff]
        %v4970 = vld [vmem:[%s4609 + $0x81] sm:$0xff]
        %v4971 = vld [vmem:[%s4609 + $0x91] sm:$0xff]
        %v4972 = vld [vmem:[%s4609 + $0x99] sm:$0xff]
        %v4973 = vld [vmem:[%s4609 + $0xa9] sm:$0xff]
        %v4974 = vld [vmem:[%s4609 + $0xb1] sm:$0xff]
        %v4975 = vld [vmem:[%s4609 + $0xc1] sm:$0xff]
        %v4976 = vld [vmem:[%s4609 + $0xc9] sm:$0xff]
        %v4977 = vld [vmem:[%s4609 + $0xd9] sm:$0xff]
        %v4978 = vld [vmem:[%s4609 + $0xe1] sm:$0xff]
        %v4979 = vld [vmem:[%s4609 + $0xf1] sm:$0xff]
        %v4980 = vld [vmem:[%s4609 + $0xf9] sm:$0xff]
        %v4981 = vld [vmem:[%s4609 + $0x109] sm:$0xff]
        %v4982 = vld [vmem:[%s4609 + $0x111] sm:$0xff]
        %v4983 = vld [vmem:[%s4609 + $0x121] sm:$0xff]
        %v4984 = vld [vmem:[%s4609 + $0x129] sm:$0xff]
        %v4985 = vld [vmem:[%s4609 + $0x139] sm:$0xff]
        %v4986 = vld [vmem:[%s4609 + $0x141] sm:$0xff]
        %v4987 = vld [vmem:[%s4609 + $0x151] sm:$0xff]
        %v4988 = vld [vmem:[%s4609 + $0x159] sm:$0xff]
        %v4989 = vld [vmem:[%s4609 + $0x169] sm:$0xff]
        %v4990 = vld [vmem:[%s4609 + $0x171] sm:$0xff]
        %v4991 = vld [vmem:[%s4609 + $0x2] sm:$0xff]
        %v4992 = vld [vmem:[%s4609 + $0xa] sm:$0xff]
        %v4993 = vld [vmem:[%s4609 + $0x1a] sm:$0xff]
        %v4994 = vld [vmem:[%s4609 + $0x22] sm:$0xff]
        %v4995 = vld [vmem:[%s4609 + $0x32] sm:$0xff]
        %v4996 = vld [vmem:[%s4609 + $0x3a] sm:$0xff]
        %v4997 = vld [vmem:[%s4609 + $0x4a] sm:$0xff]
        %v4998 = vld [vmem:[%s4609 + $0x52] sm:$0xff]
        %v4999 = vld [vmem:[%s4609 + $0x62] sm:$0xff]
        %v5000 = vld [vmem:[%s4609 + $0x6a] sm:$0xff]
        %v5001 = vld [vmem:[%s4609 + $0x7a] sm:$0xff]
        %v5002 = vld [vmem:[%s4609 + $0x82] sm:$0xff]
        %v5003 = vld [vmem:[%s4609 + $0x92] sm:$0xff]
        %v5004 = vld [vmem:[%s4609 + $0x9a] sm:$0xff]
        %v5005 = vld [vmem:[%s4609 + $0xaa] sm:$0xff]
        %v5006 = vld [vmem:[%s4609 + $0xb2] sm:$0xff]
        %v5007 = vld [vmem:[%s4609 + $0xc2] sm:$0xff]
        %v5008 = vld [vmem:[%s4609 + $0xca] sm:$0xff]
        %v5009 = vld [vmem:[%s4609 + $0xda] sm:$0xff]
        %v5010 = vld [vmem:[%s4609 + $0xe2] sm:$0xff]
        %v5011 = vld [vmem:[%s4609 + $0xf2] sm:$0xff]
        %v5012 = vld [vmem:[%s4609 + $0xfa] sm:$0xff]
        %v5013 = vld [vmem:[%s4609 + $0x10a] sm:$0xff]
        %v5014 = vld [vmem:[%s4609 + $0x112] sm:$0xff]
        %v5015 = vld [vmem:[%s4609 + $0x122] sm:$0xff]
        %v5016 = vld [vmem:[%s4609 + $0x12a] sm:$0xff]
        %v5017 = vld [vmem:[%s4609 + $0x13a] sm:$0xff]
        %v5018 = vld [vmem:[%s4609 + $0x142] sm:$0xff]
        %v5019 = vld [vmem:[%s4609 + $0x152] sm:$0xff]
        %v5020 = vld [vmem:[%s4609 + $0x15a] sm:$0xff]
        %v5021 = vld [vmem:[%s4609 + $0x16a] sm:$0xff]
        %v5022 = vld [vmem:[%s4609 + $0x172] sm:$0xff]
        %5055 = vrot.lane.b32.xlu0 %v4959, 64
        %v5056 = vpop.permute.xlu0 %5055
        %5057 = vrot.lane.b32.xlu0 %v4960, 64
        %v5058 = vpop.permute.xlu0 %5057
        %5059 = vrot.lane.b32.xlu0 %v4961, 64
        %v5060 = vpop.permute.xlu0 %5059
        %5061 = vrot.lane.b32.xlu0 %v4962, 64
        %v5062 = vpop.permute.xlu0 %5061
        %5063 = vrot.lane.b32.xlu0 %v4963, 64
        %v5064 = vpop.permute.xlu0 %5063
        %5065 = vrot.lane.b32.xlu0 %v4964, 64
        %v5066 = vpop.permute.xlu0 %5065
        %5067 = vrot.lane.b32.xlu0 %v4965, 64
        %v5068 = vpop.permute.xlu0 %5067
        %5069 = vrot.lane.b32.xlu0 %v4966, 64
        %v5070 = vpop.permute.xlu0 %5069
        %5071 = vrot.lane.b32.xlu0 %v4967, 64
        %v5072 = vpop.permute.xlu0 %5071
        %5073 = vrot.lane.b32.xlu0 %v4968, 64
        %v5074 = vpop.permute.xlu0 %5073
        %5075 = vrot.lane.b32.xlu0 %v4969, 64
        %v5076 = vpop.permute.xlu0 %5075
        %5077 = vrot.lane.b32.xlu0 %v4970, 64
        %v5078 = vpop.permute.xlu0 %5077
        %5079 = vrot.lane.b32.xlu0 %v4971, 64
        %v5080 = vpop.permute.xlu0 %5079
        %5081 = vrot.lane.b32.xlu0 %v4972, 64
        %v5082 = vpop.permute.xlu0 %5081
        %5083 = vrot.lane.b32.xlu0 %v4973, 64
        %v5084 = vpop.permute.xlu0 %5083
        %5085 = vrot.lane.b32.xlu0 %v4974, 64
        %v5086 = vpop.permute.xlu0 %5085
        %5087 = vrot.lane.b32.xlu0 %v4975, 64
        %v5088 = vpop.permute.xlu0 %5087
        %5089 = vrot.lane.b32.xlu0 %v4976, 64
        %v5090 = vpop.permute.xlu0 %5089
        %5091 = vrot.lane.b32.xlu0 %v4977, 64
        %v5092 = vpop.permute.xlu0 %5091
        %5093 = vrot.lane.b32.xlu0 %v4978, 64
        %v5094 = vpop.permute.xlu0 %5093
        %5095 = vrot.lane.b32.xlu0 %v4979, 64
        %v5096 = vpop.permute.xlu0 %5095
        %5097 = vrot.lane.b32.xlu0 %v4980, 64
        %v5098 = vpop.permute.xlu0 %5097
        %5099 = vrot.lane.b32.xlu0 %v4981, 64
        %v5100 = vpop.permute.xlu0 %5099
        %5101 = vrot.lane.b32.xlu0 %v4982, 64
        %v5102 = vpop.permute.xlu0 %5101
        %5103 = vrot.lane.b32.xlu0 %v4983, 64
        %v5104 = vpop.permute.xlu0 %5103
        %5105 = vrot.lane.b32.xlu0 %v4984, 64
        %v5106 = vpop.permute.xlu0 %5105
        %5107 = vrot.lane.b32.xlu0 %v4985, 64
        %v5108 = vpop.permute.xlu0 %5107
        %5109 = vrot.lane.b32.xlu0 %v4986, 64
        %v5110 = vpop.permute.xlu0 %5109
        %5111 = vrot.lane.b32.xlu0 %v4987, 64
        %v5112 = vpop.permute.xlu0 %5111
        %5113 = vrot.lane.b32.xlu0 %v4988, 64
        %v5114 = vpop.permute.xlu0 %5113
        %5115 = vrot.lane.b32.xlu0 %v4989, 64
        %v5116 = vpop.permute.xlu0 %5115
        %5117 = vrot.lane.b32.xlu0 %v4990, 64
        %v5118 = vpop.permute.xlu0 %5117
        %v5151 = vsel %vm198, %v4927, %v5056
        %v5152 = vsel %vm198, %v4928, %v5058
        %v5153 = vsel %vm198, %v4929, %v5060
        %v5154 = vsel %vm198, %v4930, %v5062
        %v5155 = vsel %vm198, %v4931, %v5064
        %v5156 = vsel %vm198, %v4932, %v5066
        %v5157 = vsel %vm198, %v4933, %v5068
        %v5158 = vsel %vm198, %v4934, %v5070
        %v5159 = vsel %vm198, %v4935, %v5072
        %v5160 = vsel %vm198, %v4936, %v5074
        %v5161 = vsel %vm198, %v4937, %v5076
        %v5162 = vsel %vm198, %v4938, %v5078
        %v5163 = vsel %vm198, %v4939, %v5080
        %v5164 = vsel %vm198, %v4940, %v5082
        %v5165 = vsel %vm198, %v4941, %v5084
        %v5166 = vsel %vm198, %v4942, %v5086
        %v5167 = vsel %vm198, %v4943, %v5088
        %v5168 = vsel %vm198, %v4944, %v5090
        %v5169 = vsel %vm198, %v4945, %v5092
        %v5170 = vsel %vm198, %v4946, %v5094
        %v5171 = vsel %vm198, %v4947, %v5096
        %v5172 = vsel %vm198, %v4948, %v5098
        %v5173 = vsel %vm198, %v4949, %v5100
        %v5174 = vsel %vm198, %v4950, %v5102
        %v5175 = vsel %vm198, %v4951, %v5104
        %v5176 = vsel %vm198, %v4952, %v5106
        %v5177 = vsel %vm198, %v4953, %v5108
        %v5178 = vsel %vm198, %v4954, %v5110
        %v5179 = vsel %vm198, %v4955, %v5112
        %v5180 = vsel %vm198, %v4956, %v5114
        %v5181 = vsel %vm198, %v4957, %v5116
        %v5182 = vsel %vm198, %v4958, %v5118
        %s5183 = sadd.s32 %s4900, 1
        %s5184 = smul.u32 %s5183, 192
        %s5185 = scalar_lea.vmem %s2, %s5184
        %v5186 = vld [vmem:[%s5185] sm:$0xff]
        %v5187 = vld [vmem:[%s5185 + $0x8] sm:$0xff]
        %v5188 = vld [vmem:[%s5185 + $0x10] sm:$0xff]
        %v5189 = vld [vmem:[%s5185 + $0x18] sm:$0xff]
        %v5190 = vld [vmem:[%s5185 + $0x20] sm:$0xff]
        %v5191 = vld [vmem:[%s5185 + $0x28] sm:$0xff]
        %v5192 = vld [vmem:[%s5185 + $0x30] sm:$0xff]
        %v5193 = vld [vmem:[%s5185 + $0x38] sm:$0xff]
        %v5194 = vld [vmem:[%s5185 + $0x40] sm:$0xff]
        %v5195 = vld [vmem:[%s5185 + $0x48] sm:$0xff]
        %v5196 = vld [vmem:[%s5185 + $0x50] sm:$0xff]
        %v5197 = vld [vmem:[%s5185 + $0x58] sm:$0xff]
        %v5198 = vld [vmem:[%s5185 + $0x60] sm:$0xff]
        %v5199 = vld [vmem:[%s5185 + $0x68] sm:$0xff]
        %v5200 = vld [vmem:[%s5185 + $0x70] sm:$0xff]
        %v5201 = vld [vmem:[%s5185 + $0x78] sm:$0xff]
        %v5202 = vld [vmem:[%s5185 + $0x80] sm:$0xff]
        %v5203 = vld [vmem:[%s5185 + $0x88] sm:$0xff]
        %v5204 = vld [vmem:[%s5185 + $0x90] sm:$0xff]
        %v5205 = vld [vmem:[%s5185 + $0x98] sm:$0xff]
        %v5206 = vld [vmem:[%s5185 + $0xa0] sm:$0xff]
        %v5207 = vld [vmem:[%s5185 + $0xa8] sm:$0xff]
        %v5208 = vld [vmem:[%s5185 + $0xb0] sm:$0xff]
        %v5209 = vld [vmem:[%s5185 + $0xb8] sm:$0xff]
        %v5211 = vsel %vm198, %v4991, 0
        %v5214 = vsel %vm198, %v4992, 0
        %v5217 = vsel %vm198, %v4993, 0
        %v5220 = vsel %vm198, %v4994, 0
        %v5223 = vsel %vm198, %v4995, 0
        %v5226 = vsel %vm198, %v4996, 0
        %v5229 = vsel %vm198, %v4997, 0
        %v5232 = vsel %vm198, %v4998, 0
        %v5235 = vsel %vm198, %v4999, 0
        %v5238 = vsel %vm198, %v5000, 0
        %v5241 = vsel %vm198, %v5001, 0
        %v5244 = vsel %vm198, %v5002, 0
        %v5247 = vsel %vm198, %v5003, 0
        %v5250 = vsel %vm198, %v5004, 0
        %v5253 = vsel %vm198, %v5005, 0
        %v5256 = vsel %vm198, %v5006, 0
        %v5259 = vsel %vm198, %v5007, 0
        %v5262 = vsel %vm198, %v5008, 0
        %v5265 = vsel %vm198, %v5009, 0
        %v5268 = vsel %vm198, %v5010, 0
        %v5271 = vsel %vm198, %v5011, 0
        %v5274 = vsel %vm198, %v5012, 0
        %v5277 = vsel %vm198, %v5013, 0
        %v5280 = vsel %vm198, %v5014, 0
        %v5283 = vsel %vm198, %v5015, 0
        %v5286 = vsel %vm198, %v5016, 0
        %v5289 = vsel %vm198, %v5017, 0
        %v5292 = vsel %vm198, %v5018, 0
        %v5295 = vsel %vm198, %v5019, 0
        %v5298 = vsel %vm198, %v5020, 0
        %v5301 = vsel %vm198, %v5021, 0
        %v5304 = vsel %vm198, %v5022, 0
        %5306 = vmatpush.msra.mxu0 %v5201
        %5307 = vmatpush.msra.mxu0 %v5200
        %5308 = vmatpush.msra.mxu0 %v5199
        %5309 = vmatpush.msra.mxu0 %v5198
        %5310 = vmatpush.msra.mxu0 %v5197
        %5311 = vmatpush.msra.mxu0 %v5196
        %5312 = vmatpush.msra.mxu0 %v5195
        %5313 = vmatpush.msra.mxu0 %v5194
        %5314 = vmatpush.msra.mxu0 %v5193
        %5315 = vmatpush.msra.mxu0 %v5192
        %5316 = vmatpush.msra.mxu0 %v5191
        %5317 = vmatpush.msra.mxu0 %v5190
        %5318 = vmatpush.msra.mxu0 %v5189
        %5319 = vmatpush.msra.mxu0 %v5188
        %5320 = vmatpush.msra.mxu0 %v5187
        %5321 = vmatpush.msra.mxu0 %v5186
        %5322 = vmatmul.f32.gmra.mxu0 %v5151
        %v5323 = vpop.f32.mrf.mxu0
        %v5324 = vadd.f32 0.0, %v5323
        %5325 = vmatmul.f32.gmra.mxu0 %v5152
        %v5326 = vpop.f32.mrf.mxu0
        %v5327 = vadd.f32 0.0, %v5326
        %5328 = vmatmul.f32.gmra.mxu0 %v5153
        %v5329 = vpop.f32.mrf.mxu0
        %v5330 = vadd.f32 0.0, %v5329
        %5331 = vmatmul.f32.gmra.mxu0 %v5154
        %v5332 = vpop.f32.mrf.mxu0
        %v5333 = vadd.f32 0.0, %v5332
        %5334 = vmatmul.f32.gmra.mxu0 %v5155
        %v5335 = vpop.f32.mrf.mxu0
        %v5336 = vadd.f32 0.0, %v5335
        %5337 = vmatmul.f32.gmra.mxu0 %v5156
        %v5338 = vpop.f32.mrf.mxu0
        %v5339 = vadd.f32 0.0, %v5338
        %5340 = vmatmul.f32.gmra.mxu0 %v5157
        %v5341 = vpop.f32.mrf.mxu0
        %v5342 = vadd.f32 0.0, %v5341
        %5343 = vmatmul.f32.gmra.mxu0 %v5158
        %v5344 = vpop.f32.mrf.mxu0
        %v5345 = vadd.f32 0.0, %v5344
        %5346 = vmatmul.f32.gmra.mxu0 %v5159
        %v5347 = vpop.f32.mrf.mxu0
        %v5348 = vadd.f32 0.0, %v5347
        %5349 = vmatmul.f32.gmra.mxu0 %v5160
        %v5350 = vpop.f32.mrf.mxu0
        %v5351 = vadd.f32 0.0, %v5350
        %5352 = vmatmul.f32.gmra.mxu0 %v5161
        %v5353 = vpop.f32.mrf.mxu0
        %v5354 = vadd.f32 0.0, %v5353
        %5355 = vmatmul.f32.gmra.mxu0 %v5162
        %v5356 = vpop.f32.mrf.mxu0
        %v5357 = vadd.f32 0.0, %v5356
        %5358 = vmatmul.f32.gmra.mxu0 %v5163
        %v5359 = vpop.f32.mrf.mxu0
        %v5360 = vadd.f32 0.0, %v5359
        %5361 = vmatmul.f32.gmra.mxu0 %v5164
        %v5362 = vpop.f32.mrf.mxu0
        %v5363 = vadd.f32 0.0, %v5362
        %5364 = vmatmul.f32.gmra.mxu0 %v5165
        %v5365 = vpop.f32.mrf.mxu0
        %v5366 = vadd.f32 0.0, %v5365
        %5367 = vmatmul.f32.gmra.mxu0 %v5166
        %v5368 = vpop.f32.mrf.mxu0
        %v5369 = vadd.f32 0.0, %v5368
        %5370 = vmatmul.f32.gmra.mxu0 %v5167
        %v5371 = vpop.f32.mrf.mxu0
        %v5372 = vadd.f32 0.0, %v5371
        %5373 = vmatmul.f32.gmra.mxu0 %v5168
        %v5374 = vpop.f32.mrf.mxu0
        %v5375 = vadd.f32 0.0, %v5374
        %5376 = vmatmul.f32.gmra.mxu0 %v5169
        %v5377 = vpop.f32.mrf.mxu0
        %v5378 = vadd.f32 0.0, %v5377
        %5379 = vmatmul.f32.gmra.mxu0 %v5170
        %v5380 = vpop.f32.mrf.mxu0
        %v5381 = vadd.f32 0.0, %v5380
        %5382 = vmatmul.f32.gmra.mxu0 %v5171
        %v5383 = vpop.f32.mrf.mxu0
        %v5384 = vadd.f32 0.0, %v5383
        %5385 = vmatmul.f32.gmra.mxu0 %v5172
        %v5386 = vpop.f32.mrf.mxu0
        %v5387 = vadd.f32 0.0, %v5386
        %5388 = vmatmul.f32.gmra.mxu0 %v5173
        %v5389 = vpop.f32.mrf.mxu0
        %v5390 = vadd.f32 0.0, %v5389
        %5391 = vmatmul.f32.gmra.mxu0 %v5174
        %v5392 = vpop.f32.mrf.mxu0
        %v5393 = vadd.f32 0.0, %v5392
        %5394 = vmatmul.f32.gmra.mxu0 %v5175
        %v5395 = vpop.f32.mrf.mxu0
        %v5396 = vadd.f32 0.0, %v5395
        %5397 = vmatmul.f32.gmra.mxu0 %v5176
        %v5398 = vpop.f32.mrf.mxu0
        %v5399 = vadd.f32 0.0, %v5398
        %5400 = vmatmul.f32.gmra.mxu0 %v5177
        %v5401 = vpop.f32.mrf.mxu0
        %v5402 = vadd.f32 0.0, %v5401
        %5403 = vmatmul.f32.gmra.mxu0 %v5178
        %v5404 = vpop.f32.mrf.mxu0
        %v5405 = vadd.f32 0.0, %v5404
        %5406 = vmatmul.f32.gmra.mxu0 %v5179
        %v5407 = vpop.f32.mrf.mxu0
        %v5408 = vadd.f32 0.0, %v5407
        %5409 = vmatmul.f32.gmra.mxu0 %v5180
        %v5410 = vpop.f32.mrf.mxu0
        %v5411 = vadd.f32 0.0, %v5410
        %5412 = vmatmul.f32.gmra.mxu0 %v5181
        %v5413 = vpop.f32.mrf.mxu0
        %v5414 = vadd.f32 0.0, %v5413
        %5415 = vmatmul.f32.gmra.mxu0 %v5182
        %v5416 = vpop.f32.mrf.mxu0
        %v5417 = vadd.f32 0.0, %v5416
        %5418 = vdwg.mxu0
        %5419 = vmatpush.msra.mxu0 0.0
        %5420 = vmatpush.msra.mxu0 0.0
        %5421 = vmatpush.msra.mxu0 0.0
        %5422 = vmatpush.msra.mxu0 0.0
        %5423 = vmatpush.msra.mxu0 0.0
        %5424 = vmatpush.msra.mxu0 0.0
        %5425 = vmatpush.msra.mxu0 0.0
        %5426 = vmatpush.msra.mxu0 0.0
        %5427 = vmatpush.msra.mxu0 %v5209
        %5428 = vmatpush.msra.mxu0 %v5208
        %5429 = vmatpush.msra.mxu0 %v5207
        %5430 = vmatpush.msra.mxu0 %v5206
        %5431 = vmatpush.msra.mxu0 %v5205
        %5432 = vmatpush.msra.mxu0 %v5204
        %5433 = vmatpush.msra.mxu0 %v5203
        %5434 = vmatpush.msra.mxu0 %v5202
        %5435 = vmatmul.f32.gmra.mxu0 %v5211
        %v5436 = vpop.f32.mrf.mxu0
        %v5437 = vadd.f32 %v5324, %v5436
        %5438 = vmatmul.f32.gmra.mxu0 %v5214
        %v5439 = vpop.f32.mrf.mxu0
        %v5440 = vadd.f32 %v5327, %v5439
        %5441 = vmatmul.f32.gmra.mxu0 %v5217
        %v5442 = vpop.f32.mrf.mxu0
        %v5443 = vadd.f32 %v5330, %v5442
        %5444 = vmatmul.f32.gmra.mxu0 %v5220
        %v5445 = vpop.f32.mrf.mxu0
        %v5446 = vadd.f32 %v5333, %v5445
        %5447 = vmatmul.f32.gmra.mxu0 %v5223
        %v5448 = vpop.f32.mrf.mxu0
        %v5449 = vadd.f32 %v5336, %v5448
        %5450 = vmatmul.f32.gmra.mxu0 %v5226
        %v5451 = vpop.f32.mrf.mxu0
        %v5452 = vadd.f32 %v5339, %v5451
        %5453 = vmatmul.f32.gmra.mxu0 %v5229
        %v5454 = vpop.f32.mrf.mxu0
        %v5455 = vadd.f32 %v5342, %v5454
        %5456 = vmatmul.f32.gmra.mxu0 %v5232
        %v5457 = vpop.f32.mrf.mxu0
        %v5458 = vadd.f32 %v5345, %v5457
        %5459 = vmatmul.f32.gmra.mxu0 %v5235
        %v5460 = vpop.f32.mrf.mxu0
        %v5461 = vadd.f32 %v5348, %v5460
        %5462 = vmatmul.f32.gmra.mxu0 %v5238
        %v5463 = vpop.f32.mrf.mxu0
        %v5464 = vadd.f32 %v5351, %v5463
        %5465 = vmatmul.f32.gmra.mxu0 %v5241
        %v5466 = vpop.f32.mrf.mxu0
        %v5467 = vadd.f32 %v5354, %v5466
        %5468 = vmatmul.f32.gmra.mxu0 %v5244
        %v5469 = vpop.f32.mrf.mxu0
        %v5470 = vadd.f32 %v5357, %v5469
        %5471 = vmatmul.f32.gmra.mxu0 %v5247
        %v5472 = vpop.f32.mrf.mxu0
        %v5473 = vadd.f32 %v5360, %v5472
        %5474 = vmatmul.f32.gmra.mxu0 %v5250
        %v5475 = vpop.f32.mrf.mxu0
        %v5476 = vadd.f32 %v5363, %v5475
        %5477 = vmatmul.f32.gmra.mxu0 %v5253
        %v5478 = vpop.f32.mrf.mxu0
        %v5479 = vadd.f32 %v5366, %v5478
        %5480 = vmatmul.f32.gmra.mxu0 %v5256
        %v5481 = vpop.f32.mrf.mxu0
        %v5482 = vadd.f32 %v5369, %v5481
        %5483 = vmatmul.f32.gmra.mxu0 %v5259
        %v5484 = vpop.f32.mrf.mxu0
        %v5485 = vadd.f32 %v5372, %v5484
        %5486 = vmatmul.f32.gmra.mxu0 %v5262
        %v5487 = vpop.f32.mrf.mxu0
        %v5488 = vadd.f32 %v5375, %v5487
        %5489 = vmatmul.f32.gmra.mxu0 %v5265
        %v5490 = vpop.f32.mrf.mxu0
        %v5491 = vadd.f32 %v5378, %v5490
        %5492 = vmatmul.f32.gmra.mxu0 %v5268
        %v5493 = vpop.f32.mrf.mxu0
        %v5494 = vadd.f32 %v5381, %v5493
        %5495 = vmatmul.f32.gmra.mxu0 %v5271
        %v5496 = vpop.f32.mrf.mxu0
        %v5497 = vadd.f32 %v5384, %v5496
        %5498 = vmatmul.f32.gmra.mxu0 %v5274
        %v5499 = vpop.f32.mrf.mxu0
        %v5500 = vadd.f32 %v5387, %v5499
        %5501 = vmatmul.f32.gmra.mxu0 %v5277
        %v5502 = vpop.f32.mrf.mxu0
        %v5503 = vadd.f32 %v5390, %v5502
        %5504 = vmatmul.f32.gmra.mxu0 %v5280
        %v5505 = vpop.f32.mrf.mxu0
        %v5506 = vadd.f32 %v5393, %v5505
        %5507 = vmatmul.f32.gmra.mxu0 %v5283
        %v5508 = vpop.f32.mrf.mxu0
        %v5509 = vadd.f32 %v5396, %v5508
        %5510 = vmatmul.f32.gmra.mxu0 %v5286
        %v5511 = vpop.f32.mrf.mxu0
        %v5512 = vadd.f32 %v5399, %v5511
        %5513 = vmatmul.f32.gmra.mxu0 %v5289
        %v5514 = vpop.f32.mrf.mxu0
        %v5515 = vadd.f32 %v5402, %v5514
        %5516 = vmatmul.f32.gmra.mxu0 %v5292
        %v5517 = vpop.f32.mrf.mxu0
        %v5518 = vadd.f32 %v5405, %v5517
        %5519 = vmatmul.f32.gmra.mxu0 %v5295
        %v5520 = vpop.f32.mrf.mxu0
        %v5521 = vadd.f32 %v5408, %v5520
        %5522 = vmatmul.f32.gmra.mxu0 %v5298
        %v5523 = vpop.f32.mrf.mxu0
        %v5524 = vadd.f32 %v5411, %v5523
        %5525 = vmatmul.f32.gmra.mxu0 %v5301
        %v5526 = vpop.f32.mrf.mxu0
        %v5527 = vadd.f32 %v5414, %v5526
        %5528 = vmatmul.f32.gmra.mxu0 %v5304
        %v5529 = vpop.f32.mrf.mxu0
        %v5530 = vadd.f32 %v5417, %v5529
        %5531 = vdwg.mxu0
        %v5533 = vsel %vm198, %v4708, 0
        %v5536 = vsel %vm198, %v4709, 0
        %v5539 = vsel %vm198, %v4710, 0
        %v5542 = vsel %vm198, %v4711, 0
        %v5545 = vsel %vm198, %v4712, 0
        %v5548 = vsel %vm198, %v4713, 0
        %v5551 = vsel %vm198, %v4714, 0
        %v5554 = vsel %vm198, %v4715, 0
        %v5557 = vsel %vm198, %v4716, 0
        %v5560 = vsel %vm198, %v4717, 0
        %v5563 = vsel %vm198, %v4718, 0
        %v5566 = vsel %vm198, %v4719, 0
        %v5569 = vsel %vm198, %v4720, 0
        %v5572 = vsel %vm198, %v4721, 0
        %v5575 = vsel %vm198, %v4722, 0
        %v5578 = vsel %vm198, %v4723, 0
        %v5581 = vsel %vm198, %v4724, 0
        %v5584 = vsel %vm198, %v4725, 0
        %v5587 = vsel %vm198, %v4726, 0
        %v5590 = vsel %vm198, %v4727, 0
        %v5593 = vsel %vm198, %v4728, 0
        %v5596 = vsel %vm198, %v4729, 0
        %v5599 = vsel %vm198, %v4730, 0
        %v5602 = vsel %vm198, %v4731, 0
        %v5605 = vsel %vm198, %v4732, 0
        %v5608 = vsel %vm198, %v4733, 0
        %v5611 = vsel %vm198, %v4734, 0
        %v5614 = vsel %vm198, %v4735, 0
        %v5617 = vsel %vm198, %v4736, 0
        %v5620 = vsel %vm198, %v4737, 0
        %v5623 = vsel %vm198, %v4738, 0
        %v5626 = vsel %vm198, %v4739, 0
        %5628 = vmatpush.msra.mxu0 %v4918
        %5629 = vmatpush.msra.mxu0 %v4917
        %5630 = vmatpush.msra.mxu0 %v4916
        %5631 = vmatpush.msra.mxu0 %v4915
        %5632 = vmatpush.msra.mxu0 %v4914
        %5633 = vmatpush.msra.mxu0 %v4913
        %5634 = vmatpush.msra.mxu0 %v4912
        %5635 = vmatpush.msra.mxu0 %v4911
        %5636 = vmatpush.msra.mxu0 %v4910
        %5637 = vmatpush.msra.mxu0 %v4909
        %5638 = vmatpush.msra.mxu0 %v4908
        %5639 = vmatpush.msra.mxu0 %v4907
        %5640 = vmatpush.msra.mxu0 %v4906
        %5641 = vmatpush.msra.mxu0 %v4905
        %5642 = vmatpush.msra.mxu0 %v4904
        %5643 = vmatpush.msra.mxu0 %v4903
        %5644 = vmatmul.f32.gmra.mxu0 %v4868
        %v5645 = vpop.f32.mrf.mxu0
        %v5646 = vadd.f32 %v5437, %v5645
        %5647 = vmatmul.f32.gmra.mxu0 %v4869
        %v5648 = vpop.f32.mrf.mxu0
        %v5649 = vadd.f32 %v5440, %v5648
        %5650 = vmatmul.f32.gmra.mxu0 %v4870
        %v5651 = vpop.f32.mrf.mxu0
        %v5652 = vadd.f32 %v5443, %v5651
        %5653 = vmatmul.f32.gmra.mxu0 %v4871
        %v5654 = vpop.f32.mrf.mxu0
        %v5655 = vadd.f32 %v5446, %v5654
        %5656 = vmatmul.f32.gmra.mxu0 %v4872
        %v5657 = vpop.f32.mrf.mxu0
        %v5658 = vadd.f32 %v5449, %v5657
        %5659 = vmatmul.f32.gmra.mxu0 %v4873
        %v5660 = vpop.f32.mrf.mxu0
        %v5661 = vadd.f32 %v5452, %v5660
        %5662 = vmatmul.f32.gmra.mxu0 %v4874
        %v5663 = vpop.f32.mrf.mxu0
        %v5664 = vadd.f32 %v5455, %v5663
        %5665 = vmatmul.f32.gmra.mxu0 %v4875
        %v5666 = vpop.f32.mrf.mxu0
        %v5667 = vadd.f32 %v5458, %v5666
        %5668 = vmatmul.f32.gmra.mxu0 %v4876
        %v5669 = vpop.f32.mrf.mxu0
        %v5670 = vadd.f32 %v5461, %v5669
        %5671 = vmatmul.f32.gmra.mxu0 %v4877
        %v5672 = vpop.f32.mrf.mxu0
        %v5673 = vadd.f32 %v5464, %v5672
        %5674 = vmatmul.f32.gmra.mxu0 %v4878
        %v5675 = vpop.f32.mrf.mxu0
        %v5676 = vadd.f32 %v5467, %v5675
        %5677 = vmatmul.f32.gmra.mxu0 %v4879
        %v5678 = vpop.f32.mrf.mxu0
        %v5679 = vadd.f32 %v5470, %v5678
        %5680 = vmatmul.f32.gmra.mxu0 %v4880
        %v5681 = vpop.f32.mrf.mxu0
        %v5682 = vadd.f32 %v5473, %v5681
        %5683 = vmatmul.f32.gmra.mxu0 %v4881
        %v5684 = vpop.f32.mrf.mxu0
        %v5685 = vadd.f32 %v5476, %v5684
        %5686 = vmatmul.f32.gmra.mxu0 %v4882
        %v5687 = vpop.f32.mrf.mxu0
        %v5688 = vadd.f32 %v5479, %v5687
        %5689 = vmatmul.f32.gmra.mxu0 %v4883
        %v5690 = vpop.f32.mrf.mxu0
        %v5691 = vadd.f32 %v5482, %v5690
        %5692 = vmatmul.f32.gmra.mxu0 %v4884
        %v5693 = vpop.f32.mrf.mxu0
        %v5694 = vadd.f32 %v5485, %v5693
        %5695 = vmatmul.f32.gmra.mxu0 %v4885
        %v5696 = vpop.f32.mrf.mxu0
        %v5697 = vadd.f32 %v5488, %v5696
        %5698 = vmatmul.f32.gmra.mxu0 %v4886
        %v5699 = vpop.f32.mrf.mxu0
        %v5700 = vadd.f32 %v5491, %v5699
        %5701 = vmatmul.f32.gmra.mxu0 %v4887
        %v5702 = vpop.f32.mrf.mxu0
        %v5703 = vadd.f32 %v5494, %v5702
        %5704 = vmatmul.f32.gmra.mxu0 %v4888
        %v5705 = vpop.f32.mrf.mxu0
        %v5706 = vadd.f32 %v5497, %v5705
        %5707 = vmatmul.f32.gmra.mxu0 %v4889
        %v5708 = vpop.f32.mrf.mxu0
        %v5709 = vadd.f32 %v5500, %v5708
        %5710 = vmatmul.f32.gmra.mxu0 %v4890
        %v5711 = vpop.f32.mrf.mxu0
        %v5712 = vadd.f32 %v5503, %v5711
        %5713 = vmatmul.f32.gmra.mxu0 %v4891
        %v5714 = vpop.f32.mrf.mxu0
        %v5715 = vadd.f32 %v5506, %v5714
        %5716 = vmatmul.f32.gmra.mxu0 %v4892
        %v5717 = vpop.f32.mrf.mxu0
        %v5718 = vadd.f32 %v5509, %v5717
        %5719 = vmatmul.f32.gmra.mxu0 %v4893
        %v5720 = vpop.f32.mrf.mxu0
        %v5721 = vadd.f32 %v5512, %v5720
        %5722 = vmatmul.f32.gmra.mxu0 %v4894
        %v5723 = vpop.f32.mrf.mxu0
        %v5724 = vadd.f32 %v5515, %v5723
        %5725 = vmatmul.f32.gmra.mxu0 %v4895
        %v5726 = vpop.f32.mrf.mxu0
        %v5727 = vadd.f32 %v5518, %v5726
        %5728 = vmatmul.f32.gmra.mxu0 %v4896
        %v5729 = vpop.f32.mrf.mxu0
        %v5730 = vadd.f32 %v5521, %v5729
        %5731 = vmatmul.f32.gmra.mxu0 %v4897
        %v5732 = vpop.f32.mrf.mxu0
        %v5733 = vadd.f32 %v5524, %v5732
        %5734 = vmatmul.f32.gmra.mxu0 %v4898
        %v5735 = vpop.f32.mrf.mxu0
        %v5736 = vadd.f32 %v5527, %v5735
        %5737 = vmatmul.f32.gmra.mxu0 %v4899
        %v5738 = vpop.f32.mrf.mxu0
        %v5739 = vadd.f32 %v5530, %v5738
        %5740 = vdwg.mxu0
        %5741 = vmatpush.msra.mxu0 0.0
        %5742 = vmatpush.msra.mxu0 0.0
        %5743 = vmatpush.msra.mxu0 0.0
        %5744 = vmatpush.msra.mxu0 0.0
        %5745 = vmatpush.msra.mxu0 0.0
        %5746 = vmatpush.msra.mxu0 0.0
        %5747 = vmatpush.msra.mxu0 0.0
        %5748 = vmatpush.msra.mxu0 0.0
        %5749 = vmatpush.msra.mxu0 %v4926
        %5750 = vmatpush.msra.mxu0 %v4925
        %5751 = vmatpush.msra.mxu0 %v4924
        %5752 = vmatpush.msra.mxu0 %v4923
        %5753 = vmatpush.msra.mxu0 %v4922
        %5754 = vmatpush.msra.mxu0 %v4921
        %5755 = vmatpush.msra.mxu0 %v4920
        %5756 = vmatpush.msra.mxu0 %v4919
        %5757 = vmatmul.f32.gmra.mxu0 %v5533
        %v5758 = vpop.f32.mrf.mxu0
        %v5759 = vadd.f32 %v5646, %v5758
        %5760 = vmatmul.f32.gmra.mxu0 %v5536
        %v5761 = vpop.f32.mrf.mxu0
        %v5762 = vadd.f32 %v5649, %v5761
        %5763 = vmatmul.f32.gmra.mxu0 %v5539
        %v5764 = vpop.f32.mrf.mxu0
        %v5765 = vadd.f32 %v5652, %v5764
        %5766 = vmatmul.f32.gmra.mxu0 %v5542
        %v5767 = vpop.f32.mrf.mxu0
        %v5768 = vadd.f32 %v5655, %v5767
        %5769 = vmatmul.f32.gmra.mxu0 %v5545
        %v5770 = vpop.f32.mrf.mxu0
        %v5771 = vadd.f32 %v5658, %v5770
        %5772 = vmatmul.f32.gmra.mxu0 %v5548
        %v5773 = vpop.f32.mrf.mxu0
        %v5774 = vadd.f32 %v5661, %v5773
        %5775 = vmatmul.f32.gmra.mxu0 %v5551
        %v5776 = vpop.f32.mrf.mxu0
        %v5777 = vadd.f32 %v5664, %v5776
        %5778 = vmatmul.f32.gmra.mxu0 %v5554
        %v5779 = vpop.f32.mrf.mxu0
        %v5780 = vadd.f32 %v5667, %v5779
        %5781 = vmatmul.f32.gmra.mxu0 %v5557
        %v5782 = vpop.f32.mrf.mxu0
        %v5783 = vadd.f32 %v5670, %v5782
        %5784 = vmatmul.f32.gmra.mxu0 %v5560
        %v5785 = vpop.f32.mrf.mxu0
        %v5786 = vadd.f32 %v5673, %v5785
        %5787 = vmatmul.f32.gmra.mxu0 %v5563
        %v5788 = vpop.f32.mrf.mxu0
        %v5789 = vadd.f32 %v5676, %v5788
        %5790 = vmatmul.f32.gmra.mxu0 %v5566
        %v5791 = vpop.f32.mrf.mxu0
        %v5792 = vadd.f32 %v5679, %v5791
        %5793 = vmatmul.f32.gmra.mxu0 %v5569
        %v5794 = vpop.f32.mrf.mxu0
        %v5795 = vadd.f32 %v5682, %v5794
        %5796 = vmatmul.f32.gmra.mxu0 %v5572
        %v5797 = vpop.f32.mrf.mxu0
        %v5798 = vadd.f32 %v5685, %v5797
        %5799 = vmatmul.f32.gmra.mxu0 %v5575
        %v5800 = vpop.f32.mrf.mxu0
        %v5801 = vadd.f32 %v5688, %v5800
        %5802 = vmatmul.f32.gmra.mxu0 %v5578
        %v5803 = vpop.f32.mrf.mxu0
        %v5804 = vadd.f32 %v5691, %v5803
        %5805 = vmatmul.f32.gmra.mxu0 %v5581
        %v5806 = vpop.f32.mrf.mxu0
        %v5807 = vadd.f32 %v5694, %v5806
        %5808 = vmatmul.f32.gmra.mxu0 %v5584
        %v5809 = vpop.f32.mrf.mxu0
        %v5810 = vadd.f32 %v5697, %v5809
        %5811 = vmatmul.f32.gmra.mxu0 %v5587
        %v5812 = vpop.f32.mrf.mxu0
        %v5813 = vadd.f32 %v5700, %v5812
        %5814 = vmatmul.f32.gmra.mxu0 %v5590
        %v5815 = vpop.f32.mrf.mxu0
        %v5816 = vadd.f32 %v5703, %v5815
        %5817 = vmatmul.f32.gmra.mxu0 %v5593
        %v5818 = vpop.f32.mrf.mxu0
        %v5819 = vadd.f32 %v5706, %v5818
        %5820 = vmatmul.f32.gmra.mxu0 %v5596
        %v5821 = vpop.f32.mrf.mxu0
        %v5822 = vadd.f32 %v5709, %v5821
        %5823 = vmatmul.f32.gmra.mxu0 %v5599
        %v5824 = vpop.f32.mrf.mxu0
        %v5825 = vadd.f32 %v5712, %v5824
        %5826 = vmatmul.f32.gmra.mxu0 %v5602
        %v5827 = vpop.f32.mrf.mxu0
        %v5828 = vadd.f32 %v5715, %v5827
        %5829 = vmatmul.f32.gmra.mxu0 %v5605
        %v5830 = vpop.f32.mrf.mxu0
        %v5831 = vadd.f32 %v5718, %v5830
        %5832 = vmatmul.f32.gmra.mxu0 %v5608
        %v5833 = vpop.f32.mrf.mxu0
        %v5834 = vadd.f32 %v5721, %v5833
        %5835 = vmatmul.f32.gmra.mxu0 %v5611
        %v5836 = vpop.f32.mrf.mxu0
        %v5837 = vadd.f32 %v5724, %v5836
        %5838 = vmatmul.f32.gmra.mxu0 %v5614
        %v5839 = vpop.f32.mrf.mxu0
        %v5840 = vadd.f32 %v5727, %v5839
        %5841 = vmatmul.f32.gmra.mxu0 %v5617
        %v5842 = vpop.f32.mrf.mxu0
        %v5843 = vadd.f32 %v5730, %v5842
        %5844 = vmatmul.f32.gmra.mxu0 %v5620
        %v5845 = vpop.f32.mrf.mxu0
        %v5846 = vadd.f32 %v5733, %v5845
        %5847 = vmatmul.f32.gmra.mxu0 %v5623
        %v5848 = vpop.f32.mrf.mxu0
        %v5849 = vadd.f32 %v5736, %v5848
        %5850 = vmatmul.f32.gmra.mxu0 %v5626
        %v5851 = vpop.f32.mrf.mxu0
        %v5852 = vadd.f32 %v5739, %v5851
        %5853 = vdwg.mxu0
        %s5854 = scalar_lea.vmem [#allocation3], 48
        %v5855 = vld [vmem:[%s5854] sm:$0xff]
        %v5856 = vld [vmem:[%s5854 + $0x8] sm:$0xff]
        %v5857 = vld [vmem:[%s5854 + $0x18] sm:$0xff]
        %v5858 = vld [vmem:[%s5854 + $0x20] sm:$0xff]
        %v5859 = vld [vmem:[%s5854 + $0x30] sm:$0xff]
        %v5860 = vld [vmem:[%s5854 + $0x38] sm:$0xff]
        %v5861 = vld [vmem:[%s5854 + $0x48] sm:$0xff]
        %v5862 = vld [vmem:[%s5854 + $0x50] sm:$0xff]
        %v5863 = vld [vmem:[%s5854 + $0x60] sm:$0xff]
        %v5864 = vld [vmem:[%s5854 + $0x68] sm:$0xff]
        %v5865 = vld [vmem:[%s5854 + $0x78] sm:$0xff]
        %v5866 = vld [vmem:[%s5854 + $0x80] sm:$0xff]
        %v5867 = vld [vmem:[%s5854 + $0x90] sm:$0xff]
        %v5868 = vld [vmem:[%s5854 + $0x98] sm:$0xff]
        %v5869 = vld [vmem:[%s5854 + $0xa8] sm:$0xff]
        %v5870 = vld [vmem:[%s5854 + $0xb0] sm:$0xff]
        %v5871 = vld [vmem:[%s5854 + $0xc0] sm:$0xff]
        %v5872 = vld [vmem:[%s5854 + $0xc8] sm:$0xff]
        %v5873 = vld [vmem:[%s5854 + $0xd8] sm:$0xff]
        %v5874 = vld [vmem:[%s5854 + $0xe0] sm:$0xff]
        %v5875 = vld [vmem:[%s5854 + $0xf0] sm:$0xff]
        %v5876 = vld [vmem:[%s5854 + $0xf8] sm:$0xff]
        %v5877 = vld [vmem:[%s5854 + $0x108] sm:$0xff]
        %v5878 = vld [vmem:[%s5854 + $0x110] sm:$0xff]
        %v5879 = vld [vmem:[%s5854 + $0x120] sm:$0xff]
        %v5880 = vld [vmem:[%s5854 + $0x128] sm:$0xff]
        %v5881 = vld [vmem:[%s5854 + $0x138] sm:$0xff]
        %v5882 = vld [vmem:[%s5854 + $0x140] sm:$0xff]
        %v5883 = vld [vmem:[%s5854 + $0x150] sm:$0xff]
        %v5884 = vld [vmem:[%s5854 + $0x158] sm:$0xff]
        %v5885 = vld [vmem:[%s5854 + $0x168] sm:$0xff]
        %v5886 = vld [vmem:[%s5854 + $0x170] sm:$0xff]
        %v5887 = vld [vmem:[%s5854 + $0x1] sm:$0xff]
        %v5888 = vld [vmem:[%s5854 + $0x9] sm:$0xff]
        %v5889 = vld [vmem:[%s5854 + $0x19] sm:$0xff]
        %v5890 = vld [vmem:[%s5854 + $0x21] sm:$0xff]
        %v5891 = vld [vmem:[%s5854 + $0x31] sm:$0xff]
        %v5892 = vld [vmem:[%s5854 + $0x39] sm:$0xff]
        %v5893 = vld [vmem:[%s5854 + $0x49] sm:$0xff]
        %v5894 = vld [vmem:[%s5854 + $0x51] sm:$0xff]
        %v5895 = vld [vmem:[%s5854 + $0x61] sm:$0xff]
        %v5896 = vld [vmem:[%s5854 + $0x69] sm:$0xff]
        %v5897 = vld [vmem:[%s5854 + $0x79] sm:$0xff]
        %v5898 = vld [vmem:[%s5854 + $0x81] sm:$0xff]
        %v5899 = vld [vmem:[%s5854 + $0x91] sm:$0xff]
        %v5900 = vld [vmem:[%s5854 + $0x99] sm:$0xff]
        %v5901 = vld [vmem:[%s5854 + $0xa9] sm:$0xff]
        %v5902 = vld [vmem:[%s5854 + $0xb1] sm:$0xff]
        %v5903 = vld [vmem:[%s5854 + $0xc1] sm:$0xff]
        %v5904 = vld [vmem:[%s5854 + $0xc9] sm:$0xff]
        %v5905 = vld [vmem:[%s5854 + $0xd9] sm:$0xff]
        %v5906 = vld [vmem:[%s5854 + $0xe1] sm:$0xff]
        %v5907 = vld [vmem:[%s5854 + $0xf1] sm:$0xff]
        %v5908 = vld [vmem:[%s5854 + $0xf9] sm:$0xff]
        %v5909 = vld [vmem:[%s5854 + $0x109] sm:$0xff]
        %v5910 = vld [vmem:[%s5854 + $0x111] sm:$0xff]
        %v5911 = vld [vmem:[%s5854 + $0x121] sm:$0xff]
        %v5912 = vld [vmem:[%s5854 + $0x129] sm:$0xff]
        %v5913 = vld [vmem:[%s5854 + $0x139] sm:$0xff]
        %v5914 = vld [vmem:[%s5854 + $0x141] sm:$0xff]
        %v5915 = vld [vmem:[%s5854 + $0x151] sm:$0xff]
        %v5916 = vld [vmem:[%s5854 + $0x159] sm:$0xff]
        %v5917 = vld [vmem:[%s5854 + $0x169] sm:$0xff]
        %v5918 = vld [vmem:[%s5854 + $0x171] sm:$0xff]
        %v5919 = vld [vmem:[%s5854 + $0x2] sm:$0xff]
        %v5920 = vld [vmem:[%s5854 + $0xa] sm:$0xff]
        %v5921 = vld [vmem:[%s5854 + $0x1a] sm:$0xff]
        %v5922 = vld [vmem:[%s5854 + $0x22] sm:$0xff]
        %v5923 = vld [vmem:[%s5854 + $0x32] sm:$0xff]
        %v5924 = vld [vmem:[%s5854 + $0x3a] sm:$0xff]
        %v5925 = vld [vmem:[%s5854 + $0x4a] sm:$0xff]
        %v5926 = vld [vmem:[%s5854 + $0x52] sm:$0xff]
        %v5927 = vld [vmem:[%s5854 + $0x62] sm:$0xff]
        %v5928 = vld [vmem:[%s5854 + $0x6a] sm:$0xff]
        %v5929 = vld [vmem:[%s5854 + $0x7a] sm:$0xff]
        %v5930 = vld [vmem:[%s5854 + $0x82] sm:$0xff]
        %v5931 = vld [vmem:[%s5854 + $0x92] sm:$0xff]
        %v5932 = vld [vmem:[%s5854 + $0x9a] sm:$0xff]
        %v5933 = vld [vmem:[%s5854 + $0xaa] sm:$0xff]
        %v5934 = vld [vmem:[%s5854 + $0xb2] sm:$0xff]
        %v5935 = vld [vmem:[%s5854 + $0xc2] sm:$0xff]
        %v5936 = vld [vmem:[%s5854 + $0xca] sm:$0xff]
        %v5937 = vld [vmem:[%s5854 + $0xda] sm:$0xff]
        %v5938 = vld [vmem:[%s5854 + $0xe2] sm:$0xff]
        %v5939 = vld [vmem:[%s5854 + $0xf2] sm:$0xff]
        %v5940 = vld [vmem:[%s5854 + $0xfa] sm:$0xff]
        %v5941 = vld [vmem:[%s5854 + $0x10a] sm:$0xff]
        %v5942 = vld [vmem:[%s5854 + $0x112] sm:$0xff]
        %v5943 = vld [vmem:[%s5854 + $0x122] sm:$0xff]
        %v5944 = vld [vmem:[%s5854 + $0x12a] sm:$0xff]
        %v5945 = vld [vmem:[%s5854 + $0x13a] sm:$0xff]
        %v5946 = vld [vmem:[%s5854 + $0x142] sm:$0xff]
        %v5947 = vld [vmem:[%s5854 + $0x152] sm:$0xff]
        %v5948 = vld [vmem:[%s5854 + $0x15a] sm:$0xff]
        %v5949 = vld [vmem:[%s5854 + $0x16a] sm:$0xff]
        %v5950 = vld [vmem:[%s5854 + $0x172] sm:$0xff]
        %5983 = vrot.lane.b32.xlu0 %v5887, 64
        %v5984 = vpop.permute.xlu0 %5983
        %5985 = vrot.lane.b32.xlu0 %v5888, 64
        %v5986 = vpop.permute.xlu0 %5985
        %5987 = vrot.lane.b32.xlu0 %v5889, 64
        %v5988 = vpop.permute.xlu0 %5987
        %5989 = vrot.lane.b32.xlu0 %v5890, 64
        %v5990 = vpop.permute.xlu0 %5989
        %5991 = vrot.lane.b32.xlu0 %v5891, 64
        %v5992 = vpop.permute.xlu0 %5991
        %5993 = vrot.lane.b32.xlu0 %v5892, 64
        %v5994 = vpop.permute.xlu0 %5993
        %5995 = vrot.lane.b32.xlu0 %v5893, 64
        %v5996 = vpop.permute.xlu0 %5995
        %5997 = vrot.lane.b32.xlu0 %v5894, 64
        %v5998 = vpop.permute.xlu0 %5997
        %5999 = vrot.lane.b32.xlu0 %v5895, 64
        %v6000 = vpop.permute.xlu0 %5999
        %6001 = vrot.lane.b32.xlu0 %v5896, 64
        %v6002 = vpop.permute.xlu0 %6001
        %6003 = vrot.lane.b32.xlu0 %v5897, 64
        %v6004 = vpop.permute.xlu0 %6003
        %6005 = vrot.lane.b32.xlu0 %v5898, 64
        %v6006 = vpop.permute.xlu0 %6005
        %6007 = vrot.lane.b32.xlu0 %v5899, 64
        %v6008 = vpop.permute.xlu0 %6007
        %6009 = vrot.lane.b32.xlu0 %v5900, 64
        %v6010 = vpop.permute.xlu0 %6009
        %6011 = vrot.lane.b32.xlu0 %v5901, 64
        %v6012 = vpop.permute.xlu0 %6011
        %6013 = vrot.lane.b32.xlu0 %v5902, 64
        %v6014 = vpop.permute.xlu0 %6013
        %6015 = vrot.lane.b32.xlu0 %v5903, 64
        %v6016 = vpop.permute.xlu0 %6015
        %6017 = vrot.lane.b32.xlu0 %v5904, 64
        %v6018 = vpop.permute.xlu0 %6017
        %6019 = vrot.lane.b32.xlu0 %v5905, 64
        %v6020 = vpop.permute.xlu0 %6019
        %6021 = vrot.lane.b32.xlu0 %v5906, 64
        %v6022 = vpop.permute.xlu0 %6021
        %6023 = vrot.lane.b32.xlu0 %v5907, 64
        %v6024 = vpop.permute.xlu0 %6023
        %6025 = vrot.lane.b32.xlu0 %v5908, 64
        %v6026 = vpop.permute.xlu0 %6025
        %6027 = vrot.lane.b32.xlu0 %v5909, 64
        %v6028 = vpop.permute.xlu0 %6027
        %6029 = vrot.lane.b32.xlu0 %v5910, 64
        %v6030 = vpop.permute.xlu0 %6029
        %6031 = vrot.lane.b32.xlu0 %v5911, 64
        %v6032 = vpop.permute.xlu0 %6031
        %6033 = vrot.lane.b32.xlu0 %v5912, 64
        %v6034 = vpop.permute.xlu0 %6033
        %6035 = vrot.lane.b32.xlu0 %v5913, 64
        %v6036 = vpop.permute.xlu0 %6035
        %6037 = vrot.lane.b32.xlu0 %v5914, 64
        %v6038 = vpop.permute.xlu0 %6037
        %6039 = vrot.lane.b32.xlu0 %v5915, 64
        %v6040 = vpop.permute.xlu0 %6039
        %6041 = vrot.lane.b32.xlu0 %v5916, 64
        %v6042 = vpop.permute.xlu0 %6041
        %6043 = vrot.lane.b32.xlu0 %v5917, 64
        %v6044 = vpop.permute.xlu0 %6043
        %6045 = vrot.lane.b32.xlu0 %v5918, 64
        %v6046 = vpop.permute.xlu0 %6045
        %v6079 = vsel %vm198, %v5855, %v5984
        %v6080 = vsel %vm198, %v5856, %v5986
        %v6081 = vsel %vm198, %v5857, %v5988
        %v6082 = vsel %vm198, %v5858, %v5990
        %v6083 = vsel %vm198, %v5859, %v5992
        %v6084 = vsel %vm198, %v5860, %v5994
        %v6085 = vsel %vm198, %v5861, %v5996
        %v6086 = vsel %vm198, %v5862, %v5998
        %v6087 = vsel %vm198, %v5863, %v6000
        %v6088 = vsel %vm198, %v5864, %v6002
        %v6089 = vsel %vm198, %v5865, %v6004
        %v6090 = vsel %vm198, %v5866, %v6006
        %v6091 = vsel %vm198, %v5867, %v6008
        %v6092 = vsel %vm198, %v5868, %v6010
        %v6093 = vsel %vm198, %v5869, %v6012
        %v6094 = vsel %vm198, %v5870, %v6014
        %v6095 = vsel %vm198, %v5871, %v6016
        %v6096 = vsel %vm198, %v5872, %v6018
        %v6097 = vsel %vm198, %v5873, %v6020
        %v6098 = vsel %vm198, %v5874, %v6022
        %v6099 = vsel %vm198, %v5875, %v6024
        %v6100 = vsel %vm198, %v5876, %v6026
        %v6101 = vsel %vm198, %v5877, %v6028
        %v6102 = vsel %vm198, %v5878, %v6030
        %v6103 = vsel %vm198, %v5879, %v6032
        %v6104 = vsel %vm198, %v5880, %v6034
        %v6105 = vsel %vm198, %v5881, %v6036
        %v6106 = vsel %vm198, %v5882, %v6038
        %v6107 = vsel %vm198, %v5883, %v6040
        %v6108 = vsel %vm198, %v5884, %v6042
        %v6109 = vsel %vm198, %v5885, %v6044
        %v6110 = vsel %vm198, %v5886, %v6046
        %s6111 = sadd.s32 %s4900, 2
        %s6112 = smul.u32 %s6111, 192
        %s6113 = scalar_lea.vmem %s2, %s6112
        %v6114 = vld [vmem:[%s6113] sm:$0xff]
        %v6115 = vld [vmem:[%s6113 + $0x8] sm:$0xff]
        %v6116 = vld [vmem:[%s6113 + $0x10] sm:$0xff]
        %v6117 = vld [vmem:[%s6113 + $0x18] sm:$0xff]
        %v6118 = vld [vmem:[%s6113 + $0x20] sm:$0xff]
        %v6119 = vld [vmem:[%s6113 + $0x28] sm:$0xff]
        %v6120 = vld [vmem:[%s6113 + $0x30] sm:$0xff]
        %v6121 = vld [vmem:[%s6113 + $0x38] sm:$0xff]
        %v6122 = vld [vmem:[%s6113 + $0x40] sm:$0xff]
        %v6123 = vld [vmem:[%s6113 + $0x48] sm:$0xff]
        %v6124 = vld [vmem:[%s6113 + $0x50] sm:$0xff]
        %v6125 = vld [vmem:[%s6113 + $0x58] sm:$0xff]
        %v6126 = vld [vmem:[%s6113 + $0x60] sm:$0xff]
        %v6127 = vld [vmem:[%s6113 + $0x68] sm:$0xff]
        %v6128 = vld [vmem:[%s6113 + $0x70] sm:$0xff]
        %v6129 = vld [vmem:[%s6113 + $0x78] sm:$0xff]
        %v6130 = vld [vmem:[%s6113 + $0x80] sm:$0xff]
        %v6131 = vld [vmem:[%s6113 + $0x88] sm:$0xff]
        %v6132 = vld [vmem:[%s6113 + $0x90] sm:$0xff]
        %v6133 = vld [vmem:[%s6113 + $0x98] sm:$0xff]
        %v6134 = vld [vmem:[%s6113 + $0xa0] sm:$0xff]
        %v6135 = vld [vmem:[%s6113 + $0xa8] sm:$0xff]
        %v6136 = vld [vmem:[%s6113 + $0xb0] sm:$0xff]
        %v6137 = vld [vmem:[%s6113 + $0xb8] sm:$0xff]
        %v6139 = vsel %vm198, %v5919, 0
        %v6142 = vsel %vm198, %v5920, 0
        %v6145 = vsel %vm198, %v5921, 0
        %v6148 = vsel %vm198, %v5922, 0
        %v6151 = vsel %vm198, %v5923, 0
        %v6154 = vsel %vm198, %v5924, 0
        %v6157 = vsel %vm198, %v5925, 0
        %v6160 = vsel %vm198, %v5926, 0
        %v6163 = vsel %vm198, %v5927, 0
        %v6166 = vsel %vm198, %v5928, 0
        %v6169 = vsel %vm198, %v5929, 0
        %v6172 = vsel %vm198, %v5930, 0
        %v6175 = vsel %vm198, %v5931, 0
        %v6178 = vsel %vm198, %v5932, 0
        %v6181 = vsel %vm198, %v5933, 0
        %v6184 = vsel %vm198, %v5934, 0
        %v6187 = vsel %vm198, %v5935, 0
        %v6190 = vsel %vm198, %v5936, 0
        %v6193 = vsel %vm198, %v5937, 0
        %v6196 = vsel %vm198, %v5938, 0
        %v6199 = vsel %vm198, %v5939, 0
        %v6202 = vsel %vm198, %v5940, 0
        %v6205 = vsel %vm198, %v5941, 0
        %v6208 = vsel %vm198, %v5942, 0
        %v6211 = vsel %vm198, %v5943, 0
        %v6214 = vsel %vm198, %v5944, 0
        %v6217 = vsel %vm198, %v5945, 0
        %v6220 = vsel %vm198, %v5946, 0
        %v6223 = vsel %vm198, %v5947, 0
        %v6226 = vsel %vm198, %v5948, 0
        %v6229 = vsel %vm198, %v5949, 0
        %v6232 = vsel %vm198, %v5950, 0
        %6234 = vmatpush.msra.mxu0 %v6129
        %6235 = vmatpush.msra.mxu0 %v6128
        %6236 = vmatpush.msra.mxu0 %v6127
        %6237 = vmatpush.msra.mxu0 %v6126
        %6238 = vmatpush.msra.mxu0 %v6125
        %6239 = vmatpush.msra.mxu0 %v6124
        %6240 = vmatpush.msra.mxu0 %v6123
        %6241 = vmatpush.msra.mxu0 %v6122
        %6242 = vmatpush.msra.mxu0 %v6121
        %6243 = vmatpush.msra.mxu0 %v6120
        %6244 = vmatpush.msra.mxu0 %v6119
        %6245 = vmatpush.msra.mxu0 %v6118
        %6246 = vmatpush.msra.mxu0 %v6117
        %6247 = vmatpush.msra.mxu0 %v6116
        %6248 = vmatpush.msra.mxu0 %v6115
        %6249 = vmatpush.msra.mxu0 %v6114
        %6250 = vmatmul.f32.gmra.mxu0 %v6079
        %v6251 = vpop.f32.mrf.mxu0
        %v6252 = vadd.f32 0.0, %v6251
        %6253 = vmatmul.f32.gmra.mxu0 %v6080
        %v6254 = vpop.f32.mrf.mxu0
        %v6255 = vadd.f32 0.0, %v6254
        %6256 = vmatmul.f32.gmra.mxu0 %v6081
        %v6257 = vpop.f32.mrf.mxu0
        %v6258 = vadd.f32 0.0, %v6257
        %6259 = vmatmul.f32.gmra.mxu0 %v6082
        %v6260 = vpop.f32.mrf.mxu0
        %v6261 = vadd.f32 0.0, %v6260
        %6262 = vmatmul.f32.gmra.mxu0 %v6083
        %v6263 = vpop.f32.mrf.mxu0
        %v6264 = vadd.f32 0.0, %v6263
        %6265 = vmatmul.f32.gmra.mxu0 %v6084
        %v6266 = vpop.f32.mrf.mxu0
        %v6267 = vadd.f32 0.0, %v6266
        %6268 = vmatmul.f32.gmra.mxu0 %v6085
        %v6269 = vpop.f32.mrf.mxu0
        %v6270 = vadd.f32 0.0, %v6269
        %6271 = vmatmul.f32.gmra.mxu0 %v6086
        %v6272 = vpop.f32.mrf.mxu0
        %v6273 = vadd.f32 0.0, %v6272
        %6274 = vmatmul.f32.gmra.mxu0 %v6087
        %v6275 = vpop.f32.mrf.mxu0
        %v6276 = vadd.f32 0.0, %v6275
        %6277 = vmatmul.f32.gmra.mxu0 %v6088
        %v6278 = vpop.f32.mrf.mxu0
        %v6279 = vadd.f32 0.0, %v6278
        %6280 = vmatmul.f32.gmra.mxu0 %v6089
        %v6281 = vpop.f32.mrf.mxu0
        %v6282 = vadd.f32 0.0, %v6281
        %6283 = vmatmul.f32.gmra.mxu0 %v6090
        %v6284 = vpop.f32.mrf.mxu0
        %v6285 = vadd.f32 0.0, %v6284
        %6286 = vmatmul.f32.gmra.mxu0 %v6091
        %v6287 = vpop.f32.mrf.mxu0
        %v6288 = vadd.f32 0.0, %v6287
        %6289 = vmatmul.f32.gmra.mxu0 %v6092
        %v6290 = vpop.f32.mrf.mxu0
        %v6291 = vadd.f32 0.0, %v6290
        %6292 = vmatmul.f32.gmra.mxu0 %v6093
        %v6293 = vpop.f32.mrf.mxu0
        %v6294 = vadd.f32 0.0, %v6293
        %6295 = vmatmul.f32.gmra.mxu0 %v6094
        %v6296 = vpop.f32.mrf.mxu0
        %v6297 = vadd.f32 0.0, %v6296
        %6298 = vmatmul.f32.gmra.mxu0 %v6095
        %v6299 = vpop.f32.mrf.mxu0
        %v6300 = vadd.f32 0.0, %v6299
        %6301 = vmatmul.f32.gmra.mxu0 %v6096
        %v6302 = vpop.f32.mrf.mxu0
        %v6303 = vadd.f32 0.0, %v6302
        %6304 = vmatmul.f32.gmra.mxu0 %v6097
        %v6305 = vpop.f32.mrf.mxu0
        %v6306 = vadd.f32 0.0, %v6305
        %6307 = vmatmul.f32.gmra.mxu0 %v6098
        %v6308 = vpop.f32.mrf.mxu0
        %v6309 = vadd.f32 0.0, %v6308
        %6310 = vmatmul.f32.gmra.mxu0 %v6099
        %v6311 = vpop.f32.mrf.mxu0
        %v6312 = vadd.f32 0.0, %v6311
        %6313 = vmatmul.f32.gmra.mxu0 %v6100
        %v6314 = vpop.f32.mrf.mxu0
        %v6315 = vadd.f32 0.0, %v6314
        %6316 = vmatmul.f32.gmra.mxu0 %v6101
        %v6317 = vpop.f32.mrf.mxu0
        %v6318 = vadd.f32 0.0, %v6317
        %6319 = vmatmul.f32.gmra.mxu0 %v6102
        %v6320 = vpop.f32.mrf.mxu0
        %v6321 = vadd.f32 0.0, %v6320
        %6322 = vmatmul.f32.gmra.mxu0 %v6103
        %v6323 = vpop.f32.mrf.mxu0
        %v6324 = vadd.f32 0.0, %v6323
        %6325 = vmatmul.f32.gmra.mxu0 %v6104
        %v6326 = vpop.f32.mrf.mxu0
        %v6327 = vadd.f32 0.0, %v6326
        %6328 = vmatmul.f32.gmra.mxu0 %v6105
        %v6329 = vpop.f32.mrf.mxu0
        %v6330 = vadd.f32 0.0, %v6329
        %6331 = vmatmul.f32.gmra.mxu0 %v6106
        %v6332 = vpop.f32.mrf.mxu0
        %v6333 = vadd.f32 0.0, %v6332
        %6334 = vmatmul.f32.gmra.mxu0 %v6107
        %v6335 = vpop.f32.mrf.mxu0
        %v6336 = vadd.f32 0.0, %v6335
        %6337 = vmatmul.f32.gmra.mxu0 %v6108
        %v6338 = vpop.f32.mrf.mxu0
        %v6339 = vadd.f32 0.0, %v6338
        %6340 = vmatmul.f32.gmra.mxu0 %v6109
        %v6341 = vpop.f32.mrf.mxu0
        %v6342 = vadd.f32 0.0, %v6341
        %6343 = vmatmul.f32.gmra.mxu0 %v6110
        %v6344 = vpop.f32.mrf.mxu0
        %v6345 = vadd.f32 0.0, %v6344
        %6346 = vdwg.mxu0
        %6347 = vmatpush.msra.mxu0 0.0
        %6348 = vmatpush.msra.mxu0 0.0
        %6349 = vmatpush.msra.mxu0 0.0
        %6350 = vmatpush.msra.mxu0 0.0
        %6351 = vmatpush.msra.mxu0 0.0
        %6352 = vmatpush.msra.mxu0 0.0
        %6353 = vmatpush.msra.mxu0 0.0
        %6354 = vmatpush.msra.mxu0 0.0
        %6355 = vmatpush.msra.mxu0 %v6137
        %6356 = vmatpush.msra.mxu0 %v6136
        %6357 = vmatpush.msra.mxu0 %v6135
        %6358 = vmatpush.msra.mxu0 %v6134
        %6359 = vmatpush.msra.mxu0 %v6133
        %6360 = vmatpush.msra.mxu0 %v6132
        %6361 = vmatpush.msra.mxu0 %v6131
        %6362 = vmatpush.msra.mxu0 %v6130
        %6363 = vmatmul.f32.gmra.mxu0 %v6139
        %v6364 = vpop.f32.mrf.mxu0
        %v6365 = vadd.f32 %v6252, %v6364
        %6366 = vmatmul.f32.gmra.mxu0 %v6142
        %v6367 = vpop.f32.mrf.mxu0
        %v6368 = vadd.f32 %v6255, %v6367
        %6369 = vmatmul.f32.gmra.mxu0 %v6145
        %v6370 = vpop.f32.mrf.mxu0
        %v6371 = vadd.f32 %v6258, %v6370
        %6372 = vmatmul.f32.gmra.mxu0 %v6148
        %v6373 = vpop.f32.mrf.mxu0
        %v6374 = vadd.f32 %v6261, %v6373
        %6375 = vmatmul.f32.gmra.mxu0 %v6151
        %v6376 = vpop.f32.mrf.mxu0
        %v6377 = vadd.f32 %v6264, %v6376
        %6378 = vmatmul.f32.gmra.mxu0 %v6154
        %v6379 = vpop.f32.mrf.mxu0
        %v6380 = vadd.f32 %v6267, %v6379
        %6381 = vmatmul.f32.gmra.mxu0 %v6157
        %v6382 = vpop.f32.mrf.mxu0
        %v6383 = vadd.f32 %v6270, %v6382
        %6384 = vmatmul.f32.gmra.mxu0 %v6160
        %v6385 = vpop.f32.mrf.mxu0
        %v6386 = vadd.f32 %v6273, %v6385
        %6387 = vmatmul.f32.gmra.mxu0 %v6163
        %v6388 = vpop.f32.mrf.mxu0
        %v6389 = vadd.f32 %v6276, %v6388
        %6390 = vmatmul.f32.gmra.mxu0 %v6166
        %v6391 = vpop.f32.mrf.mxu0
        %v6392 = vadd.f32 %v6279, %v6391
        %6393 = vmatmul.f32.gmra.mxu0 %v6169
        %v6394 = vpop.f32.mrf.mxu0
        %v6395 = vadd.f32 %v6282, %v6394
        %6396 = vmatmul.f32.gmra.mxu0 %v6172
        %v6397 = vpop.f32.mrf.mxu0
        %v6398 = vadd.f32 %v6285, %v6397
        %6399 = vmatmul.f32.gmra.mxu0 %v6175
        %v6400 = vpop.f32.mrf.mxu0
        %v6401 = vadd.f32 %v6288, %v6400
        %6402 = vmatmul.f32.gmra.mxu0 %v6178
        %v6403 = vpop.f32.mrf.mxu0
        %v6404 = vadd.f32 %v6291, %v6403
        %6405 = vmatmul.f32.gmra.mxu0 %v6181
        %v6406 = vpop.f32.mrf.mxu0
        %v6407 = vadd.f32 %v6294, %v6406
        %6408 = vmatmul.f32.gmra.mxu0 %v6184
        %v6409 = vpop.f32.mrf.mxu0
        %v6410 = vadd.f32 %v6297, %v6409
        %6411 = vmatmul.f32.gmra.mxu0 %v6187
        %v6412 = vpop.f32.mrf.mxu0
        %v6413 = vadd.f32 %v6300, %v6412
        %6414 = vmatmul.f32.gmra.mxu0 %v6190
        %v6415 = vpop.f32.mrf.mxu0
        %v6416 = vadd.f32 %v6303, %v6415
        %6417 = vmatmul.f32.gmra.mxu0 %v6193
        %v6418 = vpop.f32.mrf.mxu0
        %v6419 = vadd.f32 %v6306, %v6418
        %6420 = vmatmul.f32.gmra.mxu0 %v6196
        %v6421 = vpop.f32.mrf.mxu0
        %v6422 = vadd.f32 %v6309, %v6421
        %6423 = vmatmul.f32.gmra.mxu0 %v6199
        %v6424 = vpop.f32.mrf.mxu0
        %v6425 = vadd.f32 %v6312, %v6424
        %6426 = vmatmul.f32.gmra.mxu0 %v6202
        %v6427 = vpop.f32.mrf.mxu0
        %v6428 = vadd.f32 %v6315, %v6427
        %6429 = vmatmul.f32.gmra.mxu0 %v6205
        %v6430 = vpop.f32.mrf.mxu0
        %v6431 = vadd.f32 %v6318, %v6430
        %6432 = vmatmul.f32.gmra.mxu0 %v6208
        %v6433 = vpop.f32.mrf.mxu0
        %v6434 = vadd.f32 %v6321, %v6433
        %6435 = vmatmul.f32.gmra.mxu0 %v6211
        %v6436 = vpop.f32.mrf.mxu0
        %v6437 = vadd.f32 %v6324, %v6436
        %6438 = vmatmul.f32.gmra.mxu0 %v6214
        %v6439 = vpop.f32.mrf.mxu0
        %v6440 = vadd.f32 %v6327, %v6439
        %6441 = vmatmul.f32.gmra.mxu0 %v6217
        %v6442 = vpop.f32.mrf.mxu0
        %v6443 = vadd.f32 %v6330, %v6442
        %6444 = vmatmul.f32.gmra.mxu0 %v6220
        %v6445 = vpop.f32.mrf.mxu0
        %v6446 = vadd.f32 %v6333, %v6445
        %6447 = vmatmul.f32.gmra.mxu0 %v6223
        %v6448 = vpop.f32.mrf.mxu0
        %v6449 = vadd.f32 %v6336, %v6448
        %6450 = vmatmul.f32.gmra.mxu0 %v6226
        %v6451 = vpop.f32.mrf.mxu0
        %v6452 = vadd.f32 %v6339, %v6451
        %6453 = vmatmul.f32.gmra.mxu0 %v6229
        %v6454 = vpop.f32.mrf.mxu0
        %v6455 = vadd.f32 %v6342, %v6454
        %6456 = vmatmul.f32.gmra.mxu0 %v6232
        %v6457 = vpop.f32.mrf.mxu0
        %v6458 = vadd.f32 %v6345, %v6457
        %6459 = vdwg.mxu0
        %v6460 = vadd.f32 %v5759, %v6365
        %v6461 = vadd.f32 %v5762, %v6368
        %v6462 = vadd.f32 %v5765, %v6371
        %v6463 = vadd.f32 %v5768, %v6374
        %v6464 = vadd.f32 %v5771, %v6377
        %v6465 = vadd.f32 %v5774, %v6380
        %v6466 = vadd.f32 %v5777, %v6383
        %v6467 = vadd.f32 %v5780, %v6386
        %v6468 = vadd.f32 %v5783, %v6389
        %v6469 = vadd.f32 %v5786, %v6392
        %v6470 = vadd.f32 %v5789, %v6395
        %v6471 = vadd.f32 %v5792, %v6398
        %v6472 = vadd.f32 %v5795, %v6401
        %v6473 = vadd.f32 %v5798, %v6404
        %v6474 = vadd.f32 %v5801, %v6407
        %v6475 = vadd.f32 %v5804, %v6410
        %v6476 = vadd.f32 %v5807, %v6413
        %v6477 = vadd.f32 %v5810, %v6416
        %v6478 = vadd.f32 %v5813, %v6419
        %v6479 = vadd.f32 %v5816, %v6422
        %v6480 = vadd.f32 %v5819, %v6425
        %v6481 = vadd.f32 %v5822, %v6428
        %v6482 = vadd.f32 %v5825, %v6431
        %v6483 = vadd.f32 %v5828, %v6434
        %v6484 = vadd.f32 %v5831, %v6437
        %v6485 = vadd.f32 %v5834, %v6440
        %v6486 = vadd.f32 %v5837, %v6443
        %v6487 = vadd.f32 %v5840, %v6446
        %v6488 = vadd.f32 %v5843, %v6449
        %v6489 = vadd.f32 %v5846, %v6452
        %v6490 = vadd.f32 %v5849, %v6455
        %v6491 = vadd.f32 %v5852, %v6458
        %v6492 = vmax.f32 %v6460, 0.0
        %v6493 = vmax.f32 %v6461, 0.0
        %v6494 = vmax.f32 %v6462, 0.0
        %v6495 = vmax.f32 %v6463, 0.0
        %v6496 = vmax.f32 %v6464, 0.0
        %v6497 = vmax.f32 %v6465, 0.0
        %v6498 = vmax.f32 %v6466, 0.0
        %v6499 = vmax.f32 %v6467, 0.0
        %v6500 = vmax.f32 %v6468, 0.0
        %v6501 = vmax.f32 %v6469, 0.0
        %v6502 = vmax.f32 %v6470, 0.0
        %v6503 = vmax.f32 %v6471, 0.0
        %v6504 = vmax.f32 %v6472, 0.0
        %v6505 = vmax.f32 %v6473, 0.0
        %v6506 = vmax.f32 %v6474, 0.0
        %v6507 = vmax.f32 %v6475, 0.0
        %v6508 = vmax.f32 %v6476, 0.0
        %v6509 = vmax.f32 %v6477, 0.0
        %v6510 = vmax.f32 %v6478, 0.0
        %v6511 = vmax.f32 %v6479, 0.0
        %v6512 = vmax.f32 %v6480, 0.0
        %v6513 = vmax.f32 %v6481, 0.0
        %v6514 = vmax.f32 %v6482, 0.0
        %v6515 = vmax.f32 %v6483, 0.0
        %v6516 = vmax.f32 %v6484, 0.0
        %v6517 = vmax.f32 %v6485, 0.0
        %v6518 = vmax.f32 %v6486, 0.0
        %v6519 = vmax.f32 %v6487, 0.0
        %v6520 = vmax.f32 %v6488, 0.0
        %v6521 = vmax.f32 %v6489, 0.0
        %v6522 = vmax.f32 %v6490, 0.0
        %v6523 = vmax.f32 %v6491, 0.0
        %6524 = vst.msk [vmem:[%s2690 + $0x1] sm:$0xff] %vm198, %v6492
        %6525 = vst.msk [vmem:[%s2690 + $0x9] sm:$0xff] %vm198, %v6493
        %6526 = vst.msk [vmem:[%s2690 + $0x19] sm:$0xff] %vm198, %v6494
        %6527 = vst.msk [vmem:[%s2690 + $0x21] sm:$0xff] %vm198, %v6495
        %6528 = vst.msk [vmem:[%s2690 + $0x31] sm:$0xff] %vm198, %v6496
        %6529 = vst.msk [vmem:[%s2690 + $0x39] sm:$0xff] %vm198, %v6497
        %6530 = vst.msk [vmem:[%s2690 + $0x49] sm:$0xff] %vm198, %v6498
        %6531 = vst.msk [vmem:[%s2690 + $0x51] sm:$0xff] %vm198, %v6499
        %6532 = vst.msk [vmem:[%s2690 + $0x61] sm:$0xff] %vm198, %v6500
        %6533 = vst.msk [vmem:[%s2690 + $0x69] sm:$0xff] %vm198, %v6501
        %6534 = vst.msk [vmem:[%s2690 + $0x79] sm:$0xff] %vm198, %v6502
        %6535 = vst.msk [vmem:[%s2690 + $0x81] sm:$0xff] %vm198, %v6503
        %6536 = vst.msk [vmem:[%s2690 + $0x91] sm:$0xff] %vm198, %v6504
        %6537 = vst.msk [vmem:[%s2690 + $0x99] sm:$0xff] %vm198, %v6505
        %6538 = vst.msk [vmem:[%s2690 + $0xa9] sm:$0xff] %vm198, %v6506
        %6539 = vst.msk [vmem:[%s2690 + $0xb1] sm:$0xff] %vm198, %v6507
        %6540 = vst.msk [vmem:[%s2690 + $0xc1] sm:$0xff] %vm198, %v6508
        %6541 = vst.msk [vmem:[%s2690 + $0xc9] sm:$0xff] %vm198, %v6509
        %6542 = vst.msk [vmem:[%s2690 + $0xd9] sm:$0xff] %vm198, %v6510
        %6543 = vst.msk [vmem:[%s2690 + $0xe1] sm:$0xff] %vm198, %v6511
        %6544 = vst.msk [vmem:[%s2690 + $0xf1] sm:$0xff] %vm198, %v6512
        %6545 = vst.msk [vmem:[%s2690 + $0xf9] sm:$0xff] %vm198, %v6513
        %6546 = vst.msk [vmem:[%s2690 + $0x109] sm:$0xff] %vm198, %v6514
        %6547 = vst.msk [vmem:[%s2690 + $0x111] sm:$0xff] %vm198, %v6515
        %6548 = vst.msk [vmem:[%s2690 + $0x121] sm:$0xff] %vm198, %v6516
        %6549 = vst.msk [vmem:[%s2690 + $0x129] sm:$0xff] %vm198, %v6517
        %6550 = vst.msk [vmem:[%s2690 + $0x139] sm:$0xff] %vm198, %v6518
        %6551 = vst.msk [vmem:[%s2690 + $0x141] sm:$0xff] %vm198, %v6519
        %6552 = vst.msk [vmem:[%s2690 + $0x151] sm:$0xff] %vm198, %v6520
        %6553 = vst.msk [vmem:[%s2690 + $0x159] sm:$0xff] %vm198, %v6521
        %6554 = vst.msk [vmem:[%s2690 + $0x169] sm:$0xff] %vm198, %v6522
        %6555 = vst.msk [vmem:[%s2690 + $0x171] sm:$0xff] %vm198, %v6523
      $region41: #{vdsr_forward.1} parent=35 // loop_footer
        %s2728 = sadd.s32 1, %s2724
      $region42: #{vdsr_forward.1} parent=35 // loop_footer_branch
        %2723 = sbr.rel target = $region38
      $region43: #{vdsr_forward.1} parent=35 // loop_exit
        _
      %v6556 = vld [vmem:[#allocation2] sm:$0xff]
      %v6557 = vld [vmem:[#allocation2 + $0x8] sm:$0xff]
      %v6558 = vld [vmem:[#allocation2 + $0x18] sm:$0xff]
      %v6559 = vld [vmem:[#allocation2 + $0x20] sm:$0xff]
      %v6560 = vld [vmem:[#allocation2 + $0x30] sm:$0xff]
      %v6561 = vld [vmem:[#allocation2 + $0x38] sm:$0xff]
      %v6562 = vld [vmem:[#allocation2 + $0x48] sm:$0xff]
      %v6563 = vld [vmem:[#allocation2 + $0x50] sm:$0xff]
      %v6564 = vld [vmem:[#allocation2 + $0x60] sm:$0xff]
      %v6565 = vld [vmem:[#allocation2 + $0x68] sm:$0xff]
      %v6566 = vld [vmem:[#allocation2 + $0x78] sm:$0xff]
      %v6567 = vld [vmem:[#allocation2 + $0x80] sm:$0xff]
      %v6568 = vld [vmem:[#allocation2 + $0x90] sm:$0xff]
      %v6569 = vld [vmem:[#allocation2 + $0x98] sm:$0xff]
      %v6570 = vld [vmem:[#allocation2 + $0xa8] sm:$0xff]
      %v6571 = vld [vmem:[#allocation2 + $0xb0] sm:$0xff]
      %v6572 = vld [vmem:[#allocation2 + $0xc0] sm:$0xff]
      %v6573 = vld [vmem:[#allocation2 + $0xc8] sm:$0xff]
      %v6574 = vld [vmem:[#allocation2 + $0xd8] sm:$0xff]
      %v6575 = vld [vmem:[#allocation2 + $0xe0] sm:$0xff]
      %v6576 = vld [vmem:[#allocation2 + $0xf0] sm:$0xff]
      %v6577 = vld [vmem:[#allocation2 + $0xf8] sm:$0xff]
      %v6578 = vld [vmem:[#allocation2 + $0x108] sm:$0xff]
      %v6579 = vld [vmem:[#allocation2 + $0x110] sm:$0xff]
      %v6580 = vld [vmem:[#allocation2 + $0x120] sm:$0xff]
      %v6581 = vld [vmem:[#allocation2 + $0x128] sm:$0xff]
      %v6582 = vld [vmem:[#allocation2 + $0x138] sm:$0xff]
      %v6583 = vld [vmem:[#allocation2 + $0x140] sm:$0xff]
      %v6584 = vld [vmem:[#allocation2 + $0x150] sm:$0xff]
      %v6585 = vld [vmem:[#allocation2 + $0x158] sm:$0xff]
      %v6586 = vld [vmem:[#allocation2 + $0x168] sm:$0xff]
      %v6587 = vld [vmem:[#allocation2 + $0x170] sm:$0xff]
      %v6588 = vld [vmem:[%s3] sm:$0x1]
      %v6590 = vperm.slane %v6588, 0
      %v6592 = vmul.f32 %v6556, %v6590
      %v6593 = vmul.f32 %v6557, %v6590
      %v6594 = vmul.f32 %v6558, %v6590
      %v6595 = vmul.f32 %v6559, %v6590
      %v6596 = vmul.f32 %v6560, %v6590
      %v6597 = vmul.f32 %v6561, %v6590
      %v6598 = vmul.f32 %v6562, %v6590
      %v6599 = vmul.f32 %v6563, %v6590
      %v6600 = vmul.f32 %v6564, %v6590
      %v6601 = vmul.f32 %v6565, %v6590
      %v6602 = vmul.f32 %v6566, %v6590
      %v6603 = vmul.f32 %v6567, %v6590
      %v6604 = vmul.f32 %v6568, %v6590
      %v6605 = vmul.f32 %v6569, %v6590
      %v6606 = vmul.f32 %v6570, %v6590
      %v6607 = vmul.f32 %v6571, %v6590
      %v6608 = vmul.f32 %v6572, %v6590
      %v6609 = vmul.f32 %v6573, %v6590
      %v6610 = vmul.f32 %v6574, %v6590
      %v6611 = vmul.f32 %v6575, %v6590
      %v6612 = vmul.f32 %v6576, %v6590
      %v6613 = vmul.f32 %v6577, %v6590
      %v6614 = vmul.f32 %v6578, %v6590
      %v6615 = vmul.f32 %v6579, %v6590
      %v6616 = vmul.f32 %v6580, %v6590
      %v6617 = vmul.f32 %v6581, %v6590
      %v6618 = vmul.f32 %v6582, %v6590
      %v6619 = vmul.f32 %v6583, %v6590
      %v6620 = vmul.f32 %v6584, %v6590
      %v6621 = vmul.f32 %v6585, %v6590
      %v6622 = vmul.f32 %v6586, %v6590
      %v6623 = vmul.f32 %v6587, %v6590
      %v6624 = vadd.f32 %v6592, 0.0
      %v6625 = vadd.f32 %v6593, 0.0
      %v6626 = vadd.f32 %v6594, 0.0
      %v6627 = vadd.f32 %v6595, 0.0
      %v6628 = vadd.f32 %v6596, 0.0
      %v6629 = vadd.f32 %v6597, 0.0
      %v6630 = vadd.f32 %v6598, 0.0
      %v6631 = vadd.f32 %v6599, 0.0
      %v6632 = vadd.f32 %v6600, 0.0
      %v6633 = vadd.f32 %v6601, 0.0
      %v6634 = vadd.f32 %v6602, 0.0
      %v6635 = vadd.f32 %v6603, 0.0
      %v6636 = vadd.f32 %v6604, 0.0
      %v6637 = vadd.f32 %v6605, 0.0
      %v6638 = vadd.f32 %v6606, 0.0
      %v6639 = vadd.f32 %v6607, 0.0
      %v6640 = vadd.f32 %v6608, 0.0
      %v6641 = vadd.f32 %v6609, 0.0
      %v6642 = vadd.f32 %v6610, 0.0
      %v6643 = vadd.f32 %v6611, 0.0
      %v6644 = vadd.f32 %v6612, 0.0
      %v6645 = vadd.f32 %v6613, 0.0
      %v6646 = vadd.f32 %v6614, 0.0
      %v6647 = vadd.f32 %v6615, 0.0
      %v6648 = vadd.f32 %v6616, 0.0
      %v6649 = vadd.f32 %v6617, 0.0
      %v6650 = vadd.f32 %v6618, 0.0
      %v6651 = vadd.f32 %v6619, 0.0
      %v6652 = vadd.f32 %v6620, 0.0
      %v6653 = vadd.f32 %v6621, 0.0
      %v6654 = vadd.f32 %v6622, 0.0
      %v6655 = vadd.f32 %v6623, 0.0
      %v6656 = vld [vmem:[#allocation2 + $0x1] sm:$0xff]
      %v6657 = vld [vmem:[#allocation2 + $0x9] sm:$0xff]
      %v6658 = vld [vmem:[#allocation2 + $0x19] sm:$0xff]
      %v6659 = vld [vmem:[#allocation2 + $0x21] sm:$0xff]
      %v6660 = vld [vmem:[#allocation2 + $0x31] sm:$0xff]
      %v6661 = vld [vmem:[#allocation2 + $0x39] sm:$0xff]
      %v6662 = vld [vmem:[#allocation2 + $0x49] sm:$0xff]
      %v6663 = vld [vmem:[#allocation2 + $0x51] sm:$0xff]
      %v6664 = vld [vmem:[#allocation2 + $0x61] sm:$0xff]
      %v6665 = vld [vmem:[#allocation2 + $0x69] sm:$0xff]
      %v6666 = vld [vmem:[#allocation2 + $0x79] sm:$0xff]
      %v6667 = vld [vmem:[#allocation2 + $0x81] sm:$0xff]
      %v6668 = vld [vmem:[#allocation2 + $0x91] sm:$0xff]
      %v6669 = vld [vmem:[#allocation2 + $0x99] sm:$0xff]
      %v6670 = vld [vmem:[#allocation2 + $0xa9] sm:$0xff]
      %v6671 = vld [vmem:[#allocation2 + $0xb1] sm:$0xff]
      %v6672 = vld [vmem:[#allocation2 + $0xc1] sm:$0xff]
      %v6673 = vld [vmem:[#allocation2 + $0xc9] sm:$0xff]
      %v6674 = vld [vmem:[#allocation2 + $0xd9] sm:$0xff]
      %v6675 = vld [vmem:[#allocation2 + $0xe1] sm:$0xff]
      %v6676 = vld [vmem:[#allocation2 + $0xf1] sm:$0xff]
      %v6677 = vld [vmem:[#allocation2 + $0xf9] sm:$0xff]
      %v6678 = vld [vmem:[#allocation2 + $0x109] sm:$0xff]
      %v6679 = vld [vmem:[#allocation2 + $0x111] sm:$0xff]
      %v6680 = vld [vmem:[#allocation2 + $0x121] sm:$0xff]
      %v6681 = vld [vmem:[#allocation2 + $0x129] sm:$0xff]
      %v6682 = vld [vmem:[#allocation2 + $0x139] sm:$0xff]
      %v6683 = vld [vmem:[#allocation2 + $0x141] sm:$0xff]
      %v6684 = vld [vmem:[#allocation2 + $0x151] sm:$0xff]
      %v6685 = vld [vmem:[#allocation2 + $0x159] sm:$0xff]
      %v6686 = vld [vmem:[#allocation2 + $0x169] sm:$0xff]
      %v6687 = vld [vmem:[#allocation2 + $0x171] sm:$0xff]
      %s6688 = scalar_lea.vmem %s3, 1
      %v6689 = vld [vmem:[%s6688] sm:$0x1]
      %v6691 = vperm.slane %v6689, 0
      %v6693 = vmul.f32 %v6656, %v6691
      %v6694 = vmul.f32 %v6657, %v6691
      %v6695 = vmul.f32 %v6658, %v6691
      %v6696 = vmul.f32 %v6659, %v6691
      %v6697 = vmul.f32 %v6660, %v6691
      %v6698 = vmul.f32 %v6661, %v6691
      %v6699 = vmul.f32 %v6662, %v6691
      %v6700 = vmul.f32 %v6663, %v6691
      %v6701 = vmul.f32 %v6664, %v6691
      %v6702 = vmul.f32 %v6665, %v6691
      %v6703 = vmul.f32 %v6666, %v6691
      %v6704 = vmul.f32 %v6667, %v6691
      %v6705 = vmul.f32 %v6668, %v6691
      %v6706 = vmul.f32 %v6669, %v6691
      %v6707 = vmul.f32 %v6670, %v6691
      %v6708 = vmul.f32 %v6671, %v6691
      %v6709 = vmul.f32 %v6672, %v6691
      %v6710 = vmul.f32 %v6673, %v6691
      %v6711 = vmul.f32 %v6674, %v6691
      %v6712 = vmul.f32 %v6675, %v6691
      %v6713 = vmul.f32 %v6676, %v6691
      %v6714 = vmul.f32 %v6677, %v6691
      %v6715 = vmul.f32 %v6678, %v6691
      %v6716 = vmul.f32 %v6679, %v6691
      %v6717 = vmul.f32 %v6680, %v6691
      %v6718 = vmul.f32 %v6681, %v6691
      %v6719 = vmul.f32 %v6682, %v6691
      %v6720 = vmul.f32 %v6683, %v6691
      %v6721 = vmul.f32 %v6684, %v6691
      %v6722 = vmul.f32 %v6685, %v6691
      %v6723 = vmul.f32 %v6686, %v6691
      %v6724 = vmul.f32 %v6687, %v6691
      %v6725 = vadd.f32 %v6624, %v6693
      %v6726 = vadd.f32 %v6625, %v6694
      %v6727 = vadd.f32 %v6626, %v6695
      %v6728 = vadd.f32 %v6627, %v6696
      %v6729 = vadd.f32 %v6628, %v6697
      %v6730 = vadd.f32 %v6629, %v6698
      %v6731 = vadd.f32 %v6630, %v6699
      %v6732 = vadd.f32 %v6631, %v6700
      %v6733 = vadd.f32 %v6632, %v6701
      %v6734 = vadd.f32 %v6633, %v6702
      %v6735 = vadd.f32 %v6634, %v6703
      %v6736 = vadd.f32 %v6635, %v6704
      %v6737 = vadd.f32 %v6636, %v6705
      %v6738 = vadd.f32 %v6637, %v6706
      %v6739 = vadd.f32 %v6638, %v6707
      %v6740 = vadd.f32 %v6639, %v6708
      %v6741 = vadd.f32 %v6640, %v6709
      %v6742 = vadd.f32 %v6641, %v6710
      %v6743 = vadd.f32 %v6642, %v6711
      %v6744 = vadd.f32 %v6643, %v6712
      %v6745 = vadd.f32 %v6644, %v6713
      %v6746 = vadd.f32 %v6645, %v6714
      %v6747 = vadd.f32 %v6646, %v6715
      %v6748 = vadd.f32 %v6647, %v6716
      %v6749 = vadd.f32 %v6648, %v6717
      %v6750 = vadd.f32 %v6649, %v6718
      %v6751 = vadd.f32 %v6650, %v6719
      %v6752 = vadd.f32 %v6651, %v6720
      %v6753 = vadd.f32 %v6652, %v6721
      %v6754 = vadd.f32 %v6653, %v6722
      %v6755 = vadd.f32 %v6654, %v6723
      %v6756 = vadd.f32 %v6655, %v6724
      %v6757 = vld [vmem:[#allocation2 + $0x2] sm:$0xff]
      %v6758 = vld [vmem:[#allocation2 + $0xa] sm:$0xff]
      %v6759 = vld [vmem:[#allocation2 + $0x1a] sm:$0xff]
      %v6760 = vld [vmem:[#allocation2 + $0x22] sm:$0xff]
      %v6761 = vld [vmem:[#allocation2 + $0x32] sm:$0xff]
      %v6762 = vld [vmem:[#allocation2 + $0x3a] sm:$0xff]
      %v6763 = vld [vmem:[#allocation2 + $0x4a] sm:$0xff]
      %v6764 = vld [vmem:[#allocation2 + $0x52] sm:$0xff]
      %v6765 = vld [vmem:[#allocation2 + $0x62] sm:$0xff]
      %v6766 = vld [vmem:[#allocation2 + $0x6a] sm:$0xff]
      %v6767 = vld [vmem:[#allocation2 + $0x7a] sm:$0xff]
      %v6768 = vld [vmem:[#allocation2 + $0x82] sm:$0xff]
      %v6769 = vld [vmem:[#allocation2 + $0x92] sm:$0xff]
      %v6770 = vld [vmem:[#allocation2 + $0x9a] sm:$0xff]
      %v6771 = vld [vmem:[#allocation2 + $0xaa] sm:$0xff]
      %v6772 = vld [vmem:[#allocation2 + $0xb2] sm:$0xff]
      %v6773 = vld [vmem:[#allocation2 + $0xc2] sm:$0xff]
      %v6774 = vld [vmem:[#allocation2 + $0xca] sm:$0xff]
      %v6775 = vld [vmem:[#allocation2 + $0xda] sm:$0xff]
      %v6776 = vld [vmem:[#allocation2 + $0xe2] sm:$0xff]
      %v6777 = vld [vmem:[#allocation2 + $0xf2] sm:$0xff]
      %v6778 = vld [vmem:[#allocation2 + $0xfa] sm:$0xff]
      %v6779 = vld [vmem:[#allocation2 + $0x10a] sm:$0xff]
      %v6780 = vld [vmem:[#allocation2 + $0x112] sm:$0xff]
      %v6781 = vld [vmem:[#allocation2 + $0x122] sm:$0xff]
      %v6782 = vld [vmem:[#allocation2 + $0x12a] sm:$0xff]
      %v6783 = vld [vmem:[#allocation2 + $0x13a] sm:$0xff]
      %v6784 = vld [vmem:[#allocation2 + $0x142] sm:$0xff]
      %v6785 = vld [vmem:[#allocation2 + $0x152] sm:$0xff]
      %v6786 = vld [vmem:[#allocation2 + $0x15a] sm:$0xff]
      %v6787 = vld [vmem:[#allocation2 + $0x16a] sm:$0xff]
      %v6788 = vld [vmem:[#allocation2 + $0x172] sm:$0xff]
      %s6789 = scalar_lea.vmem %s3, 2
      %v6790 = vld [vmem:[%s6789] sm:$0x1]
      %v6792 = vperm.slane %v6790, 0
      %v6794 = vmul.f32 %v6757, %v6792
      %v6795 = vmul.f32 %v6758, %v6792
      %v6796 = vmul.f32 %v6759, %v6792
      %v6797 = vmul.f32 %v6760, %v6792
      %v6798 = vmul.f32 %v6761, %v6792
      %v6799 = vmul.f32 %v6762, %v6792
      %v6800 = vmul.f32 %v6763, %v6792
      %v6801 = vmul.f32 %v6764, %v6792
      %v6802 = vmul.f32 %v6765, %v6792
      %v6803 = vmul.f32 %v6766, %v6792
      %v6804 = vmul.f32 %v6767, %v6792
      %v6805 = vmul.f32 %v6768, %v6792
      %v6806 = vmul.f32 %v6769, %v6792
      %v6807 = vmul.f32 %v6770, %v6792
      %v6808 = vmul.f32 %v6771, %v6792
      %v6809 = vmul.f32 %v6772, %v6792
      %v6810 = vmul.f32 %v6773, %v6792
      %v6811 = vmul.f32 %v6774, %v6792
      %v6812 = vmul.f32 %v6775, %v6792
      %v6813 = vmul.f32 %v6776, %v6792
      %v6814 = vmul.f32 %v6777, %v6792
      %v6815 = vmul.f32 %v6778, %v6792
      %v6816 = vmul.f32 %v6779, %v6792
      %v6817 = vmul.f32 %v6780, %v6792
      %v6818 = vmul.f32 %v6781, %v6792
      %v6819 = vmul.f32 %v6782, %v6792
      %v6820 = vmul.f32 %v6783, %v6792
      %v6821 = vmul.f32 %v6784, %v6792
      %v6822 = vmul.f32 %v6785, %v6792
      %v6823 = vmul.f32 %v6786, %v6792
      %v6824 = vmul.f32 %v6787, %v6792
      %v6825 = vmul.f32 %v6788, %v6792
      %v6826 = vadd.f32 %v6725, %v6794
      %v6827 = vadd.f32 %v6726, %v6795
      %v6828 = vadd.f32 %v6727, %v6796
      %v6829 = vadd.f32 %v6728, %v6797
      %v6830 = vadd.f32 %v6729, %v6798
      %v6831 = vadd.f32 %v6730, %v6799
      %v6832 = vadd.f32 %v6731, %v6800
      %v6833 = vadd.f32 %v6732, %v6801
      %v6834 = vadd.f32 %v6733, %v6802
      %v6835 = vadd.f32 %v6734, %v6803
      %v6836 = vadd.f32 %v6735, %v6804
      %v6837 = vadd.f32 %v6736, %v6805
      %v6838 = vadd.f32 %v6737, %v6806
      %v6839 = vadd.f32 %v6738, %v6807
      %v6840 = vadd.f32 %v6739, %v6808
      %v6841 = vadd.f32 %v6740, %v6809
      %v6842 = vadd.f32 %v6741, %v6810
      %v6843 = vadd.f32 %v6742, %v6811
      %v6844 = vadd.f32 %v6743, %v6812
      %v6845 = vadd.f32 %v6744, %v6813
      %v6846 = vadd.f32 %v6745, %v6814
      %v6847 = vadd.f32 %v6746, %v6815
      %v6848 = vadd.f32 %v6747, %v6816
      %v6849 = vadd.f32 %v6748, %v6817
      %v6850 = vadd.f32 %v6749, %v6818
      %v6851 = vadd.f32 %v6750, %v6819
      %v6852 = vadd.f32 %v6751, %v6820
      %v6853 = vadd.f32 %v6752, %v6821
      %v6854 = vadd.f32 %v6753, %v6822
      %v6855 = vadd.f32 %v6754, %v6823
      %v6856 = vadd.f32 %v6755, %v6824
      %v6857 = vadd.f32 %v6756, %v6825
      %v6858 = vld [vmem:[%s2690] sm:$0xff]
      %v6859 = vld [vmem:[%s2690 + $0x8] sm:$0xff]
      %v6860 = vld [vmem:[%s2690 + $0x18] sm:$0xff]
      %v6861 = vld [vmem:[%s2690 + $0x20] sm:$0xff]
      %v6862 = vld [vmem:[%s2690 + $0x30] sm:$0xff]
      %v6863 = vld [vmem:[%s2690 + $0x38] sm:$0xff]
      %v6864 = vld [vmem:[%s2690 + $0x48] sm:$0xff]
      %v6865 = vld [vmem:[%s2690 + $0x50] sm:$0xff]
      %v6866 = vld [vmem:[%s2690 + $0x60] sm:$0xff]
      %v6867 = vld [vmem:[%s2690 + $0x68] sm:$0xff]
      %v6868 = vld [vmem:[%s2690 + $0x78] sm:$0xff]
      %v6869 = vld [vmem:[%s2690 + $0x80] sm:$0xff]
      %v6870 = vld [vmem:[%s2690 + $0x90] sm:$0xff]
      %v6871 = vld [vmem:[%s2690 + $0x98] sm:$0xff]
      %v6872 = vld [vmem:[%s2690 + $0xa8] sm:$0xff]
      %v6873 = vld [vmem:[%s2690 + $0xb0] sm:$0xff]
      %v6874 = vld [vmem:[%s2690 + $0xc0] sm:$0xff]
      %v6875 = vld [vmem:[%s2690 + $0xc8] sm:$0xff]
      %v6876 = vld [vmem:[%s2690 + $0xd8] sm:$0xff]
      %v6877 = vld [vmem:[%s2690 + $0xe0] sm:$0xff]
      %v6878 = vld [vmem:[%s2690 + $0xf0] sm:$0xff]
      %v6879 = vld [vmem:[%s2690 + $0xf8] sm:$0xff]
      %v6880 = vld [vmem:[%s2690 + $0x108] sm:$0xff]
      %v6881 = vld [vmem:[%s2690 + $0x110] sm:$0xff]
      %v6882 = vld [vmem:[%s2690 + $0x120] sm:$0xff]
      %v6883 = vld [vmem:[%s2690 + $0x128] sm:$0xff]
      %v6884 = vld [vmem:[%s2690 + $0x138] sm:$0xff]
      %v6885 = vld [vmem:[%s2690 + $0x140] sm:$0xff]
      %v6886 = vld [vmem:[%s2690 + $0x150] sm:$0xff]
      %v6887 = vld [vmem:[%s2690 + $0x158] sm:$0xff]
      %v6888 = vld [vmem:[%s2690 + $0x168] sm:$0xff]
      %v6889 = vld [vmem:[%s2690 + $0x170] sm:$0xff]
      %s6890 = scalar_lea.vmem %s3, 3
      %v6891 = vld [vmem:[%s6890] sm:$0x1]
      %v6893 = vperm.slane %v6891, 0
      %v6895 = vmul.f32 %v6858, %v6893
      %v6896 = vmul.f32 %v6859, %v6893
      %v6897 = vmul.f32 %v6860, %v6893
      %v6898 = vmul.f32 %v6861, %v6893
      %v6899 = vmul.f32 %v6862, %v6893
      %v6900 = vmul.f32 %v6863, %v6893
      %v6901 = vmul.f32 %v6864, %v6893
      %v6902 = vmul.f32 %v6865, %v6893
      %v6903 = vmul.f32 %v6866, %v6893
      %v6904 = vmul.f32 %v6867, %v6893
      %v6905 = vmul.f32 %v6868, %v6893
      %v6906 = vmul.f32 %v6869, %v6893
      %v6907 = vmul.f32 %v6870, %v6893
      %v6908 = vmul.f32 %v6871, %v6893
      %v6909 = vmul.f32 %v6872, %v6893
      %v6910 = vmul.f32 %v6873, %v6893
      %v6911 = vmul.f32 %v6874, %v6893
      %v6912 = vmul.f32 %v6875, %v6893
      %v6913 = vmul.f32 %v6876, %v6893
      %v6914 = vmul.f32 %v6877, %v6893
      %v6915 = vmul.f32 %v6878, %v6893
      %v6916 = vmul.f32 %v6879, %v6893
      %v6917 = vmul.f32 %v6880, %v6893
      %v6918 = vmul.f32 %v6881, %v6893
      %v6919 = vmul.f32 %v6882, %v6893
      %v6920 = vmul.f32 %v6883, %v6893
      %v6921 = vmul.f32 %v6884, %v6893
      %v6922 = vmul.f32 %v6885, %v6893
      %v6923 = vmul.f32 %v6886, %v6893
      %v6924 = vmul.f32 %v6887, %v6893
      %v6925 = vmul.f32 %v6888, %v6893
      %v6926 = vmul.f32 %v6889, %v6893
      %v6927 = vadd.f32 %v6826, %v6895
      %v6928 = vadd.f32 %v6827, %v6896
      %v6929 = vadd.f32 %v6828, %v6897
      %v6930 = vadd.f32 %v6829, %v6898
      %v6931 = vadd.f32 %v6830, %v6899
      %v6932 = vadd.f32 %v6831, %v6900
      %v6933 = vadd.f32 %v6832, %v6901
      %v6934 = vadd.f32 %v6833, %v6902
      %v6935 = vadd.f32 %v6834, %v6903
      %v6936 = vadd.f32 %v6835, %v6904
      %v6937 = vadd.f32 %v6836, %v6905
      %v6938 = vadd.f32 %v6837, %v6906
      %v6939 = vadd.f32 %v6838, %v6907
      %v6940 = vadd.f32 %v6839, %v6908
      %v6941 = vadd.f32 %v6840, %v6909
      %v6942 = vadd.f32 %v6841, %v6910
      %v6943 = vadd.f32 %v6842, %v6911
      %v6944 = vadd.f32 %v6843, %v6912
      %v6945 = vadd.f32 %v6844, %v6913
      %v6946 = vadd.f32 %v6845, %v6914
      %v6947 = vadd.f32 %v6846, %v6915
      %v6948 = vadd.f32 %v6847, %v6916
      %v6949 = vadd.f32 %v6848, %v6917
      %v6950 = vadd.f32 %v6849, %v6918
      %v6951 = vadd.f32 %v6850, %v6919
      %v6952 = vadd.f32 %v6851, %v6920
      %v6953 = vadd.f32 %v6852, %v6921
      %v6954 = vadd.f32 %v6853, %v6922
      %v6955 = vadd.f32 %v6854, %v6923
      %v6956 = vadd.f32 %v6855, %v6924
      %v6957 = vadd.f32 %v6856, %v6925
      %v6958 = vadd.f32 %v6857, %v6926
      %v6959 = vld [vmem:[%s2690 + $0x1] sm:$0xff]
      %v6960 = vld [vmem:[%s2690 + $0x9] sm:$0xff]
      %v6961 = vld [vmem:[%s2690 + $0x19] sm:$0xff]
      %v6962 = vld [vmem:[%s2690 + $0x21] sm:$0xff]
      %v6963 = vld [vmem:[%s2690 + $0x31] sm:$0xff]
      %v6964 = vld [vmem:[%s2690 + $0x39] sm:$0xff]
      %v6965 = vld [vmem:[%s2690 + $0x49] sm:$0xff]
      %v6966 = vld [vmem:[%s2690 + $0x51] sm:$0xff]
      %v6967 = vld [vmem:[%s2690 + $0x61] sm:$0xff]
      %v6968 = vld [vmem:[%s2690 + $0x69] sm:$0xff]
      %v6969 = vld [vmem:[%s2690 + $0x79] sm:$0xff]
      %v6970 = vld [vmem:[%s2690 + $0x81] sm:$0xff]
      %v6971 = vld [vmem:[%s2690 + $0x91] sm:$0xff]
      %v6972 = vld [vmem:[%s2690 + $0x99] sm:$0xff]
      %v6973 = vld [vmem:[%s2690 + $0xa9] sm:$0xff]
      %v6974 = vld [vmem:[%s2690 + $0xb1] sm:$0xff]
      %v6975 = vld [vmem:[%s2690 + $0xc1] sm:$0xff]
      %v6976 = vld [vmem:[%s2690 + $0xc9] sm:$0xff]
      %v6977 = vld [vmem:[%s2690 + $0xd9] sm:$0xff]
      %v6978 = vld [vmem:[%s2690 + $0xe1] sm:$0xff]
      %v6979 = vld [vmem:[%s2690 + $0xf1] sm:$0xff]
      %v6980 = vld [vmem:[%s2690 + $0xf9] sm:$0xff]
      %v6981 = vld [vmem:[%s2690 + $0x109] sm:$0xff]
      %v6982 = vld [vmem:[%s2690 + $0x111] sm:$0xff]
      %v6983 = vld [vmem:[%s2690 + $0x121] sm:$0xff]
      %v6984 = vld [vmem:[%s2690 + $0x129] sm:$0xff]
      %v6985 = vld [vmem:[%s2690 + $0x139] sm:$0xff]
      %v6986 = vld [vmem:[%s2690 + $0x141] sm:$0xff]
      %v6987 = vld [vmem:[%s2690 + $0x151] sm:$0xff]
      %v6988 = vld [vmem:[%s2690 + $0x159] sm:$0xff]
      %v6989 = vld [vmem:[%s2690 + $0x169] sm:$0xff]
      %v6990 = vld [vmem:[%s2690 + $0x171] sm:$0xff]
      %s6991 = scalar_lea.vmem %s3, 4
      %v6992 = vld [vmem:[%s6991] sm:$0x1]
      %v6994 = vperm.slane %v6992, 0
      %v6996 = vmul.f32 %v6959, %v6994
      %v6997 = vmul.f32 %v6960, %v6994
      %v6998 = vmul.f32 %v6961, %v6994
      %v6999 = vmul.f32 %v6962, %v6994
      %v7000 = vmul.f32 %v6963, %v6994
      %v7001 = vmul.f32 %v6964, %v6994
      %v7002 = vmul.f32 %v6965, %v6994
      %v7003 = vmul.f32 %v6966, %v6994
      %v7004 = vmul.f32 %v6967, %v6994
      %v7005 = vmul.f32 %v6968, %v6994
      %v7006 = vmul.f32 %v6969, %v6994
      %v7007 = vmul.f32 %v6970, %v6994
      %v7008 = vmul.f32 %v6971, %v6994
      %v7009 = vmul.f32 %v6972, %v6994
      %v7010 = vmul.f32 %v6973, %v6994
      %v7011 = vmul.f32 %v6974, %v6994
      %v7012 = vmul.f32 %v6975, %v6994
      %v7013 = vmul.f32 %v6976, %v6994
      %v7014 = vmul.f32 %v6977, %v6994
      %v7015 = vmul.f32 %v6978, %v6994
      %v7016 = vmul.f32 %v6979, %v6994
      %v7017 = vmul.f32 %v6980, %v6994
      %v7018 = vmul.f32 %v6981, %v6994
      %v7019 = vmul.f32 %v6982, %v6994
      %v7020 = vmul.f32 %v6983, %v6994
      %v7021 = vmul.f32 %v6984, %v6994
      %v7022 = vmul.f32 %v6985, %v6994
      %v7023 = vmul.f32 %v6986, %v6994
      %v7024 = vmul.f32 %v6987, %v6994
      %v7025 = vmul.f32 %v6988, %v6994
      %v7026 = vmul.f32 %v6989, %v6994
      %v7027 = vmul.f32 %v6990, %v6994
      %v7028 = vadd.f32 %v6927, %v6996
      %v7029 = vadd.f32 %v6928, %v6997
      %v7030 = vadd.f32 %v6929, %v6998
      %v7031 = vadd.f32 %v6930, %v6999
      %v7032 = vadd.f32 %v6931, %v7000
      %v7033 = vadd.f32 %v6932, %v7001
      %v7034 = vadd.f32 %v6933, %v7002
      %v7035 = vadd.f32 %v6934, %v7003
      %v7036 = vadd.f32 %v6935, %v7004
      %v7037 = vadd.f32 %v6936, %v7005
      %v7038 = vadd.f32 %v6937, %v7006
      %v7039 = vadd.f32 %v6938, %v7007
      %v7040 = vadd.f32 %v6939, %v7008
      %v7041 = vadd.f32 %v6940, %v7009
      %v7042 = vadd.f32 %v6941, %v7010
      %v7043 = vadd.f32 %v6942, %v7011
      %v7044 = vadd.f32 %v6943, %v7012
      %v7045 = vadd.f32 %v6944, %v7013
      %v7046 = vadd.f32 %v6945, %v7014
      %v7047 = vadd.f32 %v6946, %v7015
      %v7048 = vadd.f32 %v6947, %v7016
      %v7049 = vadd.f32 %v6948, %v7017
      %v7050 = vadd.f32 %v6949, %v7018
      %v7051 = vadd.f32 %v6950, %v7019
      %v7052 = vadd.f32 %v6951, %v7020
      %v7053 = vadd.f32 %v6952, %v7021
      %v7054 = vadd.f32 %v6953, %v7022
      %v7055 = vadd.f32 %v6954, %v7023
      %v7056 = vadd.f32 %v6955, %v7024
      %v7057 = vadd.f32 %v6956, %v7025
      %v7058 = vadd.f32 %v6957, %v7026
      %v7059 = vadd.f32 %v6958, %v7027
      %v7060 = vld [vmem:[%s2690 + $0x2] sm:$0xff]
      %v7061 = vld [vmem:[%s2690 + $0xa] sm:$0xff]
      %v7062 = vld [vmem:[%s2690 + $0x1a] sm:$0xff]
      %v7063 = vld [vmem:[%s2690 + $0x22] sm:$0xff]
      %v7064 = vld [vmem:[%s2690 + $0x32] sm:$0xff]
      %v7065 = vld [vmem:[%s2690 + $0x3a] sm:$0xff]
      %v7066 = vld [vmem:[%s2690 + $0x4a] sm:$0xff]
      %v7067 = vld [vmem:[%s2690 + $0x52] sm:$0xff]
      %v7068 = vld [vmem:[%s2690 + $0x62] sm:$0xff]
      %v7069 = vld [vmem:[%s2690 + $0x6a] sm:$0xff]
      %v7070 = vld [vmem:[%s2690 + $0x7a] sm:$0xff]
      %v7071 = vld [vmem:[%s2690 + $0x82] sm:$0xff]
      %v7072 = vld [vmem:[%s2690 + $0x92] sm:$0xff]
      %v7073 = vld [vmem:[%s2690 + $0x9a] sm:$0xff]
      %v7074 = vld [vmem:[%s2690 + $0xaa] sm:$0xff]
      %v7075 = vld [vmem:[%s2690 + $0xb2] sm:$0xff]
      %v7076 = vld [vmem:[%s2690 + $0xc2] sm:$0xff]
      %v7077 = vld [vmem:[%s2690 + $0xca] sm:$0xff]
      %v7078 = vld [vmem:[%s2690 + $0xda] sm:$0xff]
      %v7079 = vld [vmem:[%s2690 + $0xe2] sm:$0xff]
      %v7080 = vld [vmem:[%s2690 + $0xf2] sm:$0xff]
      %v7081 = vld [vmem:[%s2690 + $0xfa] sm:$0xff]
      %v7082 = vld [vmem:[%s2690 + $0x10a] sm:$0xff]
      %v7083 = vld [vmem:[%s2690 + $0x112] sm:$0xff]
      %v7084 = vld [vmem:[%s2690 + $0x122] sm:$0xff]
      %v7085 = vld [vmem:[%s2690 + $0x12a] sm:$0xff]
      %v7086 = vld [vmem:[%s2690 + $0x13a] sm:$0xff]
      %v7087 = vld [vmem:[%s2690 + $0x142] sm:$0xff]
      %v7088 = vld [vmem:[%s2690 + $0x152] sm:$0xff]
      %v7089 = vld [vmem:[%s2690 + $0x15a] sm:$0xff]
      %v7090 = vld [vmem:[%s2690 + $0x16a] sm:$0xff]
      %v7091 = vld [vmem:[%s2690 + $0x172] sm:$0xff]
      %s7092 = scalar_lea.vmem %s3, 5
      %v7093 = vld [vmem:[%s7092] sm:$0x1]
      %v7095 = vperm.slane %v7093, 0
      %v7097 = vmul.f32 %v7060, %v7095
      %v7098 = vmul.f32 %v7061, %v7095
      %v7099 = vmul.f32 %v7062, %v7095
      %v7100 = vmul.f32 %v7063, %v7095
      %v7101 = vmul.f32 %v7064, %v7095
      %v7102 = vmul.f32 %v7065, %v7095
      %v7103 = vmul.f32 %v7066, %v7095
      %v7104 = vmul.f32 %v7067, %v7095
      %v7105 = vmul.f32 %v7068, %v7095
      %v7106 = vmul.f32 %v7069, %v7095
      %v7107 = vmul.f32 %v7070, %v7095
      %v7108 = vmul.f32 %v7071, %v7095
      %v7109 = vmul.f32 %v7072, %v7095
      %v7110 = vmul.f32 %v7073, %v7095
      %v7111 = vmul.f32 %v7074, %v7095
      %v7112 = vmul.f32 %v7075, %v7095
      %v7113 = vmul.f32 %v7076, %v7095
      %v7114 = vmul.f32 %v7077, %v7095
      %v7115 = vmul.f32 %v7078, %v7095
      %v7116 = vmul.f32 %v7079, %v7095
      %v7117 = vmul.f32 %v7080, %v7095
      %v7118 = vmul.f32 %v7081, %v7095
      %v7119 = vmul.f32 %v7082, %v7095
      %v7120 = vmul.f32 %v7083, %v7095
      %v7121 = vmul.f32 %v7084, %v7095
      %v7122 = vmul.f32 %v7085, %v7095
      %v7123 = vmul.f32 %v7086, %v7095
      %v7124 = vmul.f32 %v7087, %v7095
      %v7125 = vmul.f32 %v7088, %v7095
      %v7126 = vmul.f32 %v7089, %v7095
      %v7127 = vmul.f32 %v7090, %v7095
      %v7128 = vmul.f32 %v7091, %v7095
      %v7129 = vadd.f32 %v7028, %v7097
      %v7130 = vadd.f32 %v7029, %v7098
      %v7131 = vadd.f32 %v7030, %v7099
      %v7132 = vadd.f32 %v7031, %v7100
      %v7133 = vadd.f32 %v7032, %v7101
      %v7134 = vadd.f32 %v7033, %v7102
      %v7135 = vadd.f32 %v7034, %v7103
      %v7136 = vadd.f32 %v7035, %v7104
      %v7137 = vadd.f32 %v7036, %v7105
      %v7138 = vadd.f32 %v7037, %v7106
      %v7139 = vadd.f32 %v7038, %v7107
      %v7140 = vadd.f32 %v7039, %v7108
      %v7141 = vadd.f32 %v7040, %v7109
      %v7142 = vadd.f32 %v7041, %v7110
      %v7143 = vadd.f32 %v7042, %v7111
      %v7144 = vadd.f32 %v7043, %v7112
      %v7145 = vadd.f32 %v7044, %v7113
      %v7146 = vadd.f32 %v7045, %v7114
      %v7147 = vadd.f32 %v7046, %v7115
      %v7148 = vadd.f32 %v7047, %v7116
      %v7149 = vadd.f32 %v7048, %v7117
      %v7150 = vadd.f32 %v7049, %v7118
      %v7151 = vadd.f32 %v7050, %v7119
      %v7152 = vadd.f32 %v7051, %v7120
      %v7153 = vadd.f32 %v7052, %v7121
      %v7154 = vadd.f32 %v7053, %v7122
      %v7155 = vadd.f32 %v7054, %v7123
      %v7156 = vadd.f32 %v7055, %v7124
      %v7157 = vadd.f32 %v7056, %v7125
      %v7158 = vadd.f32 %v7057, %v7126
      %v7159 = vadd.f32 %v7058, %v7127
      %v7160 = vadd.f32 %v7059, %v7128
      %s7161 = scalar_lea.vmem [#allocation2], 48
      %v7162 = vld [vmem:[%s7161] sm:$0xff]
      %v7163 = vld [vmem:[%s7161 + $0x8] sm:$0xff]
      %v7164 = vld [vmem:[%s7161 + $0x18] sm:$0xff]
      %v7165 = vld [vmem:[%s7161 + $0x20] sm:$0xff]
      %v7166 = vld [vmem:[%s7161 + $0x30] sm:$0xff]
      %v7167 = vld [vmem:[%s7161 + $0x38] sm:$0xff]
      %v7168 = vld [vmem:[%s7161 + $0x48] sm:$0xff]
      %v7169 = vld [vmem:[%s7161 + $0x50] sm:$0xff]
      %v7170 = vld [vmem:[%s7161 + $0x60] sm:$0xff]
      %v7171 = vld [vmem:[%s7161 + $0x68] sm:$0xff]
      %v7172 = vld [vmem:[%s7161 + $0x78] sm:$0xff]
      %v7173 = vld [vmem:[%s7161 + $0x80] sm:$0xff]
      %v7174 = vld [vmem:[%s7161 + $0x90] sm:$0xff]
      %v7175 = vld [vmem:[%s7161 + $0x98] sm:$0xff]
      %v7176 = vld [vmem:[%s7161 + $0xa8] sm:$0xff]
      %v7177 = vld [vmem:[%s7161 + $0xb0] sm:$0xff]
      %v7178 = vld [vmem:[%s7161 + $0xc0] sm:$0xff]
      %v7179 = vld [vmem:[%s7161 + $0xc8] sm:$0xff]
      %v7180 = vld [vmem:[%s7161 + $0xd8] sm:$0xff]
      %v7181 = vld [vmem:[%s7161 + $0xe0] sm:$0xff]
      %v7182 = vld [vmem:[%s7161 + $0xf0] sm:$0xff]
      %v7183 = vld [vmem:[%s7161 + $0xf8] sm:$0xff]
      %v7184 = vld [vmem:[%s7161 + $0x108] sm:$0xff]
      %v7185 = vld [vmem:[%s7161 + $0x110] sm:$0xff]
      %v7186 = vld [vmem:[%s7161 + $0x120] sm:$0xff]
      %v7187 = vld [vmem:[%s7161 + $0x128] sm:$0xff]
      %v7188 = vld [vmem:[%s7161 + $0x138] sm:$0xff]
      %v7189 = vld [vmem:[%s7161 + $0x140] sm:$0xff]
      %v7190 = vld [vmem:[%s7161 + $0x150] sm:$0xff]
      %v7191 = vld [vmem:[%s7161 + $0x158] sm:$0xff]
      %v7192 = vld [vmem:[%s7161 + $0x168] sm:$0xff]
      %v7193 = vld [vmem:[%s7161 + $0x170] sm:$0xff]
      %s7194 = scalar_lea.vmem %s3, 6
      %v7195 = vld [vmem:[%s7194] sm:$0x1]
      %v7197 = vperm.slane %v7195, 0
      %v7199 = vmul.f32 %v7162, %v7197
      %v7200 = vmul.f32 %v7163, %v7197
      %v7201 = vmul.f32 %v7164, %v7197
      %v7202 = vmul.f32 %v7165, %v7197
      %v7203 = vmul.f32 %v7166, %v7197
      %v7204 = vmul.f32 %v7167, %v7197
      %v7205 = vmul.f32 %v7168, %v7197
      %v7206 = vmul.f32 %v7169, %v7197
      %v7207 = vmul.f32 %v7170, %v7197
      %v7208 = vmul.f32 %v7171, %v7197
      %v7209 = vmul.f32 %v7172, %v7197
      %v7210 = vmul.f32 %v7173, %v7197
      %v7211 = vmul.f32 %v7174, %v7197
      %v7212 = vmul.f32 %v7175, %v7197
      %v7213 = vmul.f32 %v7176, %v7197
      %v7214 = vmul.f32 %v7177, %v7197
      %v7215 = vmul.f32 %v7178, %v7197
      %v7216 = vmul.f32 %v7179, %v7197
      %v7217 = vmul.f32 %v7180, %v7197
      %v7218 = vmul.f32 %v7181, %v7197
      %v7219 = vmul.f32 %v7182, %v7197
      %v7220 = vmul.f32 %v7183, %v7197
      %v7221 = vmul.f32 %v7184, %v7197
      %v7222 = vmul.f32 %v7185, %v7197
      %v7223 = vmul.f32 %v7186, %v7197
      %v7224 = vmul.f32 %v7187, %v7197
      %v7225 = vmul.f32 %v7188, %v7197
      %v7226 = vmul.f32 %v7189, %v7197
      %v7227 = vmul.f32 %v7190, %v7197
      %v7228 = vmul.f32 %v7191, %v7197
      %v7229 = vmul.f32 %v7192, %v7197
      %v7230 = vmul.f32 %v7193, %v7197
      %v7231 = vadd.f32 %v7129, %v7199
      %v7232 = vadd.f32 %v7130, %v7200
      %v7233 = vadd.f32 %v7131, %v7201
      %v7234 = vadd.f32 %v7132, %v7202
      %v7235 = vadd.f32 %v7133, %v7203
      %v7236 = vadd.f32 %v7134, %v7204
      %v7237 = vadd.f32 %v7135, %v7205
      %v7238 = vadd.f32 %v7136, %v7206
      %v7239 = vadd.f32 %v7137, %v7207
      %v7240 = vadd.f32 %v7138, %v7208
      %v7241 = vadd.f32 %v7139, %v7209
      %v7242 = vadd.f32 %v7140, %v7210
      %v7243 = vadd.f32 %v7141, %v7211
      %v7244 = vadd.f32 %v7142, %v7212
      %v7245 = vadd.f32 %v7143, %v7213
      %v7246 = vadd.f32 %v7144, %v7214
      %v7247 = vadd.f32 %v7145, %v7215
      %v7248 = vadd.f32 %v7146, %v7216
      %v7249 = vadd.f32 %v7147, %v7217
      %v7250 = vadd.f32 %v7148, %v7218
      %v7251 = vadd.f32 %v7149, %v7219
      %v7252 = vadd.f32 %v7150, %v7220
      %v7253 = vadd.f32 %v7151, %v7221
      %v7254 = vadd.f32 %v7152, %v7222
      %v7255 = vadd.f32 %v7153, %v7223
      %v7256 = vadd.f32 %v7154, %v7224
      %v7257 = vadd.f32 %v7155, %v7225
      %v7258 = vadd.f32 %v7156, %v7226
      %v7259 = vadd.f32 %v7157, %v7227
      %v7260 = vadd.f32 %v7158, %v7228
      %v7261 = vadd.f32 %v7159, %v7229
      %v7262 = vadd.f32 %v7160, %v7230
      %v7263 = vld [vmem:[%s7161 + $0x1] sm:$0xff]
      %v7264 = vld [vmem:[%s7161 + $0x9] sm:$0xff]
      %v7265 = vld [vmem:[%s7161 + $0x19] sm:$0xff]
      %v7266 = vld [vmem:[%s7161 + $0x21] sm:$0xff]
      %v7267 = vld [vmem:[%s7161 + $0x31] sm:$0xff]
      %v7268 = vld [vmem:[%s7161 + $0x39] sm:$0xff]
      %v7269 = vld [vmem:[%s7161 + $0x49] sm:$0xff]
      %v7270 = vld [vmem:[%s7161 + $0x51] sm:$0xff]
      %v7271 = vld [vmem:[%s7161 + $0x61] sm:$0xff]
      %v7272 = vld [vmem:[%s7161 + $0x69] sm:$0xff]
      %v7273 = vld [vmem:[%s7161 + $0x79] sm:$0xff]
      %v7274 = vld [vmem:[%s7161 + $0x81] sm:$0xff]
      %v7275 = vld [vmem:[%s7161 + $0x91] sm:$0xff]
      %v7276 = vld [vmem:[%s7161 + $0x99] sm:$0xff]
      %v7277 = vld [vmem:[%s7161 + $0xa9] sm:$0xff]
      %v7278 = vld [vmem:[%s7161 + $0xb1] sm:$0xff]
      %v7279 = vld [vmem:[%s7161 + $0xc1] sm:$0xff]
      %v7280 = vld [vmem:[%s7161 + $0xc9] sm:$0xff]
      %v7281 = vld [vmem:[%s7161 + $0xd9] sm:$0xff]
      %v7282 = vld [vmem:[%s7161 + $0xe1] sm:$0xff]
      %v7283 = vld [vmem:[%s7161 + $0xf1] sm:$0xff]
      %v7284 = vld [vmem:[%s7161 + $0xf9] sm:$0xff]
      %v7285 = vld [vmem:[%s7161 + $0x109] sm:$0xff]
      %v7286 = vld [vmem:[%s7161 + $0x111] sm:$0xff]
      %v7287 = vld [vmem:[%s7161 + $0x121] sm:$0xff]
      %v7288 = vld [vmem:[%s7161 + $0x129] sm:$0xff]
      %v7289 = vld [vmem:[%s7161 + $0x139] sm:$0xff]
      %v7290 = vld [vmem:[%s7161 + $0x141] sm:$0xff]
      %v7291 = vld [vmem:[%s7161 + $0x151] sm:$0xff]
      %v7292 = vld [vmem:[%s7161 + $0x159] sm:$0xff]
      %v7293 = vld [vmem:[%s7161 + $0x169] sm:$0xff]
      %v7294 = vld [vmem:[%s7161 + $0x171] sm:$0xff]
      %s7295 = scalar_lea.vmem %s3, 7
      %v7296 = vld [vmem:[%s7295] sm:$0x1]
      %v7298 = vperm.slane %v7296, 0
      %v7300 = vmul.f32 %v7263, %v7298
      %v7301 = vmul.f32 %v7264, %v7298
      %v7302 = vmul.f32 %v7265, %v7298
      %v7303 = vmul.f32 %v7266, %v7298
      %v7304 = vmul.f32 %v7267, %v7298
      %v7305 = vmul.f32 %v7268, %v7298
      %v7306 = vmul.f32 %v7269, %v7298
      %v7307 = vmul.f32 %v7270, %v7298
      %v7308 = vmul.f32 %v7271, %v7298
      %v7309 = vmul.f32 %v7272, %v7298
      %v7310 = vmul.f32 %v7273, %v7298
      %v7311 = vmul.f32 %v7274, %v7298
      %v7312 = vmul.f32 %v7275, %v7298
      %v7313 = vmul.f32 %v7276, %v7298
      %v7314 = vmul.f32 %v7277, %v7298
      %v7315 = vmul.f32 %v7278, %v7298
      %v7316 = vmul.f32 %v7279, %v7298
      %v7317 = vmul.f32 %v7280, %v7298
      %v7318 = vmul.f32 %v7281, %v7298
      %v7319 = vmul.f32 %v7282, %v7298
      %v7320 = vmul.f32 %v7283, %v7298
      %v7321 = vmul.f32 %v7284, %v7298
      %v7322 = vmul.f32 %v7285, %v7298
      %v7323 = vmul.f32 %v7286, %v7298
      %v7324 = vmul.f32 %v7287, %v7298
      %v7325 = vmul.f32 %v7288, %v7298
      %v7326 = vmul.f32 %v7289, %v7298
      %v7327 = vmul.f32 %v7290, %v7298
      %v7328 = vmul.f32 %v7291, %v7298
      %v7329 = vmul.f32 %v7292, %v7298
      %v7330 = vmul.f32 %v7293, %v7298
      %v7331 = vmul.f32 %v7294, %v7298
      %v7332 = vadd.f32 %v7231, %v7300
      %v7333 = vadd.f32 %v7232, %v7301
      %v7334 = vadd.f32 %v7233, %v7302
      %v7335 = vadd.f32 %v7234, %v7303
      %v7336 = vadd.f32 %v7235, %v7304
      %v7337 = vadd.f32 %v7236, %v7305
      %v7338 = vadd.f32 %v7237, %v7306
      %v7339 = vadd.f32 %v7238, %v7307
      %v7340 = vadd.f32 %v7239, %v7308
      %v7341 = vadd.f32 %v7240, %v7309
      %v7342 = vadd.f32 %v7241, %v7310
      %v7343 = vadd.f32 %v7242, %v7311
      %v7344 = vadd.f32 %v7243, %v7312
      %v7345 = vadd.f32 %v7244, %v7313
      %v7346 = vadd.f32 %v7245, %v7314
      %v7347 = vadd.f32 %v7246, %v7315
      %v7348 = vadd.f32 %v7247, %v7316
      %v7349 = vadd.f32 %v7248, %v7317
      %v7350 = vadd.f32 %v7249, %v7318
      %v7351 = vadd.f32 %v7250, %v7319
      %v7352 = vadd.f32 %v7251, %v7320
      %v7353 = vadd.f32 %v7252, %v7321
      %v7354 = vadd.f32 %v7253, %v7322
      %v7355 = vadd.f32 %v7254, %v7323
      %v7356 = vadd.f32 %v7255, %v7324
      %v7357 = vadd.f32 %v7256, %v7325
      %v7358 = vadd.f32 %v7257, %v7326
      %v7359 = vadd.f32 %v7258, %v7327
      %v7360 = vadd.f32 %v7259, %v7328
      %v7361 = vadd.f32 %v7260, %v7329
      %v7362 = vadd.f32 %v7261, %v7330
      %v7363 = vadd.f32 %v7262, %v7331
      %v7364 = vld [vmem:[%s7161 + $0x2] sm:$0xff]
      %v7365 = vld [vmem:[%s7161 + $0xa] sm:$0xff]
      %v7366 = vld [vmem:[%s7161 + $0x1a] sm:$0xff]
      %v7367 = vld [vmem:[%s7161 + $0x22] sm:$0xff]
      %v7368 = vld [vmem:[%s7161 + $0x32] sm:$0xff]
      %v7369 = vld [vmem:[%s7161 + $0x3a] sm:$0xff]
      %v7370 = vld [vmem:[%s7161 + $0x4a] sm:$0xff]
      %v7371 = vld [vmem:[%s7161 + $0x52] sm:$0xff]
      %v7372 = vld [vmem:[%s7161 + $0x62] sm:$0xff]
      %v7373 = vld [vmem:[%s7161 + $0x6a] sm:$0xff]
      %v7374 = vld [vmem:[%s7161 + $0x7a] sm:$0xff]
      %v7375 = vld [vmem:[%s7161 + $0x82] sm:$0xff]
      %v7376 = vld [vmem:[%s7161 + $0x92] sm:$0xff]
      %v7377 = vld [vmem:[%s7161 + $0x9a] sm:$0xff]
      %v7378 = vld [vmem:[%s7161 + $0xaa] sm:$0xff]
      %v7379 = vld [vmem:[%s7161 + $0xb2] sm:$0xff]
      %v7380 = vld [vmem:[%s7161 + $0xc2] sm:$0xff]
      %v7381 = vld [vmem:[%s7161 + $0xca] sm:$0xff]
      %v7382 = vld [vmem:[%s7161 + $0xda] sm:$0xff]
      %v7383 = vld [vmem:[%s7161 + $0xe2] sm:$0xff]
      %v7384 = vld [vmem:[%s7161 + $0xf2] sm:$0xff]
      %v7385 = vld [vmem:[%s7161 + $0xfa] sm:$0xff]
      %v7386 = vld [vmem:[%s7161 + $0x10a] sm:$0xff]
      %v7387 = vld [vmem:[%s7161 + $0x112] sm:$0xff]
      %v7388 = vld [vmem:[%s7161 + $0x122] sm:$0xff]
      %v7389 = vld [vmem:[%s7161 + $0x12a] sm:$0xff]
      %v7390 = vld [vmem:[%s7161 + $0x13a] sm:$0xff]
      %v7391 = vld [vmem:[%s7161 + $0x142] sm:$0xff]
      %v7392 = vld [vmem:[%s7161 + $0x152] sm:$0xff]
      %v7393 = vld [vmem:[%s7161 + $0x15a] sm:$0xff]
      %v7394 = vld [vmem:[%s7161 + $0x16a] sm:$0xff]
      %v7395 = vld [vmem:[%s7161 + $0x172] sm:$0xff]
      %s7396 = scalar_lea.vmem %s3, 8
      %v7397 = vld [vmem:[%s7396] sm:$0x1]
      %v7399 = vperm.slane %v7397, 0
      %v7401 = vmul.f32 %v7364, %v7399
      %v7402 = vmul.f32 %v7365, %v7399
      %v7403 = vmul.f32 %v7366, %v7399
      %v7404 = vmul.f32 %v7367, %v7399
      %v7405 = vmul.f32 %v7368, %v7399
      %v7406 = vmul.f32 %v7369, %v7399
      %v7407 = vmul.f32 %v7370, %v7399
      %v7408 = vmul.f32 %v7371, %v7399
      %v7409 = vmul.f32 %v7372, %v7399
      %v7410 = vmul.f32 %v7373, %v7399
      %v7411 = vmul.f32 %v7374, %v7399
      %v7412 = vmul.f32 %v7375, %v7399
      %v7413 = vmul.f32 %v7376, %v7399
      %v7414 = vmul.f32 %v7377, %v7399
      %v7415 = vmul.f32 %v7378, %v7399
      %v7416 = vmul.f32 %v7379, %v7399
      %v7417 = vmul.f32 %v7380, %v7399
      %v7418 = vmul.f32 %v7381, %v7399
      %v7419 = vmul.f32 %v7382, %v7399
      %v7420 = vmul.f32 %v7383, %v7399
      %v7421 = vmul.f32 %v7384, %v7399
      %v7422 = vmul.f32 %v7385, %v7399
      %v7423 = vmul.f32 %v7386, %v7399
      %v7424 = vmul.f32 %v7387, %v7399
      %v7425 = vmul.f32 %v7388, %v7399
      %v7426 = vmul.f32 %v7389, %v7399
      %v7427 = vmul.f32 %v7390, %v7399
      %v7428 = vmul.f32 %v7391, %v7399
      %v7429 = vmul.f32 %v7392, %v7399
      %v7430 = vmul.f32 %v7393, %v7399
      %v7431 = vmul.f32 %v7394, %v7399
      %v7432 = vmul.f32 %v7395, %v7399
      %v7433 = vadd.f32 %v7332, %v7401
      %v7434 = vadd.f32 %v7333, %v7402
      %v7435 = vadd.f32 %v7334, %v7403
      %v7436 = vadd.f32 %v7335, %v7404
      %v7437 = vadd.f32 %v7336, %v7405
      %v7438 = vadd.f32 %v7337, %v7406
      %v7439 = vadd.f32 %v7338, %v7407
      %v7440 = vadd.f32 %v7339, %v7408
      %v7441 = vadd.f32 %v7340, %v7409
      %v7442 = vadd.f32 %v7341, %v7410
      %v7443 = vadd.f32 %v7342, %v7411
      %v7444 = vadd.f32 %v7343, %v7412
      %v7445 = vadd.f32 %v7344, %v7413
      %v7446 = vadd.f32 %v7345, %v7414
      %v7447 = vadd.f32 %v7346, %v7415
      %v7448 = vadd.f32 %v7347, %v7416
      %v7449 = vadd.f32 %v7348, %v7417
      %v7450 = vadd.f32 %v7349, %v7418
      %v7451 = vadd.f32 %v7350, %v7419
      %v7452 = vadd.f32 %v7351, %v7420
      %v7453 = vadd.f32 %v7352, %v7421
      %v7454 = vadd.f32 %v7353, %v7422
      %v7455 = vadd.f32 %v7354, %v7423
      %v7456 = vadd.f32 %v7355, %v7424
      %v7457 = vadd.f32 %v7356, %v7425
      %v7458 = vadd.f32 %v7357, %v7426
      %v7459 = vadd.f32 %v7358, %v7427
      %v7460 = vadd.f32 %v7359, %v7428
      %v7461 = vadd.f32 %v7360, %v7429
      %v7462 = vadd.f32 %v7361, %v7430
      %v7463 = vadd.f32 %v7362, %v7431
      %v7464 = vadd.f32 %v7363, %v7432
      %v7465 = vld [vmem:[%s1090 + $0x1] sm:$0xff]
      %v7466 = vld [vmem:[%s1090 + $0x9] sm:$0xff]
      %v7467 = vld [vmem:[%s1090 + $0x19] sm:$0xff]
      %v7468 = vld [vmem:[%s1090 + $0x21] sm:$0xff]
      %v7469 = vld [vmem:[%s1090 + $0x31] sm:$0xff]
      %v7470 = vld [vmem:[%s1090 + $0x39] sm:$0xff]
      %v7471 = vld [vmem:[%s1090 + $0x49] sm:$0xff]
      %v7472 = vld [vmem:[%s1090 + $0x51] sm:$0xff]
      %v7473 = vld [vmem:[%s1090 + $0x61] sm:$0xff]
      %v7474 = vld [vmem:[%s1090 + $0x69] sm:$0xff]
      %v7475 = vld [vmem:[%s1090 + $0x79] sm:$0xff]
      %v7476 = vld [vmem:[%s1090 + $0x81] sm:$0xff]
      %v7477 = vld [vmem:[%s1090 + $0x91] sm:$0xff]
      %v7478 = vld [vmem:[%s1090 + $0x99] sm:$0xff]
      %v7479 = vld [vmem:[%s1090 + $0xa9] sm:$0xff]
      %v7480 = vld [vmem:[%s1090 + $0xb1] sm:$0xff]
      %v7481 = vld [vmem:[%s1090 + $0xc1] sm:$0xff]
      %v7482 = vld [vmem:[%s1090 + $0xc9] sm:$0xff]
      %v7483 = vld [vmem:[%s1090 + $0xd9] sm:$0xff]
      %v7484 = vld [vmem:[%s1090 + $0xe1] sm:$0xff]
      %v7485 = vld [vmem:[%s1090 + $0xf1] sm:$0xff]
      %v7486 = vld [vmem:[%s1090 + $0xf9] sm:$0xff]
      %v7487 = vld [vmem:[%s1090 + $0x109] sm:$0xff]
      %v7488 = vld [vmem:[%s1090 + $0x111] sm:$0xff]
      %v7489 = vld [vmem:[%s1090 + $0x121] sm:$0xff]
      %v7490 = vld [vmem:[%s1090 + $0x129] sm:$0xff]
      %v7491 = vld [vmem:[%s1090 + $0x139] sm:$0xff]
      %v7492 = vld [vmem:[%s1090 + $0x141] sm:$0xff]
      %v7493 = vld [vmem:[%s1090 + $0x151] sm:$0xff]
      %v7494 = vld [vmem:[%s1090 + $0x159] sm:$0xff]
      %v7495 = vld [vmem:[%s1090 + $0x169] sm:$0xff]
      %v7496 = vld [vmem:[%s1090 + $0x171] sm:$0xff]
      %v7497 = vsel %vm198, %v7433, 0.0
      %7498 = vadd.xlane.f32.xlu0 %v7497
      %v7499 = vpop.xlane.xlu0 %7498
      %v7500 = vsel %vm198, %v7434, 0.0
      %7501 = vadd.xlane.f32.xlu0 %v7500
      %v7502 = vpop.xlane.xlu0 %7501
      %v7503 = vsel %vm198, %v7435, 0.0
      %7504 = vadd.xlane.f32.xlu0 %v7503
      %v7505 = vpop.xlane.xlu0 %7504
      %v7506 = vsel %vm198, %v7436, 0.0
      %7507 = vadd.xlane.f32.xlu0 %v7506
      %v7508 = vpop.xlane.xlu0 %7507
      %v7509 = vsel %vm198, %v7437, 0.0
      %7510 = vadd.xlane.f32.xlu0 %v7509
      %v7511 = vpop.xlane.xlu0 %7510
      %v7512 = vsel %vm198, %v7438, 0.0
      %7513 = vadd.xlane.f32.xlu0 %v7512
      %v7514 = vpop.xlane.xlu0 %7513
      %v7515 = vsel %vm198, %v7439, 0.0
      %7516 = vadd.xlane.f32.xlu0 %v7515
      %v7517 = vpop.xlane.xlu0 %7516
      %v7518 = vsel %vm198, %v7440, 0.0
      %7519 = vadd.xlane.f32.xlu0 %v7518
      %v7520 = vpop.xlane.xlu0 %7519
      %v7521 = vsel %vm198, %v7441, 0.0
      %7522 = vadd.xlane.f32.xlu0 %v7521
      %v7523 = vpop.xlane.xlu0 %7522
      %v7524 = vsel %vm198, %v7442, 0.0
      %7525 = vadd.xlane.f32.xlu0 %v7524
      %v7526 = vpop.xlane.xlu0 %7525
      %v7527 = vsel %vm198, %v7443, 0.0
      %7528 = vadd.xlane.f32.xlu0 %v7527
      %v7529 = vpop.xlane.xlu0 %7528
      %v7530 = vsel %vm198, %v7444, 0.0
      %7531 = vadd.xlane.f32.xlu0 %v7530
      %v7532 = vpop.xlane.xlu0 %7531
      %v7533 = vsel %vm198, %v7445, 0.0
      %7534 = vadd.xlane.f32.xlu0 %v7533
      %v7535 = vpop.xlane.xlu0 %7534
      %v7536 = vsel %vm198, %v7446, 0.0
      %7537 = vadd.xlane.f32.xlu0 %v7536
      %v7538 = vpop.xlane.xlu0 %7537
      %v7539 = vsel %vm198, %v7447, 0.0
      %7540 = vadd.xlane.f32.xlu0 %v7539
      %v7541 = vpop.xlane.xlu0 %7540
      %v7542 = vsel %vm198, %v7448, 0.0
      %7543 = vadd.xlane.f32.xlu0 %v7542
      %v7544 = vpop.xlane.xlu0 %7543
      %v7545 = vsel %vm198, %v7449, 0.0
      %7546 = vadd.xlane.f32.xlu0 %v7545
      %v7547 = vpop.xlane.xlu0 %7546
      %v7548 = vsel %vm198, %v7450, 0.0
      %7549 = vadd.xlane.f32.xlu0 %v7548
      %v7550 = vpop.xlane.xlu0 %7549
      %v7551 = vsel %vm198, %v7451, 0.0
      %7552 = vadd.xlane.f32.xlu0 %v7551
      %v7553 = vpop.xlane.xlu0 %7552
      %v7554 = vsel %vm198, %v7452, 0.0
      %7555 = vadd.xlane.f32.xlu0 %v7554
      %v7556 = vpop.xlane.xlu0 %7555
      %v7557 = vsel %vm198, %v7453, 0.0
      %7558 = vadd.xlane.f32.xlu0 %v7557
      %v7559 = vpop.xlane.xlu0 %7558
      %v7560 = vsel %vm198, %v7454, 0.0
      %7561 = vadd.xlane.f32.xlu0 %v7560
      %v7562 = vpop.xlane.xlu0 %7561
      %v7563 = vsel %vm198, %v7455, 0.0
      %7564 = vadd.xlane.f32.xlu0 %v7563
      %v7565 = vpop.xlane.xlu0 %7564
      %v7566 = vsel %vm198, %v7456, 0.0
      %7567 = vadd.xlane.f32.xlu0 %v7566
      %v7568 = vpop.xlane.xlu0 %7567
      %v7569 = vsel %vm198, %v7457, 0.0
      %7570 = vadd.xlane.f32.xlu0 %v7569
      %v7571 = vpop.xlane.xlu0 %7570
      %v7572 = vsel %vm198, %v7458, 0.0
      %7573 = vadd.xlane.f32.xlu0 %v7572
      %v7574 = vpop.xlane.xlu0 %7573
      %v7575 = vsel %vm198, %v7459, 0.0
      %7576 = vadd.xlane.f32.xlu0 %v7575
      %v7577 = vpop.xlane.xlu0 %7576
      %v7578 = vsel %vm198, %v7460, 0.0
      %7579 = vadd.xlane.f32.xlu0 %v7578
      %v7580 = vpop.xlane.xlu0 %7579
      %v7581 = vsel %vm198, %v7461, 0.0
      %7582 = vadd.xlane.f32.xlu0 %v7581
      %v7583 = vpop.xlane.xlu0 %7582
      %v7584 = vsel %vm198, %v7462, 0.0
      %7585 = vadd.xlane.f32.xlu0 %v7584
      %v7586 = vpop.xlane.xlu0 %7585
      %v7587 = vsel %vm198, %v7463, 0.0
      %7588 = vadd.xlane.f32.xlu0 %v7587
      %v7589 = vpop.xlane.xlu0 %7588
      %v7590 = vsel %vm198, %v7464, 0.0
      %7591 = vadd.xlane.f32.xlu0 %v7590
      %v7592 = vpop.xlane.xlu0 %7591
      %v7593 = vadd.f32 %v7499, %v7465
      %v7594 = vadd.f32 %v7502, %v7466
      %v7595 = vadd.f32 %v7505, %v7467
      %v7596 = vadd.f32 %v7508, %v7468
      %v7597 = vadd.f32 %v7511, %v7469
      %v7598 = vadd.f32 %v7514, %v7470
      %v7599 = vadd.f32 %v7517, %v7471
      %v7600 = vadd.f32 %v7520, %v7472
      %v7601 = vadd.f32 %v7523, %v7473
      %v7602 = vadd.f32 %v7526, %v7474
      %v7603 = vadd.f32 %v7529, %v7475
      %v7604 = vadd.f32 %v7532, %v7476
      %v7605 = vadd.f32 %v7535, %v7477
      %v7606 = vadd.f32 %v7538, %v7478
      %v7607 = vadd.f32 %v7541, %v7479
      %v7608 = vadd.f32 %v7544, %v7480
      %v7609 = vadd.f32 %v7547, %v7481
      %v7610 = vadd.f32 %v7550, %v7482
      %v7611 = vadd.f32 %v7553, %v7483
      %v7612 = vadd.f32 %v7556, %v7484
      %v7613 = vadd.f32 %v7559, %v7485
      %v7614 = vadd.f32 %v7562, %v7486
      %v7615 = vadd.f32 %v7565, %v7487
      %v7616 = vadd.f32 %v7568, %v7488
      %v7617 = vadd.f32 %v7571, %v7489
      %v7618 = vadd.f32 %v7574, %v7490
      %v7619 = vadd.f32 %v7577, %v7491
      %v7620 = vadd.f32 %v7580, %v7492
      %v7621 = vadd.f32 %v7583, %v7493
      %v7622 = vadd.f32 %v7586, %v7494
      %v7623 = vadd.f32 %v7589, %v7495
      %v7624 = vadd.f32 %v7592, %v7496
      %vm7625 = vcmask 7168
      %7626 = vst.msk [vmem:[%s197] sm:$0xff] %vm7625, %v7593
      %7627 = vst.msk [vmem:[%s197 + $0x8] sm:$0xff] %vm7625, %v7594
      %7628 = vst.msk [vmem:[%s197 + $0x10] sm:$0xff] %vm7625, %v7595
      %7629 = vst.msk [vmem:[%s197 + $0x18] sm:$0xff] %vm7625, %v7596
      %7630 = vst.msk [vmem:[%s197 + $0x20] sm:$0xff] %vm7625, %v7597
      %7631 = vst.msk [vmem:[%s197 + $0x28] sm:$0xff] %vm7625, %v7598
      %7632 = vst.msk [vmem:[%s197 + $0x30] sm:$0xff] %vm7625, %v7599
      %7633 = vst.msk [vmem:[%s197 + $0x38] sm:$0xff] %vm7625, %v7600
      %7634 = vst.msk [vmem:[%s197 + $0x40] sm:$0xff] %vm7625, %v7601
      %7635 = vst.msk [vmem:[%s197 + $0x48] sm:$0xff] %vm7625, %v7602
      %7636 = vst.msk [vmem:[%s197 + $0x50] sm:$0xff] %vm7625, %v7603
      %7637 = vst.msk [vmem:[%s197 + $0x58] sm:$0xff] %vm7625, %v7604
      %7638 = vst.msk [vmem:[%s197 + $0x60] sm:$0xff] %vm7625, %v7605
      %7639 = vst.msk [vmem:[%s197 + $0x68] sm:$0xff] %vm7625, %v7606
      %7640 = vst.msk [vmem:[%s197 + $0x70] sm:$0xff] %vm7625, %v7607
      %7641 = vst.msk [vmem:[%s197 + $0x78] sm:$0xff] %vm7625, %v7608
      %7642 = vst.msk [vmem:[%s197 + $0x80] sm:$0xff] %vm7625, %v7609
      %7643 = vst.msk [vmem:[%s197 + $0x88] sm:$0xff] %vm7625, %v7610
      %7644 = vst.msk [vmem:[%s197 + $0x90] sm:$0xff] %vm7625, %v7611
      %7645 = vst.msk [vmem:[%s197 + $0x98] sm:$0xff] %vm7625, %v7612
      %7646 = vst.msk [vmem:[%s197 + $0xa0] sm:$0xff] %vm7625, %v7613
      %7647 = vst.msk [vmem:[%s197 + $0xa8] sm:$0xff] %vm7625, %v7614
      %7648 = vst.msk [vmem:[%s197 + $0xb0] sm:$0xff] %vm7625, %v7615
      %7649 = vst.msk [vmem:[%s197 + $0xb8] sm:$0xff] %vm7625, %v7616
      %7650 = vst.msk [vmem:[%s197 + $0xc0] sm:$0xff] %vm7625, %v7617
      %7651 = vst.msk [vmem:[%s197 + $0xc8] sm:$0xff] %vm7625, %v7618
      %7652 = vst.msk [vmem:[%s197 + $0xd0] sm:$0xff] %vm7625, %v7619
      %7653 = vst.msk [vmem:[%s197 + $0xd8] sm:$0xff] %vm7625, %v7620
      %7654 = vst.msk [vmem:[%s197 + $0xe0] sm:$0xff] %vm7625, %v7621
      %7655 = vst.msk [vmem:[%s197 + $0xe8] sm:$0xff] %vm7625, %v7622
      %7656 = vst.msk [vmem:[%s197 + $0xf0] sm:$0xff] %vm7625, %v7623
      %7657 = vst.msk [vmem:[%s197 + $0xf8] sm:$0xff] %vm7625, %v7624
      %p7658 = scmp.lt.s32.totalorder %s15, 1
      %s7659 = scalar_select %p7658, %s15, 1
      %s7660 = smul.addr %s7659, 32
      %s7661 = smul.addr %s7660, 8
      %s7662 = scalar_lea.vmem %s4, %s7661
      // Predicated region
      $region44: #{vdsr_forward.1} parent=35 // pred_check
        %p7663 = pneg %p122
      $region45: #{vdsr_forward.1} parent=35 // pred_check_branch
        %7665 = sbr.rel (%p7663) target = $region47
      $region46: #{vdsr_forward.1} parent=35 // pred_region
        _
      $region47: #{vdsr_forward.1} parent=35 // pred_fallthru
        _
    $region36: #{vdsr_forward.1} parent=5 // pred_fallthru
      _
    %p7666 = scmp.le.s32.totalorder 2, %s10
    // Predicated region
    $region48: #{vdsr_forward.1} parent=5 // pred_check
      %p7667 = pneg %p7666
    $region49: #{vdsr_forward.1} parent=5 // pred_check_branch
      %7669 = sbr.rel (%p7667) target = $region51
    $region50: #{vdsr_forward.1} parent=5 // pred_region
      %s7670 = ssub.s32 %s10, 2
      // Predicated region
      $region52: #{vdsr_forward.1} parent=50 // pred_check
        %p7671 = pneg %p128
      $region53: #{vdsr_forward.1} parent=50 // pred_check_branch
        %7673 = sbr.rel (%p7671) target = $region55
      $region54: #{vdsr_forward.1} parent=50 // pred_region
        %p7674 = scmp.lt.s32.totalorder %s16, 1
        %s7675 = scalar_select %p7674, %s16, 1
        %s7676 = smul.addr %s7675, 32
        %s7677 = smul.addr %s7676, 8
        %s7678 = scalar_lea.vmem %s4, %s7677
      $region55: #{vdsr_forward.1} parent=50 // pred_fallthru
        _
    $region51: #{vdsr_forward.1} parent=5 // pred_fallthru
      _
  $region6: #{vdsr_forward.1} parent=0 // loop_footer
    %s14 = sadd.s32 1, %s10
  $region7: #{vdsr_forward.1} parent=0 // loop_footer_branch
    %9 = sbr.rel target = $region3
  $region8: #{vdsr_forward.1} parent=0 // loop_exit
    _

</llo_original>
